<compile_context>
chip_gen: v6e
topology: v6e:2x2x1
jax: 0.10.0
libtpu: 0.0.40
codegen_flags: <defaults>
</compile_context>

<pallas_src>
import jax
import jax.numpy as jnp
from jax.experimental import pallas as pl
from jax.experimental.pallas import tpu as pltpu

LANES = 128
TILE_ROWS = 512     # reduce-kernel tile rows (512*128 f32 = 256 KiB / tile)
CHUNK_ROWS = 512    # lovasz-kernel chunk rows
N_CORES = 2         # leading "parallel" grid axis for kernel 1 (megacore on v7x)
EPS = 1e-7
# Prediction padding value. Properties that make every padded term exactly zero:
#   exp(-|PAD|) underflows to 0  -> sigmoid(PAD) = 0, BCE(PAD, 0) = 0
#   hinge error 1 - PAD*sign(0) = 1 + PAD <= 0 -> relu = 0, and any real element that
#   sorts after a padded one also has error <= 0, so its contribution is 0 regardless
#   of the position shift. -1e4 keeps exp's range reduction trivially safe.
PAD_PRED = -1e4


def _pad_to_tiles(x_flat, pad_value, chunk_elems):
    """Pad a 1-D array to a multiple of chunk_elems and reshape to (rows, 128)."""
    n = x_flat.shape[0]
    n_pad = ((n + chunk_elems - 1) // chunk_elems) * chunk_elems
    x = jnp.pad(x_flat, (0, n_pad - n), constant_values=pad_value)
    return x.reshape(n_pad // LANES, LANES)


# ---------------------------------------------------------------------------
# Kernel 1: sigmoid / BCE-with-logits statistics + fused hinge-error output.
#   grid = (N_CORES [parallel], tiles_per_core [arbitrary])
#   Each parallel slice owns its own (8, 128) accumulator block (row 0 is used).
#   No validity mask is needed: PAD_PRED padding contributes exactly 0 everywhere.
# ---------------------------------------------------------------------------
def _reduce_kernel(pred_ref, gt_ref, nerr_ref, inter_ref, card_ref, bce_ref, gts_ref):
    i = pl.program_id(1)

    @pl.when(i == 0)
    def _():
        inter_ref[...] = jnp.zeros_like(inter_ref)
        card_ref[...] = jnp.zeros_like(card_ref)
        bce_ref[...] = jnp.zeros_like(bce_ref)
        gts_ref[...] = jnp.zeros_like(gts_ref)

    x = pred_ref[...]                       # (TILE_ROWS, 128) f32 logits, PAD_PRED pad
    t = gt_ref[...].astype(jnp.float32)     # (TILE_ROWS, 128) targets {0,1} (bf16->f32)

    # One EUP transcendental feeds both sigmoid and the BCE log term.
    z = jnp.exp(-jnp.abs(x))                                   # exp(-1e4) == 0 exactly
    p = jnp.where(x >= 0.0, 1.0, z) / (1.0 + z)                # sigmoid(x); 0 on pad
    # stable BCE-with-logits; log(1+z) differs from log1p(z) by <= ~1.2e-7 abs
    # (z in [0,1]) which is negligible for the mean-reduced loss.
    bce_el = jnp.maximum(x, 0.0) - x * t + jnp.log(1.0 + z)    # 0 on pad

    # Negated Lovász hinge error: -(1 - x*sign) = x*(2t-1) - 1.  Padding -> +9999, so
    # it sorts to the end of the ascending sort and contributes nothing downstream.
    nerr_ref[...] = x * (2.0 * t - 1.0) - 1.0

    inter_ref[0:1, :] += jnp.sum(p * t, axis=0, keepdims=True)
    card_ref[0:1, :] += jnp.sum(p + t, axis=0, keepdims=True)
    bce_ref[0:1, :] += jnp.sum(bce_el, axis=0, keepdims=True)
    gts_ref[0:1, :] += jnp.sum(t, axis=0, keepdims=True)


# ---------------------------------------------------------------------------
# Kernel 2: Lovász-hinge on pre-sorted (descending-error) data, chunked.
#   For global position i (1-based cnt):
#     jac_i      = 1 - (gts - C_i) / (gts + cnt - C_i)        C_i: inclusive cumsum(gt)
#     jac_{i-1}  = 1 - (gts - C^ex_i) / (gts + cnt-1 - C^ex_i) C^ex_i = C_i - gt_i
#     loss      += relu(err_i) * (jac_i - jac_{i-1}),  jac_{-1} := 0
#   The stream holds -errors (ascending-sorted); padding carries -err <= 0 and gt = 0
#   so it contributes exactly zero.  The running gt-prefix before the current chunk is
#   carried in VMEM scratch; the constant triangular matmul operands and the in-chunk
#   position plane are built once at chunk 0 and cached in VMEM scratch.
# ---------------------------------------------------------------------------
def _lovasz_kernel(nerr_ref, gt_ref, gts_ref, out_ref,
                   carry_ref, u_ref, l_ref, pos_ref):
    chunk = pl.program_id(0)

    @pl.when(chunk == 0)
    def _():
        out_ref[...] = jnp.zeros_like(out_ref)
        carry_ref[...] = jnp.zeros_like(carry_ref)
        # Constant operands, built once and reused by every chunk.
        ci = jax.lax.broadcasted_iota(jnp.int32, (LANES, LANES), 0)
        cj = jax.lax.broadcasted_iota(jnp.int32, (LANES, LANES), 1)
        u_ref[...] = (ci <= cj).astype(jnp.float32).astype(jnp.bfloat16)   # incl upper
        ri = jax.lax.broadcasted_iota(jnp.int32, (CHUNK_ROWS, CHUNK_ROWS), 0)
        rj = jax.lax.broadcasted_iota(jnp.int32, (CHUNK_ROWS, CHUNK_ROWS), 1)
        l_ref[...] = (rj < ri).astype(jnp.float32).astype(jnp.bfloat16)    # strict lower
        r = jax.lax.broadcasted_iota(jnp.int32, (CHUNK_ROWS, LANES), 0)
        c = jax.lax.broadcasted_iota(jnp.int32, (CHUNK_ROWS, LANES), 1)
        pos_ref[...] = (r * LANES + c + 1).astype(jnp.float32)             # 1-based pos

    e = nerr_ref[...]                       # (R, 128) f32, holds -errors (ascending)
    t_bf = gt_ref[...]                      # (R, 128) bf16 in {0, 1}
    t = t_bf.astype(jnp.float32)
    gts = gts_ref[...]                      # (1, 128) f32, total positives (broadcast)
    cc = carry_ref[...]                     # (1, 128) f32, positives before this chunk

    # Global inclusive cumsum of gt in row-major (sorted) order:
    #   within-row part: t @ inclusive-upper-triangular   (bf16 MXU, exact 0/1 counts)
    #   cross-row part:  strictly-lower-triangular @ t, reduced over lanes
    row_cs = jnp.dot(t_bf, u_ref[...], preferred_element_type=jnp.float32)
    pref = jnp.dot(l_ref[...], t_bf, preferred_element_type=jnp.float32)
    row_off = jnp.sum(pref, axis=1, keepdims=True)             # (R, 1)

    cum_gt = row_cs + row_off + cc          # inclusive cumsum of gt (exact small ints)
    cum_ex = cum_gt - t                     # exclusive cumsum

    cnt_f = pos_ref[...] + (chunk * (CHUNK_ROWS * LANES)).astype(jnp.float32)

    jac = 1.0 - (gts - cum_gt) / (gts + cnt_f - cum_gt)         # denom >= cnt >= 1
    jac_prev = 1.0 - (gts - cum_ex) / jnp.maximum(gts + (cnt_f - 1.0) - cum_ex, 1.0)
    jac_prev = jnp.where(cnt_f == 1.0, 0.0, jac_prev)           # jac_{-1} := 0

    # hinge = relu(errors) = max(-nerr, 0); padding contributes exactly 0.
    contrib = jnp.maximum(-e, 0.0) * (jac - jac_prev)
    out_ref[...] += jnp.sum(contrib, axis=0, keepdims=True)

    carry_ref[...] = cc + jnp.sum(t)


# ---------------------------------------------------------------------------
# Wrapper reproducing DiceLovaszBCELoss.forward
# ---------------------------------------------------------------------------
def dice_lovasz_bce_loss(y_pr, y_gt, alpha=0.5, beta=0.03, gamma=0.2):
    n_elem = int(y_pr.size)
    pred_flat = y_pr.reshape(-1).astype(jnp.float32)
    gt_flat_bf = y_gt.reshape(-1).astype(jnp.bfloat16)          # {0,1} exact in bf16

    # Pad so the flat length is a multiple of both kernels' chunk sizes
    # (chunk1 is a multiple of CHUNK_ROWS*LANES, so kernel 2 reuses the same layout).
    chunk1 = N_CORES * TILE_ROWS * LANES
    pred2d = _pad_to_tiles(pred_flat, PAD_PRED, chunk1)
    gt2d = _pad_to_tiles(gt_flat_bf, 0.0, chunk1)
    rows = pred2d.shape[0]
    tiles_per_core = rows // (N_CORES * TILE_ROWS)

    tile_spec = pl.BlockSpec((TILE_ROWS, LANES),
                             lambda p, i: (p * tiles_per_core + i, 0))
    acc_spec = pl.BlockSpec((8, LANES), lambda p, i: (p, 0))
    acc_sd = jax.ShapeDtypeStruct((N_CORES * 8, LANES), jnp.float32)

    nerr2d, inter_o, card_o, bce_o, gts_o = pl.pallas_call(
        _reduce_kernel,
        out_shape=(jax.ShapeDtypeStruct((rows, LANES), jnp.float32),
                   acc_sd, acc_sd, acc_sd, acc_sd),
        grid_spec=pltpu.PrefetchScalarGridSpec(
            num_scalar_prefetch=0,
            grid=(N_CORES, tiles_per_core),
            in_specs=[tile_spec, tile_spec],
            out_specs=(tile_spec, acc_spec, acc_spec, acc_spec, acc_spec),
        ),
        compiler_params=pltpu.CompilerParams(
            dimension_semantics=("parallel", "arbitrary")),
    )(pred2d, gt2d)

    intersection = jnp.sum(inter_o)
    cardinality = jnp.sum(card_o)
    bce_sum = jnp.sum(bce_o)
    gt_sum = jnp.sum(gts_o)

    # --- Dice (smp binary: from_logits=True, smooth=0, eps=1e-7, log_loss=False) ---
    dice_score = (2.0 * intersection) / jnp.maximum(cardinality, EPS)
    dice = (1.0 - dice_score) * (gt_sum > 0).astype(jnp.float32)

    # --- BCEWithLogitsLoss (mean reduction over the true element count) ---
    bce = bce_sum / float(n_elem)

    # ---------------- Lovász hinge (binary, per_image=False) ----------------
    # TODO(synk): the global sort has no Pallas TPU primitive; done with a single
    # stable multi-operand jax.lax.sort (ascending on -errors == descending on errors,
    # payload carried in the same pass — no argsort, gathers, or negation passes).
    nerr_sorted, gt_sorted = jax.lax.sort(
        (nerr2d.reshape(-1), gt2d.reshape(-1)), num_keys=1)

    gts_b = jnp.broadcast_to(gt_sum, (1, LANES))

    lov_o = pl.pallas_call(
        _lovasz_kernel,
        out_shape=jax.ShapeDtypeStruct((1, LANES), jnp.float32),
        grid_spec=pltpu.PrefetchScalarGridSpec(
            num_scalar_prefetch=0,
            grid=(rows // CHUNK_ROWS,),
            in_specs=[pl.BlockSpec((CHUNK_ROWS, LANES), lambda i: (i, 0)),
                      pl.BlockSpec((CHUNK_ROWS, LANES), lambda i: (i, 0)),
                      pl.BlockSpec((1, LANES), lambda i: (0, 0))],
            out_specs=pl.BlockSpec((1, LANES), lambda i: (0, 0)),
            scratch_shapes=[pltpu.VMEM((1, LANES), jnp.float32),
                            pltpu.VMEM((LANES, LANES), jnp.bfloat16),
                            pltpu.VMEM((CHUNK_ROWS, CHUNK_ROWS), jnp.bfloat16),
                            pltpu.VMEM((CHUNK_ROWS, LANES), jnp.float32)],
        ),
        compiler_params=pltpu.CompilerParams(dimension_semantics=("arbitrary",)),
    )(nerr_sorted.reshape(rows, LANES), gt_sorted.reshape(rows, LANES), gts_b)
    lovasz = jnp.sum(lov_o)

    return alpha * dice + beta * lovasz + gamma * bce


# ---------------------------------------------------------------------------
# Pure-JAX reference (mirrors the PyTorch semantics) for a sanity check
# ---------------------------------------------------------------------------
def _reference_loss(y_pr, y_gt, alpha=0.5, beta=0.03, gamma=0.2):
    x = y_pr.reshape(-1).astype(jnp.float32)
    t = y_gt.reshape(-1).astype(jnp.float32)
    p = jax.nn.sigmoid(x)
    inter = jnp.sum(p * t)
    card = jnp.sum(p + t)
    score = 2.0 * inter / jnp.maximum(card, EPS)
    dice = (1.0 - score) * (jnp.sum(t) > 0).astype(jnp.float32)
    bce = jnp.mean(jnp.maximum(x, 0.0) - x * t + jnp.log1p(jnp.exp(-jnp.abs(x))))
    signs = 2.0 * t - 1.0
    errors = 1.0 - x * signs
    order = jnp.argsort(-errors)
    e_s = errors[order]
    g_s = t[order]
    gts = jnp.sum(g_s)
    inter_c = gts - jnp.cumsum(g_s)
    union_c = gts + jnp.cumsum(1.0 - g_s)
    jac = 1.0 - inter_c / union_c
    grad = jnp.concatenate([jac[:1], jac[1:] - jac[:-1]])
    lov = jnp.dot(jnp.maximum(e_s, 0.0), grad)
    return alpha * dice + beta * lov + gamma * bce


if __name__ == "__main__":
    key = jax.random.PRNGKey(0)
    k1, k2 = jax.random.split(key)
    # Binary segmentation: NCHW logits and {0,1} targets (1 channel for 'binary' mode)
    y_pr = jax.random.normal(k1, (2, 1, 16, 16), dtype=jnp.float32)
    y_gt = (jax.random.uniform(k2, (2, 1, 16, 16)) > 0.5).astype(jnp.float32)

    loss = jax.jit(dice_lovasz_bce_loss)(y_pr, y_gt)
    loss = jax.block_until_ready(loss)

    ref = _reference_loss(y_pr, y_gt)
    assert bool(jnp.isfinite(loss)), f"non-finite loss: {loss}"
    assert bool(jnp.allclose(loss, ref, rtol=1e-3, atol=1e-3)), (loss, ref)

    print("KERNEL_OK")
</pallas_src>

<mosaic_0001>
module attributes {stable_mosaic.version = 11 : i64} {
  func.func @_reduce_kernel(%arg0: i32, %arg1: i32, %arg2: memref<512x128xf32, #tpu.memory_space<vmem>>, %arg3: memref<512x128xbf16, #tpu.memory_space<vmem>>, %arg4: memref<512x128xf32, #tpu.memory_space<vmem>>, %arg5: memref<8x128xf32, #tpu.memory_space<vmem>>, %arg6: memref<8x128xf32, #tpu.memory_space<vmem>>, %arg7: memref<8x128xf32, #tpu.memory_space<vmem>>, %arg8: memref<8x128xf32, #tpu.memory_space<vmem>>) attributes {dimension_semantics = [#tpu.dimension_semantics<parallel>, #tpu.dimension_semantics<arbitrary>], iteration_bounds = array<i64: 2, 1>, scalar_prefetch = 0 : i64, scratch_operands = 0 : i64, tpu.core_type = #tpu.core_type<tc>, window_params = [{transform_indices = @transform_0, window_bounds = array<i64: 512, 128>}, {transform_indices = @transform_1, window_bounds = array<i64: 512, 128>}, {transform_indices = @transform_2, window_bounds = array<i64: 512, 128>}, {transform_indices = @transform_3, window_bounds = array<i64: 8, 128>}, {transform_indices = @transform_4, window_bounds = array<i64: 8, 128>}, {transform_indices = @transform_5, window_bounds = array<i64: 8, 128>}, {transform_indices = @transform_6, window_bounds = array<i64: 8, 128>}]} {
    %c0_i32 = arith.constant 0 : i32
    %0 = arith.cmpi eq, %arg1, %c0_i32 : i32
    %1 = arith.extui %0 : i1 to i32
    %c0_i32_0 = arith.constant 0 : i32
    %2 = arith.cmpi ne, %1, %c0_i32_0 : i32
    scf.if %2 {
      %cst_34 = arith.constant 0.000000e+00 : f32
      %55 = vector.broadcast %cst_34 : f32 to vector<8x128xf32>
      %c0_35 = arith.constant 0 : index
      %c0_36 = arith.constant 0 : index
      %56 = vector.load %arg5[%c0_35, %c0_36] : memref<8x128xf32, #tpu.memory_space<vmem>>, vector<8x128xf32>
      tpu.vector_store %arg5[%c0_35, %c0_36], %55 {strides = array<i32>} : memref<8x128xf32, #tpu.memory_space<vmem>>, vector<8x128xf32>,
      %cst_37 = arith.constant 0.000000e+00 : f32
      %57 = vector.broadcast %cst_37 : f32 to vector<8x128xf32>
      %c0_38 = arith.constant 0 : index
      %c0_39 = arith.constant 0 : index
      %58 = vector.load %arg6[%c0_38, %c0_39] : memref<8x128xf32, #tpu.memory_space<vmem>>, vector<8x128xf32>
      tpu.vector_store %arg6[%c0_38, %c0_39], %57 {strides = array<i32>} : memref<8x128xf32, #tpu.memory_space<vmem>>, vector<8x128xf32>,
      %cst_40 = arith.constant 0.000000e+00 : f32
      %59 = vector.broadcast %cst_40 : f32 to vector<8x128xf32>
      %c0_41 = arith.constant 0 : index
      %c0_42 = arith.constant 0 : index
      %60 = vector.load %arg7[%c0_41, %c0_42] : memref<8x128xf32, #tpu.memory_space<vmem>>, vector<8x128xf32>
      tpu.vector_store %arg7[%c0_41, %c0_42], %59 {strides = array<i32>} : memref<8x128xf32, #tpu.memory_space<vmem>>, vector<8x128xf32>,
      %cst_43 = arith.constant 0.000000e+00 : f32
      %61 = vector.broadcast %cst_43 : f32 to vector<8x128xf32>
      %c0_44 = arith.constant 0 : index
      %c0_45 = arith.constant 0 : index
      %62 = vector.load %arg8[%c0_44, %c0_45] : memref<8x128xf32, #tpu.memory_space<vmem>>, vector<8x128xf32>
      tpu.vector_store %arg8[%c0_44, %c0_45], %61 {strides = array<i32>} : memref<8x128xf32, #tpu.memory_space<vmem>>, vector<8x128xf32>,
    } else {
    }
    %c0 = arith.constant 0 : index
    %c0_1 = arith.constant 0 : index
    %3 = vector.load %arg2[%c0, %c0_1] : memref<512x128xf32, #tpu.memory_space<vmem>>, vector<512x128xf32>
    %c0_2 = arith.constant 0 : index
    %c0_3 = arith.constant 0 : index
    %4 = vector.load %arg3[%c0_2, %c0_3] : memref<512x128xbf16, #tpu.memory_space<vmem>>, vector<512x128xbf16>
    %5 = arith.extf %4 : vector<512x128xbf16> to vector<512x128xf32>
    %6 = math.absf %3 : vector<512x128xf32>
    %cst = arith.constant 0.000000e+00 : f32
    %7 = vector.broadcast %cst : f32 to vector<512x128xf32>
    %8 = arith.subf %7, %6 : vector<512x128xf32>
    %9 = math.exp %8 : vector<512x128xf32>
    %cst_4 = arith.constant 0.000000e+00 : f32
    %10 = vector.broadcast %cst_4 : f32 to vector<512x128xf32>
    %11 = arith.cmpf oge, %3, %10 : vector<512x128xf32>
    %cst_5 = arith.constant 1.000000e+00 : f32
    %12 = vector.broadcast %cst_5 : f32 to vector<512x128xf32>
    %13 = arith.select %11, %12, %9 : vector<512x128xi1>, vector<512x128xf32>
    %cst_6 = arith.constant 1.000000e+00 : f32
    %14 = vector.broadcast %cst_6 : f32 to vector<512x128xf32>
    %15 = arith.addf %14, %9 : vector<512x128xf32>
    %16 = arith.divf %13, %15 : vector<512x128xf32>
    %cst_7 = arith.constant 0.000000e+00 : f32
    %17 = vector.broadcast %cst_7 : f32 to vector<512x128xf32>
    %18 = arith.maximumf %3, %17 : vector<512x128xf32>
    %19 = arith.mulf %3, %5 : vector<512x128xf32>
    %20 = arith.subf %18, %19 : vector<512x128xf32>
    %cst_8 = arith.constant 1.000000e+00 : f32
    %21 = vector.broadcast %cst_8 : f32 to vector<512x128xf32>
    %22 = arith.addf %21, %9 : vector<512x128xf32>
    %23 = math.log %22 : vector<512x128xf32>
    %24 = arith.addf %20, %23 : vector<512x128xf32>
    %cst_9 = arith.constant 2.000000e+00 : f32
    %25 = vector.broadcast %cst_9 : f32 to vector<512x128xf32>
    %26 = arith.mulf %25, %5 : vector<512x128xf32>
    %cst_10 = arith.constant 1.000000e+00 : f32
    %27 = vector.broadcast %cst_10 : f32 to vector<512x128xf32>
    %28 = arith.subf %26, %27 : vector<512x128xf32>
    %29 = arith.mulf %3, %28 : vector<512x128xf32>
    %cst_11 = arith.constant 1.000000e+00 : f32
    %30 = vector.broadcast %cst_11 : f32 to vector<512x128xf32>
    %31 = arith.subf %29, %30 : vector<512x128xf32>
    %c0_12 = arith.constant 0 : index
    %c0_13 = arith.constant 0 : index
    %32 = vector.load %arg4[%c0_12, %c0_13] : memref<512x128xf32, #tpu.memory_space<vmem>>, vector<512x128xf32>
    tpu.vector_store %arg4[%c0_12, %c0_13], %31 {strides = array<i32>} : memref<512x128xf32, #tpu.memory_space<vmem>>, vector<512x128xf32>,
    %c0_14 = arith.constant 0 : index
    %c0_15 = arith.constant 0 : index
    %33 = vector.load %arg5[%c0_14, %c0_15] : memref<8x128xf32, #tpu.memory_space<vmem>>, vector<1x128xf32>
    %34 = arith.mulf %16, %5 : vector<512x128xf32>
    %cst_16 = arith.constant dense<0.000000e+00> : vector<128xf32>
    %35 = vector.multi_reduction <add>, %34, %cst_16 [0] : vector<512x128xf32> to vector<128xf32>
    %36 = vector.shape_cast %35 : vector<128xf32> to vector<1x128xf32>
    %37 = arith.addf %33, %36 : vector<1x128xf32>
    %c0_17 = arith.constant 0 : index
    %c0_18 = arith.constant 0 : index
    %38 = vector.load %arg5[%c0_17, %c0_18] : memref<8x128xf32, #tpu.memory_space<vmem>>, vector<1x128xf32>
    tpu.vector_store %arg5[%c0_17, %c0_18], %37 {strides = array<i32>} : memref<8x128xf32, #tpu.memory_space<vmem>>, vector<1x128xf32>,
    %c0_19 = arith.constant 0 : index
    %c0_20 = arith.constant 0 : index
    %39 = vector.load %arg6[%c0_19, %c0_20] : memref<8x128xf32, #tpu.memory_space<vmem>>, vector<1x128xf32>
    %40 = arith.addf %16, %5 : vector<512x128xf32>
    %cst_21 = arith.constant dense<0.000000e+00> : vector<128xf32>
    %41 = vector.multi_reduction <add>, %40, %cst_21 [0] : vector<512x128xf32> to vector<128xf32>
    %42 = vector.shape_cast %41 : vector<128xf32> to vector<1x128xf32>
    %43 = arith.addf %39, %42 : vector<1x128xf32>
    %c0_22 = arith.constant 0 : index
    %c0_23 = arith.constant 0 : index
    %44 = vector.load %arg6[%c0_22, %c0_23] : memref<8x128xf32, #tpu.memory_space<vmem>>, vector<1x128xf32>
    tpu.vector_store %arg6[%c0_22, %c0_23], %43 {strides = array<i32>} : memref<8x128xf32, #tpu.memory_space<vmem>>, vector<1x128xf32>,
    %c0_24 = arith.constant 0 : index
    %c0_25 = arith.constant 0 : index
    %45 = vector.load %arg7[%c0_24, %c0_25] : memref<8x128xf32, #tpu.memory_space<vmem>>, vector<1x128xf32>
    %cst_26 = arith.constant dense<0.000000e+00> : vector<128xf32>
    %46 = vector.multi_reduction <add>, %24, %cst_26 [0] : vector<512x128xf32> to vector<128xf32>
    %47 = vector.shape_cast %46 : vector<128xf32> to vector<1x128xf32>
    %48 = arith.addf %45, %47 : vector<1x128xf32>
    %c0_27 = arith.constant 0 : index
    %c0_28 = arith.constant 0 : index
    %49 = vector.load %arg7[%c0_27, %c0_28] : memref<8x128xf32, #tpu.memory_space<vmem>>, vector<1x128xf32>
    tpu.vector_store %arg7[%c0_27, %c0_28], %48 {strides = array<i32>} : memref<8x128xf32, #tpu.memory_space<vmem>>, vector<1x128xf32>,
    %c0_29 = arith.constant 0 : index
    %c0_30 = arith.constant 0 : index
    %50 = vector.load %arg8[%c0_29, %c0_30] : memref<8x128xf32, #tpu.memory_space<vmem>>, vector<1x128xf32>
    %cst_31 = arith.constant dense<0.000000e+00> : vector<128xf32>
    %51 = vector.multi_reduction <add>, %5, %cst_31 [0] : vector<512x128xf32> to vector<128xf32>
    %52 = vector.shape_cast %51 : vector<128xf32> to vector<1x128xf32>
    %53 = arith.addf %50, %52 : vector<1x128xf32>
    %c0_32 = arith.constant 0 : index
    %c0_33 = arith.constant 0 : index
    %54 = vector.load %arg8[%c0_32, %c0_33] : memref<8x128xf32, #tpu.memory_space<vmem>>, vector<1x128xf32>
    tpu.vector_store %arg8[%c0_32, %c0_33], %53 {strides = array<i32>} : memref<8x128xf32, #tpu.memory_space<vmem>>, vector<1x128xf32>,
    return
  }
  func.func @transform_0(%arg0: i32, %arg1: i32) -> (i32, i32) {
    %c1_i32 = arith.constant 1 : i32
    %0 = arith.muli %arg0, %c1_i32 : i32
    %1 = arith.addi %0, %arg1 : i32
    %c0_i32 = arith.constant 0 : i32
    %c0_i32_0 = arith.constant 0 : i32
    return %1, %c0_i32 : i32, i32
  }
  func.func @transform_1(%arg0: i32, %arg1: i32) -> (i32, i32) {
    %c1_i32 = arith.constant 1 : i32
    %0 = arith.muli %arg0, %c1_i32 : i32
    %1 = arith.addi %0, %arg1 : i32
    %c0_i32 = arith.constant 0 : i32
    %c0_i32_0 = arith.constant 0 : i32
    return %1, %c0_i32 : i32, i32
  }
  func.func @transform_2(%arg0: i32, %arg1: i32) -> (i32, i32) {
    %c1_i32 = arith.constant 1 : i32
    %0 = arith.muli %arg0, %c1_i32 : i32
    %1 = arith.addi %0, %arg1 : i32
    %c0_i32 = arith.constant 0 : i32
    %c0_i32_0 = arith.constant 0 : i32
    return %1, %c0_i32 : i32, i32
  }
  func.func @transform_3(%arg0: i32, %arg1: i32) -> (i32, i32) {
    %c0_i32 = arith.constant 0 : i32
    %c0_i32_0 = arith.constant 0 : i32
    return %arg0, %c0_i32 : i32, i32
  }
  func.func @transform_4(%arg0: i32, %arg1: i32) -> (i32, i32) {
    %c0_i32 = arith.constant 0 : i32
    %c0_i32_0 = arith.constant 0 : i32
    return %arg0, %c0_i32 : i32, i32
  }
  func.func @transform_5(%arg0: i32, %arg1: i32) -> (i32, i32) {
    %c0_i32 = arith.constant 0 : i32
    %c0_i32_0 = arith.constant 0 : i32
    return %arg0, %c0_i32 : i32, i32
  }
  func.func @transform_6(%arg0: i32, %arg1: i32) -> (i32, i32) {
    %c0_i32 = arith.constant 0 : i32
    %c0_i32_0 = arith.constant 0 : i32
    return %arg0, %c0_i32 : i32, i32
  }
}

module attributes {stable_mosaic.version = 11 : i64} {
  func.func @_lovasz_kernel(%arg0: i32, %arg1: memref<512x128xf32, #tpu.memory_space<vmem>>, %arg2: memref<512x128xbf16, #tpu.memory_space<vmem>>, %arg3: memref<1x128xf32, #tpu.memory_space<vmem>>, %arg4: memref<1x128xf32, #tpu.memory_space<vmem>>, %arg5: memref<1x128xf32, #tpu.memory_space<vmem>>, %arg6: memref<128x128xbf16, #tpu.memory_space<vmem>>, %arg7: memref<512x512xbf16, #tpu.memory_space<vmem>>, %arg8: memref<512x128xf32, #tpu.memory_space<vmem>>) attributes {dimension_semantics = [#tpu.dimension_semantics<arbitrary>], iteration_bounds = array<i64: 2>, scalar_prefetch = 0 : i64, scratch_operands = 4 : i64, tpu.core_type = #tpu.core_type<tc>, window_params = [{transform_indices = @transform_0, window_bounds = array<i64: 512, 128>}, {transform_indices = @transform_1, window_bounds = array<i64: 512, 128>}, {pipeline_mode = #tpu.pipeline_mode<synchronous>, transform_indices = @transform_2, window_bounds = array<i64: 1, 128>}, {pipeline_mode = #tpu.pipeline_mode<synchronous>, transform_indices = @transform_3, window_bounds = array<i64: 1, 128>}]} {
    %c0_i32 = arith.constant 0 : i32
    %0 = arith.cmpi eq, %arg0, %c0_i32 : i32
    %1 = arith.extui %0 : i1 to i32
    %c0_i32_0 = arith.constant 0 : i32
    %2 = arith.cmpi ne, %1, %c0_i32_0 : i32
    scf.if %2 {
      %cst_32 = arith.constant 0.000000e+00 : f32
      %66 = vector.broadcast %cst_32 : f32 to vector<1x128xf32>
      %c0_33 = arith.constant 0 : index
      %c0_34 = arith.constant 0 : index
      %67 = vector.load %arg4[%c0_33, %c0_34] : memref<1x128xf32, #tpu.memory_space<vmem>>, vector<1x128xf32>
      tpu.vector_store %arg4[%c0_33, %c0_34], %66 {strides = array<i32>} : memref<1x128xf32, #tpu.memory_space<vmem>>, vector<1x128xf32>,
      %cst_35 = arith.constant 0.000000e+00 : f32
      %68 = vector.broadcast %cst_35 : f32 to vector<1x128xf32>
      %c0_36 = arith.constant 0 : index
      %c0_37 = arith.constant 0 : index
      %69 = vector.load %arg5[%c0_36, %c0_37] : memref<1x128xf32, #tpu.memory_space<vmem>>, vector<1x128xf32>
      tpu.vector_store %arg5[%c0_36, %c0_37], %68 {strides = array<i32>} : memref<1x128xf32, #tpu.memory_space<vmem>>, vector<1x128xf32>,
      %70 = tpu.iota {dimensions = array<i32: 0>} : vector<128x128xi32>
      %71 = tpu.iota {dimensions = array<i32: 1>} : vector<128x128xi32>
      %72 = arith.cmpi sle, %70, %71 : vector<128x128xi32>
      %73 = arith.extui %72 : vector<128x128xi1> to vector<128x128xi32>
      %74 = arith.sitofp %73 : vector<128x128xi32> to vector<128x128xf32>
      %75 = arith.truncf %74 : vector<128x128xf32> to vector<128x128xbf16>
      %c0_38 = arith.constant 0 : index
      %c0_39 = arith.constant 0 : index
      %76 = vector.load %arg6[%c0_38, %c0_39] : memref<128x128xbf16, #tpu.memory_space<vmem>>, vector<128x128xbf16>
      tpu.vector_store %arg6[%c0_38, %c0_39], %75 {strides = array<i32>} : memref<128x128xbf16, #tpu.memory_space<vmem>>, vector<128x128xbf16>,
      %77 = tpu.iota {dimensions = array<i32: 0>} : vector<512x512xi32>
      %78 = tpu.iota {dimensions = array<i32: 1>} : vector<512x512xi32>
      %79 = arith.cmpi slt, %78, %77 : vector<512x512xi32>
      %80 = arith.extui %79 : vector<512x512xi1> to vector<512x512xi32>
      %81 = arith.sitofp %80 : vector<512x512xi32> to vector<512x512xf32>
      %82 = arith.truncf %81 : vector<512x512xf32> to vector<512x512xbf16>
      %c0_40 = arith.constant 0 : index
      %c0_41 = arith.constant 0 : index
      %83 = vector.load %arg7[%c0_40, %c0_41] : memref<512x512xbf16, #tpu.memory_space<vmem>>, vector<512x512xbf16>
      tpu.vector_store %arg7[%c0_40, %c0_41], %82 {strides = array<i32>} : memref<512x512xbf16, #tpu.memory_space<vmem>>, vector<512x512xbf16>,
      %84 = tpu.iota {dimensions = array<i32: 0>} : vector<512x128xi32>
      %85 = tpu.iota {dimensions = array<i32: 1>} : vector<512x128xi32>
      %c128_i32 = arith.constant 128 : i32
      %86 = vector.broadcast %c128_i32 : i32 to vector<512x128xi32>
      %87 = arith.muli %84, %86 : vector<512x128xi32>
      %88 = arith.addi %87, %85 : vector<512x128xi32>
      %c1_i32 = arith.constant 1 : i32
      %89 = vector.broadcast %c1_i32 : i32 to vector<512x128xi32>
      %90 = arith.addi %88, %89 : vector<512x128xi32>
      %91 = arith.sitofp %90 : vector<512x128xi32> to vector<512x128xf32>
      %c0_42 = arith.constant 0 : index
      %c0_43 = arith.constant 0 : index
      %92 = vector.load %arg8[%c0_42, %c0_43] : memref<512x128xf32, #tpu.memory_space<vmem>>, vector<512x128xf32>
      tpu.vector_store %arg8[%c0_42, %c0_43], %91 {strides = array<i32>} : memref<512x128xf32, #tpu.memory_space<vmem>>, vector<512x128xf32>,
    } else {
    }
    %c0 = arith.constant 0 : index
    %c0_1 = arith.constant 0 : index
    %3 = vector.load %arg1[%c0, %c0_1] : memref<512x128xf32, #tpu.memory_space<vmem>>, vector<512x128xf32>
    %c0_2 = arith.constant 0 : index
    %c0_3 = arith.constant 0 : index
    %4 = vector.load %arg2[%c0_2, %c0_3] : memref<512x128xbf16, #tpu.memory_space<vmem>>, vector<512x128xbf16>
    %5 = arith.extf %4 : vector<512x128xbf16> to vector<512x128xf32>
    %c0_4 = arith.constant 0 : index
    %c0_5 = arith.constant 0 : index
    %6 = vector.load %arg3[%c0_4, %c0_5] : memref<1x128xf32, #tpu.memory_space<vmem>>, vector<1x128xf32>
    %c0_6 = arith.constant 0 : index
    %c0_7 = arith.constant 0 : index
    %7 = vector.load %arg5[%c0_6, %c0_7] : memref<1x128xf32, #tpu.memory_space<vmem>>, vector<1x128xf32>
    %c0_8 = arith.constant 0 : index
    %c0_9 = arith.constant 0 : index
    %8 = vector.load %arg6[%c0_8, %c0_9] : memref<128x128xbf16, #tpu.memory_space<vmem>>, vector<128x128xbf16>
    %cst = arith.constant dense<0.000000e+00> : vector<512x128xf32>
    %9 = tpu.matmul %4, %8, %cst {dimension_numbers = #tpu.dot_dimension_numbers<[1], [0], [0], [1], [0, 0, 1, 1], [], []>} : vector<512x128xbf16>, vector<128x128xbf16>, vector<512x128xf32> -> vector<512x128xf32>
    %c0_10 = arith.constant 0 : index
    %c0_11 = arith.constant 0 : index
    %10 = vector.load %arg7[%c0_10, %c0_11] : memref<512x512xbf16, #tpu.memory_space<vmem>>, vector<512x512xbf16>
    %cst_12 = arith.constant dense<0.000000e+00> : vector<512x128xf32>
    %11 = tpu.matmul %10, %4, %cst_12 {dimension_numbers = #tpu.dot_dimension_numbers<[1], [0], [0], [1], [0, 0, 1, 1], [], []>} : vector<512x512xbf16>, vector<512x128xbf16>, vector<512x128xf32> -> vector<512x128xf32>
    %cst_13 = arith.constant dense<0.000000e+00> : vector<512xf32>
    %12 = vector.multi_reduction <add>, %11, %cst_13 [1] : vector<512x128xf32> to vector<512xf32>
    %13 = vector.shape_cast %12 : vector<512xf32> to vector<512x1xf32>
    %14 = vector.broadcast %13 : vector<512x1xf32> to vector<512x128xf32>
    %15 = arith.addf %9, %14 : vector<512x128xf32>
    %16 = vector.broadcast %7 : vector<1x128xf32> to vector<512x128xf32>
    %17 = arith.addf %15, %16 : vector<512x128xf32>
    %18 = arith.subf %17, %5 : vector<512x128xf32>
    %c0_14 = arith.constant 0 : index
    %c0_15 = arith.constant 0 : index
    %19 = vector.load %arg8[%c0_14, %c0_15] : memref<512x128xf32, #tpu.memory_space<vmem>>, vector<512x128xf32>
    %c65536_i32 = arith.constant 65536 : i32
    %20 = arith.muli %arg0, %c65536_i32 : i32
    %21 = arith.sitofp %20 : i32 to f32
    %22 = vector.broadcast %21 : f32 to vector<512x128xf32>
    %23 = arith.addf %19, %22 : vector<512x128xf32>
    %24 = vector.broadcast %6 : vector<1x128xf32> to vector<512x128xf32>
    %25 = arith.subf %24, %17 : vector<512x128xf32>
    %26 = vector.broadcast %6 : vector<1x128xf32> to vector<512x128xf32>
    %27 = arith.addf %26, %23 : vector<512x128xf32>
    %28 = arith.subf %27, %17 : vector<512x128xf32>
    %29 = arith.divf %25, %28 : vector<512x128xf32>
    %cst_16 = arith.constant 1.000000e+00 : f32
    %30 = vector.broadcast %cst_16 : f32 to vector<512x128xf32>
    %31 = arith.subf %30, %29 : vector<512x128xf32>
    %32 = vector.broadcast %6 : vector<1x128xf32> to vector<512x128xf32>
    %33 = arith.subf %32, %18 : vector<512x128xf32>
    %cst_17 = arith.constant 1.000000e+00 : f32
    %34 = vector.broadcast %cst_17 : f32 to vector<512x128xf32>
    %35 = arith.subf %23, %34 : vector<512x128xf32>
    %36 = vector.broadcast %6 : vector<1x128xf32> to vector<512x128xf32>
    %37 = arith.addf %36, %35 : vector<512x128xf32>
    %38 = arith.subf %37, %18 : vector<512x128xf32>
    %cst_18 = arith.constant 1.000000e+00 : f32
    %39 = vector.broadcast %cst_18 : f32 to vector<512x128xf32>
    %40 = arith.maximumf %38, %39 : vector<512x128xf32>
    %41 = arith.divf %33, %40 : vector<512x128xf32>
    %cst_19 = arith.constant 1.000000e+00 : f32
    %42 = vector.broadcast %cst_19 : f32 to vector<512x128xf32>
    %43 = arith.subf %42, %41 : vector<512x128xf32>
    %cst_20 = arith.constant 1.000000e+00 : f32
    %44 = vector.broadcast %cst_20 : f32 to vector<512x128xf32>
    %45 = arith.cmpf oeq, %23, %44 : vector<512x128xf32>
    %cst_21 = arith.constant 0.000000e+00 : f32
    %46 = vector.broadcast %cst_21 : f32 to vector<512x128xf32>
    %47 = arith.select %45, %46, %43 : vector<512x128xi1>, vector<512x128xf32>
    %cst_22 = arith.constant 0.000000e+00 : f32
    %48 = vector.broadcast %cst_22 : f32 to vector<512x128xf32>
    %49 = arith.subf %48, %3 : vector<512x128xf32>
    %cst_23 = arith.constant 0.000000e+00 : f32
    %50 = vector.broadcast %cst_23 : f32 to vector<512x128xf32>
    %51 = arith.maximumf %49, %50 : vector<512x128xf32>
    %52 = arith.subf %31, %47 : vector<512x128xf32>
    %53 = arith.mulf %51, %52 : vector<512x128xf32>
    %c0_24 = arith.constant 0 : index
    %c0_25 = arith.constant 0 : index
    %54 = vector.load %arg4[%c0_24, %c0_25] : memref<1x128xf32, #tpu.memory_space<vmem>>, vector<1x128xf32>
    %cst_26 = arith.constant dense<0.000000e+00> : vector<128xf32>
    %55 = vector.multi_reduction <add>, %53, %cst_26 [0] : vector<512x128xf32> to vector<128xf32>
    %56 = vector.shape_cast %55 : vector<128xf32> to vector<1x128xf32>
    %57 = arith.addf %54, %56 : vector<1x128xf32>
    %c0_27 = arith.constant 0 : index
    %c0_28 = arith.constant 0 : index
    %58 = vector.load %arg4[%c0_27, %c0_28] : memref<1x128xf32, #tpu.memory_space<vmem>>, vector<1x128xf32>
    tpu.vector_store %arg4[%c0_27, %c0_28], %57 {strides = array<i32>} : memref<1x128xf32, #tpu.memory_space<vmem>>, vector<1x128xf32>,
    %59 = vector.shape_cast %5 : vector<512x128xf32> to vector<1x512x128xf32>
    %cst_29 = arith.constant dense<0.000000e+00> : vector<1xf32>
    %60 = vector.multi_reduction <add>, %59, %cst_29 [1, 2] : vector<1x512x128xf32> to vector<1xf32>
    %61 = vector.shape_cast %60 : vector<1xf32> to vector<1x1x1xf32>
    %62 = vector.extract %61[0, 0, 0] : f32 from vector<1x1x1xf32>
    %63 = vector.broadcast %62 : f32 to vector<1x128xf32>
    %64 = arith.addf %7, %63 : vector<1x128xf32>
    %c0_30 = arith.constant 0 : index
    %c0_31 = arith.constant 0 : index
    %65 = vector.load %arg5[%c0_30, %c0_31] : memref<1x128xf32, #tpu.memory_space<vmem>>, vector<1x128xf32>
    tpu.vector_store %arg5[%c0_30, %c0_31], %64 {strides = array<i32>} : memref<1x128xf32, #tpu.memory_space<vmem>>, vector<1x128xf32>,
    return
  }
  func.func @transform_0(%arg0: i32) -> (i32, i32) {
    %c0_i32 = arith.constant 0 : i32
    %c0_i32_0 = arith.constant 0 : i32
    return %arg0, %c0_i32 : i32, i32
  }
  func.func @transform_1(%arg0: i32) -> (i32, i32) {
    %c0_i32 = arith.constant 0 : i32
    %c0_i32_0 = arith.constant 0 : i32
    return %arg0, %c0_i32 : i32, i32
  }
  func.func @transform_2(%arg0: i32) -> (i32, i32) {
    %c0_i32 = arith.constant 0 : i32
    %c0_i32_0 = arith.constant 0 : i32
    %c0_i32_1 = arith.constant 0 : i32
    return %c0_i32, %c0_i32_0 : i32, i32
  }
  func.func @transform_3(%arg0: i32) -> (i32, i32) {
    %c0_i32 = arith.constant 0 : i32
    %c0_i32_0 = arith.constant 0 : i32
    %c0_i32_1 = arith.constant 0 : i32
    return %c0_i32, %c0_i32_0 : i32, i32
  }
}

</mosaic_0001>

<llo_original>
// kernel: dice_lovasz_bce_loss.2
$region0: #{dice_lovasz_bce_loss.2}
  #allocation0 [shape = 'u32[]', space=smem, size = 0x4, offset = 0x4, fixed_abs, tag = 'smem constant byte address 0x4 - core index']
  #allocation1 [shape = 'u32[144,128]{1,0:T(1,128)}', space=vmem, size = 0x12000, scoped, tag = 'internal scratch']
  %s0 = inlined_call_operand.vmem [shape: f32[1024,128], index: 0, kind: input, shape index: {}]
  %s1 = inlined_call_operand.vmem [shape: bf16[1024,128], index: 1, kind: input, shape index: {}]
  %s2 = inlined_call_operand.vmem [shape: f32[1024,128], index: 2, kind: output, shape index: {0}]
  %s3 = inlined_call_operand.vmem [shape: f32[16,128], index: 3, kind: output, shape index: {1}]
  %s4 = inlined_call_operand.vmem [shape: f32[16,128], index: 4, kind: output, shape index: {2}]
  %s5 = inlined_call_operand.vmem [shape: f32[16,128], index: 5, kind: output, shape index: {3}]
  %s6 = inlined_call_operand.vmem [shape: f32[16,128], index: 6, kind: output, shape index: {4}]
  %7 = xla_tuple %s2, %s3, %s4, %s5, %s6
  %s8 = sld [smem:[#allocation0]]
  $region77: #{dice_lovasz_bce_loss.2} parent=0
    _
  %s10 = ssub.s32 1, %s8
  %s11 = scalar_select 0, %s10, %s8
  loop: start=0, step=1, limit=4
  $region2: #{dice_lovasz_bce_loss.2} parent=0 // loop_pre_header
    _
  $region3: #{dice_lovasz_bce_loss.2} parent=0 // loop_header
    %s13 = sphi 0, %s17
    %p14 = scmp.ge.s32.totalorder %s13, 4
    %s20 = sphi 0, %s32
    %s21 = sphi 0, %s28
    %s22 = sphi 0, %s20
    %s23 = sphi 0, %s21
    %s24 = sphi 0, %s22
    %s25 = sphi 0, %s23
    %s37 = sphi 0, %s39
    %s40 = sphi 0, %s37
    %s41 = sphi 0, %s40
    %s57 = sphi 0, %s41
    %s65 = sphi 0, %s67
    %s68 = sphi 0, %s65
    %s69 = sphi 0, %s68
    %s85 = sphi 0, %s69
    %s93 = sphi 0, %s95
    %s96 = sphi 0, %s93
    %s97 = sphi 0, %s96
    %s113 = sphi 0, %s97
    %s119 = sphi 0, %s121
    %s122 = sphi 0, %s119
    %s123 = sphi 0, %s122
    %s139 = sphi 0, %s123
    %s145 = sphi 0, %s147
    %s148 = sphi 0, %s145
    %s149 = sphi 0, %s148
    %s165 = sphi 0, %s149
    %s171 = sphi 0, %s173
    %s174 = sphi 0, %s171
    %s175 = sphi 0, %s174
    %s191 = sphi 0, %s175
    %s197 = sphi 0, %s199
    %s200 = sphi 0, %s197
    %s201 = sphi 0, %s200
    %s217 = sphi 0, %s201
  $region4: #{dice_lovasz_bce_loss.2} parent=0 // loop_header_branch
    %16 = sbr.rel (%p14) target = $region8
  $region5: #{dice_lovasz_bce_loss.2} parent=0 // loop_body
    %s18 = ssub.s32 %s13, 1
    %s19 = ssub.s32 %s13, 2
    %s26 = sadd.s32 1, %s21
    %p27 = scmp.ge.s32.totalorder %s26, 1
    %s28 = scalar_select %p27, 0, %s26
    %s29 = sadd.s32 1, %s20
    %s30 = scalar_select %p27, %s29, %s20
    %p31 = scmp.ge.s32.totalorder %s30, 2
    %s32 = scalar_select %p31, 0, %s30
    %s33 = sadd.s32 %s20, %s21
    %s34 = sadd.s32 %s32, %s28
    %s35 = ssub.s32 %s33, %s34
    %p36 = scmp.eq.s32.totalorder %s35, 0
    %s38 = sadd.s32 %s37, 1
    %s39 = scalar_select %p36, %s37, %s38
    %p42 = pneg %p36
    %p43 = scmp.eq.s32.totalorder %s13, 1
    %p44 = por %p42, %p43
    %p45 = scmp.ne.s32.totalorder %s37, %s40
    %p46 = scmp.eq.s32.totalorder %s13, 0
    %p47 = por %p45, %p46
    %p48 = scmp.ne.s32.totalorder %s37, %s40
    %p49 = scmp.eq.s32.totalorder %s18, 1
    %p50 = por %p48, %p49
    %p51 = scmp.ne.s32.totalorder %s40, %s41
    %p52 = scmp.eq.s32.totalorder %s18, 0
    %p53 = por %p51, %p52
    %p54 = scmp.ne.s32.totalorder %s40, %s41
    %p55 = scmp.eq.s32.totalorder %s19, 1
    %p56 = por %p54, %p55
    %p58 = scmp.ne.s32.totalorder %s41, %s57
    %p59 = scmp.eq.s32.totalorder %s19, 0
    %p60 = por %p58, %p59
    %s61 = sadd.s32 %s20, %s21
    %s62 = sadd.s32 %s32, %s28
    %s63 = ssub.s32 %s61, %s62
    %p64 = scmp.eq.s32.totalorder %s63, 0
    %s66 = sadd.s32 %s65, 1
    %s67 = scalar_select %p64, %s65, %s66
    %p70 = pneg %p64
    %p71 = scmp.eq.s32.totalorder %s13, 1
    %p72 = por %p70, %p71
    %p73 = scmp.ne.s32.totalorder %s65, %s68
    %p74 = scmp.eq.s32.totalorder %s13, 0
    %p75 = por %p73, %p74
    %p76 = scmp.ne.s32.totalorder %s65, %s68
    %p77 = scmp.eq.s32.totalorder %s18, 1
    %p78 = por %p76, %p77
    %p79 = scmp.ne.s32.totalorder %s68, %s69
    %p80 = scmp.eq.s32.totalorder %s18, 0
    %p81 = por %p79, %p80
    %p82 = scmp.ne.s32.totalorder %s68, %s69
    %p83 = scmp.eq.s32.totalorder %s19, 1
    %p84 = por %p82, %p83
    %p86 = scmp.ne.s32.totalorder %s69, %s85
    %p87 = scmp.eq.s32.totalorder %s19, 0
    %p88 = por %p86, %p87
    %s89 = sadd.s32 %s20, %s21
    %s90 = sadd.s32 %s32, %s28
    %s91 = ssub.s32 %s89, %s90
    %p92 = scmp.eq.s32.totalorder %s91, 0
    %s94 = sadd.s32 %s93, 1
    %s95 = scalar_select %p92, %s93, %s94
    %p98 = pneg %p92
    %p99 = scmp.eq.s32.totalorder %s13, 1
    %p100 = por %p98, %p99
    %p101 = scmp.ne.s32.totalorder %s93, %s96
    %p102 = scmp.eq.s32.totalorder %s13, 0
    %p103 = por %p101, %p102
    %p104 = scmp.ne.s32.totalorder %s93, %s96
    %p105 = scmp.eq.s32.totalorder %s18, 1
    %p106 = por %p104, %p105
    %p107 = scmp.ne.s32.totalorder %s96, %s97
    %p108 = scmp.eq.s32.totalorder %s18, 0
    %p109 = por %p107, %p108
    %p110 = scmp.ne.s32.totalorder %s96, %s97
    %p111 = scmp.eq.s32.totalorder %s19, 1
    %p112 = por %p110, %p111
    %p114 = scmp.ne.s32.totalorder %s97, %s113
    %p115 = scmp.eq.s32.totalorder %s19, 0
    %p116 = por %p114, %p115
    %s117 = ssub.s32 %s20, %s32
    %p118 = scmp.eq.s32.totalorder %s117, 0
    %s120 = sadd.s32 %s119, 1
    %s121 = scalar_select %p118, %s119, %s120
    %p124 = pneg %p118
    %p125 = scmp.eq.s32.totalorder %s13, 1
    %p126 = por %p124, %p125
    %p127 = scmp.ne.s32.totalorder %s119, %s122
    %p128 = scmp.eq.s32.totalorder %s13, 0
    %p129 = por %p127, %p128
    %p130 = scmp.ne.s32.totalorder %s119, %s122
    %p131 = scmp.eq.s32.totalorder %s18, 1
    %p132 = por %p130, %p131
    %p133 = scmp.ne.s32.totalorder %s122, %s123
    %p134 = scmp.eq.s32.totalorder %s18, 0
    %p135 = por %p133, %p134
    %p136 = scmp.ne.s32.totalorder %s122, %s123
    %p137 = scmp.eq.s32.totalorder %s19, 1
    %p138 = por %p136, %p137
    %p140 = scmp.ne.s32.totalorder %s123, %s139
    %p141 = scmp.eq.s32.totalorder %s19, 0
    %p142 = por %p140, %p141
    %s143 = ssub.s32 %s20, %s32
    %p144 = scmp.eq.s32.totalorder %s143, 0
    %s146 = sadd.s32 %s145, 1
    %s147 = scalar_select %p144, %s145, %s146
    %p150 = pneg %p144
    %p151 = scmp.eq.s32.totalorder %s13, 1
    %p152 = por %p150, %p151
    %p153 = scmp.ne.s32.totalorder %s145, %s148
    %p154 = scmp.eq.s32.totalorder %s13, 0
    %p155 = por %p153, %p154
    %p156 = scmp.ne.s32.totalorder %s145, %s148
    %p157 = scmp.eq.s32.totalorder %s18, 1
    %p158 = por %p156, %p157
    %p159 = scmp.ne.s32.totalorder %s148, %s149
    %p160 = scmp.eq.s32.totalorder %s18, 0
    %p161 = por %p159, %p160
    %p162 = scmp.ne.s32.totalorder %s148, %s149
    %p163 = scmp.eq.s32.totalorder %s19, 1
    %p164 = por %p162, %p163
    %p166 = scmp.ne.s32.totalorder %s149, %s165
    %p167 = scmp.eq.s32.totalorder %s19, 0
    %p168 = por %p166, %p167
    %s169 = ssub.s32 %s20, %s32
    %p170 = scmp.eq.s32.totalorder %s169, 0
    %s172 = sadd.s32 %s171, 1
    %s173 = scalar_select %p170, %s171, %s172
    %p176 = pneg %p170
    %p177 = scmp.eq.s32.totalorder %s13, 1
    %p178 = por %p176, %p177
    %p179 = scmp.ne.s32.totalorder %s171, %s174
    %p180 = scmp.eq.s32.totalorder %s13, 0
    %p181 = por %p179, %p180
    %p182 = scmp.ne.s32.totalorder %s171, %s174
    %p183 = scmp.eq.s32.totalorder %s18, 1
    %p184 = por %p182, %p183
    %p185 = scmp.ne.s32.totalorder %s174, %s175
    %p186 = scmp.eq.s32.totalorder %s18, 0
    %p187 = por %p185, %p186
    %p188 = scmp.ne.s32.totalorder %s174, %s175
    %p189 = scmp.eq.s32.totalorder %s19, 1
    %p190 = por %p188, %p189
    %p192 = scmp.ne.s32.totalorder %s175, %s191
    %p193 = scmp.eq.s32.totalorder %s19, 0
    %p194 = por %p192, %p193
    %s195 = ssub.s32 %s20, %s32
    %p196 = scmp.eq.s32.totalorder %s195, 0
    %s198 = sadd.s32 %s197, 1
    %s199 = scalar_select %p196, %s197, %s198
    %p202 = pneg %p196
    %p203 = scmp.eq.s32.totalorder %s13, 1
    %p204 = por %p202, %p203
    %p205 = scmp.ne.s32.totalorder %s197, %s200
    %p206 = scmp.eq.s32.totalorder %s13, 0
    %p207 = por %p205, %p206
    %p208 = scmp.ne.s32.totalorder %s197, %s200
    %p209 = scmp.eq.s32.totalorder %s18, 1
    %p210 = por %p208, %p209
    %p211 = scmp.ne.s32.totalorder %s200, %s201
    %p212 = scmp.eq.s32.totalorder %s18, 0
    %p213 = por %p211, %p212
    %p214 = scmp.ne.s32.totalorder %s200, %s201
    %p215 = scmp.eq.s32.totalorder %s19, 1
    %p216 = por %p214, %p215
    %p218 = scmp.ne.s32.totalorder %s201, %s217
    %p219 = scmp.eq.s32.totalorder %s19, 0
    %p220 = por %p218, %p219
    %p221 = scmp.le.s32.totalorder 1, %s13
    %p222 = scmp.lt.s32.totalorder %s13, 3
    %p223 = pnand %p221, %p222
    %p224 = pneg %p223
    // Predicated region
    $region9: #{dice_lovasz_bce_loss.2} parent=5 // pred_check
      _
    $region10: #{dice_lovasz_bce_loss.2} parent=5 // pred_check_branch
      %226 = sbr.rel (%p223) target = $region12
    $region11: #{dice_lovasz_bce_loss.2} parent=5 // pred_region
      %s227 = ssub.s32 %s13, 1
    $region12: #{dice_lovasz_bce_loss.2} parent=5 // pred_fallthru
      _
    %p228 = scmp.lt.s32.totalorder %s13, 2
    // Predicated region
    $region13: #{dice_lovasz_bce_loss.2} parent=5 // pred_check
      %p229 = pneg %p228
    $region14: #{dice_lovasz_bce_loss.2} parent=5 // pred_check_branch
      %231 = sbr.rel (%p229) target = $region16
    $region15: #{dice_lovasz_bce_loss.2} parent=5 // pred_region
      // Predicated region
      $region17: #{dice_lovasz_bce_loss.2} parent=15 // pred_check
        %p232 = pneg %p47
      $region18: #{dice_lovasz_bce_loss.2} parent=15 // pred_check_branch
        %234 = sbr.rel (%p232) target = $region20
      $region19: #{dice_lovasz_bce_loss.2} parent=15 // pred_region
        %s235 = sadd.s32 %s20, %s21
        %s236 = smul.u32 64, %s235
        %p237 = scmp.lt.s32.totalorder %s236, 127
        %s238 = scalar_select %p237, %s236, 127
        %s239 = smul.addr %s238, 8
        %s240 = scalar_lea.vmem %s0, %s239
        %s241 = sadd.s32 %s20, %s21
        %s242 = smul.u32 64, %s241
      $region20: #{dice_lovasz_bce_loss.2} parent=15 // pred_fallthru
        _
      // Predicated region
      $region21: #{dice_lovasz_bce_loss.2} parent=15 // pred_check
        %p243 = pneg %p75
      $region22: #{dice_lovasz_bce_loss.2} parent=15 // pred_check_branch
        %245 = sbr.rel (%p243) target = $region24
      $region23: #{dice_lovasz_bce_loss.2} parent=15 // pred_region
        %s246 = sadd.s32 %s20, %s21
        %s247 = smul.u32 64, %s246
        %p248 = scmp.lt.s32.totalorder %s247, 127
        %s249 = scalar_select %p248, %s247, 127
        %s250 = smul.addr %s249, 4
        %s251 = scalar_lea.vmem %s1, %s250
        %s252 = sadd.s32 %s20, %s21
        %s253 = smul.u32 64, %s252
      $region24: #{dice_lovasz_bce_loss.2} parent=15 // pred_fallthru
        _
    $region16: #{dice_lovasz_bce_loss.2} parent=5 // pred_fallthru
      _
    %p254 = scmp.le.s32.totalorder 1, %s13
    %p255 = scmp.lt.s32.totalorder %s13, 3
    %p256 = pnand %p254, %p255
    %p257 = pneg %p256
    // Predicated region
    $region25: #{dice_lovasz_bce_loss.2} parent=5 // pred_check
      _
    $region26: #{dice_lovasz_bce_loss.2} parent=5 // pred_check_branch
      %259 = sbr.rel (%p256) target = $region28
    $region27: #{dice_lovasz_bce_loss.2} parent=5 // pred_region
      %s260 = ssub.s32 %s13, 1
      %s261 = sadd.s32 %s22, %s23
      %s262 = smul.u32 64, %s261
      %p263 = scmp.lt.s32.totalorder %s262, 127
      %s264 = scalar_select %p263, %s262, 127
      %s265 = smul.addr %s264, 8
      %s266 = scalar_lea.vmem %s0, %s265
      %p267 = pneg %p53
      %p268 = pneg %p50
      %s269 = sadd.s32 %s22, %s23
      %s270 = smul.u32 64, %s269
      %p271 = scmp.lt.s32.totalorder %s270, 127
      %s272 = scalar_select %p271, %s270, 127
      %s273 = smul.addr %s272, 4
      %s274 = scalar_lea.vmem %s1, %s273
      %p275 = pneg %p81
      %p276 = pneg %p78
      %p277 = pneg %p109
      %p278 = pneg %p106
      %s279 = sadd.s32 %s22, %s23
      %s280 = smul.u32 64, %s279
      %p281 = scmp.lt.s32.totalorder %s280, 127
      %s282 = scalar_select %p281, %s280, 127
      %s283 = smul.addr %s282, 8
      %s284 = scalar_lea.vmem %s2, %s283
      %p285 = pneg %p135
      %p286 = pneg %p132
      %p287 = scmp.lt.s32.totalorder %s22, 1
      %s288 = scalar_select %p287, %s22, 1
      %s289 = smul.addr %s288, 8
      %s290 = scalar_lea.vmem %s3, %s289
      %p291 = pneg %p161
      %p292 = pneg %p158
      %p293 = scmp.lt.s32.totalorder %s22, 1
      %s294 = scalar_select %p293, %s22, 1
      %s295 = smul.addr %s294, 8
      %s296 = scalar_lea.vmem %s4, %s295
      %p297 = pneg %p187
      %p298 = pneg %p184
      %p299 = scmp.lt.s32.totalorder %s22, 1
      %s300 = scalar_select %p299, %s22, 1
      %s301 = smul.addr %s300, 8
      %s302 = scalar_lea.vmem %s5, %s301
      %p303 = pneg %p213
      %p304 = pneg %p210
      %p305 = scmp.lt.s32.totalorder %s22, 1
      %s306 = scalar_select %p305, %s22, 1
      %s307 = smul.addr %s306, 8
      %s308 = scalar_lea.vmem %s6, %s307
      %s309 = sadd.s32 %s22, %s23
      %s310 = smul.u32 64, %s309
      %p311 = scmp.lt.s32.totalorder %s310, 127
      %s312 = scalar_select %p311, %s310, 127
      %s313 = smul.addr %s312, 8
      %s314 = scalar_lea.vmem %s0, %s313
      %s315 = sadd.s32 %s22, %s23
      %s316 = smul.u32 64, %s315
      %s317 = sadd.s32 %s22, %s23
      %s318 = smul.u32 64, %s317
      %p319 = scmp.lt.s32.totalorder %s318, 127
      %s320 = scalar_select %p319, %s318, 127
      %s321 = smul.addr %s320, 4
      %s322 = scalar_lea.vmem %s1, %s321
      %s323 = sadd.s32 %s22, %s23
      %s324 = smul.u32 64, %s323
      %s325 = sadd.s32 %s22, %s23
      %s326 = smul.u32 64, %s325
      %p327 = scmp.lt.s32.totalorder %s326, 127
      %s328 = scalar_select %p327, %s326, 127
      %s329 = smul.addr %s328, 8
      %s330 = scalar_lea.vmem %s2, %s329
      %s331 = sadd.s32 %s22, %s23
      %s332 = smul.u32 64, %s331
      %p333 = scmp.lt.s32.totalorder %s22, 1
      %s334 = scalar_select %p333, %s22, 1
      %s335 = smul.addr %s334, 8
      %s336 = scalar_lea.vmem %s3, %s335
      %p337 = scmp.lt.s32.totalorder %s22, 1
      %s338 = scalar_select %p337, %s22, 1
      %s339 = smul.addr %s338, 8
      %s340 = scalar_lea.vmem %s4, %s339
      %p341 = scmp.lt.s32.totalorder %s22, 1
      %s342 = scalar_select %p341, %s22, 1
      %s343 = smul.addr %s342, 8
      %s344 = scalar_lea.vmem %s5, %s343
      %p345 = scmp.lt.s32.totalorder %s22, 1
      %s346 = scalar_select %p345, %s22, 1
      %s347 = smul.addr %s346, 8
      %s348 = scalar_lea.vmem %s6, %s347
      %p349 = scmp.eq.s32.totalorder %s23, 0
      // Predicated region
      $region29: #{dice_lovasz_bce_loss.2} parent=27 // pred_check
        %p350 = pneg %p349
      $region30: #{dice_lovasz_bce_loss.2} parent=27 // pred_check_branch
        %352 = sbr.rel (%p350) target = $region32
      $region31: #{dice_lovasz_bce_loss.2} parent=27 // pred_region
        %353 = vst [vmem:[%s336] sm:$0xff] 0.0
        %354 = vst [vmem:[%s340] sm:$0xff] 0.0
        %355 = vst [vmem:[%s344] sm:$0xff] 0.0
        %356 = vst [vmem:[%s348] sm:$0xff] 0.0
      $region32: #{dice_lovasz_bce_loss.2} parent=27 // pred_fallthru
        _
      %v357 = vld [vmem:[%s314] sm:$0xff]
      %v358 = vld [vmem:[%s314 + $0x8] sm:$0xff]
      %v359 = vld [vmem:[%s314 + $0x10] sm:$0xff]
      %v360 = vld [vmem:[%s314 + $0x18] sm:$0xff]
      %v361 = vld [vmem:[%s314 + $0x20] sm:$0xff]
      %v362 = vld [vmem:[%s314 + $0x28] sm:$0xff]
      %v363 = vld [vmem:[%s314 + $0x30] sm:$0xff]
      %v364 = vld [vmem:[%s314 + $0x38] sm:$0xff]
      %v365 = vld [vmem:[%s314 + $0x40] sm:$0xff]
      %v366 = vld [vmem:[%s314 + $0x48] sm:$0xff]
      %v367 = vld [vmem:[%s314 + $0x50] sm:$0xff]
      %v368 = vld [vmem:[%s314 + $0x58] sm:$0xff]
      %v369 = vld [vmem:[%s314 + $0x60] sm:$0xff]
      %v370 = vld [vmem:[%s314 + $0x68] sm:$0xff]
      %v371 = vld [vmem:[%s314 + $0x70] sm:$0xff]
      %v372 = vld [vmem:[%s314 + $0x78] sm:$0xff]
      %v373 = vld [vmem:[%s314 + $0x80] sm:$0xff]
      %v374 = vld [vmem:[%s314 + $0x88] sm:$0xff]
      %v375 = vld [vmem:[%s314 + $0x90] sm:$0xff]
      %v376 = vld [vmem:[%s314 + $0x98] sm:$0xff]
      %v377 = vld [vmem:[%s314 + $0xa0] sm:$0xff]
      %v378 = vld [vmem:[%s314 + $0xa8] sm:$0xff]
      %v379 = vld [vmem:[%s314 + $0xb0] sm:$0xff]
      %v380 = vld [vmem:[%s314 + $0xb8] sm:$0xff]
      %v381 = vld [vmem:[%s314 + $0xc0] sm:$0xff]
      %v382 = vld [vmem:[%s314 + $0xc8] sm:$0xff]
      %v383 = vld [vmem:[%s314 + $0xd0] sm:$0xff]
      %v384 = vld [vmem:[%s314 + $0xd8] sm:$0xff]
      %v385 = vld [vmem:[%s314 + $0xe0] sm:$0xff]
      %v386 = vld [vmem:[%s314 + $0xe8] sm:$0xff]
      %v387 = vld [vmem:[%s314 + $0xf0] sm:$0xff]
      %v388 = vld [vmem:[%s314 + $0xf8] sm:$0xff]
      %v389 = vld [vmem:[%s314 + $0x100] sm:$0xff]
      %v390 = vld [vmem:[%s314 + $0x108] sm:$0xff]
      %v391 = vld [vmem:[%s314 + $0x110] sm:$0xff]
      %v392 = vld [vmem:[%s314 + $0x118] sm:$0xff]
      %v393 = vld [vmem:[%s314 + $0x120] sm:$0xff]
      %v394 = vld [vmem:[%s314 + $0x128] sm:$0xff]
      %v395 = vld [vmem:[%s314 + $0x130] sm:$0xff]
      %v396 = vld [vmem:[%s314 + $0x138] sm:$0xff]
      %v397 = vld [vmem:[%s314 + $0x140] sm:$0xff]
      %v398 = vld [vmem:[%s314 + $0x148] sm:$0xff]
      %v399 = vld [vmem:[%s314 + $0x150] sm:$0xff]
      %v400 = vld [vmem:[%s314 + $0x158] sm:$0xff]
      %v401 = vld [vmem:[%s314 + $0x160] sm:$0xff]
      %v402 = vld [vmem:[%s314 + $0x168] sm:$0xff]
      %v403 = vld [vmem:[%s314 + $0x170] sm:$0xff]
      %v404 = vld [vmem:[%s314 + $0x178] sm:$0xff]
      %v405 = vld [vmem:[%s314 + $0x180] sm:$0xff]
      %v406 = vld [vmem:[%s314 + $0x188] sm:$0xff]
      %v407 = vld [vmem:[%s314 + $0x190] sm:$0xff]
      %v408 = vld [vmem:[%s314 + $0x198] sm:$0xff]
      %v409 = vld [vmem:[%s314 + $0x1a0] sm:$0xff]
      %v410 = vld [vmem:[%s314 + $0x1a8] sm:$0xff]
      %v411 = vld [vmem:[%s314 + $0x1b0] sm:$0xff]
      %v412 = vld [vmem:[%s314 + $0x1b8] sm:$0xff]
      %v413 = vld [vmem:[%s314 + $0x1c0] sm:$0xff]
      %v414 = vld [vmem:[%s314 + $0x1c8] sm:$0xff]
      %v415 = vld [vmem:[%s314 + $0x1d0] sm:$0xff]
      %v416 = vld [vmem:[%s314 + $0x1d8] sm:$0xff]
      %v417 = vld [vmem:[%s314 + $0x1e0] sm:$0xff]
      %v418 = vld [vmem:[%s314 + $0x1e8] sm:$0xff]
      %v419 = vld [vmem:[%s314 + $0x1f0] sm:$0xff]
      %v420 = vld [vmem:[%s314 + $0x1f8] sm:$0xff]
      %v421 = vld [vmem:[%s322] sm:$0xf]
      %v422 = vld [vmem:[%s322 + $0x4] sm:$0xf]
      %v423 = vld [vmem:[%s322 + $0x8] sm:$0xf]
      %v424 = vld [vmem:[%s322 + $0xc] sm:$0xf]
      %v425 = vld [vmem:[%s322 + $0x10] sm:$0xf]
      %v426 = vld [vmem:[%s322 + $0x14] sm:$0xf]
      %v427 = vld [vmem:[%s322 + $0x18] sm:$0xf]
      %v428 = vld [vmem:[%s322 + $0x1c] sm:$0xf]
      %v429 = vld [vmem:[%s322 + $0x20] sm:$0xf]
      %v430 = vld [vmem:[%s322 + $0x24] sm:$0xf]
      %v431 = vld [vmem:[%s322 + $0x28] sm:$0xf]
      %v432 = vld [vmem:[%s322 + $0x2c] sm:$0xf]
      %v433 = vld [vmem:[%s322 + $0x30] sm:$0xf]
      %v434 = vld [vmem:[%s322 + $0x34] sm:$0xf]
      %v435 = vld [vmem:[%s322 + $0x38] sm:$0xf]
      %v436 = vld [vmem:[%s322 + $0x3c] sm:$0xf]
      %v437 = vld [vmem:[%s322 + $0x40] sm:$0xf]
      %v438 = vld [vmem:[%s322 + $0x44] sm:$0xf]
      %v439 = vld [vmem:[%s322 + $0x48] sm:$0xf]
      %v440 = vld [vmem:[%s322 + $0x4c] sm:$0xf]
      %v441 = vld [vmem:[%s322 + $0x50] sm:$0xf]
      %v442 = vld [vmem:[%s322 + $0x54] sm:$0xf]
      %v443 = vld [vmem:[%s322 + $0x58] sm:$0xf]
      %v444 = vld [vmem:[%s322 + $0x5c] sm:$0xf]
      %v445 = vld [vmem:[%s322 + $0x60] sm:$0xf]
      %v446 = vld [vmem:[%s322 + $0x64] sm:$0xf]
      %v447 = vld [vmem:[%s322 + $0x68] sm:$0xf]
      %v448 = vld [vmem:[%s322 + $0x6c] sm:$0xf]
      %v449 = vld [vmem:[%s322 + $0x70] sm:$0xf]
      %v450 = vld [vmem:[%s322 + $0x74] sm:$0xf]
      %v451 = vld [vmem:[%s322 + $0x78] sm:$0xf]
      %v452 = vld [vmem:[%s322 + $0x7c] sm:$0xf]
      %v453 = vld [vmem:[%s322 + $0x80] sm:$0xf]
      %v454 = vld [vmem:[%s322 + $0x84] sm:$0xf]
      %v455 = vld [vmem:[%s322 + $0x88] sm:$0xf]
      %v456 = vld [vmem:[%s322 + $0x8c] sm:$0xf]
      %v457 = vld [vmem:[%s322 + $0x90] sm:$0xf]
      %v458 = vld [vmem:[%s322 + $0x94] sm:$0xf]
      %v459 = vld [vmem:[%s322 + $0x98] sm:$0xf]
      %v460 = vld [vmem:[%s322 + $0x9c] sm:$0xf]
      %v461 = vld [vmem:[%s322 + $0xa0] sm:$0xf]
      %v462 = vld [vmem:[%s322 + $0xa4] sm:$0xf]
      %v463 = vld [vmem:[%s322 + $0xa8] sm:$0xf]
      %v464 = vld [vmem:[%s322 + $0xac] sm:$0xf]
      %v465 = vld [vmem:[%s322 + $0xb0] sm:$0xf]
      %v466 = vld [vmem:[%s322 + $0xb4] sm:$0xf]
      %v467 = vld [vmem:[%s322 + $0xb8] sm:$0xf]
      %v468 = vld [vmem:[%s322 + $0xbc] sm:$0xf]
      %v469 = vld [vmem:[%s322 + $0xc0] sm:$0xf]
      %v470 = vld [vmem:[%s322 + $0xc4] sm:$0xf]
      %v471 = vld [vmem:[%s322 + $0xc8] sm:$0xf]
      %v472 = vld [vmem:[%s322 + $0xcc] sm:$0xf]
      %v473 = vld [vmem:[%s322 + $0xd0] sm:$0xf]
      %v474 = vld [vmem:[%s322 + $0xd4] sm:$0xf]
      %v475 = vld [vmem:[%s322 + $0xd8] sm:$0xf]
      %v476 = vld [vmem:[%s322 + $0xdc] sm:$0xf]
      %v477 = vld [vmem:[%s322 + $0xe0] sm:$0xf]
      %v478 = vld [vmem:[%s322 + $0xe4] sm:$0xf]
      %v479 = vld [vmem:[%s322 + $0xe8] sm:$0xf]
      %v480 = vld [vmem:[%s322 + $0xec] sm:$0xf]
      %v481 = vld [vmem:[%s322 + $0xf0] sm:$0xf]
      %v482 = vld [vmem:[%s322 + $0xf4] sm:$0xf]
      %v483 = vld [vmem:[%s322 + $0xf8] sm:$0xf]
      %v484 = vld [vmem:[%s322 + $0xfc] sm:$0xf]
      %v485 = vunpack.c.l.bf16 %v421
      %v486 = vunpack.c.l.bf16 %v422
      %v487 = vunpack.c.l.bf16 %v423
      %v488 = vunpack.c.l.bf16 %v424
      %v489 = vunpack.c.l.bf16 %v425
      %v490 = vunpack.c.l.bf16 %v426
      %v491 = vunpack.c.l.bf16 %v427
      %v492 = vunpack.c.l.bf16 %v428
      %v493 = vunpack.c.l.bf16 %v429
      %v494 = vunpack.c.l.bf16 %v430
      %v495 = vunpack.c.l.bf16 %v431
      %v496 = vunpack.c.l.bf16 %v432
      %v497 = vunpack.c.l.bf16 %v433
      %v498 = vunpack.c.l.bf16 %v434
      %v499 = vunpack.c.l.bf16 %v435
      %v500 = vunpack.c.l.bf16 %v436
      %v501 = vunpack.c.l.bf16 %v437
      %v502 = vunpack.c.l.bf16 %v438
      %v503 = vunpack.c.l.bf16 %v439
      %v504 = vunpack.c.l.bf16 %v440
      %v505 = vunpack.c.l.bf16 %v441
      %v506 = vunpack.c.l.bf16 %v442
      %v507 = vunpack.c.l.bf16 %v443
      %v508 = vunpack.c.l.bf16 %v444
      %v509 = vunpack.c.l.bf16 %v445
      %v510 = vunpack.c.l.bf16 %v446
      %v511 = vunpack.c.l.bf16 %v447
      %v512 = vunpack.c.l.bf16 %v448
      %v513 = vunpack.c.l.bf16 %v449
      %v514 = vunpack.c.l.bf16 %v450
      %v515 = vunpack.c.l.bf16 %v451
      %v516 = vunpack.c.l.bf16 %v452
      %v517 = vunpack.c.l.bf16 %v453
      %v518 = vunpack.c.l.bf16 %v454
      %v519 = vunpack.c.l.bf16 %v455
      %v520 = vunpack.c.l.bf16 %v456
      %v521 = vunpack.c.l.bf16 %v457
      %v522 = vunpack.c.l.bf16 %v458
      %v523 = vunpack.c.l.bf16 %v459
      %v524 = vunpack.c.l.bf16 %v460
      %v525 = vunpack.c.l.bf16 %v461
      %v526 = vunpack.c.l.bf16 %v462
      %v527 = vunpack.c.l.bf16 %v463
      %v528 = vunpack.c.l.bf16 %v464
      %v529 = vunpack.c.l.bf16 %v465
      %v530 = vunpack.c.l.bf16 %v466
      %v531 = vunpack.c.l.bf16 %v467
      %v532 = vunpack.c.l.bf16 %v468
      %v533 = vunpack.c.l.bf16 %v469
      %v534 = vunpack.c.l.bf16 %v470
      %v535 = vunpack.c.l.bf16 %v471
      %v536 = vunpack.c.l.bf16 %v472
      %v537 = vunpack.c.l.bf16 %v473
      %v538 = vunpack.c.l.bf16 %v474
      %v539 = vunpack.c.l.bf16 %v475
      %v540 = vunpack.c.l.bf16 %v476
      %v541 = vunpack.c.l.bf16 %v477
      %v542 = vunpack.c.l.bf16 %v478
      %v543 = vunpack.c.l.bf16 %v479
      %v544 = vunpack.c.l.bf16 %v480
      %v545 = vunpack.c.l.bf16 %v481
      %v546 = vunpack.c.l.bf16 %v482
      %v547 = vunpack.c.l.bf16 %v483
      %v548 = vunpack.c.l.bf16 %v484
      %v549 = vand.u32 2147483647, %v357
      %v550 = vand.u32 2147483647, %v358
      %v551 = vand.u32 2147483647, %v359
      %v552 = vand.u32 2147483647, %v360
      %v553 = vand.u32 2147483647, %v361
      %v554 = vand.u32 2147483647, %v362
      %v555 = vand.u32 2147483647, %v363
      %v556 = vand.u32 2147483647, %v364
      %v557 = vand.u32 2147483647, %v365
      %v558 = vand.u32 2147483647, %v366
      %v559 = vand.u32 2147483647, %v367
      %v560 = vand.u32 2147483647, %v368
      %v561 = vand.u32 2147483647, %v369
      %v562 = vand.u32 2147483647, %v370
      %v563 = vand.u32 2147483647, %v371
      %v564 = vand.u32 2147483647, %v372
      %v565 = vand.u32 2147483647, %v373
      %v566 = vand.u32 2147483647, %v374
      %v567 = vand.u32 2147483647, %v375
      %v568 = vand.u32 2147483647, %v376
      %v569 = vand.u32 2147483647, %v377
      %v570 = vand.u32 2147483647, %v378
      %v571 = vand.u32 2147483647, %v379
      %v572 = vand.u32 2147483647, %v380
      %v573 = vand.u32 2147483647, %v381
      %v574 = vand.u32 2147483647, %v382
      %v575 = vand.u32 2147483647, %v383
      %v576 = vand.u32 2147483647, %v384
      %v577 = vand.u32 2147483647, %v385
      %v578 = vand.u32 2147483647, %v386
      %v579 = vand.u32 2147483647, %v387
      %v580 = vand.u32 2147483647, %v388
      %v581 = vand.u32 2147483647, %v389
      %v582 = vand.u32 2147483647, %v390
      %v583 = vand.u32 2147483647, %v391
      %v584 = vand.u32 2147483647, %v392
      %v585 = vand.u32 2147483647, %v393
      %v586 = vand.u32 2147483647, %v394
      %v587 = vand.u32 2147483647, %v395
      %v588 = vand.u32 2147483647, %v396
      %v589 = vand.u32 2147483647, %v397
      %v590 = vand.u32 2147483647, %v398
      %v591 = vand.u32 2147483647, %v399
      %v592 = vand.u32 2147483647, %v400
      %v593 = vand.u32 2147483647, %v401
      %v594 = vand.u32 2147483647, %v402
      %v595 = vand.u32 2147483647, %v403
      %v596 = vand.u32 2147483647, %v404
      %v597 = vand.u32 2147483647, %v405
      %v598 = vand.u32 2147483647, %v406
      %v599 = vand.u32 2147483647, %v407
      %v600 = vand.u32 2147483647, %v408
      %v601 = vand.u32 2147483647, %v409
      %v602 = vand.u32 2147483647, %v410
      %v603 = vand.u32 2147483647, %v411
      %v604 = vand.u32 2147483647, %v412
      %v605 = vand.u32 2147483647, %v413
      %v606 = vand.u32 2147483647, %v414
      %v607 = vand.u32 2147483647, %v415
      %v608 = vand.u32 2147483647, %v416
      %v609 = vand.u32 2147483647, %v417
      %v610 = vand.u32 2147483647, %v418
      %v611 = vand.u32 2147483647, %v419
      %v612 = vand.u32 2147483647, %v420
      %v613 = vsub.f32 0.0, %v549
      %v614 = vsub.f32 0.0, %v550
      %v615 = vsub.f32 0.0, %v551
      %v616 = vsub.f32 0.0, %v552
      %v617 = vsub.f32 0.0, %v553
      %v618 = vsub.f32 0.0, %v554
      %v619 = vsub.f32 0.0, %v555
      %v620 = vsub.f32 0.0, %v556
      %v621 = vsub.f32 0.0, %v557
      %v622 = vsub.f32 0.0, %v558
      %v623 = vsub.f32 0.0, %v559
      %v624 = vsub.f32 0.0, %v560
      %v625 = vsub.f32 0.0, %v561
      %v626 = vsub.f32 0.0, %v562
      %v627 = vsub.f32 0.0, %v563
      %v628 = vsub.f32 0.0, %v564
      %v629 = vsub.f32 0.0, %v565
      %v630 = vsub.f32 0.0, %v566
      %v631 = vsub.f32 0.0, %v567
      %v632 = vsub.f32 0.0, %v568
      %v633 = vsub.f32 0.0, %v569
      %v634 = vsub.f32 0.0, %v570
      %v635 = vsub.f32 0.0, %v571
      %v636 = vsub.f32 0.0, %v572
      %v637 = vsub.f32 0.0, %v573
      %v638 = vsub.f32 0.0, %v574
      %v639 = vsub.f32 0.0, %v575
      %v640 = vsub.f32 0.0, %v576
      %v641 = vsub.f32 0.0, %v577
      %v642 = vsub.f32 0.0, %v578
      %v643 = vsub.f32 0.0, %v579
      %v644 = vsub.f32 0.0, %v580
      %v645 = vsub.f32 0.0, %v581
      %v646 = vsub.f32 0.0, %v582
      %v647 = vsub.f32 0.0, %v583
      %v648 = vsub.f32 0.0, %v584
      %v649 = vsub.f32 0.0, %v585
      %v650 = vsub.f32 0.0, %v586
      %v651 = vsub.f32 0.0, %v587
      %v652 = vsub.f32 0.0, %v588
      %v653 = vsub.f32 0.0, %v589
      %v654 = vsub.f32 0.0, %v590
      %v655 = vsub.f32 0.0, %v591
      %v656 = vsub.f32 0.0, %v592
      %v657 = vsub.f32 0.0, %v593
      %v658 = vsub.f32 0.0, %v594
      %v659 = vsub.f32 0.0, %v595
      %v660 = vsub.f32 0.0, %v596
      %v661 = vsub.f32 0.0, %v597
      %v662 = vsub.f32 0.0, %v598
      %v663 = vsub.f32 0.0, %v599
      %v664 = vsub.f32 0.0, %v600
      %v665 = vsub.f32 0.0, %v601
      %v666 = vsub.f32 0.0, %v602
      %v667 = vsub.f32 0.0, %v603
      %v668 = vsub.f32 0.0, %v604
      %v669 = vsub.f32 0.0, %v605
      %v670 = vsub.f32 0.0, %v606
      %v671 = vsub.f32 0.0, %v607
      %v672 = vsub.f32 0.0, %v608
      %v673 = vsub.f32 0.0, %v609
      %v674 = vsub.f32 0.0, %v610
      %v675 = vsub.f32 0.0, %v611
      %v676 = vsub.f32 0.0, %v612
      %v677 = vmul.f32 %v613, 1.442695
      %v678 = vpow.pop %v677
      %v679 = vmul.f32 %v614, 1.442695
      %v680 = vpow.pop %v679
      %v681 = vmul.f32 %v615, 1.442695
      %v682 = vpow.pop %v681
      %v683 = vmul.f32 %v616, 1.442695
      %v684 = vpow.pop %v683
      %v685 = vmul.f32 %v617, 1.442695
      %v686 = vpow.pop %v685
      %v687 = vmul.f32 %v618, 1.442695
      %v688 = vpow.pop %v687
      %v689 = vmul.f32 %v619, 1.442695
      %v690 = vpow.pop %v689
      %v691 = vmul.f32 %v620, 1.442695
      %v692 = vpow.pop %v691
      %v693 = vmul.f32 %v621, 1.442695
      %v694 = vpow.pop %v693
      %v695 = vmul.f32 %v622, 1.442695
      %v696 = vpow.pop %v695
      %v697 = vmul.f32 %v623, 1.442695
      %v698 = vpow.pop %v697
      %v699 = vmul.f32 %v624, 1.442695
      %v700 = vpow.pop %v699
      %v701 = vmul.f32 %v625, 1.442695
      %v702 = vpow.pop %v701
      %v703 = vmul.f32 %v626, 1.442695
      %v704 = vpow.pop %v703
      %v705 = vmul.f32 %v627, 1.442695
      %v706 = vpow.pop %v705
      %v707 = vmul.f32 %v628, 1.442695
      %v708 = vpow.pop %v707
      %v709 = vmul.f32 %v629, 1.442695
      %v710 = vpow.pop %v709
      %v711 = vmul.f32 %v630, 1.442695
      %v712 = vpow.pop %v711
      %v713 = vmul.f32 %v631, 1.442695
      %v714 = vpow.pop %v713
      %v715 = vmul.f32 %v632, 1.442695
      %v716 = vpow.pop %v715
      %v717 = vmul.f32 %v633, 1.442695
      %v718 = vpow.pop %v717
      %v719 = vmul.f32 %v634, 1.442695
      %v720 = vpow.pop %v719
      %v721 = vmul.f32 %v635, 1.442695
      %v722 = vpow.pop %v721
      %v723 = vmul.f32 %v636, 1.442695
      %v724 = vpow.pop %v723
      %v725 = vmul.f32 %v637, 1.442695
      %v726 = vpow.pop %v725
      %v727 = vmul.f32 %v638, 1.442695
      %v728 = vpow.pop %v727
      %v729 = vmul.f32 %v639, 1.442695
      %v730 = vpow.pop %v729
      %v731 = vmul.f32 %v640, 1.442695
      %v732 = vpow.pop %v731
      %v733 = vmul.f32 %v641, 1.442695
      %v734 = vpow.pop %v733
      %v735 = vmul.f32 %v642, 1.442695
      %v736 = vpow.pop %v735
      %v737 = vmul.f32 %v643, 1.442695
      %v738 = vpow.pop %v737
      %v739 = vmul.f32 %v644, 1.442695
      %v740 = vpow.pop %v739
      %v741 = vmul.f32 %v645, 1.442695
      %v742 = vpow.pop %v741
      %v743 = vmul.f32 %v646, 1.442695
      %v744 = vpow.pop %v743
      %v745 = vmul.f32 %v647, 1.442695
      %v746 = vpow.pop %v745
      %v747 = vmul.f32 %v648, 1.442695
      %v748 = vpow.pop %v747
      %v749 = vmul.f32 %v649, 1.442695
      %v750 = vpow.pop %v749
      %v751 = vmul.f32 %v650, 1.442695
      %v752 = vpow.pop %v751
      %v753 = vmul.f32 %v651, 1.442695
      %v754 = vpow.pop %v753
      %v755 = vmul.f32 %v652, 1.442695
      %v756 = vpow.pop %v755
      %v757 = vmul.f32 %v653, 1.442695
      %v758 = vpow.pop %v757
      %v759 = vmul.f32 %v654, 1.442695
      %v760 = vpow.pop %v759
      %v761 = vmul.f32 %v655, 1.442695
      %v762 = vpow.pop %v761
      %v763 = vmul.f32 %v656, 1.442695
      %v764 = vpow.pop %v763
      %v765 = vmul.f32 %v657, 1.442695
      %v766 = vpow.pop %v765
      %v767 = vmul.f32 %v658, 1.442695
      %v768 = vpow.pop %v767
      %v769 = vmul.f32 %v659, 1.442695
      %v770 = vpow.pop %v769
      %v771 = vmul.f32 %v660, 1.442695
      %v772 = vpow.pop %v771
      %v773 = vmul.f32 %v661, 1.442695
      %v774 = vpow.pop %v773
      %v775 = vmul.f32 %v662, 1.442695
      %v776 = vpow.pop %v775
      %v777 = vmul.f32 %v663, 1.442695
      %v778 = vpow.pop %v777
      %v779 = vmul.f32 %v664, 1.442695
      %v780 = vpow.pop %v779
      %v781 = vmul.f32 %v665, 1.442695
      %v782 = vpow.pop %v781
      %v783 = vmul.f32 %v666, 1.442695
      %v784 = vpow.pop %v783
      %v785 = vmul.f32 %v667, 1.442695
      %v786 = vpow.pop %v785
      %v787 = vmul.f32 %v668, 1.442695
      %v788 = vpow.pop %v787
      %v789 = vmul.f32 %v669, 1.442695
      %v790 = vpow.pop %v789
      %v791 = vmul.f32 %v670, 1.442695
      %v792 = vpow.pop %v791
      %v793 = vmul.f32 %v671, 1.442695
      %v794 = vpow.pop %v793
      %v795 = vmul.f32 %v672, 1.442695
      %v796 = vpow.pop %v795
      %v797 = vmul.f32 %v673, 1.442695
      %v798 = vpow.pop %v797
      %v799 = vmul.f32 %v674, 1.442695
      %v800 = vpow.pop %v799
      %v801 = vmul.f32 %v675, 1.442695
      %v802 = vpow.pop %v801
      %v803 = vmul.f32 %v676, 1.442695
      %v804 = vpow.pop %v803
      %vm805 = vcmp.ge.f32.partialorder %v357, 0.0
      %vm806 = vcmp.ge.f32.partialorder %v358, 0.0
      %vm807 = vcmp.ge.f32.partialorder %v359, 0.0
      %vm808 = vcmp.ge.f32.partialorder %v360, 0.0
      %vm809 = vcmp.ge.f32.partialorder %v361, 0.0
      %vm810 = vcmp.ge.f32.partialorder %v362, 0.0
      %vm811 = vcmp.ge.f32.partialorder %v363, 0.0
      %vm812 = vcmp.ge.f32.partialorder %v364, 0.0
      %vm813 = vcmp.ge.f32.partialorder %v365, 0.0
      %vm814 = vcmp.ge.f32.partialorder %v366, 0.0
      %vm815 = vcmp.ge.f32.partialorder %v367, 0.0
      %vm816 = vcmp.ge.f32.partialorder %v368, 0.0
      %vm817 = vcmp.ge.f32.partialorder %v369, 0.0
      %vm818 = vcmp.ge.f32.partialorder %v370, 0.0
      %vm819 = vcmp.ge.f32.partialorder %v371, 0.0
      %vm820 = vcmp.ge.f32.partialorder %v372, 0.0
      %vm821 = vcmp.ge.f32.partialorder %v373, 0.0
      %vm822 = vcmp.ge.f32.partialorder %v374, 0.0
      %vm823 = vcmp.ge.f32.partialorder %v375, 0.0
      %vm824 = vcmp.ge.f32.partialorder %v376, 0.0
      %vm825 = vcmp.ge.f32.partialorder %v377, 0.0
      %vm826 = vcmp.ge.f32.partialorder %v378, 0.0
      %vm827 = vcmp.ge.f32.partialorder %v379, 0.0
      %vm828 = vcmp.ge.f32.partialorder %v380, 0.0
      %vm829 = vcmp.ge.f32.partialorder %v381, 0.0
      %vm830 = vcmp.ge.f32.partialorder %v382, 0.0
      %vm831 = vcmp.ge.f32.partialorder %v383, 0.0
      %vm832 = vcmp.ge.f32.partialorder %v384, 0.0
      %vm833 = vcmp.ge.f32.partialorder %v385, 0.0
      %vm834 = vcmp.ge.f32.partialorder %v386, 0.0
      %vm835 = vcmp.ge.f32.partialorder %v387, 0.0
      %vm836 = vcmp.ge.f32.partialorder %v388, 0.0
      %vm837 = vcmp.ge.f32.partialorder %v389, 0.0
      %vm838 = vcmp.ge.f32.partialorder %v390, 0.0
      %vm839 = vcmp.ge.f32.partialorder %v391, 0.0
      %vm840 = vcmp.ge.f32.partialorder %v392, 0.0
      %vm841 = vcmp.ge.f32.partialorder %v393, 0.0
      %vm842 = vcmp.ge.f32.partialorder %v394, 0.0
      %vm843 = vcmp.ge.f32.partialorder %v395, 0.0
      %vm844 = vcmp.ge.f32.partialorder %v396, 0.0
      %vm845 = vcmp.ge.f32.partialorder %v397, 0.0
      %vm846 = vcmp.ge.f32.partialorder %v398, 0.0
      %vm847 = vcmp.ge.f32.partialorder %v399, 0.0
      %vm848 = vcmp.ge.f32.partialorder %v400, 0.0
      %vm849 = vcmp.ge.f32.partialorder %v401, 0.0
      %vm850 = vcmp.ge.f32.partialorder %v402, 0.0
      %vm851 = vcmp.ge.f32.partialorder %v403, 0.0
      %vm852 = vcmp.ge.f32.partialorder %v404, 0.0
      %vm853 = vcmp.ge.f32.partialorder %v405, 0.0
      %vm854 = vcmp.ge.f32.partialorder %v406, 0.0
      %vm855 = vcmp.ge.f32.partialorder %v407, 0.0
      %vm856 = vcmp.ge.f32.partialorder %v408, 0.0
      %vm857 = vcmp.ge.f32.partialorder %v409, 0.0
      %vm858 = vcmp.ge.f32.partialorder %v410, 0.0
      %vm859 = vcmp.ge.f32.partialorder %v411, 0.0
      %vm860 = vcmp.ge.f32.partialorder %v412, 0.0
      %vm861 = vcmp.ge.f32.partialorder %v413, 0.0
      %vm862 = vcmp.ge.f32.partialorder %v414, 0.0
      %vm863 = vcmp.ge.f32.partialorder %v415, 0.0
      %vm864 = vcmp.ge.f32.partialorder %v416, 0.0
      %vm865 = vcmp.ge.f32.partialorder %v417, 0.0
      %vm866 = vcmp.ge.f32.partialorder %v418, 0.0
      %vm867 = vcmp.ge.f32.partialorder %v419, 0.0
      %vm868 = vcmp.ge.f32.partialorder %v420, 0.0
      %v869 = vsel %vm805, 1.0, %v678
      %v870 = vsel %vm806, 1.0, %v680
      %v871 = vsel %vm807, 1.0, %v682
      %v872 = vsel %vm808, 1.0, %v684
      %v873 = vsel %vm809, 1.0, %v686
      %v874 = vsel %vm810, 1.0, %v688
      %v875 = vsel %vm811, 1.0, %v690
      %v876 = vsel %vm812, 1.0, %v692
      %v877 = vsel %vm813, 1.0, %v694
      %v878 = vsel %vm814, 1.0, %v696
      %v879 = vsel %vm815, 1.0, %v698
      %v880 = vsel %vm816, 1.0, %v700
      %v881 = vsel %vm817, 1.0, %v702
      %v882 = vsel %vm818, 1.0, %v704
      %v883 = vsel %vm819, 1.0, %v706
      %v884 = vsel %vm820, 1.0, %v708
      %v885 = vsel %vm821, 1.0, %v710
      %v886 = vsel %vm822, 1.0, %v712
      %v887 = vsel %vm823, 1.0, %v714
      %v888 = vsel %vm824, 1.0, %v716
      %v889 = vsel %vm825, 1.0, %v718
      %v890 = vsel %vm826, 1.0, %v720
      %v891 = vsel %vm827, 1.0, %v722
      %v892 = vsel %vm828, 1.0, %v724
      %v893 = vsel %vm829, 1.0, %v726
      %v894 = vsel %vm830, 1.0, %v728
      %v895 = vsel %vm831, 1.0, %v730
      %v896 = vsel %vm832, 1.0, %v732
      %v897 = vsel %vm833, 1.0, %v734
      %v898 = vsel %vm834, 1.0, %v736
      %v899 = vsel %vm835, 1.0, %v738
      %v900 = vsel %vm836, 1.0, %v740
      %v901 = vsel %vm837, 1.0, %v742
      %v902 = vsel %vm838, 1.0, %v744
      %v903 = vsel %vm839, 1.0, %v746
      %v904 = vsel %vm840, 1.0, %v748
      %v905 = vsel %vm841, 1.0, %v750
      %v906 = vsel %vm842, 1.0, %v752
      %v907 = vsel %vm843, 1.0, %v754
      %v908 = vsel %vm844, 1.0, %v756
      %v909 = vsel %vm845, 1.0, %v758
      %v910 = vsel %vm846, 1.0, %v760
      %v911 = vsel %vm847, 1.0, %v762
      %v912 = vsel %vm848, 1.0, %v764
      %v913 = vsel %vm849, 1.0, %v766
      %v914 = vsel %vm850, 1.0, %v768
      %v915 = vsel %vm851, 1.0, %v770
      %v916 = vsel %vm852, 1.0, %v772
      %v917 = vsel %vm853, 1.0, %v774
      %v918 = vsel %vm854, 1.0, %v776
      %v919 = vsel %vm855, 1.0, %v778
      %v920 = vsel %vm856, 1.0, %v780
      %v921 = vsel %vm857, 1.0, %v782
      %v922 = vsel %vm858, 1.0, %v784
      %v923 = vsel %vm859, 1.0, %v786
      %v924 = vsel %vm860, 1.0, %v788
      %v925 = vsel %vm861, 1.0, %v790
      %v926 = vsel %vm862, 1.0, %v792
      %v927 = vsel %vm863, 1.0, %v794
      %v928 = vsel %vm864, 1.0, %v796
      %v929 = vsel %vm865, 1.0, %v798
      %v930 = vsel %vm866, 1.0, %v800
      %v931 = vsel %vm867, 1.0, %v802
      %v932 = vsel %vm868, 1.0, %v804
      %v933 = vadd.f32 %v678, 1.0
      %v934 = vadd.f32 %v680, 1.0
      %v935 = vadd.f32 %v682, 1.0
      %v936 = vadd.f32 %v684, 1.0
      %v937 = vadd.f32 %v686, 1.0
      %v938 = vadd.f32 %v688, 1.0
      %v939 = vadd.f32 %v690, 1.0
      %v940 = vadd.f32 %v692, 1.0
      %v941 = vadd.f32 %v694, 1.0
      %v942 = vadd.f32 %v696, 1.0
      %v943 = vadd.f32 %v698, 1.0
      %v944 = vadd.f32 %v700, 1.0
      %v945 = vadd.f32 %v702, 1.0
      %v946 = vadd.f32 %v704, 1.0
      %v947 = vadd.f32 %v706, 1.0
      %v948 = vadd.f32 %v708, 1.0
      %v949 = vadd.f32 %v710, 1.0
      %v950 = vadd.f32 %v712, 1.0
      %v951 = vadd.f32 %v714, 1.0
      %v952 = vadd.f32 %v716, 1.0
      %v953 = vadd.f32 %v718, 1.0
      %v954 = vadd.f32 %v720, 1.0
      %v955 = vadd.f32 %v722, 1.0
      %v956 = vadd.f32 %v724, 1.0
      %v957 = vadd.f32 %v726, 1.0
      %v958 = vadd.f32 %v728, 1.0
      %v959 = vadd.f32 %v730, 1.0
      %v960 = vadd.f32 %v732, 1.0
      %v961 = vadd.f32 %v734, 1.0
      %v962 = vadd.f32 %v736, 1.0
      %v963 = vadd.f32 %v738, 1.0
      %v964 = vadd.f32 %v740, 1.0
      %v965 = vadd.f32 %v742, 1.0
      %v966 = vadd.f32 %v744, 1.0
      %v967 = vadd.f32 %v746, 1.0
      %v968 = vadd.f32 %v748, 1.0
      %v969 = vadd.f32 %v750, 1.0
      %v970 = vadd.f32 %v752, 1.0
      %v971 = vadd.f32 %v754, 1.0
      %v972 = vadd.f32 %v756, 1.0
      %v973 = vadd.f32 %v758, 1.0
      %v974 = vadd.f32 %v760, 1.0
      %v975 = vadd.f32 %v762, 1.0
      %v976 = vadd.f32 %v764, 1.0
      %v977 = vadd.f32 %v766, 1.0
      %v978 = vadd.f32 %v768, 1.0
      %v979 = vadd.f32 %v770, 1.0
      %v980 = vadd.f32 %v772, 1.0
      %v981 = vadd.f32 %v774, 1.0
      %v982 = vadd.f32 %v776, 1.0
      %v983 = vadd.f32 %v778, 1.0
      %v984 = vadd.f32 %v780, 1.0
      %v985 = vadd.f32 %v782, 1.0
      %v986 = vadd.f32 %v784, 1.0
      %v987 = vadd.f32 %v786, 1.0
      %v988 = vadd.f32 %v788, 1.0
      %v989 = vadd.f32 %v790, 1.0
      %v990 = vadd.f32 %v792, 1.0
      %v991 = vadd.f32 %v794, 1.0
      %v992 = vadd.f32 %v796, 1.0
      %v993 = vadd.f32 %v798, 1.0
      %v994 = vadd.f32 %v800, 1.0
      %v995 = vadd.f32 %v802, 1.0
      %v996 = vadd.f32 %v804, 1.0
      %v997 = vrcp.pop %v933
      %v998 = vmul.f32 %v869, %v997
      %v999 = vrcp.pop %v934
      %v1000 = vmul.f32 %v870, %v999
      %v1001 = vrcp.pop %v935
      %v1002 = vmul.f32 %v871, %v1001
      %v1003 = vrcp.pop %v936
      %v1004 = vmul.f32 %v872, %v1003
      %v1005 = vrcp.pop %v937
      %v1006 = vmul.f32 %v873, %v1005
      %v1007 = vrcp.pop %v938
      %v1008 = vmul.f32 %v874, %v1007
      %v1009 = vrcp.pop %v939
      %v1010 = vmul.f32 %v875, %v1009
      %v1011 = vrcp.pop %v940
      %v1012 = vmul.f32 %v876, %v1011
      %v1013 = vrcp.pop %v941
      %v1014 = vmul.f32 %v877, %v1013
      %v1015 = vrcp.pop %v942
      %v1016 = vmul.f32 %v878, %v1015
      %v1017 = vrcp.pop %v943
      %v1018 = vmul.f32 %v879, %v1017
      %v1019 = vrcp.pop %v944
      %v1020 = vmul.f32 %v880, %v1019
      %v1021 = vrcp.pop %v945
      %v1022 = vmul.f32 %v881, %v1021
      %v1023 = vrcp.pop %v946
      %v1024 = vmul.f32 %v882, %v1023
      %v1025 = vrcp.pop %v947
      %v1026 = vmul.f32 %v883, %v1025
      %v1027 = vrcp.pop %v948
      %v1028 = vmul.f32 %v884, %v1027
      %v1029 = vrcp.pop %v949
      %v1030 = vmul.f32 %v885, %v1029
      %v1031 = vrcp.pop %v950
      %v1032 = vmul.f32 %v886, %v1031
      %v1033 = vrcp.pop %v951
      %v1034 = vmul.f32 %v887, %v1033
      %v1035 = vrcp.pop %v952
      %v1036 = vmul.f32 %v888, %v1035
      %v1037 = vrcp.pop %v953
      %v1038 = vmul.f32 %v889, %v1037
      %v1039 = vrcp.pop %v954
      %v1040 = vmul.f32 %v890, %v1039
      %v1041 = vrcp.pop %v955
      %v1042 = vmul.f32 %v891, %v1041
      %v1043 = vrcp.pop %v956
      %v1044 = vmul.f32 %v892, %v1043
      %v1045 = vrcp.pop %v957
      %v1046 = vmul.f32 %v893, %v1045
      %v1047 = vrcp.pop %v958
      %v1048 = vmul.f32 %v894, %v1047
      %v1049 = vrcp.pop %v959
      %v1050 = vmul.f32 %v895, %v1049
      %v1051 = vrcp.pop %v960
      %v1052 = vmul.f32 %v896, %v1051
      %v1053 = vrcp.pop %v961
      %v1054 = vmul.f32 %v897, %v1053
      %v1055 = vrcp.pop %v962
      %v1056 = vmul.f32 %v898, %v1055
      %v1057 = vrcp.pop %v963
      %v1058 = vmul.f32 %v899, %v1057
      %v1059 = vrcp.pop %v964
      %v1060 = vmul.f32 %v900, %v1059
      %v1061 = vrcp.pop %v965
      %v1062 = vmul.f32 %v901, %v1061
      %v1063 = vrcp.pop %v966
      %v1064 = vmul.f32 %v902, %v1063
      %v1065 = vrcp.pop %v967
      %v1066 = vmul.f32 %v903, %v1065
      %v1067 = vrcp.pop %v968
      %v1068 = vmul.f32 %v904, %v1067
      %v1069 = vrcp.pop %v969
      %v1070 = vmul.f32 %v905, %v1069
      %v1071 = vrcp.pop %v970
      %v1072 = vmul.f32 %v906, %v1071
      %v1073 = vrcp.pop %v971
      %v1074 = vmul.f32 %v907, %v1073
      %v1075 = vrcp.pop %v972
      %v1076 = vmul.f32 %v908, %v1075
      %v1077 = vrcp.pop %v973
      %v1078 = vmul.f32 %v909, %v1077
      %v1079 = vrcp.pop %v974
      %v1080 = vmul.f32 %v910, %v1079
      %v1081 = vrcp.pop %v975
      %v1082 = vmul.f32 %v911, %v1081
      %v1083 = vrcp.pop %v976
      %v1084 = vmul.f32 %v912, %v1083
      %v1085 = vrcp.pop %v977
      %v1086 = vmul.f32 %v913, %v1085
      %v1087 = vrcp.pop %v978
      %v1088 = vmul.f32 %v914, %v1087
      %v1089 = vrcp.pop %v979
      %v1090 = vmul.f32 %v915, %v1089
      %v1091 = vrcp.pop %v980
      %v1092 = vmul.f32 %v916, %v1091
      %v1093 = vrcp.pop %v981
      %v1094 = vmul.f32 %v917, %v1093
      %v1095 = vrcp.pop %v982
      %v1096 = vmul.f32 %v918, %v1095
      %v1097 = vrcp.pop %v983
      %v1098 = vmul.f32 %v919, %v1097
      %v1099 = vrcp.pop %v984
      %v1100 = vmul.f32 %v920, %v1099
      %v1101 = vrcp.pop %v985
      %v1102 = vmul.f32 %v921, %v1101
      %v1103 = vrcp.pop %v986
      %v1104 = vmul.f32 %v922, %v1103
      %v1105 = vrcp.pop %v987
      %v1106 = vmul.f32 %v923, %v1105
      %v1107 = vrcp.pop %v988
      %v1108 = vmul.f32 %v924, %v1107
      %v1109 = vrcp.pop %v989
      %v1110 = vmul.f32 %v925, %v1109
      %v1111 = vrcp.pop %v990
      %v1112 = vmul.f32 %v926, %v1111
      %v1113 = vrcp.pop %v991
      %v1114 = vmul.f32 %v927, %v1113
      %v1115 = vrcp.pop %v992
      %v1116 = vmul.f32 %v928, %v1115
      %v1117 = vrcp.pop %v993
      %v1118 = vmul.f32 %v929, %v1117
      %v1119 = vrcp.pop %v994
      %v1120 = vmul.f32 %v930, %v1119
      %v1121 = vrcp.pop %v995
      %v1122 = vmul.f32 %v931, %v1121
      %v1123 = vrcp.pop %v996
      %v1124 = vmul.f32 %v932, %v1123
      %v1125 = vmax.f32 %v357, 0.0
      %v1126 = vmax.f32 %v358, 0.0
      %v1127 = vmax.f32 %v359, 0.0
      %v1128 = vmax.f32 %v360, 0.0
      %v1129 = vmax.f32 %v361, 0.0
      %v1130 = vmax.f32 %v362, 0.0
      %v1131 = vmax.f32 %v363, 0.0
      %v1132 = vmax.f32 %v364, 0.0
      %v1133 = vmax.f32 %v365, 0.0
      %v1134 = vmax.f32 %v366, 0.0
      %v1135 = vmax.f32 %v367, 0.0
      %v1136 = vmax.f32 %v368, 0.0
      %v1137 = vmax.f32 %v369, 0.0
      %v1138 = vmax.f32 %v370, 0.0
      %v1139 = vmax.f32 %v371, 0.0
      %v1140 = vmax.f32 %v372, 0.0
      %v1141 = vmax.f32 %v373, 0.0
      %v1142 = vmax.f32 %v374, 0.0
      %v1143 = vmax.f32 %v375, 0.0
      %v1144 = vmax.f32 %v376, 0.0
      %v1145 = vmax.f32 %v377, 0.0
      %v1146 = vmax.f32 %v378, 0.0
      %v1147 = vmax.f32 %v379, 0.0
      %v1148 = vmax.f32 %v380, 0.0
      %v1149 = vmax.f32 %v381, 0.0
      %v1150 = vmax.f32 %v382, 0.0
      %v1151 = vmax.f32 %v383, 0.0
      %v1152 = vmax.f32 %v384, 0.0
      %v1153 = vmax.f32 %v385, 0.0
      %v1154 = vmax.f32 %v386, 0.0
      %v1155 = vmax.f32 %v387, 0.0
      %v1156 = vmax.f32 %v388, 0.0
      %v1157 = vmax.f32 %v389, 0.0
      %v1158 = vmax.f32 %v390, 0.0
      %v1159 = vmax.f32 %v391, 0.0
      %v1160 = vmax.f32 %v392, 0.0
      %v1161 = vmax.f32 %v393, 0.0
      %v1162 = vmax.f32 %v394, 0.0
      %v1163 = vmax.f32 %v395, 0.0
      %v1164 = vmax.f32 %v396, 0.0
      %v1165 = vmax.f32 %v397, 0.0
      %v1166 = vmax.f32 %v398, 0.0
      %v1167 = vmax.f32 %v399, 0.0
      %v1168 = vmax.f32 %v400, 0.0
      %v1169 = vmax.f32 %v401, 0.0
      %v1170 = vmax.f32 %v402, 0.0
      %v1171 = vmax.f32 %v403, 0.0
      %v1172 = vmax.f32 %v404, 0.0
      %v1173 = vmax.f32 %v405, 0.0
      %v1174 = vmax.f32 %v406, 0.0
      %v1175 = vmax.f32 %v407, 0.0
      %v1176 = vmax.f32 %v408, 0.0
      %v1177 = vmax.f32 %v409, 0.0
      %v1178 = vmax.f32 %v410, 0.0
      %v1179 = vmax.f32 %v411, 0.0
      %v1180 = vmax.f32 %v412, 0.0
      %v1181 = vmax.f32 %v413, 0.0
      %v1182 = vmax.f32 %v414, 0.0
      %v1183 = vmax.f32 %v415, 0.0
      %v1184 = vmax.f32 %v416, 0.0
      %v1185 = vmax.f32 %v417, 0.0
      %v1186 = vmax.f32 %v418, 0.0
      %v1187 = vmax.f32 %v419, 0.0
      %v1188 = vmax.f32 %v420, 0.0
      %v1189 = vmul.f32 %v357, %v485
      %v1190 = vmul.f32 %v358, %v486
      %v1191 = vmul.f32 %v359, %v487
      %v1192 = vmul.f32 %v360, %v488
      %v1193 = vmul.f32 %v361, %v489
      %v1194 = vmul.f32 %v362, %v490
      %v1195 = vmul.f32 %v363, %v491
      %v1196 = vmul.f32 %v364, %v492
      %v1197 = vmul.f32 %v365, %v493
      %v1198 = vmul.f32 %v366, %v494
      %v1199 = vmul.f32 %v367, %v495
      %v1200 = vmul.f32 %v368, %v496
      %v1201 = vmul.f32 %v369, %v497
      %v1202 = vmul.f32 %v370, %v498
      %v1203 = vmul.f32 %v371, %v499
      %v1204 = vmul.f32 %v372, %v500
      %v1205 = vmul.f32 %v373, %v501
      %v1206 = vmul.f32 %v374, %v502
      %v1207 = vmul.f32 %v375, %v503
      %v1208 = vmul.f32 %v376, %v504
      %v1209 = vmul.f32 %v377, %v505
      %v1210 = vmul.f32 %v378, %v506
      %v1211 = vmul.f32 %v379, %v507
      %v1212 = vmul.f32 %v380, %v508
      %v1213 = vmul.f32 %v381, %v509
      %v1214 = vmul.f32 %v382, %v510
      %v1215 = vmul.f32 %v383, %v511
      %v1216 = vmul.f32 %v384, %v512
      %v1217 = vmul.f32 %v385, %v513
      %v1218 = vmul.f32 %v386, %v514
      %v1219 = vmul.f32 %v387, %v515
      %v1220 = vmul.f32 %v388, %v516
      %v1221 = vmul.f32 %v389, %v517
      %v1222 = vmul.f32 %v390, %v518
      %v1223 = vmul.f32 %v391, %v519
      %v1224 = vmul.f32 %v392, %v520
      %v1225 = vmul.f32 %v393, %v521
      %v1226 = vmul.f32 %v394, %v522
      %v1227 = vmul.f32 %v395, %v523
      %v1228 = vmul.f32 %v396, %v524
      %v1229 = vmul.f32 %v397, %v525
      %v1230 = vmul.f32 %v398, %v526
      %v1231 = vmul.f32 %v399, %v527
      %v1232 = vmul.f32 %v400, %v528
      %v1233 = vmul.f32 %v401, %v529
      %v1234 = vmul.f32 %v402, %v530
      %v1235 = vmul.f32 %v403, %v531
      %v1236 = vmul.f32 %v404, %v532
      %v1237 = vmul.f32 %v405, %v533
      %v1238 = vmul.f32 %v406, %v534
      %v1239 = vmul.f32 %v407, %v535
      %v1240 = vmul.f32 %v408, %v536
      %v1241 = vmul.f32 %v409, %v537
      %v1242 = vmul.f32 %v410, %v538
      %v1243 = vmul.f32 %v411, %v539
      %v1244 = vmul.f32 %v412, %v540
      %v1245 = vmul.f32 %v413, %v541
      %v1246 = vmul.f32 %v414, %v542
      %v1247 = vmul.f32 %v415, %v543
      %v1248 = vmul.f32 %v416, %v544
      %v1249 = vmul.f32 %v417, %v545
      %v1250 = vmul.f32 %v418, %v546
      %v1251 = vmul.f32 %v419, %v547
      %v1252 = vmul.f32 %v420, %v548
      %v1253 = vsub.f32 %v1125, %v1189
      %v1254 = vsub.f32 %v1126, %v1190
      %v1255 = vsub.f32 %v1127, %v1191
      %v1256 = vsub.f32 %v1128, %v1192
      %v1257 = vsub.f32 %v1129, %v1193
      %v1258 = vsub.f32 %v1130, %v1194
      %v1259 = vsub.f32 %v1131, %v1195
      %v1260 = vsub.f32 %v1132, %v1196
      %v1261 = vsub.f32 %v1133, %v1197
      %v1262 = vsub.f32 %v1134, %v1198
      %v1263 = vsub.f32 %v1135, %v1199
      %v1264 = vsub.f32 %v1136, %v1200
      %v1265 = vsub.f32 %v1137, %v1201
      %v1266 = vsub.f32 %v1138, %v1202
      %v1267 = vsub.f32 %v1139, %v1203
      %v1268 = vsub.f32 %v1140, %v1204
      %v1269 = vsub.f32 %v1141, %v1205
      %v1270 = vsub.f32 %v1142, %v1206
      %v1271 = vsub.f32 %v1143, %v1207
      %v1272 = vsub.f32 %v1144, %v1208
      %v1273 = vsub.f32 %v1145, %v1209
      %v1274 = vsub.f32 %v1146, %v1210
      %v1275 = vsub.f32 %v1147, %v1211
      %v1276 = vsub.f32 %v1148, %v1212
      %v1277 = vsub.f32 %v1149, %v1213
      %v1278 = vsub.f32 %v1150, %v1214
      %v1279 = vsub.f32 %v1151, %v1215
      %v1280 = vsub.f32 %v1152, %v1216
      %v1281 = vsub.f32 %v1153, %v1217
      %v1282 = vsub.f32 %v1154, %v1218
      %v1283 = vsub.f32 %v1155, %v1219
      %v1284 = vsub.f32 %v1156, %v1220
      %v1285 = vsub.f32 %v1157, %v1221
      %v1286 = vsub.f32 %v1158, %v1222
      %v1287 = vsub.f32 %v1159, %v1223
      %v1288 = vsub.f32 %v1160, %v1224
      %v1289 = vsub.f32 %v1161, %v1225
      %v1290 = vsub.f32 %v1162, %v1226
      %v1291 = vsub.f32 %v1163, %v1227
      %v1292 = vsub.f32 %v1164, %v1228
      %v1293 = vsub.f32 %v1165, %v1229
      %v1294 = vsub.f32 %v1166, %v1230
      %v1295 = vsub.f32 %v1167, %v1231
      %v1296 = vsub.f32 %v1168, %v1232
      %v1297 = vsub.f32 %v1169, %v1233
      %v1298 = vsub.f32 %v1170, %v1234
      %v1299 = vsub.f32 %v1171, %v1235
      %v1300 = vsub.f32 %v1172, %v1236
      %v1301 = vsub.f32 %v1173, %v1237
      %v1302 = vsub.f32 %v1174, %v1238
      %v1303 = vsub.f32 %v1175, %v1239
      %v1304 = vsub.f32 %v1176, %v1240
      %v1305 = vsub.f32 %v1177, %v1241
      %v1306 = vsub.f32 %v1178, %v1242
      %v1307 = vsub.f32 %v1179, %v1243
      %v1308 = vsub.f32 %v1180, %v1244
      %v1309 = vsub.f32 %v1181, %v1245
      %v1310 = vsub.f32 %v1182, %v1246
      %v1311 = vsub.f32 %v1183, %v1247
      %v1312 = vsub.f32 %v1184, %v1248
      %v1313 = vsub.f32 %v1185, %v1249
      %v1314 = vsub.f32 %v1186, %v1250
      %v1315 = vsub.f32 %v1187, %v1251
      %v1316 = vsub.f32 %v1188, %v1252
      %v1317 = vlog2.pop %v933
      %v1318 = vmul.f32 %v1317, 0.6931472
      %v1319 = vlog2.pop %v934
      %v1320 = vmul.f32 %v1319, 0.6931472
      %v1321 = vlog2.pop %v935
      %v1322 = vmul.f32 %v1321, 0.6931472
      %v1323 = vlog2.pop %v936
      %v1324 = vmul.f32 %v1323, 0.6931472
      %v1325 = vlog2.pop %v937
      %v1326 = vmul.f32 %v1325, 0.6931472
      %v1327 = vlog2.pop %v938
      %v1328 = vmul.f32 %v1327, 0.6931472
      %v1329 = vlog2.pop %v939
      %v1330 = vmul.f32 %v1329, 0.6931472
      %v1331 = vlog2.pop %v940
      %v1332 = vmul.f32 %v1331, 0.6931472
      %v1333 = vlog2.pop %v941
      %v1334 = vmul.f32 %v1333, 0.6931472
      %v1335 = vlog2.pop %v942
      %v1336 = vmul.f32 %v1335, 0.6931472
      %v1337 = vlog2.pop %v943
      %v1338 = vmul.f32 %v1337, 0.6931472
      %v1339 = vlog2.pop %v944
      %v1340 = vmul.f32 %v1339, 0.6931472
      %v1341 = vlog2.pop %v945
      %v1342 = vmul.f32 %v1341, 0.6931472
      %v1343 = vlog2.pop %v946
      %v1344 = vmul.f32 %v1343, 0.6931472
      %v1345 = vlog2.pop %v947
      %v1346 = vmul.f32 %v1345, 0.6931472
      %v1347 = vlog2.pop %v948
      %v1348 = vmul.f32 %v1347, 0.6931472
      %v1349 = vlog2.pop %v949
      %v1350 = vmul.f32 %v1349, 0.6931472
      %v1351 = vlog2.pop %v950
      %v1352 = vmul.f32 %v1351, 0.6931472
      %v1353 = vlog2.pop %v951
      %v1354 = vmul.f32 %v1353, 0.6931472
      %v1355 = vlog2.pop %v952
      %v1356 = vmul.f32 %v1355, 0.6931472
      %v1357 = vlog2.pop %v953
      %v1358 = vmul.f32 %v1357, 0.6931472
      %v1359 = vlog2.pop %v954
      %v1360 = vmul.f32 %v1359, 0.6931472
      %v1361 = vlog2.pop %v955
      %v1362 = vmul.f32 %v1361, 0.6931472
      %v1363 = vlog2.pop %v956
      %v1364 = vmul.f32 %v1363, 0.6931472
      %v1365 = vlog2.pop %v957
      %v1366 = vmul.f32 %v1365, 0.6931472
      %v1367 = vlog2.pop %v958
      %v1368 = vmul.f32 %v1367, 0.6931472
      %v1369 = vlog2.pop %v959
      %v1370 = vmul.f32 %v1369, 0.6931472
      %v1371 = vlog2.pop %v960
      %v1372 = vmul.f32 %v1371, 0.6931472
      %v1373 = vlog2.pop %v961
      %v1374 = vmul.f32 %v1373, 0.6931472
      %v1375 = vlog2.pop %v962
      %v1376 = vmul.f32 %v1375, 0.6931472
      %v1377 = vlog2.pop %v963
      %v1378 = vmul.f32 %v1377, 0.6931472
      %v1379 = vlog2.pop %v964
      %v1380 = vmul.f32 %v1379, 0.6931472
      %v1381 = vlog2.pop %v965
      %v1382 = vmul.f32 %v1381, 0.6931472
      %v1383 = vlog2.pop %v966
      %v1384 = vmul.f32 %v1383, 0.6931472
      %v1385 = vlog2.pop %v967
      %v1386 = vmul.f32 %v1385, 0.6931472
      %v1387 = vlog2.pop %v968
      %v1388 = vmul.f32 %v1387, 0.6931472
      %v1389 = vlog2.pop %v969
      %v1390 = vmul.f32 %v1389, 0.6931472
      %v1391 = vlog2.pop %v970
      %v1392 = vmul.f32 %v1391, 0.6931472
      %v1393 = vlog2.pop %v971
      %v1394 = vmul.f32 %v1393, 0.6931472
      %v1395 = vlog2.pop %v972
      %v1396 = vmul.f32 %v1395, 0.6931472
      %v1397 = vlog2.pop %v973
      %v1398 = vmul.f32 %v1397, 0.6931472
      %v1399 = vlog2.pop %v974
      %v1400 = vmul.f32 %v1399, 0.6931472
      %v1401 = vlog2.pop %v975
      %v1402 = vmul.f32 %v1401, 0.6931472
      %v1403 = vlog2.pop %v976
      %v1404 = vmul.f32 %v1403, 0.6931472
      %v1405 = vlog2.pop %v977
      %v1406 = vmul.f32 %v1405, 0.6931472
      %v1407 = vlog2.pop %v978
      %v1408 = vmul.f32 %v1407, 0.6931472
      %v1409 = vlog2.pop %v979
      %v1410 = vmul.f32 %v1409, 0.6931472
      %v1411 = vlog2.pop %v980
      %v1412 = vmul.f32 %v1411, 0.6931472
      %v1413 = vlog2.pop %v981
      %v1414 = vmul.f32 %v1413, 0.6931472
      %v1415 = vlog2.pop %v982
      %v1416 = vmul.f32 %v1415, 0.6931472
      %v1417 = vlog2.pop %v983
      %v1418 = vmul.f32 %v1417, 0.6931472
      %v1419 = vlog2.pop %v984
      %v1420 = vmul.f32 %v1419, 0.6931472
      %v1421 = vlog2.pop %v985
      %v1422 = vmul.f32 %v1421, 0.6931472
      %v1423 = vlog2.pop %v986
      %v1424 = vmul.f32 %v1423, 0.6931472
      %v1425 = vlog2.pop %v987
      %v1426 = vmul.f32 %v1425, 0.6931472
      %v1427 = vlog2.pop %v988
      %v1428 = vmul.f32 %v1427, 0.6931472
      %v1429 = vlog2.pop %v989
      %v1430 = vmul.f32 %v1429, 0.6931472
      %v1431 = vlog2.pop %v990
      %v1432 = vmul.f32 %v1431, 0.6931472
      %v1433 = vlog2.pop %v991
      %v1434 = vmul.f32 %v1433, 0.6931472
      %v1435 = vlog2.pop %v992
      %v1436 = vmul.f32 %v1435, 0.6931472
      %v1437 = vlog2.pop %v993
      %v1438 = vmul.f32 %v1437, 0.6931472
      %v1439 = vlog2.pop %v994
      %v1440 = vmul.f32 %v1439, 0.6931472
      %v1441 = vlog2.pop %v995
      %v1442 = vmul.f32 %v1441, 0.6931472
      %v1443 = vlog2.pop %v996
      %v1444 = vmul.f32 %v1443, 0.6931472
      %v1445 = vadd.f32 %v1253, %v1318
      %v1446 = vadd.f32 %v1254, %v1320
      %v1447 = vadd.f32 %v1255, %v1322
      %v1448 = vadd.f32 %v1256, %v1324
      %v1449 = vadd.f32 %v1257, %v1326
      %v1450 = vadd.f32 %v1258, %v1328
      %v1451 = vadd.f32 %v1259, %v1330
      %v1452 = vadd.f32 %v1260, %v1332
      %v1453 = vadd.f32 %v1261, %v1334
      %v1454 = vadd.f32 %v1262, %v1336
      %v1455 = vadd.f32 %v1263, %v1338
      %v1456 = vadd.f32 %v1264, %v1340
      %v1457 = vadd.f32 %v1265, %v1342
      %v1458 = vadd.f32 %v1266, %v1344
      %v1459 = vadd.f32 %v1267, %v1346
      %v1460 = vadd.f32 %v1268, %v1348
      %v1461 = vadd.f32 %v1269, %v1350
      %v1462 = vadd.f32 %v1270, %v1352
      %v1463 = vadd.f32 %v1271, %v1354
      %v1464 = vadd.f32 %v1272, %v1356
      %v1465 = vadd.f32 %v1273, %v1358
      %v1466 = vadd.f32 %v1274, %v1360
      %v1467 = vadd.f32 %v1275, %v1362
      %v1468 = vadd.f32 %v1276, %v1364
      %v1469 = vadd.f32 %v1277, %v1366
      %v1470 = vadd.f32 %v1278, %v1368
      %v1471 = vadd.f32 %v1279, %v1370
      %v1472 = vadd.f32 %v1280, %v1372
      %v1473 = vadd.f32 %v1281, %v1374
      %v1474 = vadd.f32 %v1282, %v1376
      %v1475 = vadd.f32 %v1283, %v1378
      %v1476 = vadd.f32 %v1284, %v1380
      %v1477 = vadd.f32 %v1285, %v1382
      %v1478 = vadd.f32 %v1286, %v1384
      %v1479 = vadd.f32 %v1287, %v1386
      %v1480 = vadd.f32 %v1288, %v1388
      %v1481 = vadd.f32 %v1289, %v1390
      %v1482 = vadd.f32 %v1290, %v1392
      %v1483 = vadd.f32 %v1291, %v1394
      %v1484 = vadd.f32 %v1292, %v1396
      %v1485 = vadd.f32 %v1293, %v1398
      %v1486 = vadd.f32 %v1294, %v1400
      %v1487 = vadd.f32 %v1295, %v1402
      %v1488 = vadd.f32 %v1296, %v1404
      %v1489 = vadd.f32 %v1297, %v1406
      %v1490 = vadd.f32 %v1298, %v1408
      %v1491 = vadd.f32 %v1299, %v1410
      %v1492 = vadd.f32 %v1300, %v1412
      %v1493 = vadd.f32 %v1301, %v1414
      %v1494 = vadd.f32 %v1302, %v1416
      %v1495 = vadd.f32 %v1303, %v1418
      %v1496 = vadd.f32 %v1304, %v1420
      %v1497 = vadd.f32 %v1305, %v1422
      %v1498 = vadd.f32 %v1306, %v1424
      %v1499 = vadd.f32 %v1307, %v1426
      %v1500 = vadd.f32 %v1308, %v1428
      %v1501 = vadd.f32 %v1309, %v1430
      %v1502 = vadd.f32 %v1310, %v1432
      %v1503 = vadd.f32 %v1311, %v1434
      %v1504 = vadd.f32 %v1312, %v1436
      %v1505 = vadd.f32 %v1313, %v1438
      %v1506 = vadd.f32 %v1314, %v1440
      %v1507 = vadd.f32 %v1315, %v1442
      %v1508 = vadd.f32 %v1316, %v1444
      %v1509 = vmul.f32 %v485, 2.0
      %v1510 = vmul.f32 %v486, 2.0
      %v1511 = vmul.f32 %v487, 2.0
      %v1512 = vmul.f32 %v488, 2.0
      %v1513 = vmul.f32 %v489, 2.0
      %v1514 = vmul.f32 %v490, 2.0
      %v1515 = vmul.f32 %v491, 2.0
      %v1516 = vmul.f32 %v492, 2.0
      %v1517 = vmul.f32 %v493, 2.0
      %v1518 = vmul.f32 %v494, 2.0
      %v1519 = vmul.f32 %v495, 2.0
      %v1520 = vmul.f32 %v496, 2.0
      %v1521 = vmul.f32 %v497, 2.0
      %v1522 = vmul.f32 %v498, 2.0
      %v1523 = vmul.f32 %v499, 2.0
      %v1524 = vmul.f32 %v500, 2.0
      %v1525 = vmul.f32 %v501, 2.0
      %v1526 = vmul.f32 %v502, 2.0
      %v1527 = vmul.f32 %v503, 2.0
      %v1528 = vmul.f32 %v504, 2.0
      %v1529 = vmul.f32 %v505, 2.0
      %v1530 = vmul.f32 %v506, 2.0
      %v1531 = vmul.f32 %v507, 2.0
      %v1532 = vmul.f32 %v508, 2.0
      %v1533 = vmul.f32 %v509, 2.0
      %v1534 = vmul.f32 %v510, 2.0
      %v1535 = vmul.f32 %v511, 2.0
      %v1536 = vmul.f32 %v512, 2.0
      %v1537 = vmul.f32 %v513, 2.0
      %v1538 = vmul.f32 %v514, 2.0
      %v1539 = vmul.f32 %v515, 2.0
      %v1540 = vmul.f32 %v516, 2.0
      %v1541 = vmul.f32 %v517, 2.0
      %v1542 = vmul.f32 %v518, 2.0
      %v1543 = vmul.f32 %v519, 2.0
      %v1544 = vmul.f32 %v520, 2.0
      %v1545 = vmul.f32 %v521, 2.0
      %v1546 = vmul.f32 %v522, 2.0
      %v1547 = vmul.f32 %v523, 2.0
      %v1548 = vmul.f32 %v524, 2.0
      %v1549 = vmul.f32 %v525, 2.0
      %v1550 = vmul.f32 %v526, 2.0
      %v1551 = vmul.f32 %v527, 2.0
      %v1552 = vmul.f32 %v528, 2.0
      %v1553 = vmul.f32 %v529, 2.0
      %v1554 = vmul.f32 %v530, 2.0
      %v1555 = vmul.f32 %v531, 2.0
      %v1556 = vmul.f32 %v532, 2.0
      %v1557 = vmul.f32 %v533, 2.0
      %v1558 = vmul.f32 %v534, 2.0
      %v1559 = vmul.f32 %v535, 2.0
      %v1560 = vmul.f32 %v536, 2.0
      %v1561 = vmul.f32 %v537, 2.0
      %v1562 = vmul.f32 %v538, 2.0
      %v1563 = vmul.f32 %v539, 2.0
      %v1564 = vmul.f32 %v540, 2.0
      %v1565 = vmul.f32 %v541, 2.0
      %v1566 = vmul.f32 %v542, 2.0
      %v1567 = vmul.f32 %v543, 2.0
      %v1568 = vmul.f32 %v544, 2.0
      %v1569 = vmul.f32 %v545, 2.0
      %v1570 = vmul.f32 %v546, 2.0
      %v1571 = vmul.f32 %v547, 2.0
      %v1572 = vmul.f32 %v548, 2.0
      %v1573 = vsub.f32 %v1509, 1.0
      %v1574 = vsub.f32 %v1510, 1.0
      %v1575 = vsub.f32 %v1511, 1.0
      %v1576 = vsub.f32 %v1512, 1.0
      %v1577 = vsub.f32 %v1513, 1.0
      %v1578 = vsub.f32 %v1514, 1.0
      %v1579 = vsub.f32 %v1515, 1.0
      %v1580 = vsub.f32 %v1516, 1.0
      %v1581 = vsub.f32 %v1517, 1.0
      %v1582 = vsub.f32 %v1518, 1.0
      %v1583 = vsub.f32 %v1519, 1.0
      %v1584 = vsub.f32 %v1520, 1.0
      %v1585 = vsub.f32 %v1521, 1.0
      %v1586 = vsub.f32 %v1522, 1.0
      %v1587 = vsub.f32 %v1523, 1.0
      %v1588 = vsub.f32 %v1524, 1.0
      %v1589 = vsub.f32 %v1525, 1.0
      %v1590 = vsub.f32 %v1526, 1.0
      %v1591 = vsub.f32 %v1527, 1.0
      %v1592 = vsub.f32 %v1528, 1.0
      %v1593 = vsub.f32 %v1529, 1.0
      %v1594 = vsub.f32 %v1530, 1.0
      %v1595 = vsub.f32 %v1531, 1.0
      %v1596 = vsub.f32 %v1532, 1.0
      %v1597 = vsub.f32 %v1533, 1.0
      %v1598 = vsub.f32 %v1534, 1.0
      %v1599 = vsub.f32 %v1535, 1.0
      %v1600 = vsub.f32 %v1536, 1.0
      %v1601 = vsub.f32 %v1537, 1.0
      %v1602 = vsub.f32 %v1538, 1.0
      %v1603 = vsub.f32 %v1539, 1.0
      %v1604 = vsub.f32 %v1540, 1.0
      %v1605 = vsub.f32 %v1541, 1.0
      %v1606 = vsub.f32 %v1542, 1.0
      %v1607 = vsub.f32 %v1543, 1.0
      %v1608 = vsub.f32 %v1544, 1.0
      %v1609 = vsub.f32 %v1545, 1.0
      %v1610 = vsub.f32 %v1546, 1.0
      %v1611 = vsub.f32 %v1547, 1.0
      %v1612 = vsub.f32 %v1548, 1.0
      %v1613 = vsub.f32 %v1549, 1.0
      %v1614 = vsub.f32 %v1550, 1.0
      %v1615 = vsub.f32 %v1551, 1.0
      %v1616 = vsub.f32 %v1552, 1.0
      %v1617 = vsub.f32 %v1553, 1.0
      %v1618 = vsub.f32 %v1554, 1.0
      %v1619 = vsub.f32 %v1555, 1.0
      %v1620 = vsub.f32 %v1556, 1.0
      %v1621 = vsub.f32 %v1557, 1.0
      %v1622 = vsub.f32 %v1558, 1.0
      %v1623 = vsub.f32 %v1559, 1.0
      %v1624 = vsub.f32 %v1560, 1.0
      %v1625 = vsub.f32 %v1561, 1.0
      %v1626 = vsub.f32 %v1562, 1.0
      %v1627 = vsub.f32 %v1563, 1.0
      %v1628 = vsub.f32 %v1564, 1.0
      %v1629 = vsub.f32 %v1565, 1.0
      %v1630 = vsub.f32 %v1566, 1.0
      %v1631 = vsub.f32 %v1567, 1.0
      %v1632 = vsub.f32 %v1568, 1.0
      %v1633 = vsub.f32 %v1569, 1.0
      %v1634 = vsub.f32 %v1570, 1.0
      %v1635 = vsub.f32 %v1571, 1.0
      %v1636 = vsub.f32 %v1572, 1.0
      %v1637 = vmul.f32 %v357, %v1573
      %v1638 = vmul.f32 %v358, %v1574
      %v1639 = vmul.f32 %v359, %v1575
      %v1640 = vmul.f32 %v360, %v1576
      %v1641 = vmul.f32 %v361, %v1577
      %v1642 = vmul.f32 %v362, %v1578
      %v1643 = vmul.f32 %v363, %v1579
      %v1644 = vmul.f32 %v364, %v1580
      %v1645 = vmul.f32 %v365, %v1581
      %v1646 = vmul.f32 %v366, %v1582
      %v1647 = vmul.f32 %v367, %v1583
      %v1648 = vmul.f32 %v368, %v1584
      %v1649 = vmul.f32 %v369, %v1585
      %v1650 = vmul.f32 %v370, %v1586
      %v1651 = vmul.f32 %v371, %v1587
      %v1652 = vmul.f32 %v372, %v1588
      %v1653 = vmul.f32 %v373, %v1589
      %v1654 = vmul.f32 %v374, %v1590
      %v1655 = vmul.f32 %v375, %v1591
      %v1656 = vmul.f32 %v376, %v1592
      %v1657 = vmul.f32 %v377, %v1593
      %v1658 = vmul.f32 %v378, %v1594
      %v1659 = vmul.f32 %v379, %v1595
      %v1660 = vmul.f32 %v380, %v1596
      %v1661 = vmul.f32 %v381, %v1597
      %v1662 = vmul.f32 %v382, %v1598
      %v1663 = vmul.f32 %v383, %v1599
      %v1664 = vmul.f32 %v384, %v1600
      %v1665 = vmul.f32 %v385, %v1601
      %v1666 = vmul.f32 %v386, %v1602
      %v1667 = vmul.f32 %v387, %v1603
      %v1668 = vmul.f32 %v388, %v1604
      %v1669 = vmul.f32 %v389, %v1605
      %v1670 = vmul.f32 %v390, %v1606
      %v1671 = vmul.f32 %v391, %v1607
      %v1672 = vmul.f32 %v392, %v1608
      %v1673 = vmul.f32 %v393, %v1609
      %v1674 = vmul.f32 %v394, %v1610
      %v1675 = vmul.f32 %v395, %v1611
      %v1676 = vmul.f32 %v396, %v1612
      %v1677 = vmul.f32 %v397, %v1613
      %v1678 = vmul.f32 %v398, %v1614
      %v1679 = vmul.f32 %v399, %v1615
      %v1680 = vmul.f32 %v400, %v1616
      %v1681 = vmul.f32 %v401, %v1617
      %v1682 = vmul.f32 %v402, %v1618
      %v1683 = vmul.f32 %v403, %v1619
      %v1684 = vmul.f32 %v404, %v1620
      %v1685 = vmul.f32 %v405, %v1621
      %v1686 = vmul.f32 %v406, %v1622
      %v1687 = vmul.f32 %v407, %v1623
      %v1688 = vmul.f32 %v408, %v1624
      %v1689 = vmul.f32 %v409, %v1625
      %v1690 = vmul.f32 %v410, %v1626
      %v1691 = vmul.f32 %v411, %v1627
      %v1692 = vmul.f32 %v412, %v1628
      %v1693 = vmul.f32 %v413, %v1629
      %v1694 = vmul.f32 %v414, %v1630
      %v1695 = vmul.f32 %v415, %v1631
      %v1696 = vmul.f32 %v416, %v1632
      %v1697 = vmul.f32 %v417, %v1633
      %v1698 = vmul.f32 %v418, %v1634
      %v1699 = vmul.f32 %v419, %v1635
      %v1700 = vmul.f32 %v420, %v1636
      %v1701 = vsub.f32 %v1637, 1.0
      %v1702 = vsub.f32 %v1638, 1.0
      %v1703 = vsub.f32 %v1639, 1.0
      %v1704 = vsub.f32 %v1640, 1.0
      %v1705 = vsub.f32 %v1641, 1.0
      %v1706 = vsub.f32 %v1642, 1.0
      %v1707 = vsub.f32 %v1643, 1.0
      %v1708 = vsub.f32 %v1644, 1.0
      %v1709 = vsub.f32 %v1645, 1.0
      %v1710 = vsub.f32 %v1646, 1.0
      %v1711 = vsub.f32 %v1647, 1.0
      %v1712 = vsub.f32 %v1648, 1.0
      %v1713 = vsub.f32 %v1649, 1.0
      %v1714 = vsub.f32 %v1650, 1.0
      %v1715 = vsub.f32 %v1651, 1.0
      %v1716 = vsub.f32 %v1652, 1.0
      %v1717 = vsub.f32 %v1653, 1.0
      %v1718 = vsub.f32 %v1654, 1.0
      %v1719 = vsub.f32 %v1655, 1.0
      %v1720 = vsub.f32 %v1656, 1.0
      %v1721 = vsub.f32 %v1657, 1.0
      %v1722 = vsub.f32 %v1658, 1.0
      %v1723 = vsub.f32 %v1659, 1.0
      %v1724 = vsub.f32 %v1660, 1.0
      %v1725 = vsub.f32 %v1661, 1.0
      %v1726 = vsub.f32 %v1662, 1.0
      %v1727 = vsub.f32 %v1663, 1.0
      %v1728 = vsub.f32 %v1664, 1.0
      %v1729 = vsub.f32 %v1665, 1.0
      %v1730 = vsub.f32 %v1666, 1.0
      %v1731 = vsub.f32 %v1667, 1.0
      %v1732 = vsub.f32 %v1668, 1.0
      %v1733 = vsub.f32 %v1669, 1.0
      %v1734 = vsub.f32 %v1670, 1.0
      %v1735 = vsub.f32 %v1671, 1.0
      %v1736 = vsub.f32 %v1672, 1.0
      %v1737 = vsub.f32 %v1673, 1.0
      %v1738 = vsub.f32 %v1674, 1.0
      %v1739 = vsub.f32 %v1675, 1.0
      %v1740 = vsub.f32 %v1676, 1.0
      %v1741 = vsub.f32 %v1677, 1.0
      %v1742 = vsub.f32 %v1678, 1.0
      %v1743 = vsub.f32 %v1679, 1.0
      %v1744 = vsub.f32 %v1680, 1.0
      %v1745 = vsub.f32 %v1681, 1.0
      %v1746 = vsub.f32 %v1682, 1.0
      %v1747 = vsub.f32 %v1683, 1.0
      %v1748 = vsub.f32 %v1684, 1.0
      %v1749 = vsub.f32 %v1685, 1.0
      %v1750 = vsub.f32 %v1686, 1.0
      %v1751 = vsub.f32 %v1687, 1.0
      %v1752 = vsub.f32 %v1688, 1.0
      %v1753 = vsub.f32 %v1689, 1.0
      %v1754 = vsub.f32 %v1690, 1.0
      %v1755 = vsub.f32 %v1691, 1.0
      %v1756 = vsub.f32 %v1692, 1.0
      %v1757 = vsub.f32 %v1693, 1.0
      %v1758 = vsub.f32 %v1694, 1.0
      %v1759 = vsub.f32 %v1695, 1.0
      %v1760 = vsub.f32 %v1696, 1.0
      %v1761 = vsub.f32 %v1697, 1.0
      %v1762 = vsub.f32 %v1698, 1.0
      %v1763 = vsub.f32 %v1699, 1.0
      %v1764 = vsub.f32 %v1700, 1.0
      %1765 = vst [vmem:[%s330] sm:$0xff] %v1701
      %1766 = vst [vmem:[%s330 + $0x8] sm:$0xff] %v1702
      %1767 = vst [vmem:[%s330 + $0x10] sm:$0xff] %v1703
      %1768 = vst [vmem:[%s330 + $0x18] sm:$0xff] %v1704
      %1769 = vst [vmem:[%s330 + $0x20] sm:$0xff] %v1705
      %1770 = vst [vmem:[%s330 + $0x28] sm:$0xff] %v1706
      %1771 = vst [vmem:[%s330 + $0x30] sm:$0xff] %v1707
      %1772 = vst [vmem:[%s330 + $0x38] sm:$0xff] %v1708
      %1773 = vst [vmem:[%s330 + $0x40] sm:$0xff] %v1709
      %1774 = vst [vmem:[%s330 + $0x48] sm:$0xff] %v1710
      %1775 = vst [vmem:[%s330 + $0x50] sm:$0xff] %v1711
      %1776 = vst [vmem:[%s330 + $0x58] sm:$0xff] %v1712
      %1777 = vst [vmem:[%s330 + $0x60] sm:$0xff] %v1713
      %1778 = vst [vmem:[%s330 + $0x68] sm:$0xff] %v1714
      %1779 = vst [vmem:[%s330 + $0x70] sm:$0xff] %v1715
      %1780 = vst [vmem:[%s330 + $0x78] sm:$0xff] %v1716
      %1781 = vst [vmem:[%s330 + $0x80] sm:$0xff] %v1717
      %1782 = vst [vmem:[%s330 + $0x88] sm:$0xff] %v1718
      %1783 = vst [vmem:[%s330 + $0x90] sm:$0xff] %v1719
      %1784 = vst [vmem:[%s330 + $0x98] sm:$0xff] %v1720
      %1785 = vst [vmem:[%s330 + $0xa0] sm:$0xff] %v1721
      %1786 = vst [vmem:[%s330 + $0xa8] sm:$0xff] %v1722
      %1787 = vst [vmem:[%s330 + $0xb0] sm:$0xff] %v1723
      %1788 = vst [vmem:[%s330 + $0xb8] sm:$0xff] %v1724
      %1789 = vst [vmem:[%s330 + $0xc0] sm:$0xff] %v1725
      %1790 = vst [vmem:[%s330 + $0xc8] sm:$0xff] %v1726
      %1791 = vst [vmem:[%s330 + $0xd0] sm:$0xff] %v1727
      %1792 = vst [vmem:[%s330 + $0xd8] sm:$0xff] %v1728
      %1793 = vst [vmem:[%s330 + $0xe0] sm:$0xff] %v1729
      %1794 = vst [vmem:[%s330 + $0xe8] sm:$0xff] %v1730
      %1795 = vst [vmem:[%s330 + $0xf0] sm:$0xff] %v1731
      %1796 = vst [vmem:[%s330 + $0xf8] sm:$0xff] %v1732
      %1797 = vst [vmem:[%s330 + $0x100] sm:$0xff] %v1733
      %1798 = vst [vmem:[%s330 + $0x108] sm:$0xff] %v1734
      %1799 = vst [vmem:[%s330 + $0x110] sm:$0xff] %v1735
      %1800 = vst [vmem:[%s330 + $0x118] sm:$0xff] %v1736
      %1801 = vst [vmem:[%s330 + $0x120] sm:$0xff] %v1737
      %1802 = vst [vmem:[%s330 + $0x128] sm:$0xff] %v1738
      %1803 = vst [vmem:[%s330 + $0x130] sm:$0xff] %v1739
      %1804 = vst [vmem:[%s330 + $0x138] sm:$0xff] %v1740
      %1805 = vst [vmem:[%s330 + $0x140] sm:$0xff] %v1741
      %1806 = vst [vmem:[%s330 + $0x148] sm:$0xff] %v1742
      %1807 = vst [vmem:[%s330 + $0x150] sm:$0xff] %v1743
      %1808 = vst [vmem:[%s330 + $0x158] sm:$0xff] %v1744
      %1809 = vst [vmem:[%s330 + $0x160] sm:$0xff] %v1745
      %1810 = vst [vmem:[%s330 + $0x168] sm:$0xff] %v1746
      %1811 = vst [vmem:[%s330 + $0x170] sm:$0xff] %v1747
      %1812 = vst [vmem:[%s330 + $0x178] sm:$0xff] %v1748
      %1813 = vst [vmem:[%s330 + $0x180] sm:$0xff] %v1749
      %1814 = vst [vmem:[%s330 + $0x188] sm:$0xff] %v1750
      %1815 = vst [vmem:[%s330 + $0x190] sm:$0xff] %v1751
      %1816 = vst [vmem:[%s330 + $0x198] sm:$0xff] %v1752
      %1817 = vst [vmem:[%s330 + $0x1a0] sm:$0xff] %v1753
      %1818 = vst [vmem:[%s330 + $0x1a8] sm:$0xff] %v1754
      %1819 = vst [vmem:[%s330 + $0x1b0] sm:$0xff] %v1755
      %1820 = vst [vmem:[%s330 + $0x1b8] sm:$0xff] %v1756
      %1821 = vst [vmem:[%s330 + $0x1c0] sm:$0xff] %v1757
      %1822 = vst [vmem:[%s330 + $0x1c8] sm:$0xff] %v1758
      %1823 = vst [vmem:[%s330 + $0x1d0] sm:$0xff] %v1759
      %1824 = vst [vmem:[%s330 + $0x1d8] sm:$0xff] %v1760
      %1825 = vst [vmem:[%s330 + $0x1e0] sm:$0xff] %v1761
      %1826 = vst [vmem:[%s330 + $0x1e8] sm:$0xff] %v1762
      %1827 = vst [vmem:[%s330 + $0x1f0] sm:$0xff] %v1763
      %1828 = vst [vmem:[%s330 + $0x1f8] sm:$0xff] %v1764
      %v1829 = vld [vmem:[%s336] sm:$0x1]
      %v1830 = vmul.f32 %v998, %v485
      %v1831 = vmul.f32 %v1000, %v486
      %v1832 = vmul.f32 %v1002, %v487
      %v1833 = vmul.f32 %v1004, %v488
      %v1834 = vmul.f32 %v1006, %v489
      %v1835 = vmul.f32 %v1008, %v490
      %v1836 = vmul.f32 %v1010, %v491
      %v1837 = vmul.f32 %v1012, %v492
      %v1838 = vmul.f32 %v1014, %v493
      %v1839 = vmul.f32 %v1016, %v494
      %v1840 = vmul.f32 %v1018, %v495
      %v1841 = vmul.f32 %v1020, %v496
      %v1842 = vmul.f32 %v1022, %v497
      %v1843 = vmul.f32 %v1024, %v498
      %v1844 = vmul.f32 %v1026, %v499
      %v1845 = vmul.f32 %v1028, %v500
      %v1846 = vmul.f32 %v1030, %v501
      %v1847 = vmul.f32 %v1032, %v502
      %v1848 = vmul.f32 %v1034, %v503
      %v1849 = vmul.f32 %v1036, %v504
      %v1850 = vmul.f32 %v1038, %v505
      %v1851 = vmul.f32 %v1040, %v506
      %v1852 = vmul.f32 %v1042, %v507
      %v1853 = vmul.f32 %v1044, %v508
      %v1854 = vmul.f32 %v1046, %v509
      %v1855 = vmul.f32 %v1048, %v510
      %v1856 = vmul.f32 %v1050, %v511
      %v1857 = vmul.f32 %v1052, %v512
      %v1858 = vmul.f32 %v1054, %v513
      %v1859 = vmul.f32 %v1056, %v514
      %v1860 = vmul.f32 %v1058, %v515
      %v1861 = vmul.f32 %v1060, %v516
      %v1862 = vmul.f32 %v1062, %v517
      %v1863 = vmul.f32 %v1064, %v518
      %v1864 = vmul.f32 %v1066, %v519
      %v1865 = vmul.f32 %v1068, %v520
      %v1866 = vmul.f32 %v1070, %v521
      %v1867 = vmul.f32 %v1072, %v522
      %v1868 = vmul.f32 %v1074, %v523
      %v1869 = vmul.f32 %v1076, %v524
      %v1870 = vmul.f32 %v1078, %v525
      %v1871 = vmul.f32 %v1080, %v526
      %v1872 = vmul.f32 %v1082, %v527
      %v1873 = vmul.f32 %v1084, %v528
      %v1874 = vmul.f32 %v1086, %v529
      %v1875 = vmul.f32 %v1088, %v530
      %v1876 = vmul.f32 %v1090, %v531
      %v1877 = vmul.f32 %v1092, %v532
      %v1878 = vmul.f32 %v1094, %v533
      %v1879 = vmul.f32 %v1096, %v534
      %v1880 = vmul.f32 %v1098, %v535
      %v1881 = vmul.f32 %v1100, %v536
      %v1882 = vmul.f32 %v1102, %v537
      %v1883 = vmul.f32 %v1104, %v538
      %v1884 = vmul.f32 %v1106, %v539
      %v1885 = vmul.f32 %v1108, %v540
      %v1886 = vmul.f32 %v1110, %v541
      %v1887 = vmul.f32 %v1112, %v542
      %v1888 = vmul.f32 %v1114, %v543
      %v1889 = vmul.f32 %v1116, %v544
      %v1890 = vmul.f32 %v1118, %v545
      %v1891 = vmul.f32 %v1120, %v546
      %v1892 = vmul.f32 %v1122, %v547
      %v1893 = vmul.f32 %v1124, %v548
      %v1894 = vadd.f32 %v1830, %v1831
      %v1895 = vadd.f32 %v1894, %v1832
      %v1896 = vadd.f32 %v1895, %v1833
      %v1897 = vadd.f32 %v1896, %v1834
      %v1898 = vadd.f32 %v1897, %v1835
      %v1899 = vadd.f32 %v1898, %v1836
      %v1900 = vadd.f32 %v1899, %v1837
      %v1901 = vadd.f32 %v1900, %v1838
      %v1902 = vadd.f32 %v1901, %v1839
      %v1903 = vadd.f32 %v1902, %v1840
      %v1904 = vadd.f32 %v1903, %v1841
      %v1905 = vadd.f32 %v1904, %v1842
      %v1906 = vadd.f32 %v1905, %v1843
      %v1907 = vadd.f32 %v1906, %v1844
      %v1908 = vadd.f32 %v1907, %v1845
      %v1909 = vadd.f32 %v1908, %v1846
      %v1910 = vadd.f32 %v1909, %v1847
      %v1911 = vadd.f32 %v1910, %v1848
      %v1912 = vadd.f32 %v1911, %v1849
      %v1913 = vadd.f32 %v1912, %v1850
      %v1914 = vadd.f32 %v1913, %v1851
      %v1915 = vadd.f32 %v1914, %v1852
      %v1916 = vadd.f32 %v1915, %v1853
      %v1917 = vadd.f32 %v1916, %v1854
      %v1918 = vadd.f32 %v1917, %v1855
      %v1919 = vadd.f32 %v1918, %v1856
      %v1920 = vadd.f32 %v1919, %v1857
      %v1921 = vadd.f32 %v1920, %v1858
      %v1922 = vadd.f32 %v1921, %v1859
      %v1923 = vadd.f32 %v1922, %v1860
      %v1924 = vadd.f32 %v1923, %v1861
      %v1925 = vadd.f32 %v1924, %v1862
      %v1926 = vadd.f32 %v1925, %v1863
      %v1927 = vadd.f32 %v1926, %v1864
      %v1928 = vadd.f32 %v1927, %v1865
      %v1929 = vadd.f32 %v1928, %v1866
      %v1930 = vadd.f32 %v1929, %v1867
      %v1931 = vadd.f32 %v1930, %v1868
      %v1932 = vadd.f32 %v1931, %v1869
      %v1933 = vadd.f32 %v1932, %v1870
      %v1934 = vadd.f32 %v1933, %v1871
      %v1935 = vadd.f32 %v1934, %v1872
      %v1936 = vadd.f32 %v1935, %v1873
      %v1937 = vadd.f32 %v1936, %v1874
      %v1938 = vadd.f32 %v1937, %v1875
      %v1939 = vadd.f32 %v1938, %v1876
      %v1940 = vadd.f32 %v1939, %v1877
      %v1941 = vadd.f32 %v1940, %v1878
      %v1942 = vadd.f32 %v1941, %v1879
      %v1943 = vadd.f32 %v1942, %v1880
      %v1944 = vadd.f32 %v1943, %v1881
      %v1945 = vadd.f32 %v1944, %v1882
      %v1946 = vadd.f32 %v1945, %v1883
      %v1947 = vadd.f32 %v1946, %v1884
      %v1948 = vadd.f32 %v1947, %v1885
      %v1949 = vadd.f32 %v1948, %v1886
      %v1950 = vadd.f32 %v1949, %v1887
      %v1951 = vadd.f32 %v1950, %v1888
      %v1952 = vadd.f32 %v1951, %v1889
      %v1953 = vadd.f32 %v1952, %v1890
      %v1954 = vadd.f32 %v1953, %v1891
      %v1955 = vadd.f32 %v1954, %v1892
      %v1956 = vadd.f32 %v1955, %v1893
      %v1957 = vrot.slane %v1956, 4
      %v1958 = vadd.f32 %v1956, %v1957
      %v1959 = vrot.slane %v1958, 2
      %v1960 = vadd.f32 %v1958, %v1959
      %v1961 = vrot.slane %v1960, 1
      %v1962 = vadd.f32 %v1960, %v1961
      %v1963 = vadd.f32 %v1829, %v1962
      %1964 = vst [vmem:[%s336] sm:$0x1] %v1963
      %v1965 = vld [vmem:[%s340] sm:$0x1]
      %v1966 = vadd.f32 %v998, %v485
      %v1967 = vadd.f32 %v1000, %v486
      %v1968 = vadd.f32 %v1002, %v487
      %v1969 = vadd.f32 %v1004, %v488
      %v1970 = vadd.f32 %v1006, %v489
      %v1971 = vadd.f32 %v1008, %v490
      %v1972 = vadd.f32 %v1010, %v491
      %v1973 = vadd.f32 %v1012, %v492
      %v1974 = vadd.f32 %v1014, %v493
      %v1975 = vadd.f32 %v1016, %v494
      %v1976 = vadd.f32 %v1018, %v495
      %v1977 = vadd.f32 %v1020, %v496
      %v1978 = vadd.f32 %v1022, %v497
      %v1979 = vadd.f32 %v1024, %v498
      %v1980 = vadd.f32 %v1026, %v499
      %v1981 = vadd.f32 %v1028, %v500
      %v1982 = vadd.f32 %v1030, %v501
      %v1983 = vadd.f32 %v1032, %v502
      %v1984 = vadd.f32 %v1034, %v503
      %v1985 = vadd.f32 %v1036, %v504
      %v1986 = vadd.f32 %v1038, %v505
      %v1987 = vadd.f32 %v1040, %v506
      %v1988 = vadd.f32 %v1042, %v507
      %v1989 = vadd.f32 %v1044, %v508
      %v1990 = vadd.f32 %v1046, %v509
      %v1991 = vadd.f32 %v1048, %v510
      %v1992 = vadd.f32 %v1050, %v511
      %v1993 = vadd.f32 %v1052, %v512
      %v1994 = vadd.f32 %v1054, %v513
      %v1995 = vadd.f32 %v1056, %v514
      %v1996 = vadd.f32 %v1058, %v515
      %v1997 = vadd.f32 %v1060, %v516
      %v1998 = vadd.f32 %v1062, %v517
      %v1999 = vadd.f32 %v1064, %v518
      %v2000 = vadd.f32 %v1066, %v519
      %v2001 = vadd.f32 %v1068, %v520
      %v2002 = vadd.f32 %v1070, %v521
      %v2003 = vadd.f32 %v1072, %v522
      %v2004 = vadd.f32 %v1074, %v523
      %v2005 = vadd.f32 %v1076, %v524
      %v2006 = vadd.f32 %v1078, %v525
      %v2007 = vadd.f32 %v1080, %v526
      %v2008 = vadd.f32 %v1082, %v527
      %v2009 = vadd.f32 %v1084, %v528
      %v2010 = vadd.f32 %v1086, %v529
      %v2011 = vadd.f32 %v1088, %v530
      %v2012 = vadd.f32 %v1090, %v531
      %v2013 = vadd.f32 %v1092, %v532
      %v2014 = vadd.f32 %v1094, %v533
      %v2015 = vadd.f32 %v1096, %v534
      %v2016 = vadd.f32 %v1098, %v535
      %v2017 = vadd.f32 %v1100, %v536
      %v2018 = vadd.f32 %v1102, %v537
      %v2019 = vadd.f32 %v1104, %v538
      %v2020 = vadd.f32 %v1106, %v539
      %v2021 = vadd.f32 %v1108, %v540
      %v2022 = vadd.f32 %v1110, %v541
      %v2023 = vadd.f32 %v1112, %v542
      %v2024 = vadd.f32 %v1114, %v543
      %v2025 = vadd.f32 %v1116, %v544
      %v2026 = vadd.f32 %v1118, %v545
      %v2027 = vadd.f32 %v1120, %v546
      %v2028 = vadd.f32 %v1122, %v547
      %v2029 = vadd.f32 %v1124, %v548
      %v2030 = vadd.f32 %v1966, %v1967
      %v2031 = vadd.f32 %v2030, %v1968
      %v2032 = vadd.f32 %v2031, %v1969
      %v2033 = vadd.f32 %v2032, %v1970
      %v2034 = vadd.f32 %v2033, %v1971
      %v2035 = vadd.f32 %v2034, %v1972
      %v2036 = vadd.f32 %v2035, %v1973
      %v2037 = vadd.f32 %v2036, %v1974
      %v2038 = vadd.f32 %v2037, %v1975
      %v2039 = vadd.f32 %v2038, %v1976
      %v2040 = vadd.f32 %v2039, %v1977
      %v2041 = vadd.f32 %v2040, %v1978
      %v2042 = vadd.f32 %v2041, %v1979
      %v2043 = vadd.f32 %v2042, %v1980
      %v2044 = vadd.f32 %v2043, %v1981
      %v2045 = vadd.f32 %v2044, %v1982
      %v2046 = vadd.f32 %v2045, %v1983
      %v2047 = vadd.f32 %v2046, %v1984
      %v2048 = vadd.f32 %v2047, %v1985
      %v2049 = vadd.f32 %v2048, %v1986
      %v2050 = vadd.f32 %v2049, %v1987
      %v2051 = vadd.f32 %v2050, %v1988
      %v2052 = vadd.f32 %v2051, %v1989
      %v2053 = vadd.f32 %v2052, %v1990
      %v2054 = vadd.f32 %v2053, %v1991
      %v2055 = vadd.f32 %v2054, %v1992
      %v2056 = vadd.f32 %v2055, %v1993
      %v2057 = vadd.f32 %v2056, %v1994
      %v2058 = vadd.f32 %v2057, %v1995
      %v2059 = vadd.f32 %v2058, %v1996
      %v2060 = vadd.f32 %v2059, %v1997
      %v2061 = vadd.f32 %v2060, %v1998
      %v2062 = vadd.f32 %v2061, %v1999
      %v2063 = vadd.f32 %v2062, %v2000
      %v2064 = vadd.f32 %v2063, %v2001
      %v2065 = vadd.f32 %v2064, %v2002
      %v2066 = vadd.f32 %v2065, %v2003
      %v2067 = vadd.f32 %v2066, %v2004
      %v2068 = vadd.f32 %v2067, %v2005
      %v2069 = vadd.f32 %v2068, %v2006
      %v2070 = vadd.f32 %v2069, %v2007
      %v2071 = vadd.f32 %v2070, %v2008
      %v2072 = vadd.f32 %v2071, %v2009
      %v2073 = vadd.f32 %v2072, %v2010
      %v2074 = vadd.f32 %v2073, %v2011
      %v2075 = vadd.f32 %v2074, %v2012
      %v2076 = vadd.f32 %v2075, %v2013
      %v2077 = vadd.f32 %v2076, %v2014
      %v2078 = vadd.f32 %v2077, %v2015
      %v2079 = vadd.f32 %v2078, %v2016
      %v2080 = vadd.f32 %v2079, %v2017
      %v2081 = vadd.f32 %v2080, %v2018
      %v2082 = vadd.f32 %v2081, %v2019
      %v2083 = vadd.f32 %v2082, %v2020
      %v2084 = vadd.f32 %v2083, %v2021
      %v2085 = vadd.f32 %v2084, %v2022
      %v2086 = vadd.f32 %v2085, %v2023
      %v2087 = vadd.f32 %v2086, %v2024
      %v2088 = vadd.f32 %v2087, %v2025
      %v2089 = vadd.f32 %v2088, %v2026
      %v2090 = vadd.f32 %v2089, %v2027
      %v2091 = vadd.f32 %v2090, %v2028
      %v2092 = vadd.f32 %v2091, %v2029
      %v2093 = vrot.slane %v2092, 4
      %v2094 = vadd.f32 %v2092, %v2093
      %v2095 = vrot.slane %v2094, 2
      %v2096 = vadd.f32 %v2094, %v2095
      %v2097 = vrot.slane %v2096, 1
      %v2098 = vadd.f32 %v2096, %v2097
      %v2099 = vadd.f32 %v1965, %v2098
      %2100 = vst [vmem:[%s340] sm:$0x1] %v2099
      %v2101 = vld [vmem:[%s344] sm:$0x1]
      %v2102 = vadd.f32 %v1445, %v1446
      %v2103 = vadd.f32 %v2102, %v1447
      %v2104 = vadd.f32 %v2103, %v1448
      %v2105 = vadd.f32 %v2104, %v1449
      %v2106 = vadd.f32 %v2105, %v1450
      %v2107 = vadd.f32 %v2106, %v1451
      %v2108 = vadd.f32 %v2107, %v1452
      %v2109 = vadd.f32 %v2108, %v1453
      %v2110 = vadd.f32 %v2109, %v1454
      %v2111 = vadd.f32 %v2110, %v1455
      %v2112 = vadd.f32 %v2111, %v1456
      %v2113 = vadd.f32 %v2112, %v1457
      %v2114 = vadd.f32 %v2113, %v1458
      %v2115 = vadd.f32 %v2114, %v1459
      %v2116 = vadd.f32 %v2115, %v1460
      %v2117 = vadd.f32 %v2116, %v1461
      %v2118 = vadd.f32 %v2117, %v1462
      %v2119 = vadd.f32 %v2118, %v1463
      %v2120 = vadd.f32 %v2119, %v1464
      %v2121 = vadd.f32 %v2120, %v1465
      %v2122 = vadd.f32 %v2121, %v1466
      %v2123 = vadd.f32 %v2122, %v1467
      %v2124 = vadd.f32 %v2123, %v1468
      %v2125 = vadd.f32 %v2124, %v1469
      %v2126 = vadd.f32 %v2125, %v1470
      %v2127 = vadd.f32 %v2126, %v1471
      %v2128 = vadd.f32 %v2127, %v1472
      %v2129 = vadd.f32 %v2128, %v1473
      %v2130 = vadd.f32 %v2129, %v1474
      %v2131 = vadd.f32 %v2130, %v1475
      %v2132 = vadd.f32 %v2131, %v1476
      %v2133 = vadd.f32 %v2132, %v1477
      %v2134 = vadd.f32 %v2133, %v1478
      %v2135 = vadd.f32 %v2134, %v1479
      %v2136 = vadd.f32 %v2135, %v1480
      %v2137 = vadd.f32 %v2136, %v1481
      %v2138 = vadd.f32 %v2137, %v1482
      %v2139 = vadd.f32 %v2138, %v1483
      %v2140 = vadd.f32 %v2139, %v1484
      %v2141 = vadd.f32 %v2140, %v1485
      %v2142 = vadd.f32 %v2141, %v1486
      %v2143 = vadd.f32 %v2142, %v1487
      %v2144 = vadd.f32 %v2143, %v1488
      %v2145 = vadd.f32 %v2144, %v1489
      %v2146 = vadd.f32 %v2145, %v1490
      %v2147 = vadd.f32 %v2146, %v1491
      %v2148 = vadd.f32 %v2147, %v1492
      %v2149 = vadd.f32 %v2148, %v1493
      %v2150 = vadd.f32 %v2149, %v1494
      %v2151 = vadd.f32 %v2150, %v1495
      %v2152 = vadd.f32 %v2151, %v1496
      %v2153 = vadd.f32 %v2152, %v1497
      %v2154 = vadd.f32 %v2153, %v1498
      %v2155 = vadd.f32 %v2154, %v1499
      %v2156 = vadd.f32 %v2155, %v1500
      %v2157 = vadd.f32 %v2156, %v1501
      %v2158 = vadd.f32 %v2157, %v1502
      %v2159 = vadd.f32 %v2158, %v1503
      %v2160 = vadd.f32 %v2159, %v1504
      %v2161 = vadd.f32 %v2160, %v1505
      %v2162 = vadd.f32 %v2161, %v1506
      %v2163 = vadd.f32 %v2162, %v1507
      %v2164 = vadd.f32 %v2163, %v1508
      %v2165 = vrot.slane %v2164, 4
      %v2166 = vadd.f32 %v2164, %v2165
      %v2167 = vrot.slane %v2166, 2
      %v2168 = vadd.f32 %v2166, %v2167
      %v2169 = vrot.slane %v2168, 1
      %v2170 = vadd.f32 %v2168, %v2169
      %v2171 = vadd.f32 %v2101, %v2170
      %2172 = vst [vmem:[%s344] sm:$0x1] %v2171
      %v2173 = vld [vmem:[%s348] sm:$0x1]
      %v2174 = vadd.f32 %v485, %v486
      %v2175 = vadd.f32 %v2174, %v487
      %v2176 = vadd.f32 %v2175, %v488
      %v2177 = vadd.f32 %v2176, %v489
      %v2178 = vadd.f32 %v2177, %v490
      %v2179 = vadd.f32 %v2178, %v491
      %v2180 = vadd.f32 %v2179, %v492
      %v2181 = vadd.f32 %v2180, %v493
      %v2182 = vadd.f32 %v2181, %v494
      %v2183 = vadd.f32 %v2182, %v495
      %v2184 = vadd.f32 %v2183, %v496
      %v2185 = vadd.f32 %v2184, %v497
      %v2186 = vadd.f32 %v2185, %v498
      %v2187 = vadd.f32 %v2186, %v499
      %v2188 = vadd.f32 %v2187, %v500
      %v2189 = vadd.f32 %v2188, %v501
      %v2190 = vadd.f32 %v2189, %v502
      %v2191 = vadd.f32 %v2190, %v503
      %v2192 = vadd.f32 %v2191, %v504
      %v2193 = vadd.f32 %v2192, %v505
      %v2194 = vadd.f32 %v2193, %v506
      %v2195 = vadd.f32 %v2194, %v507
      %v2196 = vadd.f32 %v2195, %v508
      %v2197 = vadd.f32 %v2196, %v509
      %v2198 = vadd.f32 %v2197, %v510
      %v2199 = vadd.f32 %v2198, %v511
      %v2200 = vadd.f32 %v2199, %v512
      %v2201 = vadd.f32 %v2200, %v513
      %v2202 = vadd.f32 %v2201, %v514
      %v2203 = vadd.f32 %v2202, %v515
      %v2204 = vadd.f32 %v2203, %v516
      %v2205 = vadd.f32 %v2204, %v517
      %v2206 = vadd.f32 %v2205, %v518
      %v2207 = vadd.f32 %v2206, %v519
      %v2208 = vadd.f32 %v2207, %v520
      %v2209 = vadd.f32 %v2208, %v521
      %v2210 = vadd.f32 %v2209, %v522
      %v2211 = vadd.f32 %v2210, %v523
      %v2212 = vadd.f32 %v2211, %v524
      %v2213 = vadd.f32 %v2212, %v525
      %v2214 = vadd.f32 %v2213, %v526
      %v2215 = vadd.f32 %v2214, %v527
      %v2216 = vadd.f32 %v2215, %v528
      %v2217 = vadd.f32 %v2216, %v529
      %v2218 = vadd.f32 %v2217, %v530
      %v2219 = vadd.f32 %v2218, %v531
      %v2220 = vadd.f32 %v2219, %v532
      %v2221 = vadd.f32 %v2220, %v533
      %v2222 = vadd.f32 %v2221, %v534
      %v2223 = vadd.f32 %v2222, %v535
      %v2224 = vadd.f32 %v2223, %v536
      %v2225 = vadd.f32 %v2224, %v537
      %v2226 = vadd.f32 %v2225, %v538
      %v2227 = vadd.f32 %v2226, %v539
      %v2228 = vadd.f32 %v2227, %v540
      %v2229 = vadd.f32 %v2228, %v541
      %v2230 = vadd.f32 %v2229, %v542
      %v2231 = vadd.f32 %v2230, %v543
      %v2232 = vadd.f32 %v2231, %v544
      %v2233 = vadd.f32 %v2232, %v545
      %v2234 = vadd.f32 %v2233, %v546
      %v2235 = vadd.f32 %v2234, %v547
      %v2236 = vadd.f32 %v2235, %v548
      %v2237 = vrot.slane %v2236, 4
      %v2238 = vadd.f32 %v2236, %v2237
      %v2239 = vrot.slane %v2238, 2
      %v2240 = vadd.f32 %v2238, %v2239
      %v2241 = vrot.slane %v2240, 1
      %v2242 = vadd.f32 %v2240, %v2241
      %v2243 = vadd.f32 %v2173, %v2242
      %2244 = vst [vmem:[%s348] sm:$0x1] %v2243
      %s2245 = sadd.s32 %s22, %s23
      %s2246 = smul.u32 64, %s2245
      %p2247 = scmp.lt.s32.totalorder %s2246, 127
      %s2248 = scalar_select %p2247, %s2246, 127
      %s2249 = smul.addr %s2248, 8
      %s2250 = scalar_lea.vmem %s2, %s2249
      %p2251 = scmp.lt.s32.totalorder %s22, 1
      %s2252 = scalar_select %p2251, %s22, 1
      %s2253 = smul.addr %s2252, 8
      %s2254 = scalar_lea.vmem %s3, %s2253
      %p2255 = scmp.lt.s32.totalorder %s22, 1
      %s2256 = scalar_select %p2255, %s22, 1
      %s2257 = smul.addr %s2256, 8
      %s2258 = scalar_lea.vmem %s4, %s2257
      %p2259 = scmp.lt.s32.totalorder %s22, 1
      %s2260 = scalar_select %p2259, %s22, 1
      %s2261 = smul.addr %s2260, 8
      %s2262 = scalar_lea.vmem %s5, %s2261
      %p2263 = scmp.lt.s32.totalorder %s22, 1
      %s2264 = scalar_select %p2263, %s22, 1
      %s2265 = smul.addr %s2264, 8
      %s2266 = scalar_lea.vmem %s6, %s2265
      // Predicated region
      $region33: #{dice_lovasz_bce_loss.2} parent=27 // pred_check
        %p2267 = pneg %p106
      $region34: #{dice_lovasz_bce_loss.2} parent=27 // pred_check_branch
        %2269 = sbr.rel (%p2267) target = $region36
      $region35: #{dice_lovasz_bce_loss.2} parent=27 // pred_region
        %s2270 = sadd.s32 %s22, %s23
        %s2271 = smul.u32 64, %s2270
      $region36: #{dice_lovasz_bce_loss.2} parent=27 // pred_fallthru
        _
      // Predicated region
      $region37: #{dice_lovasz_bce_loss.2} parent=27 // pred_check
        %p2272 = pneg %p132
      $region38: #{dice_lovasz_bce_loss.2} parent=27 // pred_check_branch
        %2274 = sbr.rel (%p2272) target = $region40
      $region39: #{dice_lovasz_bce_loss.2} parent=27 // pred_region
        _
      $region40: #{dice_lovasz_bce_loss.2} parent=27 // pred_fallthru
        _
      // Predicated region
      $region41: #{dice_lovasz_bce_loss.2} parent=27 // pred_check
        %p2275 = pneg %p158
      $region42: #{dice_lovasz_bce_loss.2} parent=27 // pred_check_branch
        %2277 = sbr.rel (%p2275) target = $region44
      $region43: #{dice_lovasz_bce_loss.2} parent=27 // pred_region
        _
      $region44: #{dice_lovasz_bce_loss.2} parent=27 // pred_fallthru
        _
      // Predicated region
      $region45: #{dice_lovasz_bce_loss.2} parent=27 // pred_check
        %p2278 = pneg %p184
      $region46: #{dice_lovasz_bce_loss.2} parent=27 // pred_check_branch
        %2280 = sbr.rel (%p2278) target = $region48
      $region47: #{dice_lovasz_bce_loss.2} parent=27 // pred_region
        _
      $region48: #{dice_lovasz_bce_loss.2} parent=27 // pred_fallthru
        _
      // Predicated region
      $region49: #{dice_lovasz_bce_loss.2} parent=27 // pred_check
        %p2281 = pneg %p210
      $region50: #{dice_lovasz_bce_loss.2} parent=27 // pred_check_branch
        %2283 = sbr.rel (%p2281) target = $region52
      $region51: #{dice_lovasz_bce_loss.2} parent=27 // pred_region
        _
      $region52: #{dice_lovasz_bce_loss.2} parent=27 // pred_fallthru
        _
    $region28: #{dice_lovasz_bce_loss.2} parent=5 // pred_fallthru
      _
    %p2284 = scmp.le.s32.totalorder 2, %s13
    // Predicated region
    $region53: #{dice_lovasz_bce_loss.2} parent=5 // pred_check
      %p2285 = pneg %p2284
    $region54: #{dice_lovasz_bce_loss.2} parent=5 // pred_check_branch
      %2287 = sbr.rel (%p2285) target = $region56
    $region55: #{dice_lovasz_bce_loss.2} parent=5 // pred_region
      %s2288 = ssub.s32 %s13, 2
      // Predicated region
      $region57: #{dice_lovasz_bce_loss.2} parent=55 // pred_check
        %p2289 = pneg %p112
      $region58: #{dice_lovasz_bce_loss.2} parent=55 // pred_check_branch
        %2291 = sbr.rel (%p2289) target = $region60
      $region59: #{dice_lovasz_bce_loss.2} parent=55 // pred_region
        %s2292 = sadd.s32 %s24, %s25
        %s2293 = smul.u32 64, %s2292
        %p2294 = scmp.lt.s32.totalorder %s2293, 127
        %s2295 = scalar_select %p2294, %s2293, 127
        %s2296 = smul.addr %s2295, 8
        %s2297 = scalar_lea.vmem %s2, %s2296
      $region60: #{dice_lovasz_bce_loss.2} parent=55 // pred_fallthru
        _
      // Predicated region
      $region61: #{dice_lovasz_bce_loss.2} parent=55 // pred_check
        %p2298 = pneg %p138
      $region62: #{dice_lovasz_bce_loss.2} parent=55 // pred_check_branch
        %2300 = sbr.rel (%p2298) target = $region64
      $region63: #{dice_lovasz_bce_loss.2} parent=55 // pred_region
        %p2301 = scmp.lt.s32.totalorder %s24, 1
        %s2302 = scalar_select %p2301, %s24, 1
        %s2303 = smul.addr %s2302, 8
        %s2304 = scalar_lea.vmem %s3, %s2303
      $region64: #{dice_lovasz_bce_loss.2} parent=55 // pred_fallthru
        _
      // Predicated region
      $region65: #{dice_lovasz_bce_loss.2} parent=55 // pred_check
        %p2305 = pneg %p164
      $region66: #{dice_lovasz_bce_loss.2} parent=55 // pred_check_branch
        %2307 = sbr.rel (%p2305) target = $region68
      $region67: #{dice_lovasz_bce_loss.2} parent=55 // pred_region
        %p2308 = scmp.lt.s32.totalorder %s24, 1
        %s2309 = scalar_select %p2308, %s24, 1
        %s2310 = smul.addr %s2309, 8
        %s2311 = scalar_lea.vmem %s4, %s2310
      $region68: #{dice_lovasz_bce_loss.2} parent=55 // pred_fallthru
        _
      // Predicated region
      $region69: #{dice_lovasz_bce_loss.2} parent=55 // pred_check
        %p2312 = pneg %p190
      $region70: #{dice_lovasz_bce_loss.2} parent=55 // pred_check_branch
        %2314 = sbr.rel (%p2312) target = $region72
      $region71: #{dice_lovasz_bce_loss.2} parent=55 // pred_region
        %p2315 = scmp.lt.s32.totalorder %s24, 1
        %s2316 = scalar_select %p2315, %s24, 1
        %s2317 = smul.addr %s2316, 8
        %s2318 = scalar_lea.vmem %s5, %s2317
      $region72: #{dice_lovasz_bce_loss.2} parent=55 // pred_fallthru
        _
      // Predicated region
      $region73: #{dice_lovasz_bce_loss.2} parent=55 // pred_check
        %p2319 = pneg %p216
      $region74: #{dice_lovasz_bce_loss.2} parent=55 // pred_check_branch
        %2321 = sbr.rel (%p2319) target = $region76
      $region75: #{dice_lovasz_bce_loss.2} parent=55 // pred_region
        %p2322 = scmp.lt.s32.totalorder %s24, 1
        %s2323 = scalar_select %p2322, %s24, 1
        %s2324 = smul.addr %s2323, 8
        %s2325 = scalar_lea.vmem %s6, %s2324
      $region76: #{dice_lovasz_bce_loss.2} parent=55 // pred_fallthru
        _
    $region56: #{dice_lovasz_bce_loss.2} parent=5 // pred_fallthru
      _
  $region6: #{dice_lovasz_bce_loss.2} parent=0 // loop_footer
    %s17 = sadd.s32 1, %s13
  $region7: #{dice_lovasz_bce_loss.2} parent=0 // loop_footer_branch
    %12 = sbr.rel target = $region3
  $region8: #{dice_lovasz_bce_loss.2} parent=0 // loop_exit
    _

// kernel: dice_lovasz_bce_loss.3
$region0: #{dice_lovasz_bce_loss.3}
  #allocation0 [shape = 'u32[]', space=smem, size = 0x4, offset = 0x4, fixed_abs, tag = 'smem constant byte address 0x4 - core index']
  #allocation1 [shape = 'u32[144,128]{1,0:T(1,128)}', space=vmem, size = 0x12000, scoped, tag = 'internal scratch']
  #allocation2 [shape = 'f32[1,128]{1,0:T(1,128)}', space=vmem, size = 0x200, scoped, tag = 'scratch operand']
  #allocation3 [shape = 'bf16[128,128]{1,0:T(8,128)(2,1)}', space=vmem, size = 0x8000, scoped, tag = 'scratch operand']
  #allocation4 [shape = 'bf16[512,512]{1,0:T(8,128)(2,1)}', space=vmem, size = 0x80000, scoped, tag = 'scratch operand']
  #allocation5 [shape = 'f32[512,128]{1,0:T(8,128)}', space=vmem, size = 0x40000, scoped, tag = 'scratch operand']
  %s0 = inlined_call_operand.vmem [shape: f32[1024,128], index: 0, kind: input, shape index: {}]
  %s1 = inlined_call_operand.vmem [shape: bf16[1024,128], index: 1, kind: input, shape index: {}]
  %s2 = inlined_call_operand.vmem [shape: f32[1,128], index: 2, kind: input, shape index: {}]
  %s3 = inlined_call_operand.vmem [shape: f32[1,128], index: 3, kind: output, shape index: {}]
  %s4 = sld [smem:[#allocation0]]
  $region49: #{dice_lovasz_bce_loss.3} parent=0
    _
  %s6 = ssub.s32 1, %s4
  %s7 = scalar_select 0, %s6, %s4
  loop: start=0, step=1, limit=4
  $region2: #{dice_lovasz_bce_loss.3} parent=0 // loop_pre_header
    _
  $region3: #{dice_lovasz_bce_loss.3} parent=0 // loop_header
    %s9 = sphi 0, %s13
    %p10 = scmp.ge.s32.totalorder %s9, 4
    %s19 = sphi 0, %s21
    %s22 = sphi 0, %s19
    %s23 = sphi 0, %s22
    %s39 = sphi 0, %s23
    %s45 = sphi 0, %s47
    %s48 = sphi 0, %s45
    %s49 = sphi 0, %s48
    %s65 = sphi 0, %s49
    %s69 = sphi 0, %s69
    %s71 = sphi 0, %s69
    %s72 = sphi 0, %s71
    %s86 = sphi 0, %s72
    %s90 = sphi 0, %s90
    %s92 = sphi 0, %s90
    %s93 = sphi 0, %s92
    %s107 = sphi 0, %s93
  $region4: #{dice_lovasz_bce_loss.3} parent=0 // loop_header_branch
    %12 = sbr.rel (%p10) target = $region8
  $region5: #{dice_lovasz_bce_loss.3} parent=0 // loop_body
    %s14 = ssub.s32 %s9, 1
    %s15 = ssub.s32 %s9, 2
    %s16 = sadd.s32 %s9, 1
    %s17 = ssub.s32 %s9, %s16
    %p18 = scmp.eq.s32.totalorder %s17, 0
    %s20 = sadd.s32 %s19, 1
    %s21 = scalar_select %p18, %s19, %s20
    %p24 = pneg %p18
    %p25 = scmp.eq.s32.totalorder %s9, 1
    %p26 = por %p24, %p25
    %p27 = scmp.ne.s32.totalorder %s19, %s22
    %p28 = scmp.eq.s32.totalorder %s9, 0
    %p29 = por %p27, %p28
    %p30 = scmp.ne.s32.totalorder %s19, %s22
    %p31 = scmp.eq.s32.totalorder %s14, 1
    %p32 = por %p30, %p31
    %p33 = scmp.ne.s32.totalorder %s22, %s23
    %p34 = scmp.eq.s32.totalorder %s14, 0
    %p35 = por %p33, %p34
    %p36 = scmp.ne.s32.totalorder %s22, %s23
    %p37 = scmp.eq.s32.totalorder %s15, 1
    %p38 = por %p36, %p37
    %p40 = scmp.ne.s32.totalorder %s23, %s39
    %p41 = scmp.eq.s32.totalorder %s15, 0
    %p42 = por %p40, %p41
    %s43 = ssub.s32 %s9, %s16
    %p44 = scmp.eq.s32.totalorder %s43, 0
    %s46 = sadd.s32 %s45, 1
    %s47 = scalar_select %p44, %s45, %s46
    %p50 = pneg %p44
    %p51 = scmp.eq.s32.totalorder %s9, 1
    %p52 = por %p50, %p51
    %p53 = scmp.ne.s32.totalorder %s45, %s48
    %p54 = scmp.eq.s32.totalorder %s9, 0
    %p55 = por %p53, %p54
    %p56 = scmp.ne.s32.totalorder %s45, %s48
    %p57 = scmp.eq.s32.totalorder %s14, 1
    %p58 = por %p56, %p57
    %p59 = scmp.ne.s32.totalorder %s48, %s49
    %p60 = scmp.eq.s32.totalorder %s14, 0
    %p61 = por %p59, %p60
    %p62 = scmp.ne.s32.totalorder %s48, %s49
    %p63 = scmp.eq.s32.totalorder %s15, 1
    %p64 = por %p62, %p63
    %p66 = scmp.ne.s32.totalorder %s49, %s65
    %p67 = scmp.eq.s32.totalorder %s15, 0
    %p68 = por %p66, %p67
    %s70 = sadd.s32 %s69, 1
    %p73 = scmp.eq.s32.totalorder %s9, 1
    %p74 = scmp.ne.s32.totalorder %s69, %s71
    %p75 = scmp.eq.s32.totalorder %s9, 0
    %p76 = por %p74, %p75
    %p77 = scmp.ne.s32.totalorder %s69, %s71
    %p78 = scmp.eq.s32.totalorder %s14, 1
    %p79 = por %p77, %p78
    %p80 = scmp.ne.s32.totalorder %s71, %s72
    %p81 = scmp.eq.s32.totalorder %s14, 0
    %p82 = por %p80, %p81
    %p83 = scmp.ne.s32.totalorder %s71, %s72
    %p84 = scmp.eq.s32.totalorder %s15, 1
    %p85 = por %p83, %p84
    %p87 = scmp.ne.s32.totalorder %s72, %s86
    %p88 = scmp.eq.s32.totalorder %s15, 0
    %p89 = por %p87, %p88
    %s91 = sadd.s32 %s90, 1
    %p94 = scmp.eq.s32.totalorder %s9, 1
    %p95 = scmp.ne.s32.totalorder %s90, %s92
    %p96 = scmp.eq.s32.totalorder %s9, 0
    %p97 = por %p95, %p96
    %p98 = scmp.ne.s32.totalorder %s90, %s92
    %p99 = scmp.eq.s32.totalorder %s14, 1
    %p100 = por %p98, %p99
    %p101 = scmp.ne.s32.totalorder %s92, %s93
    %p102 = scmp.eq.s32.totalorder %s14, 0
    %p103 = por %p101, %p102
    %p104 = scmp.ne.s32.totalorder %s92, %s93
    %p105 = scmp.eq.s32.totalorder %s15, 1
    %p106 = por %p104, %p105
    %p108 = scmp.ne.s32.totalorder %s93, %s107
    %p109 = scmp.eq.s32.totalorder %s15, 0
    %p110 = por %p108, %p109
    %p111 = scmp.le.s32.totalorder 1, %s9
    %p112 = scmp.lt.s32.totalorder %s9, 3
    %p113 = pnand %p111, %p112
    %p114 = pneg %p113
    // Predicated region
    $region9: #{dice_lovasz_bce_loss.3} parent=5 // pred_check
      _
    $region10: #{dice_lovasz_bce_loss.3} parent=5 // pred_check_branch
      %116 = sbr.rel (%p113) target = $region12
    $region11: #{dice_lovasz_bce_loss.3} parent=5 // pred_region
      %s117 = ssub.s32 %s9, 1
      // Predicated region
      $region13: #{dice_lovasz_bce_loss.3} parent=11 // pred_check
        %p118 = pneg %p82
      $region14: #{dice_lovasz_bce_loss.3} parent=11 // pred_check_branch
        %120 = sbr.rel (%p118) target = $region16
      $region15: #{dice_lovasz_bce_loss.3} parent=11 // pred_region
        _
      $region16: #{dice_lovasz_bce_loss.3} parent=11 // pred_fallthru
        _
    $region12: #{dice_lovasz_bce_loss.3} parent=5 // pred_fallthru
      _
    %p121 = scmp.lt.s32.totalorder %s9, 2
    // Predicated region
    $region17: #{dice_lovasz_bce_loss.3} parent=5 // pred_check
      %p122 = pneg %p121
    $region18: #{dice_lovasz_bce_loss.3} parent=5 // pred_check_branch
      %124 = sbr.rel (%p122) target = $region20
    $region19: #{dice_lovasz_bce_loss.3} parent=5 // pred_region
      // Predicated region
      $region21: #{dice_lovasz_bce_loss.3} parent=19 // pred_check
        %p125 = pneg %p29
      $region22: #{dice_lovasz_bce_loss.3} parent=19 // pred_check_branch
        %127 = sbr.rel (%p125) target = $region24
      $region23: #{dice_lovasz_bce_loss.3} parent=19 // pred_region
        %s128 = smul.u32 64, %s9
        %p129 = scmp.lt.s32.totalorder %s128, 127
        %s130 = scalar_select %p129, %s128, 127
        %s131 = smul.addr %s130, 8
        %s132 = scalar_lea.vmem %s0, %s131
        %s133 = smul.u32 64, %s9
      $region24: #{dice_lovasz_bce_loss.3} parent=19 // pred_fallthru
        _
      // Predicated region
      $region25: #{dice_lovasz_bce_loss.3} parent=19 // pred_check
        %p134 = pneg %p55
      $region26: #{dice_lovasz_bce_loss.3} parent=19 // pred_check_branch
        %136 = sbr.rel (%p134) target = $region28
      $region27: #{dice_lovasz_bce_loss.3} parent=19 // pred_region
        %s137 = smul.u32 64, %s9
        %p138 = scmp.lt.s32.totalorder %s137, 127
        %s139 = scalar_select %p138, %s137, 127
        %s140 = smul.addr %s139, 4
        %s141 = scalar_lea.vmem %s1, %s140
        %s142 = smul.u32 64, %s9
      $region28: #{dice_lovasz_bce_loss.3} parent=19 // pred_fallthru
        _
    $region20: #{dice_lovasz_bce_loss.3} parent=5 // pred_fallthru
      _
    %p143 = scmp.le.s32.totalorder 1, %s9
    %p144 = scmp.lt.s32.totalorder %s9, 3
    %p145 = pnand %p143, %p144
    %p146 = pneg %p145
    // Predicated region
    $region29: #{dice_lovasz_bce_loss.3} parent=5 // pred_check
      _
    $region30: #{dice_lovasz_bce_loss.3} parent=5 // pred_check_branch
      %148 = sbr.rel (%p145) target = $region32
    $region31: #{dice_lovasz_bce_loss.3} parent=5 // pred_region
      %s149 = ssub.s32 %s9, 1
      %s150 = smul.u32 64, %s14
      %p151 = scmp.lt.s32.totalorder %s150, 127
      %s152 = scalar_select %p151, %s150, 127
      %s153 = smul.addr %s152, 8
      %s154 = scalar_lea.vmem %s0, %s153
      %p155 = pneg %p35
      %p156 = pneg %p32
      %s157 = smul.u32 64, %s14
      %p158 = scmp.lt.s32.totalorder %s157, 127
      %s159 = scalar_select %p158, %s157, 127
      %s160 = smul.addr %s159, 4
      %s161 = scalar_lea.vmem %s1, %s160
      %p162 = pneg %p61
      %p163 = pneg %p58
      %p164 = pneg %p82
      %p165 = pneg %p79
      %p166 = pneg %p103
      %p167 = pneg %p100
      %s168 = smul.u32 64, %s14
      %p169 = scmp.lt.s32.totalorder %s168, 127
      %s170 = scalar_select %p169, %s168, 127
      %s171 = smul.addr %s170, 8
      %s172 = scalar_lea.vmem %s0, %s171
      %s173 = smul.u32 64, %s14
      %s174 = smul.u32 64, %s14
      %p175 = scmp.lt.s32.totalorder %s174, 127
      %s176 = scalar_select %p175, %s174, 127
      %s177 = smul.addr %s176, 4
      %s178 = scalar_lea.vmem %s1, %s177
      %s179 = smul.u32 64, %s14
      %p181 = scmp.eq.s32.totalorder %s14, 0
      // Predicated region
      $region33: #{dice_lovasz_bce_loss.3} parent=31 // pred_check
        %p182 = pneg %p181
      $region34: #{dice_lovasz_bce_loss.3} parent=31 // pred_check_branch
        %184 = sbr.rel (%p182) target = $region36
      $region35: #{dice_lovasz_bce_loss.3} parent=31 // pred_region
        %185 = vst [vmem:[%s3] sm:$0x1] 0.0
        %186 = vst [vmem:[#allocation2] sm:$0x1] 0.0
        %v187 = vlaneseq
        %v188 = vshrl.u32 %v187, 7
        %v189 = vadd.s32 %v188, 8
        %v190 = vadd.s32 %v188, 16
        %v191 = vadd.s32 %v188, 24
        %v192 = vadd.s32 %v188, 32
        %v193 = vadd.s32 %v188, 40
        %v194 = vadd.s32 %v188, 48
        %v195 = vadd.s32 %v188, 56
        %v196 = vadd.s32 %v188, 64
        %v197 = vadd.s32 %v188, 72
        %v198 = vadd.s32 %v188, 80
        %v199 = vadd.s32 %v188, 88
        %v200 = vadd.s32 %v188, 96
        %v201 = vadd.s32 %v188, 104
        %v202 = vadd.s32 %v188, 112
        %v203 = vadd.s32 %v188, 120
        %v204 = vlaneseq
        %v205 = vand.u32 %v204, 127
        %vm206 = vcmp.le.s32.totalorder %v188, %v205
        %vm207 = vcmp.le.s32.totalorder %v189, %v205
        %vm208 = vcmp.le.s32.totalorder %v190, %v205
        %vm209 = vcmp.le.s32.totalorder %v191, %v205
        %vm210 = vcmp.le.s32.totalorder %v192, %v205
        %vm211 = vcmp.le.s32.totalorder %v193, %v205
        %vm212 = vcmp.le.s32.totalorder %v194, %v205
        %vm213 = vcmp.le.s32.totalorder %v195, %v205
        %vm214 = vcmp.le.s32.totalorder %v196, %v205
        %vm215 = vcmp.le.s32.totalorder %v197, %v205
        %vm216 = vcmp.le.s32.totalorder %v198, %v205
        %vm217 = vcmp.le.s32.totalorder %v199, %v205
        %vm218 = vcmp.le.s32.totalorder %v200, %v205
        %vm219 = vcmp.le.s32.totalorder %v201, %v205
        %vm220 = vcmp.le.s32.totalorder %v202, %v205
        %vm221 = vcmp.le.s32.totalorder %v203, %v205
        %v222 = vsel %vm206, 1, 0
        %v223 = vsel %vm207, 1, 0
        %v224 = vsel %vm208, 1, 0
        %v225 = vsel %vm209, 1, 0
        %v226 = vsel %vm210, 1, 0
        %v227 = vsel %vm211, 1, 0
        %v228 = vsel %vm212, 1, 0
        %v229 = vsel %vm213, 1, 0
        %v230 = vsel %vm214, 1, 0
        %v231 = vsel %vm215, 1, 0
        %v232 = vsel %vm216, 1, 0
        %v233 = vsel %vm217, 1, 0
        %v234 = vsel %vm218, 1, 0
        %v235 = vsel %vm219, 1, 0
        %v236 = vsel %vm220, 1, 0
        %v237 = vsel %vm221, 1, 0
        %v238 = vcvt.s32.f32 %v222
        %v239 = vcvt.s32.f32 %v223
        %v240 = vcvt.s32.f32 %v224
        %v241 = vcvt.s32.f32 %v225
        %v242 = vcvt.s32.f32 %v226
        %v243 = vcvt.s32.f32 %v227
        %v244 = vcvt.s32.f32 %v228
        %v245 = vcvt.s32.f32 %v229
        %v246 = vcvt.s32.f32 %v230
        %v247 = vcvt.s32.f32 %v231
        %v248 = vcvt.s32.f32 %v232
        %v249 = vcvt.s32.f32 %v233
        %v250 = vcvt.s32.f32 %v234
        %v251 = vcvt.s32.f32 %v235
        %v252 = vcvt.s32.f32 %v236
        %v253 = vcvt.s32.f32 %v237
        %v254 = vpack.c.bf16 %v239, %v238
        %v255 = vpack.c.bf16 %v241, %v240
        %v256 = vpack.c.bf16 %v243, %v242
        %v257 = vpack.c.bf16 %v245, %v244
        %v258 = vpack.c.bf16 %v247, %v246
        %v259 = vpack.c.bf16 %v249, %v248
        %v260 = vpack.c.bf16 %v251, %v250
        %v261 = vpack.c.bf16 %v253, %v252
        %v270 = vunpack.c.l.b16 %v254
        %v271 = vunpack.c.h.b16 %v254
        %v272 = vunpack.c.l.b16 %v255
        %v273 = vunpack.c.h.b16 %v255
        %v274 = vunpack.c.l.b16 %v256
        %v275 = vunpack.c.h.b16 %v256
        %v276 = vunpack.c.l.b16 %v257
        %v277 = vunpack.c.h.b16 %v257
        %v278 = vunpack.c.l.b16 %v258
        %v279 = vunpack.c.h.b16 %v258
        %v280 = vunpack.c.l.b16 %v259
        %v281 = vunpack.c.h.b16 %v259
        %v282 = vunpack.c.l.b16 %v260
        %v283 = vunpack.c.h.b16 %v260
        %v284 = vunpack.c.l.b16 %v261
        %v285 = vunpack.c.h.b16 %v261
        %v286 = vpack.c.b16 %v270, %v270
        %v287 = vpack.c.b16 %v271, %v271
        %v288 = vpack.c.b16 %v272, %v272
        %v289 = vpack.c.b16 %v273, %v273
        %v290 = vpack.c.b16 %v274, %v274
        %v291 = vpack.c.b16 %v275, %v275
        %v292 = vpack.c.b16 %v276, %v276
        %v293 = vpack.c.b16 %v277, %v277
        %v294 = vpack.c.b16 %v278, %v278
        %v295 = vpack.c.b16 %v279, %v279
        %v296 = vpack.c.b16 %v280, %v280
        %v297 = vpack.c.b16 %v281, %v281
        %v298 = vpack.c.b16 %v282, %v282
        %v299 = vpack.c.b16 %v283, %v283
        %v300 = vpack.c.b16 %v284, %v284
        %v301 = vpack.c.b16 %v285, %v285
        %318 = vst [vmem:[#allocation3] sm:$0xf] %v286
        %319 = vst [vmem:[#allocation3 + $0x4] sm:$0xf] %v287
        %320 = vst [vmem:[#allocation3 + $0x8] sm:$0xf] %v288
        %321 = vst [vmem:[#allocation3 + $0xc] sm:$0xf] %v289
        %322 = vst [vmem:[#allocation3 + $0x10] sm:$0xf] %v290
        %323 = vst [vmem:[#allocation3 + $0x14] sm:$0xf] %v291
        %324 = vst [vmem:[#allocation3 + $0x18] sm:$0xf] %v292
        %325 = vst [vmem:[#allocation3 + $0x1c] sm:$0xf] %v293
        %326 = vst [vmem:[#allocation3 + $0x20] sm:$0xf] %v294
        %327 = vst [vmem:[#allocation3 + $0x24] sm:$0xf] %v295
        %328 = vst [vmem:[#allocation3 + $0x28] sm:$0xf] %v296
        %329 = vst [vmem:[#allocation3 + $0x2c] sm:$0xf] %v297
        %330 = vst [vmem:[#allocation3 + $0x30] sm:$0xf] %v298
        %331 = vst [vmem:[#allocation3 + $0x34] sm:$0xf] %v299
        %332 = vst [vmem:[#allocation3 + $0x38] sm:$0xf] %v300
        %333 = vst [vmem:[#allocation3 + $0x3c] sm:$0xf] %v301
        %v334 = vadd.s32 %v188, 128
        %v335 = vadd.s32 %v188, 136
        %v336 = vadd.s32 %v188, 144
        %v337 = vadd.s32 %v188, 152
        %v338 = vadd.s32 %v188, 160
        %v339 = vadd.s32 %v188, 168
        %v340 = vadd.s32 %v188, 176
        %v341 = vadd.s32 %v188, 184
        %v342 = vadd.s32 %v188, 192
        %v343 = vadd.s32 %v188, 200
        %v344 = vadd.s32 %v188, 208
        %v345 = vadd.s32 %v188, 216
        %v346 = vadd.s32 %v188, 224
        %v347 = vadd.s32 %v188, 232
        %v348 = vadd.s32 %v188, 240
        %v349 = vadd.s32 %v188, 248
        %v350 = vadd.s32 %v188, 256
        %v351 = vadd.s32 %v188, 264
        %v352 = vadd.s32 %v188, 272
        %v353 = vadd.s32 %v188, 280
        %v354 = vadd.s32 %v188, 288
        %v355 = vadd.s32 %v188, 296
        %v356 = vadd.s32 %v188, 304
        %v357 = vadd.s32 %v188, 312
        %v358 = vadd.s32 %v188, 320
        %v359 = vadd.s32 %v188, 328
        %v360 = vadd.s32 %v188, 336
        %v361 = vadd.s32 %v188, 344
        %v362 = vadd.s32 %v188, 352
        %v363 = vadd.s32 %v188, 360
        %v364 = vadd.s32 %v188, 368
        %v365 = vadd.s32 %v188, 376
        %v366 = vadd.s32 %v188, 384
        %v367 = vadd.s32 %v188, 392
        %v368 = vadd.s32 %v188, 400
        %v369 = vadd.s32 %v188, 408
        %v370 = vadd.s32 %v188, 416
        %v371 = vadd.s32 %v188, 424
        %v372 = vadd.s32 %v188, 432
        %v373 = vadd.s32 %v188, 440
        %v374 = vadd.s32 %v188, 448
        %v375 = vadd.s32 %v188, 456
        %v376 = vadd.s32 %v188, 464
        %v377 = vadd.s32 %v188, 472
        %v378 = vadd.s32 %v188, 480
        %v379 = vadd.s32 %v188, 488
        %v380 = vadd.s32 %v188, 496
        %v381 = vadd.s32 %v188, 504
        %v382 = vadd.s32 %v205, 128
        %v383 = vadd.s32 %v205, 256
        %v384 = vadd.s32 %v205, 384
        %vm385 = vcmp.lt.s32.totalorder %v205, %v188
        %vm386 = vcmp.lt.s32.totalorder %v382, %v188
        %vm387 = vcmp.lt.s32.totalorder %v383, %v188
        %vm388 = vcmp.lt.s32.totalorder %v384, %v188
        %vm389 = vcmp.lt.s32.totalorder %v205, %v189
        %vm390 = vcmp.lt.s32.totalorder %v382, %v189
        %vm391 = vcmp.lt.s32.totalorder %v383, %v189
        %vm392 = vcmp.lt.s32.totalorder %v384, %v189
        %vm393 = vcmp.lt.s32.totalorder %v205, %v190
        %vm394 = vcmp.lt.s32.totalorder %v382, %v190
        %vm395 = vcmp.lt.s32.totalorder %v383, %v190
        %vm396 = vcmp.lt.s32.totalorder %v384, %v190
        %vm397 = vcmp.lt.s32.totalorder %v205, %v191
        %vm398 = vcmp.lt.s32.totalorder %v382, %v191
        %vm399 = vcmp.lt.s32.totalorder %v383, %v191
        %vm400 = vcmp.lt.s32.totalorder %v384, %v191
        %vm401 = vcmp.lt.s32.totalorder %v205, %v192
        %vm402 = vcmp.lt.s32.totalorder %v382, %v192
        %vm403 = vcmp.lt.s32.totalorder %v383, %v192
        %vm404 = vcmp.lt.s32.totalorder %v384, %v192
        %vm405 = vcmp.lt.s32.totalorder %v205, %v193
        %vm406 = vcmp.lt.s32.totalorder %v382, %v193
        %vm407 = vcmp.lt.s32.totalorder %v383, %v193
        %vm408 = vcmp.lt.s32.totalorder %v384, %v193
        %vm409 = vcmp.lt.s32.totalorder %v205, %v194
        %vm410 = vcmp.lt.s32.totalorder %v382, %v194
        %vm411 = vcmp.lt.s32.totalorder %v383, %v194
        %vm412 = vcmp.lt.s32.totalorder %v384, %v194
        %vm413 = vcmp.lt.s32.totalorder %v205, %v195
        %vm414 = vcmp.lt.s32.totalorder %v382, %v195
        %vm415 = vcmp.lt.s32.totalorder %v383, %v195
        %vm416 = vcmp.lt.s32.totalorder %v384, %v195
        %vm417 = vcmp.lt.s32.totalorder %v205, %v196
        %vm418 = vcmp.lt.s32.totalorder %v382, %v196
        %vm419 = vcmp.lt.s32.totalorder %v383, %v196
        %vm420 = vcmp.lt.s32.totalorder %v384, %v196
        %vm421 = vcmp.lt.s32.totalorder %v205, %v197
        %vm422 = vcmp.lt.s32.totalorder %v382, %v197
        %vm423 = vcmp.lt.s32.totalorder %v383, %v197
        %vm424 = vcmp.lt.s32.totalorder %v384, %v197
        %vm425 = vcmp.lt.s32.totalorder %v205, %v198
        %vm426 = vcmp.lt.s32.totalorder %v382, %v198
        %vm427 = vcmp.lt.s32.totalorder %v383, %v198
        %vm428 = vcmp.lt.s32.totalorder %v384, %v198
        %vm429 = vcmp.lt.s32.totalorder %v205, %v199
        %vm430 = vcmp.lt.s32.totalorder %v382, %v199
        %vm431 = vcmp.lt.s32.totalorder %v383, %v199
        %vm432 = vcmp.lt.s32.totalorder %v384, %v199
        %vm433 = vcmp.lt.s32.totalorder %v205, %v200
        %vm434 = vcmp.lt.s32.totalorder %v382, %v200
        %vm435 = vcmp.lt.s32.totalorder %v383, %v200
        %vm436 = vcmp.lt.s32.totalorder %v384, %v200
        %vm437 = vcmp.lt.s32.totalorder %v205, %v201
        %vm438 = vcmp.lt.s32.totalorder %v382, %v201
        %vm439 = vcmp.lt.s32.totalorder %v383, %v201
        %vm440 = vcmp.lt.s32.totalorder %v384, %v201
        %vm441 = vcmp.lt.s32.totalorder %v205, %v202
        %vm442 = vcmp.lt.s32.totalorder %v382, %v202
        %vm443 = vcmp.lt.s32.totalorder %v383, %v202
        %vm444 = vcmp.lt.s32.totalorder %v384, %v202
        %vm445 = vcmp.lt.s32.totalorder %v205, %v203
        %vm446 = vcmp.lt.s32.totalorder %v382, %v203
        %vm447 = vcmp.lt.s32.totalorder %v383, %v203
        %vm448 = vcmp.lt.s32.totalorder %v384, %v203
        %vm449 = vcmp.lt.s32.totalorder %v205, %v334
        %vm450 = vcmp.lt.s32.totalorder %v382, %v334
        %vm451 = vcmp.lt.s32.totalorder %v383, %v334
        %vm452 = vcmp.lt.s32.totalorder %v384, %v334
        %vm453 = vcmp.lt.s32.totalorder %v205, %v335
        %vm454 = vcmp.lt.s32.totalorder %v382, %v335
        %vm455 = vcmp.lt.s32.totalorder %v383, %v335
        %vm456 = vcmp.lt.s32.totalorder %v384, %v335
        %vm457 = vcmp.lt.s32.totalorder %v205, %v336
        %vm458 = vcmp.lt.s32.totalorder %v382, %v336
        %vm459 = vcmp.lt.s32.totalorder %v383, %v336
        %vm460 = vcmp.lt.s32.totalorder %v384, %v336
        %vm461 = vcmp.lt.s32.totalorder %v205, %v337
        %vm462 = vcmp.lt.s32.totalorder %v382, %v337
        %vm463 = vcmp.lt.s32.totalorder %v383, %v337
        %vm464 = vcmp.lt.s32.totalorder %v384, %v337
        %vm465 = vcmp.lt.s32.totalorder %v205, %v338
        %vm466 = vcmp.lt.s32.totalorder %v382, %v338
        %vm467 = vcmp.lt.s32.totalorder %v383, %v338
        %vm468 = vcmp.lt.s32.totalorder %v384, %v338
        %vm469 = vcmp.lt.s32.totalorder %v205, %v339
        %vm470 = vcmp.lt.s32.totalorder %v382, %v339
        %vm471 = vcmp.lt.s32.totalorder %v383, %v339
        %vm472 = vcmp.lt.s32.totalorder %v384, %v339
        %vm473 = vcmp.lt.s32.totalorder %v205, %v340
        %vm474 = vcmp.lt.s32.totalorder %v382, %v340
        %vm475 = vcmp.lt.s32.totalorder %v383, %v340
        %vm476 = vcmp.lt.s32.totalorder %v384, %v340
        %vm477 = vcmp.lt.s32.totalorder %v205, %v341
        %vm478 = vcmp.lt.s32.totalorder %v382, %v341
        %vm479 = vcmp.lt.s32.totalorder %v383, %v341
        %vm480 = vcmp.lt.s32.totalorder %v384, %v341
        %vm481 = vcmp.lt.s32.totalorder %v205, %v342
        %vm482 = vcmp.lt.s32.totalorder %v382, %v342
        %vm483 = vcmp.lt.s32.totalorder %v383, %v342
        %vm484 = vcmp.lt.s32.totalorder %v384, %v342
        %vm485 = vcmp.lt.s32.totalorder %v205, %v343
        %vm486 = vcmp.lt.s32.totalorder %v382, %v343
        %vm487 = vcmp.lt.s32.totalorder %v383, %v343
        %vm488 = vcmp.lt.s32.totalorder %v384, %v343
        %vm489 = vcmp.lt.s32.totalorder %v205, %v344
        %vm490 = vcmp.lt.s32.totalorder %v382, %v344
        %vm491 = vcmp.lt.s32.totalorder %v383, %v344
        %vm492 = vcmp.lt.s32.totalorder %v384, %v344
        %vm493 = vcmp.lt.s32.totalorder %v205, %v345
        %vm494 = vcmp.lt.s32.totalorder %v382, %v345
        %vm495 = vcmp.lt.s32.totalorder %v383, %v345
        %vm496 = vcmp.lt.s32.totalorder %v384, %v345
        %vm497 = vcmp.lt.s32.totalorder %v205, %v346
        %vm498 = vcmp.lt.s32.totalorder %v382, %v346
        %vm499 = vcmp.lt.s32.totalorder %v383, %v346
        %vm500 = vcmp.lt.s32.totalorder %v384, %v346
        %vm501 = vcmp.lt.s32.totalorder %v205, %v347
        %vm502 = vcmp.lt.s32.totalorder %v382, %v347
        %vm503 = vcmp.lt.s32.totalorder %v383, %v347
        %vm504 = vcmp.lt.s32.totalorder %v384, %v347
        %vm505 = vcmp.lt.s32.totalorder %v205, %v348
        %vm506 = vcmp.lt.s32.totalorder %v382, %v348
        %vm507 = vcmp.lt.s32.totalorder %v383, %v348
        %vm508 = vcmp.lt.s32.totalorder %v384, %v348
        %vm509 = vcmp.lt.s32.totalorder %v205, %v349
        %vm510 = vcmp.lt.s32.totalorder %v382, %v349
        %vm511 = vcmp.lt.s32.totalorder %v383, %v349
        %vm512 = vcmp.lt.s32.totalorder %v384, %v349
        %vm513 = vcmp.lt.s32.totalorder %v205, %v350
        %vm514 = vcmp.lt.s32.totalorder %v382, %v350
        %vm515 = vcmp.lt.s32.totalorder %v383, %v350
        %vm516 = vcmp.lt.s32.totalorder %v384, %v350
        %vm517 = vcmp.lt.s32.totalorder %v205, %v351
        %vm518 = vcmp.lt.s32.totalorder %v382, %v351
        %vm519 = vcmp.lt.s32.totalorder %v383, %v351
        %vm520 = vcmp.lt.s32.totalorder %v384, %v351
        %vm521 = vcmp.lt.s32.totalorder %v205, %v352
        %vm522 = vcmp.lt.s32.totalorder %v382, %v352
        %vm523 = vcmp.lt.s32.totalorder %v383, %v352
        %vm524 = vcmp.lt.s32.totalorder %v384, %v352
        %vm525 = vcmp.lt.s32.totalorder %v205, %v353
        %vm526 = vcmp.lt.s32.totalorder %v382, %v353
        %vm527 = vcmp.lt.s32.totalorder %v383, %v353
        %vm528 = vcmp.lt.s32.totalorder %v384, %v353
        %vm529 = vcmp.lt.s32.totalorder %v205, %v354
        %vm530 = vcmp.lt.s32.totalorder %v382, %v354
        %vm531 = vcmp.lt.s32.totalorder %v383, %v354
        %vm532 = vcmp.lt.s32.totalorder %v384, %v354
        %vm533 = vcmp.lt.s32.totalorder %v205, %v355
        %vm534 = vcmp.lt.s32.totalorder %v382, %v355
        %vm535 = vcmp.lt.s32.totalorder %v383, %v355
        %vm536 = vcmp.lt.s32.totalorder %v384, %v355
        %vm537 = vcmp.lt.s32.totalorder %v205, %v356
        %vm538 = vcmp.lt.s32.totalorder %v382, %v356
        %vm539 = vcmp.lt.s32.totalorder %v383, %v356
        %vm540 = vcmp.lt.s32.totalorder %v384, %v356
        %vm541 = vcmp.lt.s32.totalorder %v205, %v357
        %vm542 = vcmp.lt.s32.totalorder %v382, %v357
        %vm543 = vcmp.lt.s32.totalorder %v383, %v357
        %vm544 = vcmp.lt.s32.totalorder %v384, %v357
        %vm545 = vcmp.lt.s32.totalorder %v205, %v358
        %vm546 = vcmp.lt.s32.totalorder %v382, %v358
        %vm547 = vcmp.lt.s32.totalorder %v383, %v358
        %vm548 = vcmp.lt.s32.totalorder %v384, %v358
        %vm549 = vcmp.lt.s32.totalorder %v205, %v359
        %vm550 = vcmp.lt.s32.totalorder %v382, %v359
        %vm551 = vcmp.lt.s32.totalorder %v383, %v359
        %vm552 = vcmp.lt.s32.totalorder %v384, %v359
        %vm553 = vcmp.lt.s32.totalorder %v205, %v360
        %vm554 = vcmp.lt.s32.totalorder %v382, %v360
        %vm555 = vcmp.lt.s32.totalorder %v383, %v360
        %vm556 = vcmp.lt.s32.totalorder %v384, %v360
        %vm557 = vcmp.lt.s32.totalorder %v205, %v361
        %vm558 = vcmp.lt.s32.totalorder %v382, %v361
        %vm559 = vcmp.lt.s32.totalorder %v383, %v361
        %vm560 = vcmp.lt.s32.totalorder %v384, %v361
        %vm561 = vcmp.lt.s32.totalorder %v205, %v362
        %vm562 = vcmp.lt.s32.totalorder %v382, %v362
        %vm563 = vcmp.lt.s32.totalorder %v383, %v362
        %vm564 = vcmp.lt.s32.totalorder %v384, %v362
        %vm565 = vcmp.lt.s32.totalorder %v205, %v363
        %vm566 = vcmp.lt.s32.totalorder %v382, %v363
        %vm567 = vcmp.lt.s32.totalorder %v383, %v363
        %vm568 = vcmp.lt.s32.totalorder %v384, %v363
        %vm569 = vcmp.lt.s32.totalorder %v205, %v364
        %vm570 = vcmp.lt.s32.totalorder %v382, %v364
        %vm571 = vcmp.lt.s32.totalorder %v383, %v364
        %vm572 = vcmp.lt.s32.totalorder %v384, %v364
        %vm573 = vcmp.lt.s32.totalorder %v205, %v365
        %vm574 = vcmp.lt.s32.totalorder %v382, %v365
        %vm575 = vcmp.lt.s32.totalorder %v383, %v365
        %vm576 = vcmp.lt.s32.totalorder %v384, %v365
        %vm577 = vcmp.lt.s32.totalorder %v205, %v366
        %vm578 = vcmp.lt.s32.totalorder %v382, %v366
        %vm579 = vcmp.lt.s32.totalorder %v383, %v366
        %vm580 = vcmp.lt.s32.totalorder %v384, %v366
        %vm581 = vcmp.lt.s32.totalorder %v205, %v367
        %vm582 = vcmp.lt.s32.totalorder %v382, %v367
        %vm583 = vcmp.lt.s32.totalorder %v383, %v367
        %vm584 = vcmp.lt.s32.totalorder %v384, %v367
        %vm585 = vcmp.lt.s32.totalorder %v205, %v368
        %vm586 = vcmp.lt.s32.totalorder %v382, %v368
        %vm587 = vcmp.lt.s32.totalorder %v383, %v368
        %vm588 = vcmp.lt.s32.totalorder %v384, %v368
        %vm589 = vcmp.lt.s32.totalorder %v205, %v369
        %vm590 = vcmp.lt.s32.totalorder %v382, %v369
        %vm591 = vcmp.lt.s32.totalorder %v383, %v369
        %vm592 = vcmp.lt.s32.totalorder %v384, %v369
        %vm593 = vcmp.lt.s32.totalorder %v205, %v370
        %vm594 = vcmp.lt.s32.totalorder %v382, %v370
        %vm595 = vcmp.lt.s32.totalorder %v383, %v370
        %vm596 = vcmp.lt.s32.totalorder %v384, %v370
        %vm597 = vcmp.lt.s32.totalorder %v205, %v371
        %vm598 = vcmp.lt.s32.totalorder %v382, %v371
        %vm599 = vcmp.lt.s32.totalorder %v383, %v371
        %vm600 = vcmp.lt.s32.totalorder %v384, %v371
        %vm601 = vcmp.lt.s32.totalorder %v205, %v372
        %vm602 = vcmp.lt.s32.totalorder %v382, %v372
        %vm603 = vcmp.lt.s32.totalorder %v383, %v372
        %vm604 = vcmp.lt.s32.totalorder %v384, %v372
        %vm605 = vcmp.lt.s32.totalorder %v205, %v373
        %vm606 = vcmp.lt.s32.totalorder %v382, %v373
        %vm607 = vcmp.lt.s32.totalorder %v383, %v373
        %vm608 = vcmp.lt.s32.totalorder %v384, %v373
        %vm609 = vcmp.lt.s32.totalorder %v205, %v374
        %vm610 = vcmp.lt.s32.totalorder %v382, %v374
        %vm611 = vcmp.lt.s32.totalorder %v383, %v374
        %vm612 = vcmp.lt.s32.totalorder %v384, %v374
        %vm613 = vcmp.lt.s32.totalorder %v205, %v375
        %vm614 = vcmp.lt.s32.totalorder %v382, %v375
        %vm615 = vcmp.lt.s32.totalorder %v383, %v375
        %vm616 = vcmp.lt.s32.totalorder %v384, %v375
        %vm617 = vcmp.lt.s32.totalorder %v205, %v376
        %vm618 = vcmp.lt.s32.totalorder %v382, %v376
        %vm619 = vcmp.lt.s32.totalorder %v383, %v376
        %vm620 = vcmp.lt.s32.totalorder %v384, %v376
        %vm621 = vcmp.lt.s32.totalorder %v205, %v377
        %vm622 = vcmp.lt.s32.totalorder %v382, %v377
        %vm623 = vcmp.lt.s32.totalorder %v383, %v377
        %vm624 = vcmp.lt.s32.totalorder %v384, %v377
        %vm625 = vcmp.lt.s32.totalorder %v205, %v378
        %vm626 = vcmp.lt.s32.totalorder %v382, %v378
        %vm627 = vcmp.lt.s32.totalorder %v383, %v378
        %vm628 = vcmp.lt.s32.totalorder %v384, %v378
        %vm629 = vcmp.lt.s32.totalorder %v205, %v379
        %vm630 = vcmp.lt.s32.totalorder %v382, %v379
        %vm631 = vcmp.lt.s32.totalorder %v383, %v379
        %vm632 = vcmp.lt.s32.totalorder %v384, %v379
        %vm633 = vcmp.lt.s32.totalorder %v205, %v380
        %vm634 = vcmp.lt.s32.totalorder %v382, %v380
        %vm635 = vcmp.lt.s32.totalorder %v383, %v380
        %vm636 = vcmp.lt.s32.totalorder %v384, %v380
        %vm637 = vcmp.lt.s32.totalorder %v205, %v381
        %vm638 = vcmp.lt.s32.totalorder %v382, %v381
        %vm639 = vcmp.lt.s32.totalorder %v383, %v381
        %vm640 = vcmp.lt.s32.totalorder %v384, %v381
        %v641 = vsel %vm385, 1, 0
        %v642 = vsel %vm386, 1, 0
        %v643 = vsel %vm387, 1, 0
        %v644 = vsel %vm388, 1, 0
        %v645 = vsel %vm389, 1, 0
        %v646 = vsel %vm390, 1, 0
        %v647 = vsel %vm391, 1, 0
        %v648 = vsel %vm392, 1, 0
        %v649 = vsel %vm393, 1, 0
        %v650 = vsel %vm394, 1, 0
        %v651 = vsel %vm395, 1, 0
        %v652 = vsel %vm396, 1, 0
        %v653 = vsel %vm397, 1, 0
        %v654 = vsel %vm398, 1, 0
        %v655 = vsel %vm399, 1, 0
        %v656 = vsel %vm400, 1, 0
        %v657 = vsel %vm401, 1, 0
        %v658 = vsel %vm402, 1, 0
        %v659 = vsel %vm403, 1, 0
        %v660 = vsel %vm404, 1, 0
        %v661 = vsel %vm405, 1, 0
        %v662 = vsel %vm406, 1, 0
        %v663 = vsel %vm407, 1, 0
        %v664 = vsel %vm408, 1, 0
        %v665 = vsel %vm409, 1, 0
        %v666 = vsel %vm410, 1, 0
        %v667 = vsel %vm411, 1, 0
        %v668 = vsel %vm412, 1, 0
        %v669 = vsel %vm413, 1, 0
        %v670 = vsel %vm414, 1, 0
        %v671 = vsel %vm415, 1, 0
        %v672 = vsel %vm416, 1, 0
        %v673 = vsel %vm417, 1, 0
        %v674 = vsel %vm418, 1, 0
        %v675 = vsel %vm419, 1, 0
        %v676 = vsel %vm420, 1, 0
        %v677 = vsel %vm421, 1, 0
        %v678 = vsel %vm422, 1, 0
        %v679 = vsel %vm423, 1, 0
        %v680 = vsel %vm424, 1, 0
        %v681 = vsel %vm425, 1, 0
        %v682 = vsel %vm426, 1, 0
        %v683 = vsel %vm427, 1, 0
        %v684 = vsel %vm428, 1, 0
        %v685 = vsel %vm429, 1, 0
        %v686 = vsel %vm430, 1, 0
        %v687 = vsel %vm431, 1, 0
        %v688 = vsel %vm432, 1, 0
        %v689 = vsel %vm433, 1, 0
        %v690 = vsel %vm434, 1, 0
        %v691 = vsel %vm435, 1, 0
        %v692 = vsel %vm436, 1, 0
        %v693 = vsel %vm437, 1, 0
        %v694 = vsel %vm438, 1, 0
        %v695 = vsel %vm439, 1, 0
        %v696 = vsel %vm440, 1, 0
        %v697 = vsel %vm441, 1, 0
        %v698 = vsel %vm442, 1, 0
        %v699 = vsel %vm443, 1, 0
        %v700 = vsel %vm444, 1, 0
        %v701 = vsel %vm445, 1, 0
        %v702 = vsel %vm446, 1, 0
        %v703 = vsel %vm447, 1, 0
        %v704 = vsel %vm448, 1, 0
        %v705 = vsel %vm449, 1, 0
        %v706 = vsel %vm450, 1, 0
        %v707 = vsel %vm451, 1, 0
        %v708 = vsel %vm452, 1, 0
        %v709 = vsel %vm453, 1, 0
        %v710 = vsel %vm454, 1, 0
        %v711 = vsel %vm455, 1, 0
        %v712 = vsel %vm456, 1, 0
        %v713 = vsel %vm457, 1, 0
        %v714 = vsel %vm458, 1, 0
        %v715 = vsel %vm459, 1, 0
        %v716 = vsel %vm460, 1, 0
        %v717 = vsel %vm461, 1, 0
        %v718 = vsel %vm462, 1, 0
        %v719 = vsel %vm463, 1, 0
        %v720 = vsel %vm464, 1, 0
        %v721 = vsel %vm465, 1, 0
        %v722 = vsel %vm466, 1, 0
        %v723 = vsel %vm467, 1, 0
        %v724 = vsel %vm468, 1, 0
        %v725 = vsel %vm469, 1, 0
        %v726 = vsel %vm470, 1, 0
        %v727 = vsel %vm471, 1, 0
        %v728 = vsel %vm472, 1, 0
        %v729 = vsel %vm473, 1, 0
        %v730 = vsel %vm474, 1, 0
        %v731 = vsel %vm475, 1, 0
        %v732 = vsel %vm476, 1, 0
        %v733 = vsel %vm477, 1, 0
        %v734 = vsel %vm478, 1, 0
        %v735 = vsel %vm479, 1, 0
        %v736 = vsel %vm480, 1, 0
        %v737 = vsel %vm481, 1, 0
        %v738 = vsel %vm482, 1, 0
        %v739 = vsel %vm483, 1, 0
        %v740 = vsel %vm484, 1, 0
        %v741 = vsel %vm485, 1, 0
        %v742 = vsel %vm486, 1, 0
        %v743 = vsel %vm487, 1, 0
        %v744 = vsel %vm488, 1, 0
        %v745 = vsel %vm489, 1, 0
        %v746 = vsel %vm490, 1, 0
        %v747 = vsel %vm491, 1, 0
        %v748 = vsel %vm492, 1, 0
        %v749 = vsel %vm493, 1, 0
        %v750 = vsel %vm494, 1, 0
        %v751 = vsel %vm495, 1, 0
        %v752 = vsel %vm496, 1, 0
        %v753 = vsel %vm497, 1, 0
        %v754 = vsel %vm498, 1, 0
        %v755 = vsel %vm499, 1, 0
        %v756 = vsel %vm500, 1, 0
        %v757 = vsel %vm501, 1, 0
        %v758 = vsel %vm502, 1, 0
        %v759 = vsel %vm503, 1, 0
        %v760 = vsel %vm504, 1, 0
        %v761 = vsel %vm505, 1, 0
        %v762 = vsel %vm506, 1, 0
        %v763 = vsel %vm507, 1, 0
        %v764 = vsel %vm508, 1, 0
        %v765 = vsel %vm509, 1, 0
        %v766 = vsel %vm510, 1, 0
        %v767 = vsel %vm511, 1, 0
        %v768 = vsel %vm512, 1, 0
        %v769 = vsel %vm513, 1, 0
        %v770 = vsel %vm514, 1, 0
        %v771 = vsel %vm515, 1, 0
        %v772 = vsel %vm516, 1, 0
        %v773 = vsel %vm517, 1, 0
        %v774 = vsel %vm518, 1, 0
        %v775 = vsel %vm519, 1, 0
        %v776 = vsel %vm520, 1, 0
        %v777 = vsel %vm521, 1, 0
        %v778 = vsel %vm522, 1, 0
        %v779 = vsel %vm523, 1, 0
        %v780 = vsel %vm524, 1, 0
        %v781 = vsel %vm525, 1, 0
        %v782 = vsel %vm526, 1, 0
        %v783 = vsel %vm527, 1, 0
        %v784 = vsel %vm528, 1, 0
        %v785 = vsel %vm529, 1, 0
        %v786 = vsel %vm530, 1, 0
        %v787 = vsel %vm531, 1, 0
        %v788 = vsel %vm532, 1, 0
        %v789 = vsel %vm533, 1, 0
        %v790 = vsel %vm534, 1, 0
        %v791 = vsel %vm535, 1, 0
        %v792 = vsel %vm536, 1, 0
        %v793 = vsel %vm537, 1, 0
        %v794 = vsel %vm538, 1, 0
        %v795 = vsel %vm539, 1, 0
        %v796 = vsel %vm540, 1, 0
        %v797 = vsel %vm541, 1, 0
        %v798 = vsel %vm542, 1, 0
        %v799 = vsel %vm543, 1, 0
        %v800 = vsel %vm544, 1, 0
        %v801 = vsel %vm545, 1, 0
        %v802 = vsel %vm546, 1, 0
        %v803 = vsel %vm547, 1, 0
        %v804 = vsel %vm548, 1, 0
        %v805 = vsel %vm549, 1, 0
        %v806 = vsel %vm550, 1, 0
        %v807 = vsel %vm551, 1, 0
        %v808 = vsel %vm552, 1, 0
        %v809 = vsel %vm553, 1, 0
        %v810 = vsel %vm554, 1, 0
        %v811 = vsel %vm555, 1, 0
        %v812 = vsel %vm556, 1, 0
        %v813 = vsel %vm557, 1, 0
        %v814 = vsel %vm558, 1, 0
        %v815 = vsel %vm559, 1, 0
        %v816 = vsel %vm560, 1, 0
        %v817 = vsel %vm561, 1, 0
        %v818 = vsel %vm562, 1, 0
        %v819 = vsel %vm563, 1, 0
        %v820 = vsel %vm564, 1, 0
        %v821 = vsel %vm565, 1, 0
        %v822 = vsel %vm566, 1, 0
        %v823 = vsel %vm567, 1, 0
        %v824 = vsel %vm568, 1, 0
        %v825 = vsel %vm569, 1, 0
        %v826 = vsel %vm570, 1, 0
        %v827 = vsel %vm571, 1, 0
        %v828 = vsel %vm572, 1, 0
        %v829 = vsel %vm573, 1, 0
        %v830 = vsel %vm574, 1, 0
        %v831 = vsel %vm575, 1, 0
        %v832 = vsel %vm576, 1, 0
        %v833 = vsel %vm577, 1, 0
        %v834 = vsel %vm578, 1, 0
        %v835 = vsel %vm579, 1, 0
        %v836 = vsel %vm580, 1, 0
        %v837 = vsel %vm581, 1, 0
        %v838 = vsel %vm582, 1, 0
        %v839 = vsel %vm583, 1, 0
        %v840 = vsel %vm584, 1, 0
        %v841 = vsel %vm585, 1, 0
        %v842 = vsel %vm586, 1, 0
        %v843 = vsel %vm587, 1, 0
        %v844 = vsel %vm588, 1, 0
        %v845 = vsel %vm589, 1, 0
        %v846 = vsel %vm590, 1, 0
        %v847 = vsel %vm591, 1, 0
        %v848 = vsel %vm592, 1, 0
        %v849 = vsel %vm593, 1, 0
        %v850 = vsel %vm594, 1, 0
        %v851 = vsel %vm595, 1, 0
        %v852 = vsel %vm596, 1, 0
        %v853 = vsel %vm597, 1, 0
        %v854 = vsel %vm598, 1, 0
        %v855 = vsel %vm599, 1, 0
        %v856 = vsel %vm600, 1, 0
        %v857 = vsel %vm601, 1, 0
        %v858 = vsel %vm602, 1, 0
        %v859 = vsel %vm603, 1, 0
        %v860 = vsel %vm604, 1, 0
        %v861 = vsel %vm605, 1, 0
        %v862 = vsel %vm606, 1, 0
        %v863 = vsel %vm607, 1, 0
        %v864 = vsel %vm608, 1, 0
        %v865 = vsel %vm609, 1, 0
        %v866 = vsel %vm610, 1, 0
        %v867 = vsel %vm611, 1, 0
        %v868 = vsel %vm612, 1, 0
        %v869 = vsel %vm613, 1, 0
        %v870 = vsel %vm614, 1, 0
        %v871 = vsel %vm615, 1, 0
        %v872 = vsel %vm616, 1, 0
        %v873 = vsel %vm617, 1, 0
        %v874 = vsel %vm618, 1, 0
        %v875 = vsel %vm619, 1, 0
        %v876 = vsel %vm620, 1, 0
        %v877 = vsel %vm621, 1, 0
        %v878 = vsel %vm622, 1, 0
        %v879 = vsel %vm623, 1, 0
        %v880 = vsel %vm624, 1, 0
        %v881 = vsel %vm625, 1, 0
        %v882 = vsel %vm626, 1, 0
        %v883 = vsel %vm627, 1, 0
        %v884 = vsel %vm628, 1, 0
        %v885 = vsel %vm629, 1, 0
        %v886 = vsel %vm630, 1, 0
        %v887 = vsel %vm631, 1, 0
        %v888 = vsel %vm632, 1, 0
        %v889 = vsel %vm633, 1, 0
        %v890 = vsel %vm634, 1, 0
        %v891 = vsel %vm635, 1, 0
        %v892 = vsel %vm636, 1, 0
        %v893 = vsel %vm637, 1, 0
        %v894 = vsel %vm638, 1, 0
        %v895 = vsel %vm639, 1, 0
        %v896 = vsel %vm640, 1, 0
        %v897 = vcvt.s32.f32 %v641
        %v898 = vcvt.s32.f32 %v642
        %v899 = vcvt.s32.f32 %v643
        %v900 = vcvt.s32.f32 %v644
        %v901 = vcvt.s32.f32 %v645
        %v902 = vcvt.s32.f32 %v646
        %v903 = vcvt.s32.f32 %v647
        %v904 = vcvt.s32.f32 %v648
        %v905 = vcvt.s32.f32 %v649
        %v906 = vcvt.s32.f32 %v650
        %v907 = vcvt.s32.f32 %v651
        %v908 = vcvt.s32.f32 %v652
        %v909 = vcvt.s32.f32 %v653
        %v910 = vcvt.s32.f32 %v654
        %v911 = vcvt.s32.f32 %v655
        %v912 = vcvt.s32.f32 %v656
        %v913 = vcvt.s32.f32 %v657
        %v914 = vcvt.s32.f32 %v658
        %v915 = vcvt.s32.f32 %v659
        %v916 = vcvt.s32.f32 %v660
        %v917 = vcvt.s32.f32 %v661
        %v918 = vcvt.s32.f32 %v662
        %v919 = vcvt.s32.f32 %v663
        %v920 = vcvt.s32.f32 %v664
        %v921 = vcvt.s32.f32 %v665
        %v922 = vcvt.s32.f32 %v666
        %v923 = vcvt.s32.f32 %v667
        %v924 = vcvt.s32.f32 %v668
        %v925 = vcvt.s32.f32 %v669
        %v926 = vcvt.s32.f32 %v670
        %v927 = vcvt.s32.f32 %v671
        %v928 = vcvt.s32.f32 %v672
        %v929 = vcvt.s32.f32 %v673
        %v930 = vcvt.s32.f32 %v674
        %v931 = vcvt.s32.f32 %v675
        %v932 = vcvt.s32.f32 %v676
        %v933 = vcvt.s32.f32 %v677
        %v934 = vcvt.s32.f32 %v678
        %v935 = vcvt.s32.f32 %v679
        %v936 = vcvt.s32.f32 %v680
        %v937 = vcvt.s32.f32 %v681
        %v938 = vcvt.s32.f32 %v682
        %v939 = vcvt.s32.f32 %v683
        %v940 = vcvt.s32.f32 %v684
        %v941 = vcvt.s32.f32 %v685
        %v942 = vcvt.s32.f32 %v686
        %v943 = vcvt.s32.f32 %v687
        %v944 = vcvt.s32.f32 %v688
        %v945 = vcvt.s32.f32 %v689
        %v946 = vcvt.s32.f32 %v690
        %v947 = vcvt.s32.f32 %v691
        %v948 = vcvt.s32.f32 %v692
        %v949 = vcvt.s32.f32 %v693
        %v950 = vcvt.s32.f32 %v694
        %v951 = vcvt.s32.f32 %v695
        %v952 = vcvt.s32.f32 %v696
        %v953 = vcvt.s32.f32 %v697
        %v954 = vcvt.s32.f32 %v698
        %v955 = vcvt.s32.f32 %v699
        %v956 = vcvt.s32.f32 %v700
        %v957 = vcvt.s32.f32 %v701
        %v958 = vcvt.s32.f32 %v702
        %v959 = vcvt.s32.f32 %v703
        %v960 = vcvt.s32.f32 %v704
        %v961 = vcvt.s32.f32 %v705
        %v962 = vcvt.s32.f32 %v706
        %v963 = vcvt.s32.f32 %v707
        %v964 = vcvt.s32.f32 %v708
        %v965 = vcvt.s32.f32 %v709
        %v966 = vcvt.s32.f32 %v710
        %v967 = vcvt.s32.f32 %v711
        %v968 = vcvt.s32.f32 %v712
        %v969 = vcvt.s32.f32 %v713
        %v970 = vcvt.s32.f32 %v714
        %v971 = vcvt.s32.f32 %v715
        %v972 = vcvt.s32.f32 %v716
        %v973 = vcvt.s32.f32 %v717
        %v974 = vcvt.s32.f32 %v718
        %v975 = vcvt.s32.f32 %v719
        %v976 = vcvt.s32.f32 %v720
        %v977 = vcvt.s32.f32 %v721
        %v978 = vcvt.s32.f32 %v722
        %v979 = vcvt.s32.f32 %v723
        %v980 = vcvt.s32.f32 %v724
        %v981 = vcvt.s32.f32 %v725
        %v982 = vcvt.s32.f32 %v726
        %v983 = vcvt.s32.f32 %v727
        %v984 = vcvt.s32.f32 %v728
        %v985 = vcvt.s32.f32 %v729
        %v986 = vcvt.s32.f32 %v730
        %v987 = vcvt.s32.f32 %v731
        %v988 = vcvt.s32.f32 %v732
        %v989 = vcvt.s32.f32 %v733
        %v990 = vcvt.s32.f32 %v734
        %v991 = vcvt.s32.f32 %v735
        %v992 = vcvt.s32.f32 %v736
        %v993 = vcvt.s32.f32 %v737
        %v994 = vcvt.s32.f32 %v738
        %v995 = vcvt.s32.f32 %v739
        %v996 = vcvt.s32.f32 %v740
        %v997 = vcvt.s32.f32 %v741
        %v998 = vcvt.s32.f32 %v742
        %v999 = vcvt.s32.f32 %v743
        %v1000 = vcvt.s32.f32 %v744
        %v1001 = vcvt.s32.f32 %v745
        %v1002 = vcvt.s32.f32 %v746
        %v1003 = vcvt.s32.f32 %v747
        %v1004 = vcvt.s32.f32 %v748
        %v1005 = vcvt.s32.f32 %v749
        %v1006 = vcvt.s32.f32 %v750
        %v1007 = vcvt.s32.f32 %v751
        %v1008 = vcvt.s32.f32 %v752
        %v1009 = vcvt.s32.f32 %v753
        %v1010 = vcvt.s32.f32 %v754
        %v1011 = vcvt.s32.f32 %v755
        %v1012 = vcvt.s32.f32 %v756
        %v1013 = vcvt.s32.f32 %v757
        %v1014 = vcvt.s32.f32 %v758
        %v1015 = vcvt.s32.f32 %v759
        %v1016 = vcvt.s32.f32 %v760
        %v1017 = vcvt.s32.f32 %v761
        %v1018 = vcvt.s32.f32 %v762
        %v1019 = vcvt.s32.f32 %v763
        %v1020 = vcvt.s32.f32 %v764
        %v1021 = vcvt.s32.f32 %v765
        %v1022 = vcvt.s32.f32 %v766
        %v1023 = vcvt.s32.f32 %v767
        %v1024 = vcvt.s32.f32 %v768
        %v1025 = vcvt.s32.f32 %v769
        %v1026 = vcvt.s32.f32 %v770
        %v1027 = vcvt.s32.f32 %v771
        %v1028 = vcvt.s32.f32 %v772
        %v1029 = vcvt.s32.f32 %v773
        %v1030 = vcvt.s32.f32 %v774
        %v1031 = vcvt.s32.f32 %v775
        %v1032 = vcvt.s32.f32 %v776
        %v1033 = vcvt.s32.f32 %v777
        %v1034 = vcvt.s32.f32 %v778
        %v1035 = vcvt.s32.f32 %v779
        %v1036 = vcvt.s32.f32 %v780
        %v1037 = vcvt.s32.f32 %v781
        %v1038 = vcvt.s32.f32 %v782
        %v1039 = vcvt.s32.f32 %v783
        %v1040 = vcvt.s32.f32 %v784
        %v1041 = vcvt.s32.f32 %v785
        %v1042 = vcvt.s32.f32 %v786
        %v1043 = vcvt.s32.f32 %v787
        %v1044 = vcvt.s32.f32 %v788
        %v1045 = vcvt.s32.f32 %v789
        %v1046 = vcvt.s32.f32 %v790
        %v1047 = vcvt.s32.f32 %v791
        %v1048 = vcvt.s32.f32 %v792
        %v1049 = vcvt.s32.f32 %v793
        %v1050 = vcvt.s32.f32 %v794
        %v1051 = vcvt.s32.f32 %v795
        %v1052 = vcvt.s32.f32 %v796
        %v1053 = vcvt.s32.f32 %v797
        %v1054 = vcvt.s32.f32 %v798
        %v1055 = vcvt.s32.f32 %v799
        %v1056 = vcvt.s32.f32 %v800
        %v1057 = vcvt.s32.f32 %v801
        %v1058 = vcvt.s32.f32 %v802
        %v1059 = vcvt.s32.f32 %v803
        %v1060 = vcvt.s32.f32 %v804
        %v1061 = vcvt.s32.f32 %v805
        %v1062 = vcvt.s32.f32 %v806
        %v1063 = vcvt.s32.f32 %v807
        %v1064 = vcvt.s32.f32 %v808
        %v1065 = vcvt.s32.f32 %v809
        %v1066 = vcvt.s32.f32 %v810
        %v1067 = vcvt.s32.f32 %v811
        %v1068 = vcvt.s32.f32 %v812
        %v1069 = vcvt.s32.f32 %v813
        %v1070 = vcvt.s32.f32 %v814
        %v1071 = vcvt.s32.f32 %v815
        %v1072 = vcvt.s32.f32 %v816
        %v1073 = vcvt.s32.f32 %v817
        %v1074 = vcvt.s32.f32 %v818
        %v1075 = vcvt.s32.f32 %v819
        %v1076 = vcvt.s32.f32 %v820
        %v1077 = vcvt.s32.f32 %v821
        %v1078 = vcvt.s32.f32 %v822
        %v1079 = vcvt.s32.f32 %v823
        %v1080 = vcvt.s32.f32 %v824
        %v1081 = vcvt.s32.f32 %v825
        %v1082 = vcvt.s32.f32 %v826
        %v1083 = vcvt.s32.f32 %v827
        %v1084 = vcvt.s32.f32 %v828
        %v1085 = vcvt.s32.f32 %v829
        %v1086 = vcvt.s32.f32 %v830
        %v1087 = vcvt.s32.f32 %v831
        %v1088 = vcvt.s32.f32 %v832
        %v1089 = vcvt.s32.f32 %v833
        %v1090 = vcvt.s32.f32 %v834
        %v1091 = vcvt.s32.f32 %v835
        %v1092 = vcvt.s32.f32 %v836
        %v1093 = vcvt.s32.f32 %v837
        %v1094 = vcvt.s32.f32 %v838
        %v1095 = vcvt.s32.f32 %v839
        %v1096 = vcvt.s32.f32 %v840
        %v1097 = vcvt.s32.f32 %v841
        %v1098 = vcvt.s32.f32 %v842
        %v1099 = vcvt.s32.f32 %v843
        %v1100 = vcvt.s32.f32 %v844
        %v1101 = vcvt.s32.f32 %v845
        %v1102 = vcvt.s32.f32 %v846
        %v1103 = vcvt.s32.f32 %v847
        %v1104 = vcvt.s32.f32 %v848
        %v1105 = vcvt.s32.f32 %v849
        %v1106 = vcvt.s32.f32 %v850
        %v1107 = vcvt.s32.f32 %v851
        %v1108 = vcvt.s32.f32 %v852
        %v1109 = vcvt.s32.f32 %v853
        %v1110 = vcvt.s32.f32 %v854
        %v1111 = vcvt.s32.f32 %v855
        %v1112 = vcvt.s32.f32 %v856
        %v1113 = vcvt.s32.f32 %v857
        %v1114 = vcvt.s32.f32 %v858
        %v1115 = vcvt.s32.f32 %v859
        %v1116 = vcvt.s32.f32 %v860
        %v1117 = vcvt.s32.f32 %v861
        %v1118 = vcvt.s32.f32 %v862
        %v1119 = vcvt.s32.f32 %v863
        %v1120 = vcvt.s32.f32 %v864
        %v1121 = vcvt.s32.f32 %v865
        %v1122 = vcvt.s32.f32 %v866
        %v1123 = vcvt.s32.f32 %v867
        %v1124 = vcvt.s32.f32 %v868
        %v1125 = vcvt.s32.f32 %v869
        %v1126 = vcvt.s32.f32 %v870
        %v1127 = vcvt.s32.f32 %v871
        %v1128 = vcvt.s32.f32 %v872
        %v1129 = vcvt.s32.f32 %v873
        %v1130 = vcvt.s32.f32 %v874
        %v1131 = vcvt.s32.f32 %v875
        %v1132 = vcvt.s32.f32 %v876
        %v1133 = vcvt.s32.f32 %v877
        %v1134 = vcvt.s32.f32 %v878
        %v1135 = vcvt.s32.f32 %v879
        %v1136 = vcvt.s32.f32 %v880
        %v1137 = vcvt.s32.f32 %v881
        %v1138 = vcvt.s32.f32 %v882
        %v1139 = vcvt.s32.f32 %v883
        %v1140 = vcvt.s32.f32 %v884
        %v1141 = vcvt.s32.f32 %v885
        %v1142 = vcvt.s32.f32 %v886
        %v1143 = vcvt.s32.f32 %v887
        %v1144 = vcvt.s32.f32 %v888
        %v1145 = vcvt.s32.f32 %v889
        %v1146 = vcvt.s32.f32 %v890
        %v1147 = vcvt.s32.f32 %v891
        %v1148 = vcvt.s32.f32 %v892
        %v1149 = vcvt.s32.f32 %v893
        %v1150 = vcvt.s32.f32 %v894
        %v1151 = vcvt.s32.f32 %v895
        %v1152 = vcvt.s32.f32 %v896
        %v1153 = vpack.c.bf16 %v901, %v897
        %v1154 = vpack.c.bf16 %v902, %v898
        %v1155 = vpack.c.bf16 %v903, %v899
        %v1156 = vpack.c.bf16 %v904, %v900
        %v1157 = vpack.c.bf16 %v909, %v905
        %v1158 = vpack.c.bf16 %v910, %v906
        %v1159 = vpack.c.bf16 %v911, %v907
        %v1160 = vpack.c.bf16 %v912, %v908
        %v1161 = vpack.c.bf16 %v917, %v913
        %v1162 = vpack.c.bf16 %v918, %v914
        %v1163 = vpack.c.bf16 %v919, %v915
        %v1164 = vpack.c.bf16 %v920, %v916
        %v1165 = vpack.c.bf16 %v925, %v921
        %v1166 = vpack.c.bf16 %v926, %v922
        %v1167 = vpack.c.bf16 %v927, %v923
        %v1168 = vpack.c.bf16 %v928, %v924
        %v1169 = vpack.c.bf16 %v933, %v929
        %v1170 = vpack.c.bf16 %v934, %v930
        %v1171 = vpack.c.bf16 %v935, %v931
        %v1172 = vpack.c.bf16 %v936, %v932
        %v1173 = vpack.c.bf16 %v941, %v937
        %v1174 = vpack.c.bf16 %v942, %v938
        %v1175 = vpack.c.bf16 %v943, %v939
        %v1176 = vpack.c.bf16 %v944, %v940
        %v1177 = vpack.c.bf16 %v949, %v945
        %v1178 = vpack.c.bf16 %v950, %v946
        %v1179 = vpack.c.bf16 %v951, %v947
        %v1180 = vpack.c.bf16 %v952, %v948
        %v1181 = vpack.c.bf16 %v957, %v953
        %v1182 = vpack.c.bf16 %v958, %v954
        %v1183 = vpack.c.bf16 %v959, %v955
        %v1184 = vpack.c.bf16 %v960, %v956
        %v1185 = vpack.c.bf16 %v965, %v961
        %v1186 = vpack.c.bf16 %v966, %v962
        %v1187 = vpack.c.bf16 %v967, %v963
        %v1188 = vpack.c.bf16 %v968, %v964
        %v1189 = vpack.c.bf16 %v973, %v969
        %v1190 = vpack.c.bf16 %v974, %v970
        %v1191 = vpack.c.bf16 %v975, %v971
        %v1192 = vpack.c.bf16 %v976, %v972
        %v1193 = vpack.c.bf16 %v981, %v977
        %v1194 = vpack.c.bf16 %v982, %v978
        %v1195 = vpack.c.bf16 %v983, %v979
        %v1196 = vpack.c.bf16 %v984, %v980
        %v1197 = vpack.c.bf16 %v989, %v985
        %v1198 = vpack.c.bf16 %v990, %v986
        %v1199 = vpack.c.bf16 %v991, %v987
        %v1200 = vpack.c.bf16 %v992, %v988
        %v1201 = vpack.c.bf16 %v997, %v993
        %v1202 = vpack.c.bf16 %v998, %v994
        %v1203 = vpack.c.bf16 %v999, %v995
        %v1204 = vpack.c.bf16 %v1000, %v996
        %v1205 = vpack.c.bf16 %v1005, %v1001
        %v1206 = vpack.c.bf16 %v1006, %v1002
        %v1207 = vpack.c.bf16 %v1007, %v1003
        %v1208 = vpack.c.bf16 %v1008, %v1004
        %v1209 = vpack.c.bf16 %v1013, %v1009
        %v1210 = vpack.c.bf16 %v1014, %v1010
        %v1211 = vpack.c.bf16 %v1015, %v1011
        %v1212 = vpack.c.bf16 %v1016, %v1012
        %v1213 = vpack.c.bf16 %v1021, %v1017
        %v1214 = vpack.c.bf16 %v1022, %v1018
        %v1215 = vpack.c.bf16 %v1023, %v1019
        %v1216 = vpack.c.bf16 %v1024, %v1020
        %v1217 = vpack.c.bf16 %v1029, %v1025
        %v1218 = vpack.c.bf16 %v1030, %v1026
        %v1219 = vpack.c.bf16 %v1031, %v1027
        %v1220 = vpack.c.bf16 %v1032, %v1028
        %v1221 = vpack.c.bf16 %v1037, %v1033
        %v1222 = vpack.c.bf16 %v1038, %v1034
        %v1223 = vpack.c.bf16 %v1039, %v1035
        %v1224 = vpack.c.bf16 %v1040, %v1036
        %v1225 = vpack.c.bf16 %v1045, %v1041
        %v1226 = vpack.c.bf16 %v1046, %v1042
        %v1227 = vpack.c.bf16 %v1047, %v1043
        %v1228 = vpack.c.bf16 %v1048, %v1044
        %v1229 = vpack.c.bf16 %v1053, %v1049
        %v1230 = vpack.c.bf16 %v1054, %v1050
        %v1231 = vpack.c.bf16 %v1055, %v1051
        %v1232 = vpack.c.bf16 %v1056, %v1052
        %v1233 = vpack.c.bf16 %v1061, %v1057
        %v1234 = vpack.c.bf16 %v1062, %v1058
        %v1235 = vpack.c.bf16 %v1063, %v1059
        %v1236 = vpack.c.bf16 %v1064, %v1060
        %v1237 = vpack.c.bf16 %v1069, %v1065
        %v1238 = vpack.c.bf16 %v1070, %v1066
        %v1239 = vpack.c.bf16 %v1071, %v1067
        %v1240 = vpack.c.bf16 %v1072, %v1068
        %v1241 = vpack.c.bf16 %v1077, %v1073
        %v1242 = vpack.c.bf16 %v1078, %v1074
        %v1243 = vpack.c.bf16 %v1079, %v1075
        %v1244 = vpack.c.bf16 %v1080, %v1076
        %v1245 = vpack.c.bf16 %v1085, %v1081
        %v1246 = vpack.c.bf16 %v1086, %v1082
        %v1247 = vpack.c.bf16 %v1087, %v1083
        %v1248 = vpack.c.bf16 %v1088, %v1084
        %v1249 = vpack.c.bf16 %v1093, %v1089
        %v1250 = vpack.c.bf16 %v1094, %v1090
        %v1251 = vpack.c.bf16 %v1095, %v1091
        %v1252 = vpack.c.bf16 %v1096, %v1092
        %v1253 = vpack.c.bf16 %v1101, %v1097
        %v1254 = vpack.c.bf16 %v1102, %v1098
        %v1255 = vpack.c.bf16 %v1103, %v1099
        %v1256 = vpack.c.bf16 %v1104, %v1100
        %v1257 = vpack.c.bf16 %v1109, %v1105
        %v1258 = vpack.c.bf16 %v1110, %v1106
        %v1259 = vpack.c.bf16 %v1111, %v1107
        %v1260 = vpack.c.bf16 %v1112, %v1108
        %v1261 = vpack.c.bf16 %v1117, %v1113
        %v1262 = vpack.c.bf16 %v1118, %v1114
        %v1263 = vpack.c.bf16 %v1119, %v1115
        %v1264 = vpack.c.bf16 %v1120, %v1116
        %v1265 = vpack.c.bf16 %v1125, %v1121
        %v1266 = vpack.c.bf16 %v1126, %v1122
        %v1267 = vpack.c.bf16 %v1127, %v1123
        %v1268 = vpack.c.bf16 %v1128, %v1124
        %v1269 = vpack.c.bf16 %v1133, %v1129
        %v1270 = vpack.c.bf16 %v1134, %v1130
        %v1271 = vpack.c.bf16 %v1135, %v1131
        %v1272 = vpack.c.bf16 %v1136, %v1132
        %v1273 = vpack.c.bf16 %v1141, %v1137
        %v1274 = vpack.c.bf16 %v1142, %v1138
        %v1275 = vpack.c.bf16 %v1143, %v1139
        %v1276 = vpack.c.bf16 %v1144, %v1140
        %v1277 = vpack.c.bf16 %v1149, %v1145
        %v1278 = vpack.c.bf16 %v1150, %v1146
        %v1279 = vpack.c.bf16 %v1151, %v1147
        %v1280 = vpack.c.bf16 %v1152, %v1148
        %v1409 = vunpack.c.l.b16 %v1153
        %v1410 = vunpack.c.l.b16 %v1154
        %v1411 = vunpack.c.l.b16 %v1155
        %v1412 = vunpack.c.l.b16 %v1156
        %v1413 = vunpack.c.h.b16 %v1153
        %v1414 = vunpack.c.h.b16 %v1154
        %v1415 = vunpack.c.h.b16 %v1155
        %v1416 = vunpack.c.h.b16 %v1156
        %v1417 = vunpack.c.l.b16 %v1157
        %v1418 = vunpack.c.l.b16 %v1158
        %v1419 = vunpack.c.l.b16 %v1159
        %v1420 = vunpack.c.l.b16 %v1160
        %v1421 = vunpack.c.h.b16 %v1157
        %v1422 = vunpack.c.h.b16 %v1158
        %v1423 = vunpack.c.h.b16 %v1159
        %v1424 = vunpack.c.h.b16 %v1160
        %v1425 = vunpack.c.l.b16 %v1161
        %v1426 = vunpack.c.l.b16 %v1162
        %v1427 = vunpack.c.l.b16 %v1163
        %v1428 = vunpack.c.l.b16 %v1164
        %v1429 = vunpack.c.h.b16 %v1161
        %v1430 = vunpack.c.h.b16 %v1162
        %v1431 = vunpack.c.h.b16 %v1163
        %v1432 = vunpack.c.h.b16 %v1164
        %v1433 = vunpack.c.l.b16 %v1165
        %v1434 = vunpack.c.l.b16 %v1166
        %v1435 = vunpack.c.l.b16 %v1167
        %v1436 = vunpack.c.l.b16 %v1168
        %v1437 = vunpack.c.h.b16 %v1165
        %v1438 = vunpack.c.h.b16 %v1166
        %v1439 = vunpack.c.h.b16 %v1167
        %v1440 = vunpack.c.h.b16 %v1168
        %v1441 = vunpack.c.l.b16 %v1169
        %v1442 = vunpack.c.l.b16 %v1170
        %v1443 = vunpack.c.l.b16 %v1171
        %v1444 = vunpack.c.l.b16 %v1172
        %v1445 = vunpack.c.h.b16 %v1169
        %v1446 = vunpack.c.h.b16 %v1170
        %v1447 = vunpack.c.h.b16 %v1171
        %v1448 = vunpack.c.h.b16 %v1172
        %v1449 = vunpack.c.l.b16 %v1173
        %v1450 = vunpack.c.l.b16 %v1174
        %v1451 = vunpack.c.l.b16 %v1175
        %v1452 = vunpack.c.l.b16 %v1176
        %v1453 = vunpack.c.h.b16 %v1173
        %v1454 = vunpack.c.h.b16 %v1174
        %v1455 = vunpack.c.h.b16 %v1175
        %v1456 = vunpack.c.h.b16 %v1176
        %v1457 = vunpack.c.l.b16 %v1177
        %v1458 = vunpack.c.l.b16 %v1178
        %v1459 = vunpack.c.l.b16 %v1179
        %v1460 = vunpack.c.l.b16 %v1180
        %v1461 = vunpack.c.h.b16 %v1177
        %v1462 = vunpack.c.h.b16 %v1178
        %v1463 = vunpack.c.h.b16 %v1179
        %v1464 = vunpack.c.h.b16 %v1180
        %v1465 = vunpack.c.l.b16 %v1181
        %v1466 = vunpack.c.l.b16 %v1182
        %v1467 = vunpack.c.l.b16 %v1183
        %v1468 = vunpack.c.l.b16 %v1184
        %v1469 = vunpack.c.h.b16 %v1181
        %v1470 = vunpack.c.h.b16 %v1182
        %v1471 = vunpack.c.h.b16 %v1183
        %v1472 = vunpack.c.h.b16 %v1184
        %v1473 = vunpack.c.l.b16 %v1185
        %v1474 = vunpack.c.l.b16 %v1186
        %v1475 = vunpack.c.l.b16 %v1187
        %v1476 = vunpack.c.l.b16 %v1188
        %v1477 = vunpack.c.h.b16 %v1185
        %v1478 = vunpack.c.h.b16 %v1186
        %v1479 = vunpack.c.h.b16 %v1187
        %v1480 = vunpack.c.h.b16 %v1188
        %v1481 = vunpack.c.l.b16 %v1189
        %v1482 = vunpack.c.l.b16 %v1190
        %v1483 = vunpack.c.l.b16 %v1191
        %v1484 = vunpack.c.l.b16 %v1192
        %v1485 = vunpack.c.h.b16 %v1189
        %v1486 = vunpack.c.h.b16 %v1190
        %v1487 = vunpack.c.h.b16 %v1191
        %v1488 = vunpack.c.h.b16 %v1192
        %v1489 = vunpack.c.l.b16 %v1193
        %v1490 = vunpack.c.l.b16 %v1194
        %v1491 = vunpack.c.l.b16 %v1195
        %v1492 = vunpack.c.l.b16 %v1196
        %v1493 = vunpack.c.h.b16 %v1193
        %v1494 = vunpack.c.h.b16 %v1194
        %v1495 = vunpack.c.h.b16 %v1195
        %v1496 = vunpack.c.h.b16 %v1196
        %v1497 = vunpack.c.l.b16 %v1197
        %v1498 = vunpack.c.l.b16 %v1198
        %v1499 = vunpack.c.l.b16 %v1199
        %v1500 = vunpack.c.l.b16 %v1200
        %v1501 = vunpack.c.h.b16 %v1197
        %v1502 = vunpack.c.h.b16 %v1198
        %v1503 = vunpack.c.h.b16 %v1199
        %v1504 = vunpack.c.h.b16 %v1200
        %v1505 = vunpack.c.l.b16 %v1201
        %v1506 = vunpack.c.l.b16 %v1202
        %v1507 = vunpack.c.l.b16 %v1203
        %v1508 = vunpack.c.l.b16 %v1204
        %v1509 = vunpack.c.h.b16 %v1201
        %v1510 = vunpack.c.h.b16 %v1202
        %v1511 = vunpack.c.h.b16 %v1203
        %v1512 = vunpack.c.h.b16 %v1204
        %v1513 = vunpack.c.l.b16 %v1205
        %v1514 = vunpack.c.l.b16 %v1206
        %v1515 = vunpack.c.l.b16 %v1207
        %v1516 = vunpack.c.l.b16 %v1208
        %v1517 = vunpack.c.h.b16 %v1205
        %v1518 = vunpack.c.h.b16 %v1206
        %v1519 = vunpack.c.h.b16 %v1207
        %v1520 = vunpack.c.h.b16 %v1208
        %v1521 = vunpack.c.l.b16 %v1209
        %v1522 = vunpack.c.l.b16 %v1210
        %v1523 = vunpack.c.l.b16 %v1211
        %v1524 = vunpack.c.l.b16 %v1212
        %v1525 = vunpack.c.h.b16 %v1209
        %v1526 = vunpack.c.h.b16 %v1210
        %v1527 = vunpack.c.h.b16 %v1211
        %v1528 = vunpack.c.h.b16 %v1212
        %v1529 = vunpack.c.l.b16 %v1213
        %v1530 = vunpack.c.l.b16 %v1214
        %v1531 = vunpack.c.l.b16 %v1215
        %v1532 = vunpack.c.l.b16 %v1216
        %v1533 = vunpack.c.h.b16 %v1213
        %v1534 = vunpack.c.h.b16 %v1214
        %v1535 = vunpack.c.h.b16 %v1215
        %v1536 = vunpack.c.h.b16 %v1216
        %v1537 = vunpack.c.l.b16 %v1217
        %v1538 = vunpack.c.l.b16 %v1218
        %v1539 = vunpack.c.l.b16 %v1219
        %v1540 = vunpack.c.l.b16 %v1220
        %v1541 = vunpack.c.h.b16 %v1217
        %v1542 = vunpack.c.h.b16 %v1218
        %v1543 = vunpack.c.h.b16 %v1219
        %v1544 = vunpack.c.h.b16 %v1220
        %v1545 = vunpack.c.l.b16 %v1221
        %v1546 = vunpack.c.l.b16 %v1222
        %v1547 = vunpack.c.l.b16 %v1223
        %v1548 = vunpack.c.l.b16 %v1224
        %v1549 = vunpack.c.h.b16 %v1221
        %v1550 = vunpack.c.h.b16 %v1222
        %v1551 = vunpack.c.h.b16 %v1223
        %v1552 = vunpack.c.h.b16 %v1224
        %v1553 = vunpack.c.l.b16 %v1225
        %v1554 = vunpack.c.l.b16 %v1226
        %v1555 = vunpack.c.l.b16 %v1227
        %v1556 = vunpack.c.l.b16 %v1228
        %v1557 = vunpack.c.h.b16 %v1225
        %v1558 = vunpack.c.h.b16 %v1226
        %v1559 = vunpack.c.h.b16 %v1227
        %v1560 = vunpack.c.h.b16 %v1228
        %v1561 = vunpack.c.l.b16 %v1229
        %v1562 = vunpack.c.l.b16 %v1230
        %v1563 = vunpack.c.l.b16 %v1231
        %v1564 = vunpack.c.l.b16 %v1232
        %v1565 = vunpack.c.h.b16 %v1229
        %v1566 = vunpack.c.h.b16 %v1230
        %v1567 = vunpack.c.h.b16 %v1231
        %v1568 = vunpack.c.h.b16 %v1232
        %v1569 = vunpack.c.l.b16 %v1233
        %v1570 = vunpack.c.l.b16 %v1234
        %v1571 = vunpack.c.l.b16 %v1235
        %v1572 = vunpack.c.l.b16 %v1236
        %v1573 = vunpack.c.h.b16 %v1233
        %v1574 = vunpack.c.h.b16 %v1234
        %v1575 = vunpack.c.h.b16 %v1235
        %v1576 = vunpack.c.h.b16 %v1236
        %v1577 = vunpack.c.l.b16 %v1237
        %v1578 = vunpack.c.l.b16 %v1238
        %v1579 = vunpack.c.l.b16 %v1239
        %v1580 = vunpack.c.l.b16 %v1240
        %v1581 = vunpack.c.h.b16 %v1237
        %v1582 = vunpack.c.h.b16 %v1238
        %v1583 = vunpack.c.h.b16 %v1239
        %v1584 = vunpack.c.h.b16 %v1240
        %v1585 = vunpack.c.l.b16 %v1241
        %v1586 = vunpack.c.l.b16 %v1242
        %v1587 = vunpack.c.l.b16 %v1243
        %v1588 = vunpack.c.l.b16 %v1244
        %v1589 = vunpack.c.h.b16 %v1241
        %v1590 = vunpack.c.h.b16 %v1242
        %v1591 = vunpack.c.h.b16 %v1243
        %v1592 = vunpack.c.h.b16 %v1244
        %v1593 = vunpack.c.l.b16 %v1245
        %v1594 = vunpack.c.l.b16 %v1246
        %v1595 = vunpack.c.l.b16 %v1247
        %v1596 = vunpack.c.l.b16 %v1248
        %v1597 = vunpack.c.h.b16 %v1245
        %v1598 = vunpack.c.h.b16 %v1246
        %v1599 = vunpack.c.h.b16 %v1247
        %v1600 = vunpack.c.h.b16 %v1248
        %v1601 = vunpack.c.l.b16 %v1249
        %v1602 = vunpack.c.l.b16 %v1250
        %v1603 = vunpack.c.l.b16 %v1251
        %v1604 = vunpack.c.l.b16 %v1252
        %v1605 = vunpack.c.h.b16 %v1249
        %v1606 = vunpack.c.h.b16 %v1250
        %v1607 = vunpack.c.h.b16 %v1251
        %v1608 = vunpack.c.h.b16 %v1252
        %v1609 = vunpack.c.l.b16 %v1253
        %v1610 = vunpack.c.l.b16 %v1254
        %v1611 = vunpack.c.l.b16 %v1255
        %v1612 = vunpack.c.l.b16 %v1256
        %v1613 = vunpack.c.h.b16 %v1253
        %v1614 = vunpack.c.h.b16 %v1254
        %v1615 = vunpack.c.h.b16 %v1255
        %v1616 = vunpack.c.h.b16 %v1256
        %v1617 = vunpack.c.l.b16 %v1257
        %v1618 = vunpack.c.l.b16 %v1258
        %v1619 = vunpack.c.l.b16 %v1259
        %v1620 = vunpack.c.l.b16 %v1260
        %v1621 = vunpack.c.h.b16 %v1257
        %v1622 = vunpack.c.h.b16 %v1258
        %v1623 = vunpack.c.h.b16 %v1259
        %v1624 = vunpack.c.h.b16 %v1260
        %v1625 = vunpack.c.l.b16 %v1261
        %v1626 = vunpack.c.l.b16 %v1262
        %v1627 = vunpack.c.l.b16 %v1263
        %v1628 = vunpack.c.l.b16 %v1264
        %v1629 = vunpack.c.h.b16 %v1261
        %v1630 = vunpack.c.h.b16 %v1262
        %v1631 = vunpack.c.h.b16 %v1263
        %v1632 = vunpack.c.h.b16 %v1264
        %v1633 = vunpack.c.l.b16 %v1265
        %v1634 = vunpack.c.l.b16 %v1266
        %v1635 = vunpack.c.l.b16 %v1267
        %v1636 = vunpack.c.l.b16 %v1268
        %v1637 = vunpack.c.h.b16 %v1265
        %v1638 = vunpack.c.h.b16 %v1266
        %v1639 = vunpack.c.h.b16 %v1267
        %v1640 = vunpack.c.h.b16 %v1268
        %v1641 = vunpack.c.l.b16 %v1269
        %v1642 = vunpack.c.l.b16 %v1270
        %v1643 = vunpack.c.l.b16 %v1271
        %v1644 = vunpack.c.l.b16 %v1272
        %v1645 = vunpack.c.h.b16 %v1269
        %v1646 = vunpack.c.h.b16 %v1270
        %v1647 = vunpack.c.h.b16 %v1271
        %v1648 = vunpack.c.h.b16 %v1272
        %v1649 = vunpack.c.l.b16 %v1273
        %v1650 = vunpack.c.l.b16 %v1274
        %v1651 = vunpack.c.l.b16 %v1275
        %v1652 = vunpack.c.l.b16 %v1276
        %v1653 = vunpack.c.h.b16 %v1273
        %v1654 = vunpack.c.h.b16 %v1274
        %v1655 = vunpack.c.h.b16 %v1275
        %v1656 = vunpack.c.h.b16 %v1276
        %v1657 = vunpack.c.l.b16 %v1277
        %v1658 = vunpack.c.l.b16 %v1278
        %v1659 = vunpack.c.l.b16 %v1279
        %v1660 = vunpack.c.l.b16 %v1280
        %v1661 = vunpack.c.h.b16 %v1277
        %v1662 = vunpack.c.h.b16 %v1278
        %v1663 = vunpack.c.h.b16 %v1279
        %v1664 = vunpack.c.h.b16 %v1280
        %v1665 = vpack.c.b16 %v1410, %v1409
        %v1666 = vpack.c.b16 %v1412, %v1411
        %v1667 = vpack.c.b16 %v1414, %v1413
        %v1668 = vpack.c.b16 %v1416, %v1415
        %v1669 = vpack.c.b16 %v1418, %v1417
        %v1670 = vpack.c.b16 %v1420, %v1419
        %v1671 = vpack.c.b16 %v1422, %v1421
        %v1672 = vpack.c.b16 %v1424, %v1423
        %v1673 = vpack.c.b16 %v1426, %v1425
        %v1674 = vpack.c.b16 %v1428, %v1427
        %v1675 = vpack.c.b16 %v1430, %v1429
        %v1676 = vpack.c.b16 %v1432, %v1431
        %v1677 = vpack.c.b16 %v1434, %v1433
        %v1678 = vpack.c.b16 %v1436, %v1435
        %v1679 = vpack.c.b16 %v1438, %v1437
        %v1680 = vpack.c.b16 %v1440, %v1439
        %v1681 = vpack.c.b16 %v1442, %v1441
        %v1682 = vpack.c.b16 %v1444, %v1443
        %v1683 = vpack.c.b16 %v1446, %v1445
        %v1684 = vpack.c.b16 %v1448, %v1447
        %v1685 = vpack.c.b16 %v1450, %v1449
        %v1686 = vpack.c.b16 %v1452, %v1451
        %v1687 = vpack.c.b16 %v1454, %v1453
        %v1688 = vpack.c.b16 %v1456, %v1455
        %v1689 = vpack.c.b16 %v1458, %v1457
        %v1690 = vpack.c.b16 %v1460, %v1459
        %v1691 = vpack.c.b16 %v1462, %v1461
        %v1692 = vpack.c.b16 %v1464, %v1463
        %v1693 = vpack.c.b16 %v1466, %v1465
        %v1694 = vpack.c.b16 %v1468, %v1467
        %v1695 = vpack.c.b16 %v1470, %v1469
        %v1696 = vpack.c.b16 %v1472, %v1471
        %v1697 = vpack.c.b16 %v1474, %v1473
        %v1698 = vpack.c.b16 %v1476, %v1475
        %v1699 = vpack.c.b16 %v1478, %v1477
        %v1700 = vpack.c.b16 %v1480, %v1479
        %v1701 = vpack.c.b16 %v1482, %v1481
        %v1702 = vpack.c.b16 %v1484, %v1483
        %v1703 = vpack.c.b16 %v1486, %v1485
        %v1704 = vpack.c.b16 %v1488, %v1487
        %v1705 = vpack.c.b16 %v1490, %v1489
        %v1706 = vpack.c.b16 %v1492, %v1491
        %v1707 = vpack.c.b16 %v1494, %v1493
        %v1708 = vpack.c.b16 %v1496, %v1495
        %v1709 = vpack.c.b16 %v1498, %v1497
        %v1710 = vpack.c.b16 %v1500, %v1499
        %v1711 = vpack.c.b16 %v1502, %v1501
        %v1712 = vpack.c.b16 %v1504, %v1503
        %v1713 = vpack.c.b16 %v1506, %v1505
        %v1714 = vpack.c.b16 %v1508, %v1507
        %v1715 = vpack.c.b16 %v1510, %v1509
        %v1716 = vpack.c.b16 %v1512, %v1511
        %v1717 = vpack.c.b16 %v1514, %v1513
        %v1718 = vpack.c.b16 %v1516, %v1515
        %v1719 = vpack.c.b16 %v1518, %v1517
        %v1720 = vpack.c.b16 %v1520, %v1519
        %v1721 = vpack.c.b16 %v1522, %v1521
        %v1722 = vpack.c.b16 %v1524, %v1523
        %v1723 = vpack.c.b16 %v1526, %v1525
        %v1724 = vpack.c.b16 %v1528, %v1527
        %v1725 = vpack.c.b16 %v1530, %v1529
        %v1726 = vpack.c.b16 %v1532, %v1531
        %v1727 = vpack.c.b16 %v1534, %v1533
        %v1728 = vpack.c.b16 %v1536, %v1535
        %v1729 = vpack.c.b16 %v1538, %v1537
        %v1730 = vpack.c.b16 %v1540, %v1539
        %v1731 = vpack.c.b16 %v1542, %v1541
        %v1732 = vpack.c.b16 %v1544, %v1543
        %v1733 = vpack.c.b16 %v1546, %v1545
        %v1734 = vpack.c.b16 %v1548, %v1547
        %v1735 = vpack.c.b16 %v1550, %v1549
        %v1736 = vpack.c.b16 %v1552, %v1551
        %v1737 = vpack.c.b16 %v1554, %v1553
        %v1738 = vpack.c.b16 %v1556, %v1555
        %v1739 = vpack.c.b16 %v1558, %v1557
        %v1740 = vpack.c.b16 %v1560, %v1559
        %v1741 = vpack.c.b16 %v1562, %v1561
        %v1742 = vpack.c.b16 %v1564, %v1563
        %v1743 = vpack.c.b16 %v1566, %v1565
        %v1744 = vpack.c.b16 %v1568, %v1567
        %v1745 = vpack.c.b16 %v1570, %v1569
        %v1746 = vpack.c.b16 %v1572, %v1571
        %v1747 = vpack.c.b16 %v1574, %v1573
        %v1748 = vpack.c.b16 %v1576, %v1575
        %v1749 = vpack.c.b16 %v1578, %v1577
        %v1750 = vpack.c.b16 %v1580, %v1579
        %v1751 = vpack.c.b16 %v1582, %v1581
        %v1752 = vpack.c.b16 %v1584, %v1583
        %v1753 = vpack.c.b16 %v1586, %v1585
        %v1754 = vpack.c.b16 %v1588, %v1587
        %v1755 = vpack.c.b16 %v1590, %v1589
        %v1756 = vpack.c.b16 %v1592, %v1591
        %v1757 = vpack.c.b16 %v1594, %v1593
        %v1758 = vpack.c.b16 %v1596, %v1595
        %v1759 = vpack.c.b16 %v1598, %v1597
        %v1760 = vpack.c.b16 %v1600, %v1599
        %v1761 = vpack.c.b16 %v1602, %v1601
        %v1762 = vpack.c.b16 %v1604, %v1603
        %v1763 = vpack.c.b16 %v1606, %v1605
        %v1764 = vpack.c.b16 %v1608, %v1607
        %v1765 = vpack.c.b16 %v1610, %v1609
        %v1766 = vpack.c.b16 %v1612, %v1611
        %v1767 = vpack.c.b16 %v1614, %v1613
        %v1768 = vpack.c.b16 %v1616, %v1615
        %v1769 = vpack.c.b16 %v1618, %v1617
        %v1770 = vpack.c.b16 %v1620, %v1619
        %v1771 = vpack.c.b16 %v1622, %v1621
        %v1772 = vpack.c.b16 %v1624, %v1623
        %v1773 = vpack.c.b16 %v1626, %v1625
        %v1774 = vpack.c.b16 %v1628, %v1627
        %v1775 = vpack.c.b16 %v1630, %v1629
        %v1776 = vpack.c.b16 %v1632, %v1631
        %v1777 = vpack.c.b16 %v1634, %v1633
        %v1778 = vpack.c.b16 %v1636, %v1635
        %v1779 = vpack.c.b16 %v1638, %v1637
        %v1780 = vpack.c.b16 %v1640, %v1639
        %v1781 = vpack.c.b16 %v1642, %v1641
        %v1782 = vpack.c.b16 %v1644, %v1643
        %v1783 = vpack.c.b16 %v1646, %v1645
        %v1784 = vpack.c.b16 %v1648, %v1647
        %v1785 = vpack.c.b16 %v1650, %v1649
        %v1786 = vpack.c.b16 %v1652, %v1651
        %v1787 = vpack.c.b16 %v1654, %v1653
        %v1788 = vpack.c.b16 %v1656, %v1655
        %v1789 = vpack.c.b16 %v1658, %v1657
        %v1790 = vpack.c.b16 %v1660, %v1659
        %v1791 = vpack.c.b16 %v1662, %v1661
        %v1792 = vpack.c.b16 %v1664, %v1663
        %1921 = vst [vmem:[#allocation4] sm:$0xff] %v1665
        %1922 = vst [vmem:[#allocation4 + $0x8] sm:$0xff] %v1666
        %1923 = vst [vmem:[#allocation4 + $0x10] sm:$0xff] %v1667
        %1924 = vst [vmem:[#allocation4 + $0x18] sm:$0xff] %v1668
        %1925 = vst [vmem:[#allocation4 + $0x20] sm:$0xff] %v1669
        %1926 = vst [vmem:[#allocation4 + $0x28] sm:$0xff] %v1670
        %1927 = vst [vmem:[#allocation4 + $0x30] sm:$0xff] %v1671
        %1928 = vst [vmem:[#allocation4 + $0x38] sm:$0xff] %v1672
        %1929 = vst [vmem:[#allocation4 + $0x40] sm:$0xff] %v1673
        %1930 = vst [vmem:[#allocation4 + $0x48] sm:$0xff] %v1674
        %1931 = vst [vmem:[#allocation4 + $0x50] sm:$0xff] %v1675
        %1932 = vst [vmem:[#allocation4 + $0x58] sm:$0xff] %v1676
        %1933 = vst [vmem:[#allocation4 + $0x60] sm:$0xff] %v1677
        %1934 = vst [vmem:[#allocation4 + $0x68] sm:$0xff] %v1678
        %1935 = vst [vmem:[#allocation4 + $0x70] sm:$0xff] %v1679
        %1936 = vst [vmem:[#allocation4 + $0x78] sm:$0xff] %v1680
        %1937 = vst [vmem:[#allocation4 + $0x80] sm:$0xff] %v1681
        %1938 = vst [vmem:[#allocation4 + $0x88] sm:$0xff] %v1682
        %1939 = vst [vmem:[#allocation4 + $0x90] sm:$0xff] %v1683
        %1940 = vst [vmem:[#allocation4 + $0x98] sm:$0xff] %v1684
        %1941 = vst [vmem:[#allocation4 + $0xa0] sm:$0xff] %v1685
        %1942 = vst [vmem:[#allocation4 + $0xa8] sm:$0xff] %v1686
        %1943 = vst [vmem:[#allocation4 + $0xb0] sm:$0xff] %v1687
        %1944 = vst [vmem:[#allocation4 + $0xb8] sm:$0xff] %v1688
        %1945 = vst [vmem:[#allocation4 + $0xc0] sm:$0xff] %v1689
        %1946 = vst [vmem:[#allocation4 + $0xc8] sm:$0xff] %v1690
        %1947 = vst [vmem:[#allocation4 + $0xd0] sm:$0xff] %v1691
        %1948 = vst [vmem:[#allocation4 + $0xd8] sm:$0xff] %v1692
        %1949 = vst [vmem:[#allocation4 + $0xe0] sm:$0xff] %v1693
        %1950 = vst [vmem:[#allocation4 + $0xe8] sm:$0xff] %v1694
        %1951 = vst [vmem:[#allocation4 + $0xf0] sm:$0xff] %v1695
        %1952 = vst [vmem:[#allocation4 + $0xf8] sm:$0xff] %v1696
        %1953 = vst [vmem:[#allocation4 + $0x100] sm:$0xff] %v1697
        %1954 = vst [vmem:[#allocation4 + $0x108] sm:$0xff] %v1698
        %1955 = vst [vmem:[#allocation4 + $0x110] sm:$0xff] %v1699
        %1956 = vst [vmem:[#allocation4 + $0x118] sm:$0xff] %v1700
        %1957 = vst [vmem:[#allocation4 + $0x120] sm:$0xff] %v1701
        %1958 = vst [vmem:[#allocation4 + $0x128] sm:$0xff] %v1702
        %1959 = vst [vmem:[#allocation4 + $0x130] sm:$0xff] %v1703
        %1960 = vst [vmem:[#allocation4 + $0x138] sm:$0xff] %v1704
        %1961 = vst [vmem:[#allocation4 + $0x140] sm:$0xff] %v1705
        %1962 = vst [vmem:[#allocation4 + $0x148] sm:$0xff] %v1706
        %1963 = vst [vmem:[#allocation4 + $0x150] sm:$0xff] %v1707
        %1964 = vst [vmem:[#allocation4 + $0x158] sm:$0xff] %v1708
        %1965 = vst [vmem:[#allocation4 + $0x160] sm:$0xff] %v1709
        %1966 = vst [vmem:[#allocation4 + $0x168] sm:$0xff] %v1710
        %1967 = vst [vmem:[#allocation4 + $0x170] sm:$0xff] %v1711
        %1968 = vst [vmem:[#allocation4 + $0x178] sm:$0xff] %v1712
        %1969 = vst [vmem:[#allocation4 + $0x180] sm:$0xff] %v1713
        %1970 = vst [vmem:[#allocation4 + $0x188] sm:$0xff] %v1714
        %1971 = vst [vmem:[#allocation4 + $0x190] sm:$0xff] %v1715
        %1972 = vst [vmem:[#allocation4 + $0x198] sm:$0xff] %v1716
        %1973 = vst [vmem:[#allocation4 + $0x1a0] sm:$0xff] %v1717
        %1974 = vst [vmem:[#allocation4 + $0x1a8] sm:$0xff] %v1718
        %1975 = vst [vmem:[#allocation4 + $0x1b0] sm:$0xff] %v1719
        %1976 = vst [vmem:[#allocation4 + $0x1b8] sm:$0xff] %v1720
        %1977 = vst [vmem:[#allocation4 + $0x1c0] sm:$0xff] %v1721
        %1978 = vst [vmem:[#allocation4 + $0x1c8] sm:$0xff] %v1722
        %1979 = vst [vmem:[#allocation4 + $0x1d0] sm:$0xff] %v1723
        %1980 = vst [vmem:[#allocation4 + $0x1d8] sm:$0xff] %v1724
        %1981 = vst [vmem:[#allocation4 + $0x1e0] sm:$0xff] %v1725
        %1982 = vst [vmem:[#allocation4 + $0x1e8] sm:$0xff] %v1726
        %1983 = vst [vmem:[#allocation4 + $0x1f0] sm:$0xff] %v1727
        %1984 = vst [vmem:[#allocation4 + $0x1f8] sm:$0xff] %v1728
        %1985 = vst [vmem:[#allocation4 + $0x200] sm:$0xff] %v1729
        %1986 = vst [vmem:[#allocation4 + $0x208] sm:$0xff] %v1730
        %1987 = vst [vmem:[#allocation4 + $0x210] sm:$0xff] %v1731
        %1988 = vst [vmem:[#allocation4 + $0x218] sm:$0xff] %v1732
        %1989 = vst [vmem:[#allocation4 + $0x220] sm:$0xff] %v1733
        %1990 = vst [vmem:[#allocation4 + $0x228] sm:$0xff] %v1734
        %1991 = vst [vmem:[#allocation4 + $0x230] sm:$0xff] %v1735
        %1992 = vst [vmem:[#allocation4 + $0x238] sm:$0xff] %v1736
        %1993 = vst [vmem:[#allocation4 + $0x240] sm:$0xff] %v1737
        %1994 = vst [vmem:[#allocation4 + $0x248] sm:$0xff] %v1738
        %1995 = vst [vmem:[#allocation4 + $0x250] sm:$0xff] %v1739
        %1996 = vst [vmem:[#allocation4 + $0x258] sm:$0xff] %v1740
        %1997 = vst [vmem:[#allocation4 + $0x260] sm:$0xff] %v1741
        %1998 = vst [vmem:[#allocation4 + $0x268] sm:$0xff] %v1742
        %1999 = vst [vmem:[#allocation4 + $0x270] sm:$0xff] %v1743
        %2000 = vst [vmem:[#allocation4 + $0x278] sm:$0xff] %v1744
        %2001 = vst [vmem:[#allocation4 + $0x280] sm:$0xff] %v1745
        %2002 = vst [vmem:[#allocation4 + $0x288] sm:$0xff] %v1746
        %2003 = vst [vmem:[#allocation4 + $0x290] sm:$0xff] %v1747
        %2004 = vst [vmem:[#allocation4 + $0x298] sm:$0xff] %v1748
        %2005 = vst [vmem:[#allocation4 + $0x2a0] sm:$0xff] %v1749
        %2006 = vst [vmem:[#allocation4 + $0x2a8] sm:$0xff] %v1750
        %2007 = vst [vmem:[#allocation4 + $0x2b0] sm:$0xff] %v1751
        %2008 = vst [vmem:[#allocation4 + $0x2b8] sm:$0xff] %v1752
        %2009 = vst [vmem:[#allocation4 + $0x2c0] sm:$0xff] %v1753
        %2010 = vst [vmem:[#allocation4 + $0x2c8] sm:$0xff] %v1754
        %2011 = vst [vmem:[#allocation4 + $0x2d0] sm:$0xff] %v1755
        %2012 = vst [vmem:[#allocation4 + $0x2d8] sm:$0xff] %v1756
        %2013 = vst [vmem:[#allocation4 + $0x2e0] sm:$0xff] %v1757
        %2014 = vst [vmem:[#allocation4 + $0x2e8] sm:$0xff] %v1758
        %2015 = vst [vmem:[#allocation4 + $0x2f0] sm:$0xff] %v1759
        %2016 = vst [vmem:[#allocation4 + $0x2f8] sm:$0xff] %v1760
        %2017 = vst [vmem:[#allocation4 + $0x300] sm:$0xff] %v1761
        %2018 = vst [vmem:[#allocation4 + $0x308] sm:$0xff] %v1762
        %2019 = vst [vmem:[#allocation4 + $0x310] sm:$0xff] %v1763
        %2020 = vst [vmem:[#allocation4 + $0x318] sm:$0xff] %v1764
        %2021 = vst [vmem:[#allocation4 + $0x320] sm:$0xff] %v1765
        %2022 = vst [vmem:[#allocation4 + $0x328] sm:$0xff] %v1766
        %2023 = vst [vmem:[#allocation4 + $0x330] sm:$0xff] %v1767
        %2024 = vst [vmem:[#allocation4 + $0x338] sm:$0xff] %v1768
        %2025 = vst [vmem:[#allocation4 + $0x340] sm:$0xff] %v1769
        %2026 = vst [vmem:[#allocation4 + $0x348] sm:$0xff] %v1770
        %2027 = vst [vmem:[#allocation4 + $0x350] sm:$0xff] %v1771
        %2028 = vst [vmem:[#allocation4 + $0x358] sm:$0xff] %v1772
        %2029 = vst [vmem:[#allocation4 + $0x360] sm:$0xff] %v1773
        %2030 = vst [vmem:[#allocation4 + $0x368] sm:$0xff] %v1774
        %2031 = vst [vmem:[#allocation4 + $0x370] sm:$0xff] %v1775
        %2032 = vst [vmem:[#allocation4 + $0x378] sm:$0xff] %v1776
        %2033 = vst [vmem:[#allocation4 + $0x380] sm:$0xff] %v1777
        %2034 = vst [vmem:[#allocation4 + $0x388] sm:$0xff] %v1778
        %2035 = vst [vmem:[#allocation4 + $0x390] sm:$0xff] %v1779
        %2036 = vst [vmem:[#allocation4 + $0x398] sm:$0xff] %v1780
        %2037 = vst [vmem:[#allocation4 + $0x3a0] sm:$0xff] %v1781
        %2038 = vst [vmem:[#allocation4 + $0x3a8] sm:$0xff] %v1782
        %2039 = vst [vmem:[#allocation4 + $0x3b0] sm:$0xff] %v1783
        %2040 = vst [vmem:[#allocation4 + $0x3b8] sm:$0xff] %v1784
        %2041 = vst [vmem:[#allocation4 + $0x3c0] sm:$0xff] %v1785
        %2042 = vst [vmem:[#allocation4 + $0x3c8] sm:$0xff] %v1786
        %2043 = vst [vmem:[#allocation4 + $0x3d0] sm:$0xff] %v1787
        %2044 = vst [vmem:[#allocation4 + $0x3d8] sm:$0xff] %v1788
        %2045 = vst [vmem:[#allocation4 + $0x3e0] sm:$0xff] %v1789
        %2046 = vst [vmem:[#allocation4 + $0x3e8] sm:$0xff] %v1790
        %2047 = vst [vmem:[#allocation4 + $0x3f0] sm:$0xff] %v1791
        %2048 = vst [vmem:[#allocation4 + $0x3f8] sm:$0xff] %v1792
        %v2049 = vmul.u32 %v188, 128
        %v2050 = vmul.u32 %v189, 128
        %v2051 = vmul.u32 %v190, 128
        %v2052 = vmul.u32 %v191, 128
        %v2053 = vmul.u32 %v192, 128
        %v2054 = vmul.u32 %v193, 128
        %v2055 = vmul.u32 %v194, 128
        %v2056 = vmul.u32 %v195, 128
        %v2057 = vmul.u32 %v196, 128
        %v2058 = vmul.u32 %v197, 128
        %v2059 = vmul.u32 %v198, 128
        %v2060 = vmul.u32 %v199, 128
        %v2061 = vmul.u32 %v200, 128
        %v2062 = vmul.u32 %v201, 128
        %v2063 = vmul.u32 %v202, 128
        %v2064 = vmul.u32 %v203, 128
        %v2065 = vmul.u32 %v334, 128
        %v2066 = vmul.u32 %v335, 128
        %v2067 = vmul.u32 %v336, 128
        %v2068 = vmul.u32 %v337, 128
        %v2069 = vmul.u32 %v338, 128
        %v2070 = vmul.u32 %v339, 128
        %v2071 = vmul.u32 %v340, 128
        %v2072 = vmul.u32 %v341, 128
        %v2073 = vmul.u32 %v342, 128
        %v2074 = vmul.u32 %v343, 128
        %v2075 = vmul.u32 %v344, 128
        %v2076 = vmul.u32 %v345, 128
        %v2077 = vmul.u32 %v346, 128
        %v2078 = vmul.u32 %v347, 128
        %v2079 = vmul.u32 %v348, 128
        %v2080 = vmul.u32 %v349, 128
        %v2081 = vmul.u32 %v350, 128
        %v2082 = vmul.u32 %v351, 128
        %v2083 = vmul.u32 %v352, 128
        %v2084 = vmul.u32 %v353, 128
        %v2085 = vmul.u32 %v354, 128
        %v2086 = vmul.u32 %v355, 128
        %v2087 = vmul.u32 %v356, 128
        %v2088 = vmul.u32 %v357, 128
        %v2089 = vmul.u32 %v358, 128
        %v2090 = vmul.u32 %v359, 128
        %v2091 = vmul.u32 %v360, 128
        %v2092 = vmul.u32 %v361, 128
        %v2093 = vmul.u32 %v362, 128
        %v2094 = vmul.u32 %v363, 128
        %v2095 = vmul.u32 %v364, 128
        %v2096 = vmul.u32 %v365, 128
        %v2097 = vmul.u32 %v366, 128
        %v2098 = vmul.u32 %v367, 128
        %v2099 = vmul.u32 %v368, 128
        %v2100 = vmul.u32 %v369, 128
        %v2101 = vmul.u32 %v370, 128
        %v2102 = vmul.u32 %v371, 128
        %v2103 = vmul.u32 %v372, 128
        %v2104 = vmul.u32 %v373, 128
        %v2105 = vmul.u32 %v374, 128
        %v2106 = vmul.u32 %v375, 128
        %v2107 = vmul.u32 %v376, 128
        %v2108 = vmul.u32 %v377, 128
        %v2109 = vmul.u32 %v378, 128
        %v2110 = vmul.u32 %v379, 128
        %v2111 = vmul.u32 %v380, 128
        %v2112 = vmul.u32 %v381, 128
        %v2113 = vadd.s32 %v2049, %v205
        %v2114 = vadd.s32 %v2050, %v205
        %v2115 = vadd.s32 %v2051, %v205
        %v2116 = vadd.s32 %v2052, %v205
        %v2117 = vadd.s32 %v2053, %v205
        %v2118 = vadd.s32 %v2054, %v205
        %v2119 = vadd.s32 %v2055, %v205
        %v2120 = vadd.s32 %v2056, %v205
        %v2121 = vadd.s32 %v2057, %v205
        %v2122 = vadd.s32 %v2058, %v205
        %v2123 = vadd.s32 %v2059, %v205
        %v2124 = vadd.s32 %v2060, %v205
        %v2125 = vadd.s32 %v2061, %v205
        %v2126 = vadd.s32 %v2062, %v205
        %v2127 = vadd.s32 %v2063, %v205
        %v2128 = vadd.s32 %v2064, %v205
        %v2129 = vadd.s32 %v2065, %v205
        %v2130 = vadd.s32 %v2066, %v205
        %v2131 = vadd.s32 %v2067, %v205
        %v2132 = vadd.s32 %v2068, %v205
        %v2133 = vadd.s32 %v2069, %v205
        %v2134 = vadd.s32 %v2070, %v205
        %v2135 = vadd.s32 %v2071, %v205
        %v2136 = vadd.s32 %v2072, %v205
        %v2137 = vadd.s32 %v2073, %v205
        %v2138 = vadd.s32 %v2074, %v205
        %v2139 = vadd.s32 %v2075, %v205
        %v2140 = vadd.s32 %v2076, %v205
        %v2141 = vadd.s32 %v2077, %v205
        %v2142 = vadd.s32 %v2078, %v205
        %v2143 = vadd.s32 %v2079, %v205
        %v2144 = vadd.s32 %v2080, %v205
        %v2145 = vadd.s32 %v2081, %v205
        %v2146 = vadd.s32 %v2082, %v205
        %v2147 = vadd.s32 %v2083, %v205
        %v2148 = vadd.s32 %v2084, %v205
        %v2149 = vadd.s32 %v2085, %v205
        %v2150 = vadd.s32 %v2086, %v205
        %v2151 = vadd.s32 %v2087, %v205
        %v2152 = vadd.s32 %v2088, %v205
        %v2153 = vadd.s32 %v2089, %v205
        %v2154 = vadd.s32 %v2090, %v205
        %v2155 = vadd.s32 %v2091, %v205
        %v2156 = vadd.s32 %v2092, %v205
        %v2157 = vadd.s32 %v2093, %v205
        %v2158 = vadd.s32 %v2094, %v205
        %v2159 = vadd.s32 %v2095, %v205
        %v2160 = vadd.s32 %v2096, %v205
        %v2161 = vadd.s32 %v2097, %v205
        %v2162 = vadd.s32 %v2098, %v205
        %v2163 = vadd.s32 %v2099, %v205
        %v2164 = vadd.s32 %v2100, %v205
        %v2165 = vadd.s32 %v2101, %v205
        %v2166 = vadd.s32 %v2102, %v205
        %v2167 = vadd.s32 %v2103, %v205
        %v2168 = vadd.s32 %v2104, %v205
        %v2169 = vadd.s32 %v2105, %v205
        %v2170 = vadd.s32 %v2106, %v205
        %v2171 = vadd.s32 %v2107, %v205
        %v2172 = vadd.s32 %v2108, %v205
        %v2173 = vadd.s32 %v2109, %v205
        %v2174 = vadd.s32 %v2110, %v205
        %v2175 = vadd.s32 %v2111, %v205
        %v2176 = vadd.s32 %v2112, %v205
        %v2177 = vadd.s32 %v2113, 1
        %v2178 = vadd.s32 %v2114, 1
        %v2179 = vadd.s32 %v2115, 1
        %v2180 = vadd.s32 %v2116, 1
        %v2181 = vadd.s32 %v2117, 1
        %v2182 = vadd.s32 %v2118, 1
        %v2183 = vadd.s32 %v2119, 1
        %v2184 = vadd.s32 %v2120, 1
        %v2185 = vadd.s32 %v2121, 1
        %v2186 = vadd.s32 %v2122, 1
        %v2187 = vadd.s32 %v2123, 1
        %v2188 = vadd.s32 %v2124, 1
        %v2189 = vadd.s32 %v2125, 1
        %v2190 = vadd.s32 %v2126, 1
        %v2191 = vadd.s32 %v2127, 1
        %v2192 = vadd.s32 %v2128, 1
        %v2193 = vadd.s32 %v2129, 1
        %v2194 = vadd.s32 %v2130, 1
        %v2195 = vadd.s32 %v2131, 1
        %v2196 = vadd.s32 %v2132, 1
        %v2197 = vadd.s32 %v2133, 1
        %v2198 = vadd.s32 %v2134, 1
        %v2199 = vadd.s32 %v2135, 1
        %v2200 = vadd.s32 %v2136, 1
        %v2201 = vadd.s32 %v2137, 1
        %v2202 = vadd.s32 %v2138, 1
        %v2203 = vadd.s32 %v2139, 1
        %v2204 = vadd.s32 %v2140, 1
        %v2205 = vadd.s32 %v2141, 1
        %v2206 = vadd.s32 %v2142, 1
        %v2207 = vadd.s32 %v2143, 1
        %v2208 = vadd.s32 %v2144, 1
        %v2209 = vadd.s32 %v2145, 1
        %v2210 = vadd.s32 %v2146, 1
        %v2211 = vadd.s32 %v2147, 1
        %v2212 = vadd.s32 %v2148, 1
        %v2213 = vadd.s32 %v2149, 1
        %v2214 = vadd.s32 %v2150, 1
        %v2215 = vadd.s32 %v2151, 1
        %v2216 = vadd.s32 %v2152, 1
        %v2217 = vadd.s32 %v2153, 1
        %v2218 = vadd.s32 %v2154, 1
        %v2219 = vadd.s32 %v2155, 1
        %v2220 = vadd.s32 %v2156, 1
        %v2221 = vadd.s32 %v2157, 1
        %v2222 = vadd.s32 %v2158, 1
        %v2223 = vadd.s32 %v2159, 1
        %v2224 = vadd.s32 %v2160, 1
        %v2225 = vadd.s32 %v2161, 1
        %v2226 = vadd.s32 %v2162, 1
        %v2227 = vadd.s32 %v2163, 1
        %v2228 = vadd.s32 %v2164, 1
        %v2229 = vadd.s32 %v2165, 1
        %v2230 = vadd.s32 %v2166, 1
        %v2231 = vadd.s32 %v2167, 1
        %v2232 = vadd.s32 %v2168, 1
        %v2233 = vadd.s32 %v2169, 1
        %v2234 = vadd.s32 %v2170, 1
        %v2235 = vadd.s32 %v2171, 1
        %v2236 = vadd.s32 %v2172, 1
        %v2237 = vadd.s32 %v2173, 1
        %v2238 = vadd.s32 %v2174, 1
        %v2239 = vadd.s32 %v2175, 1
        %v2240 = vadd.s32 %v2176, 1
        %v2241 = vcvt.s32.f32 %v2177
        %v2242 = vcvt.s32.f32 %v2178
        %v2243 = vcvt.s32.f32 %v2179
        %v2244 = vcvt.s32.f32 %v2180
        %v2245 = vcvt.s32.f32 %v2181
        %v2246 = vcvt.s32.f32 %v2182
        %v2247 = vcvt.s32.f32 %v2183
        %v2248 = vcvt.s32.f32 %v2184
        %v2249 = vcvt.s32.f32 %v2185
        %v2250 = vcvt.s32.f32 %v2186
        %v2251 = vcvt.s32.f32 %v2187
        %v2252 = vcvt.s32.f32 %v2188
        %v2253 = vcvt.s32.f32 %v2189
        %v2254 = vcvt.s32.f32 %v2190
        %v2255 = vcvt.s32.f32 %v2191
        %v2256 = vcvt.s32.f32 %v2192
        %v2257 = vcvt.s32.f32 %v2193
        %v2258 = vcvt.s32.f32 %v2194
        %v2259 = vcvt.s32.f32 %v2195
        %v2260 = vcvt.s32.f32 %v2196
        %v2261 = vcvt.s32.f32 %v2197
        %v2262 = vcvt.s32.f32 %v2198
        %v2263 = vcvt.s32.f32 %v2199
        %v2264 = vcvt.s32.f32 %v2200
        %v2265 = vcvt.s32.f32 %v2201
        %v2266 = vcvt.s32.f32 %v2202
        %v2267 = vcvt.s32.f32 %v2203
        %v2268 = vcvt.s32.f32 %v2204
        %v2269 = vcvt.s32.f32 %v2205
        %v2270 = vcvt.s32.f32 %v2206
        %v2271 = vcvt.s32.f32 %v2207
        %v2272 = vcvt.s32.f32 %v2208
        %v2273 = vcvt.s32.f32 %v2209
        %v2274 = vcvt.s32.f32 %v2210
        %v2275 = vcvt.s32.f32 %v2211
        %v2276 = vcvt.s32.f32 %v2212
        %v2277 = vcvt.s32.f32 %v2213
        %v2278 = vcvt.s32.f32 %v2214
        %v2279 = vcvt.s32.f32 %v2215
        %v2280 = vcvt.s32.f32 %v2216
        %v2281 = vcvt.s32.f32 %v2217
        %v2282 = vcvt.s32.f32 %v2218
        %v2283 = vcvt.s32.f32 %v2219
        %v2284 = vcvt.s32.f32 %v2220
        %v2285 = vcvt.s32.f32 %v2221
        %v2286 = vcvt.s32.f32 %v2222
        %v2287 = vcvt.s32.f32 %v2223
        %v2288 = vcvt.s32.f32 %v2224
        %v2289 = vcvt.s32.f32 %v2225
        %v2290 = vcvt.s32.f32 %v2226
        %v2291 = vcvt.s32.f32 %v2227
        %v2292 = vcvt.s32.f32 %v2228
        %v2293 = vcvt.s32.f32 %v2229
        %v2294 = vcvt.s32.f32 %v2230
        %v2295 = vcvt.s32.f32 %v2231
        %v2296 = vcvt.s32.f32 %v2232
        %v2297 = vcvt.s32.f32 %v2233
        %v2298 = vcvt.s32.f32 %v2234
        %v2299 = vcvt.s32.f32 %v2235
        %v2300 = vcvt.s32.f32 %v2236
        %v2301 = vcvt.s32.f32 %v2237
        %v2302 = vcvt.s32.f32 %v2238
        %v2303 = vcvt.s32.f32 %v2239
        %v2304 = vcvt.s32.f32 %v2240
        %2305 = vst [vmem:[#allocation5] sm:$0xff] %v2241
        %2306 = vst [vmem:[#allocation5 + $0x8] sm:$0xff] %v2242
        %2307 = vst [vmem:[#allocation5 + $0x10] sm:$0xff] %v2243
        %2308 = vst [vmem:[#allocation5 + $0x18] sm:$0xff] %v2244
        %2309 = vst [vmem:[#allocation5 + $0x20] sm:$0xff] %v2245
        %2310 = vst [vmem:[#allocation5 + $0x28] sm:$0xff] %v2246
        %2311 = vst [vmem:[#allocation5 + $0x30] sm:$0xff] %v2247
        %2312 = vst [vmem:[#allocation5 + $0x38] sm:$0xff] %v2248
        %2313 = vst [vmem:[#allocation5 + $0x40] sm:$0xff] %v2249
        %2314 = vst [vmem:[#allocation5 + $0x48] sm:$0xff] %v2250
        %2315 = vst [vmem:[#allocation5 + $0x50] sm:$0xff] %v2251
        %2316 = vst [vmem:[#allocation5 + $0x58] sm:$0xff] %v2252
        %2317 = vst [vmem:[#allocation5 + $0x60] sm:$0xff] %v2253
        %2318 = vst [vmem:[#allocation5 + $0x68] sm:$0xff] %v2254
        %2319 = vst [vmem:[#allocation5 + $0x70] sm:$0xff] %v2255
        %2320 = vst [vmem:[#allocation5 + $0x78] sm:$0xff] %v2256
        %2321 = vst [vmem:[#allocation5 + $0x80] sm:$0xff] %v2257
        %2322 = vst [vmem:[#allocation5 + $0x88] sm:$0xff] %v2258
        %2323 = vst [vmem:[#allocation5 + $0x90] sm:$0xff] %v2259
        %2324 = vst [vmem:[#allocation5 + $0x98] sm:$0xff] %v2260
        %2325 = vst [vmem:[#allocation5 + $0xa0] sm:$0xff] %v2261
        %2326 = vst [vmem:[#allocation5 + $0xa8] sm:$0xff] %v2262
        %2327 = vst [vmem:[#allocation5 + $0xb0] sm:$0xff] %v2263
        %2328 = vst [vmem:[#allocation5 + $0xb8] sm:$0xff] %v2264
        %2329 = vst [vmem:[#allocation5 + $0xc0] sm:$0xff] %v2265
        %2330 = vst [vmem:[#allocation5 + $0xc8] sm:$0xff] %v2266
        %2331 = vst [vmem:[#allocation5 + $0xd0] sm:$0xff] %v2267
        %2332 = vst [vmem:[#allocation5 + $0xd8] sm:$0xff] %v2268
        %2333 = vst [vmem:[#allocation5 + $0xe0] sm:$0xff] %v2269
        %2334 = vst [vmem:[#allocation5 + $0xe8] sm:$0xff] %v2270
        %2335 = vst [vmem:[#allocation5 + $0xf0] sm:$0xff] %v2271
        %2336 = vst [vmem:[#allocation5 + $0xf8] sm:$0xff] %v2272
        %2337 = vst [vmem:[#allocation5 + $0x100] sm:$0xff] %v2273
        %2338 = vst [vmem:[#allocation5 + $0x108] sm:$0xff] %v2274
        %2339 = vst [vmem:[#allocation5 + $0x110] sm:$0xff] %v2275
        %2340 = vst [vmem:[#allocation5 + $0x118] sm:$0xff] %v2276
        %2341 = vst [vmem:[#allocation5 + $0x120] sm:$0xff] %v2277
        %2342 = vst [vmem:[#allocation5 + $0x128] sm:$0xff] %v2278
        %2343 = vst [vmem:[#allocation5 + $0x130] sm:$0xff] %v2279
        %2344 = vst [vmem:[#allocation5 + $0x138] sm:$0xff] %v2280
        %2345 = vst [vmem:[#allocation5 + $0x140] sm:$0xff] %v2281
        %2346 = vst [vmem:[#allocation5 + $0x148] sm:$0xff] %v2282
        %2347 = vst [vmem:[#allocation5 + $0x150] sm:$0xff] %v2283
        %2348 = vst [vmem:[#allocation5 + $0x158] sm:$0xff] %v2284
        %2349 = vst [vmem:[#allocation5 + $0x160] sm:$0xff] %v2285
        %2350 = vst [vmem:[#allocation5 + $0x168] sm:$0xff] %v2286
        %2351 = vst [vmem:[#allocation5 + $0x170] sm:$0xff] %v2287
        %2352 = vst [vmem:[#allocation5 + $0x178] sm:$0xff] %v2288
        %2353 = vst [vmem:[#allocation5 + $0x180] sm:$0xff] %v2289
        %2354 = vst [vmem:[#allocation5 + $0x188] sm:$0xff] %v2290
        %2355 = vst [vmem:[#allocation5 + $0x190] sm:$0xff] %v2291
        %2356 = vst [vmem:[#allocation5 + $0x198] sm:$0xff] %v2292
        %2357 = vst [vmem:[#allocation5 + $0x1a0] sm:$0xff] %v2293
        %2358 = vst [vmem:[#allocation5 + $0x1a8] sm:$0xff] %v2294
        %2359 = vst [vmem:[#allocation5 + $0x1b0] sm:$0xff] %v2295
        %2360 = vst [vmem:[#allocation5 + $0x1b8] sm:$0xff] %v2296
        %2361 = vst [vmem:[#allocation5 + $0x1c0] sm:$0xff] %v2297
        %2362 = vst [vmem:[#allocation5 + $0x1c8] sm:$0xff] %v2298
        %2363 = vst [vmem:[#allocation5 + $0x1d0] sm:$0xff] %v2299
        %2364 = vst [vmem:[#allocation5 + $0x1d8] sm:$0xff] %v2300
        %2365 = vst [vmem:[#allocation5 + $0x1e0] sm:$0xff] %v2301
        %2366 = vst [vmem:[#allocation5 + $0x1e8] sm:$0xff] %v2302
        %2367 = vst [vmem:[#allocation5 + $0x1f0] sm:$0xff] %v2303
        %2368 = vst [vmem:[#allocation5 + $0x1f8] sm:$0xff] %v2304
      $region36: #{dice_lovasz_bce_loss.3} parent=31 // pred_fallthru
        _
      %v2369 = vld [vmem:[%s172] sm:$0xff]
      %v2370 = vld [vmem:[%s172 + $0x8] sm:$0xff]
      %v2371 = vld [vmem:[%s172 + $0x10] sm:$0xff]
      %v2372 = vld [vmem:[%s172 + $0x18] sm:$0xff]
      %v2373 = vld [vmem:[%s172 + $0x20] sm:$0xff]
      %v2374 = vld [vmem:[%s172 + $0x28] sm:$0xff]
      %v2375 = vld [vmem:[%s172 + $0x30] sm:$0xff]
      %v2376 = vld [vmem:[%s172 + $0x38] sm:$0xff]
      %v2377 = vld [vmem:[%s172 + $0x40] sm:$0xff]
      %v2378 = vld [vmem:[%s172 + $0x48] sm:$0xff]
      %v2379 = vld [vmem:[%s172 + $0x50] sm:$0xff]
      %v2380 = vld [vmem:[%s172 + $0x58] sm:$0xff]
      %v2381 = vld [vmem:[%s172 + $0x60] sm:$0xff]
      %v2382 = vld [vmem:[%s172 + $0x68] sm:$0xff]
      %v2383 = vld [vmem:[%s172 + $0x70] sm:$0xff]
      %v2384 = vld [vmem:[%s172 + $0x78] sm:$0xff]
      %v2385 = vld [vmem:[%s172 + $0x80] sm:$0xff]
      %v2386 = vld [vmem:[%s172 + $0x88] sm:$0xff]
      %v2387 = vld [vmem:[%s172 + $0x90] sm:$0xff]
      %v2388 = vld [vmem:[%s172 + $0x98] sm:$0xff]
      %v2389 = vld [vmem:[%s172 + $0xa0] sm:$0xff]
      %v2390 = vld [vmem:[%s172 + $0xa8] sm:$0xff]
      %v2391 = vld [vmem:[%s172 + $0xb0] sm:$0xff]
      %v2392 = vld [vmem:[%s172 + $0xb8] sm:$0xff]
      %v2393 = vld [vmem:[%s172 + $0xc0] sm:$0xff]
      %v2394 = vld [vmem:[%s172 + $0xc8] sm:$0xff]
      %v2395 = vld [vmem:[%s172 + $0xd0] sm:$0xff]
      %v2396 = vld [vmem:[%s172 + $0xd8] sm:$0xff]
      %v2397 = vld [vmem:[%s172 + $0xe0] sm:$0xff]
      %v2398 = vld [vmem:[%s172 + $0xe8] sm:$0xff]
      %v2399 = vld [vmem:[%s172 + $0xf0] sm:$0xff]
      %v2400 = vld [vmem:[%s172 + $0xf8] sm:$0xff]
      %v2401 = vld [vmem:[%s172 + $0x100] sm:$0xff]
      %v2402 = vld [vmem:[%s172 + $0x108] sm:$0xff]
      %v2403 = vld [vmem:[%s172 + $0x110] sm:$0xff]
      %v2404 = vld [vmem:[%s172 + $0x118] sm:$0xff]
      %v2405 = vld [vmem:[%s172 + $0x120] sm:$0xff]
      %v2406 = vld [vmem:[%s172 + $0x128] sm:$0xff]
      %v2407 = vld [vmem:[%s172 + $0x130] sm:$0xff]
      %v2408 = vld [vmem:[%s172 + $0x138] sm:$0xff]
      %v2409 = vld [vmem:[%s172 + $0x140] sm:$0xff]
      %v2410 = vld [vmem:[%s172 + $0x148] sm:$0xff]
      %v2411 = vld [vmem:[%s172 + $0x150] sm:$0xff]
      %v2412 = vld [vmem:[%s172 + $0x158] sm:$0xff]
      %v2413 = vld [vmem:[%s172 + $0x160] sm:$0xff]
      %v2414 = vld [vmem:[%s172 + $0x168] sm:$0xff]
      %v2415 = vld [vmem:[%s172 + $0x170] sm:$0xff]
      %v2416 = vld [vmem:[%s172 + $0x178] sm:$0xff]
      %v2417 = vld [vmem:[%s172 + $0x180] sm:$0xff]
      %v2418 = vld [vmem:[%s172 + $0x188] sm:$0xff]
      %v2419 = vld [vmem:[%s172 + $0x190] sm:$0xff]
      %v2420 = vld [vmem:[%s172 + $0x198] sm:$0xff]
      %v2421 = vld [vmem:[%s172 + $0x1a0] sm:$0xff]
      %v2422 = vld [vmem:[%s172 + $0x1a8] sm:$0xff]
      %v2423 = vld [vmem:[%s172 + $0x1b0] sm:$0xff]
      %v2424 = vld [vmem:[%s172 + $0x1b8] sm:$0xff]
      %v2425 = vld [vmem:[%s172 + $0x1c0] sm:$0xff]
      %v2426 = vld [vmem:[%s172 + $0x1c8] sm:$0xff]
      %v2427 = vld [vmem:[%s172 + $0x1d0] sm:$0xff]
      %v2428 = vld [vmem:[%s172 + $0x1d8] sm:$0xff]
      %v2429 = vld [vmem:[%s172 + $0x1e0] sm:$0xff]
      %v2430 = vld [vmem:[%s172 + $0x1e8] sm:$0xff]
      %v2431 = vld [vmem:[%s172 + $0x1f0] sm:$0xff]
      %v2432 = vld [vmem:[%s172 + $0x1f8] sm:$0xff]
      %v2433 = vld [vmem:[%s178] sm:$0xf]
      %v2434 = vld [vmem:[%s178 + $0x4] sm:$0xf]
      %v2435 = vld [vmem:[%s178 + $0x8] sm:$0xf]
      %v2436 = vld [vmem:[%s178 + $0xc] sm:$0xf]
      %v2437 = vld [vmem:[%s178 + $0x10] sm:$0xf]
      %v2438 = vld [vmem:[%s178 + $0x14] sm:$0xf]
      %v2439 = vld [vmem:[%s178 + $0x18] sm:$0xf]
      %v2440 = vld [vmem:[%s178 + $0x1c] sm:$0xf]
      %v2441 = vld [vmem:[%s178 + $0x20] sm:$0xf]
      %v2442 = vld [vmem:[%s178 + $0x24] sm:$0xf]
      %v2443 = vld [vmem:[%s178 + $0x28] sm:$0xf]
      %v2444 = vld [vmem:[%s178 + $0x2c] sm:$0xf]
      %v2445 = vld [vmem:[%s178 + $0x30] sm:$0xf]
      %v2446 = vld [vmem:[%s178 + $0x34] sm:$0xf]
      %v2447 = vld [vmem:[%s178 + $0x38] sm:$0xf]
      %v2448 = vld [vmem:[%s178 + $0x3c] sm:$0xf]
      %v2449 = vld [vmem:[%s178 + $0x40] sm:$0xf]
      %v2450 = vld [vmem:[%s178 + $0x44] sm:$0xf]
      %v2451 = vld [vmem:[%s178 + $0x48] sm:$0xf]
      %v2452 = vld [vmem:[%s178 + $0x4c] sm:$0xf]
      %v2453 = vld [vmem:[%s178 + $0x50] sm:$0xf]
      %v2454 = vld [vmem:[%s178 + $0x54] sm:$0xf]
      %v2455 = vld [vmem:[%s178 + $0x58] sm:$0xf]
      %v2456 = vld [vmem:[%s178 + $0x5c] sm:$0xf]
      %v2457 = vld [vmem:[%s178 + $0x60] sm:$0xf]
      %v2458 = vld [vmem:[%s178 + $0x64] sm:$0xf]
      %v2459 = vld [vmem:[%s178 + $0x68] sm:$0xf]
      %v2460 = vld [vmem:[%s178 + $0x6c] sm:$0xf]
      %v2461 = vld [vmem:[%s178 + $0x70] sm:$0xf]
      %v2462 = vld [vmem:[%s178 + $0x74] sm:$0xf]
      %v2463 = vld [vmem:[%s178 + $0x78] sm:$0xf]
      %v2464 = vld [vmem:[%s178 + $0x7c] sm:$0xf]
      %v2465 = vld [vmem:[%s178 + $0x80] sm:$0xf]
      %v2466 = vld [vmem:[%s178 + $0x84] sm:$0xf]
      %v2467 = vld [vmem:[%s178 + $0x88] sm:$0xf]
      %v2468 = vld [vmem:[%s178 + $0x8c] sm:$0xf]
      %v2469 = vld [vmem:[%s178 + $0x90] sm:$0xf]
      %v2470 = vld [vmem:[%s178 + $0x94] sm:$0xf]
      %v2471 = vld [vmem:[%s178 + $0x98] sm:$0xf]
      %v2472 = vld [vmem:[%s178 + $0x9c] sm:$0xf]
      %v2473 = vld [vmem:[%s178 + $0xa0] sm:$0xf]
      %v2474 = vld [vmem:[%s178 + $0xa4] sm:$0xf]
      %v2475 = vld [vmem:[%s178 + $0xa8] sm:$0xf]
      %v2476 = vld [vmem:[%s178 + $0xac] sm:$0xf]
      %v2477 = vld [vmem:[%s178 + $0xb0] sm:$0xf]
      %v2478 = vld [vmem:[%s178 + $0xb4] sm:$0xf]
      %v2479 = vld [vmem:[%s178 + $0xb8] sm:$0xf]
      %v2480 = vld [vmem:[%s178 + $0xbc] sm:$0xf]
      %v2481 = vld [vmem:[%s178 + $0xc0] sm:$0xf]
      %v2482 = vld [vmem:[%s178 + $0xc4] sm:$0xf]
      %v2483 = vld [vmem:[%s178 + $0xc8] sm:$0xf]
      %v2484 = vld [vmem:[%s178 + $0xcc] sm:$0xf]
      %v2485 = vld [vmem:[%s178 + $0xd0] sm:$0xf]
      %v2486 = vld [vmem:[%s178 + $0xd4] sm:$0xf]
      %v2487 = vld [vmem:[%s178 + $0xd8] sm:$0xf]
      %v2488 = vld [vmem:[%s178 + $0xdc] sm:$0xf]
      %v2489 = vld [vmem:[%s178 + $0xe0] sm:$0xf]
      %v2490 = vld [vmem:[%s178 + $0xe4] sm:$0xf]
      %v2491 = vld [vmem:[%s178 + $0xe8] sm:$0xf]
      %v2492 = vld [vmem:[%s178 + $0xec] sm:$0xf]
      %v2493 = vld [vmem:[%s178 + $0xf0] sm:$0xf]
      %v2494 = vld [vmem:[%s178 + $0xf4] sm:$0xf]
      %v2495 = vld [vmem:[%s178 + $0xf8] sm:$0xf]
      %v2496 = vld [vmem:[%s178 + $0xfc] sm:$0xf]
      %v2497 = vunpack.c.l.bf16 %v2433
      %v2498 = vunpack.c.l.bf16 %v2434
      %v2499 = vunpack.c.l.bf16 %v2435
      %v2500 = vunpack.c.l.bf16 %v2436
      %v2501 = vunpack.c.l.bf16 %v2437
      %v2502 = vunpack.c.l.bf16 %v2438
      %v2503 = vunpack.c.l.bf16 %v2439
      %v2504 = vunpack.c.l.bf16 %v2440
      %v2505 = vunpack.c.l.bf16 %v2441
      %v2506 = vunpack.c.l.bf16 %v2442
      %v2507 = vunpack.c.l.bf16 %v2443
      %v2508 = vunpack.c.l.bf16 %v2444
      %v2509 = vunpack.c.l.bf16 %v2445
      %v2510 = vunpack.c.l.bf16 %v2446
      %v2511 = vunpack.c.l.bf16 %v2447
      %v2512 = vunpack.c.l.bf16 %v2448
      %v2513 = vunpack.c.l.bf16 %v2449
      %v2514 = vunpack.c.l.bf16 %v2450
      %v2515 = vunpack.c.l.bf16 %v2451
      %v2516 = vunpack.c.l.bf16 %v2452
      %v2517 = vunpack.c.l.bf16 %v2453
      %v2518 = vunpack.c.l.bf16 %v2454
      %v2519 = vunpack.c.l.bf16 %v2455
      %v2520 = vunpack.c.l.bf16 %v2456
      %v2521 = vunpack.c.l.bf16 %v2457
      %v2522 = vunpack.c.l.bf16 %v2458
      %v2523 = vunpack.c.l.bf16 %v2459
      %v2524 = vunpack.c.l.bf16 %v2460
      %v2525 = vunpack.c.l.bf16 %v2461
      %v2526 = vunpack.c.l.bf16 %v2462
      %v2527 = vunpack.c.l.bf16 %v2463
      %v2528 = vunpack.c.l.bf16 %v2464
      %v2529 = vunpack.c.l.bf16 %v2465
      %v2530 = vunpack.c.l.bf16 %v2466
      %v2531 = vunpack.c.l.bf16 %v2467
      %v2532 = vunpack.c.l.bf16 %v2468
      %v2533 = vunpack.c.l.bf16 %v2469
      %v2534 = vunpack.c.l.bf16 %v2470
      %v2535 = vunpack.c.l.bf16 %v2471
      %v2536 = vunpack.c.l.bf16 %v2472
      %v2537 = vunpack.c.l.bf16 %v2473
      %v2538 = vunpack.c.l.bf16 %v2474
      %v2539 = vunpack.c.l.bf16 %v2475
      %v2540 = vunpack.c.l.bf16 %v2476
      %v2541 = vunpack.c.l.bf16 %v2477
      %v2542 = vunpack.c.l.bf16 %v2478
      %v2543 = vunpack.c.l.bf16 %v2479
      %v2544 = vunpack.c.l.bf16 %v2480
      %v2545 = vunpack.c.l.bf16 %v2481
      %v2546 = vunpack.c.l.bf16 %v2482
      %v2547 = vunpack.c.l.bf16 %v2483
      %v2548 = vunpack.c.l.bf16 %v2484
      %v2549 = vunpack.c.l.bf16 %v2485
      %v2550 = vunpack.c.l.bf16 %v2486
      %v2551 = vunpack.c.l.bf16 %v2487
      %v2552 = vunpack.c.l.bf16 %v2488
      %v2553 = vunpack.c.l.bf16 %v2489
      %v2554 = vunpack.c.l.bf16 %v2490
      %v2555 = vunpack.c.l.bf16 %v2491
      %v2556 = vunpack.c.l.bf16 %v2492
      %v2557 = vunpack.c.l.bf16 %v2493
      %v2558 = vunpack.c.l.bf16 %v2494
      %v2559 = vunpack.c.l.bf16 %v2495
      %v2560 = vunpack.c.l.bf16 %v2496
      %v2561 = vld [vmem:[%s2] sm:$0x1]
      %v2562 = vld [vmem:[#allocation2] sm:$0x1]
      %v2563 = vld [vmem:[#allocation3] sm:$0xf]
      %v2564 = vld [vmem:[#allocation3 + $0x4] sm:$0xf]
      %v2565 = vld [vmem:[#allocation3 + $0x8] sm:$0xf]
      %v2566 = vld [vmem:[#allocation3 + $0xc] sm:$0xf]
      %v2567 = vld [vmem:[#allocation3 + $0x10] sm:$0xf]
      %v2568 = vld [vmem:[#allocation3 + $0x14] sm:$0xf]
      %v2569 = vld [vmem:[#allocation3 + $0x18] sm:$0xf]
      %v2570 = vld [vmem:[#allocation3 + $0x1c] sm:$0xf]
      %v2571 = vld [vmem:[#allocation3 + $0x20] sm:$0xf]
      %v2572 = vld [vmem:[#allocation3 + $0x24] sm:$0xf]
      %v2573 = vld [vmem:[#allocation3 + $0x28] sm:$0xf]
      %v2574 = vld [vmem:[#allocation3 + $0x2c] sm:$0xf]
      %v2575 = vld [vmem:[#allocation3 + $0x30] sm:$0xf]
      %v2576 = vld [vmem:[#allocation3 + $0x34] sm:$0xf]
      %v2577 = vld [vmem:[#allocation3 + $0x38] sm:$0xf]
      %v2578 = vld [vmem:[#allocation3 + $0x3c] sm:$0xf]
      %v2579 = vld [vmem:[#allocation4] sm:$0xff]
      %v2580 = vld [vmem:[#allocation4 + $0x8] sm:$0xff]
      %v2581 = vld [vmem:[#allocation4 + $0x10] sm:$0xff]
      %v2582 = vld [vmem:[#allocation4 + $0x18] sm:$0xff]
      %v2583 = vld [vmem:[#allocation4 + $0x20] sm:$0xff]
      %v2584 = vld [vmem:[#allocation4 + $0x28] sm:$0xff]
      %v2585 = vld [vmem:[#allocation4 + $0x30] sm:$0xff]
      %v2586 = vld [vmem:[#allocation4 + $0x38] sm:$0xff]
      %v2587 = vld [vmem:[#allocation4 + $0x40] sm:$0xff]
      %v2588 = vld [vmem:[#allocation4 + $0x48] sm:$0xff]
      %v2589 = vld [vmem:[#allocation4 + $0x50] sm:$0xff]
      %v2590 = vld [vmem:[#allocation4 + $0x58] sm:$0xff]
      %v2591 = vld [vmem:[#allocation4 + $0x60] sm:$0xff]
      %v2592 = vld [vmem:[#allocation4 + $0x68] sm:$0xff]
      %v2593 = vld [vmem:[#allocation4 + $0x70] sm:$0xff]
      %v2594 = vld [vmem:[#allocation4 + $0x78] sm:$0xff]
      %v2595 = vld [vmem:[#allocation4 + $0x80] sm:$0xff]
      %v2596 = vld [vmem:[#allocation4 + $0x88] sm:$0xff]
      %v2597 = vld [vmem:[#allocation4 + $0x90] sm:$0xff]
      %v2598 = vld [vmem:[#allocation4 + $0x98] sm:$0xff]
      %v2599 = vld [vmem:[#allocation4 + $0xa0] sm:$0xff]
      %v2600 = vld [vmem:[#allocation4 + $0xa8] sm:$0xff]
      %v2601 = vld [vmem:[#allocation4 + $0xb0] sm:$0xff]
      %v2602 = vld [vmem:[#allocation4 + $0xb8] sm:$0xff]
      %v2603 = vld [vmem:[#allocation4 + $0xc0] sm:$0xff]
      %v2604 = vld [vmem:[#allocation4 + $0xc8] sm:$0xff]
      %v2605 = vld [vmem:[#allocation4 + $0xd0] sm:$0xff]
      %v2606 = vld [vmem:[#allocation4 + $0xd8] sm:$0xff]
      %v2607 = vld [vmem:[#allocation4 + $0xe0] sm:$0xff]
      %v2608 = vld [vmem:[#allocation4 + $0xe8] sm:$0xff]
      %v2609 = vld [vmem:[#allocation4 + $0xf0] sm:$0xff]
      %v2610 = vld [vmem:[#allocation4 + $0xf8] sm:$0xff]
      %v2611 = vld [vmem:[#allocation4 + $0x100] sm:$0xff]
      %v2612 = vld [vmem:[#allocation4 + $0x108] sm:$0xff]
      %v2613 = vld [vmem:[#allocation4 + $0x110] sm:$0xff]
      %v2614 = vld [vmem:[#allocation4 + $0x118] sm:$0xff]
      %v2615 = vld [vmem:[#allocation4 + $0x120] sm:$0xff]
      %v2616 = vld [vmem:[#allocation4 + $0x128] sm:$0xff]
      %v2617 = vld [vmem:[#allocation4 + $0x130] sm:$0xff]
      %v2618 = vld [vmem:[#allocation4 + $0x138] sm:$0xff]
      %v2619 = vld [vmem:[#allocation4 + $0x140] sm:$0xff]
      %v2620 = vld [vmem:[#allocation4 + $0x148] sm:$0xff]
      %v2621 = vld [vmem:[#allocation4 + $0x150] sm:$0xff]
      %v2622 = vld [vmem:[#allocation4 + $0x158] sm:$0xff]
      %v2623 = vld [vmem:[#allocation4 + $0x160] sm:$0xff]
      %v2624 = vld [vmem:[#allocation4 + $0x168] sm:$0xff]
      %v2625 = vld [vmem:[#allocation4 + $0x170] sm:$0xff]
      %v2626 = vld [vmem:[#allocation4 + $0x178] sm:$0xff]
      %v2627 = vld [vmem:[#allocation4 + $0x180] sm:$0xff]
      %v2628 = vld [vmem:[#allocation4 + $0x188] sm:$0xff]
      %v2629 = vld [vmem:[#allocation4 + $0x190] sm:$0xff]
      %v2630 = vld [vmem:[#allocation4 + $0x198] sm:$0xff]
      %v2631 = vld [vmem:[#allocation4 + $0x1a0] sm:$0xff]
      %v2632 = vld [vmem:[#allocation4 + $0x1a8] sm:$0xff]
      %v2633 = vld [vmem:[#allocation4 + $0x1b0] sm:$0xff]
      %v2634 = vld [vmem:[#allocation4 + $0x1b8] sm:$0xff]
      %v2635 = vld [vmem:[#allocation4 + $0x1c0] sm:$0xff]
      %v2636 = vld [vmem:[#allocation4 + $0x1c8] sm:$0xff]
      %v2637 = vld [vmem:[#allocation4 + $0x1d0] sm:$0xff]
      %v2638 = vld [vmem:[#allocation4 + $0x1d8] sm:$0xff]
      %v2639 = vld [vmem:[#allocation4 + $0x1e0] sm:$0xff]
      %v2640 = vld [vmem:[#allocation4 + $0x1e8] sm:$0xff]
      %v2641 = vld [vmem:[#allocation4 + $0x1f0] sm:$0xff]
      %v2642 = vld [vmem:[#allocation4 + $0x1f8] sm:$0xff]
      %v2643 = vld [vmem:[#allocation4 + $0x200] sm:$0xff]
      %v2644 = vld [vmem:[#allocation4 + $0x208] sm:$0xff]
      %v2645 = vld [vmem:[#allocation4 + $0x210] sm:$0xff]
      %v2646 = vld [vmem:[#allocation4 + $0x218] sm:$0xff]
      %v2647 = vld [vmem:[#allocation4 + $0x220] sm:$0xff]
      %v2648 = vld [vmem:[#allocation4 + $0x228] sm:$0xff]
      %v2649 = vld [vmem:[#allocation4 + $0x230] sm:$0xff]
      %v2650 = vld [vmem:[#allocation4 + $0x238] sm:$0xff]
      %v2651 = vld [vmem:[#allocation4 + $0x240] sm:$0xff]
      %v2652 = vld [vmem:[#allocation4 + $0x248] sm:$0xff]
      %v2653 = vld [vmem:[#allocation4 + $0x250] sm:$0xff]
      %v2654 = vld [vmem:[#allocation4 + $0x258] sm:$0xff]
      %v2655 = vld [vmem:[#allocation4 + $0x260] sm:$0xff]
      %v2656 = vld [vmem:[#allocation4 + $0x268] sm:$0xff]
      %v2657 = vld [vmem:[#allocation4 + $0x270] sm:$0xff]
      %v2658 = vld [vmem:[#allocation4 + $0x278] sm:$0xff]
      %v2659 = vld [vmem:[#allocation4 + $0x280] sm:$0xff]
      %v2660 = vld [vmem:[#allocation4 + $0x288] sm:$0xff]
      %v2661 = vld [vmem:[#allocation4 + $0x290] sm:$0xff]
      %v2662 = vld [vmem:[#allocation4 + $0x298] sm:$0xff]
      %v2663 = vld [vmem:[#allocation4 + $0x2a0] sm:$0xff]
      %v2664 = vld [vmem:[#allocation4 + $0x2a8] sm:$0xff]
      %v2665 = vld [vmem:[#allocation4 + $0x2b0] sm:$0xff]
      %v2666 = vld [vmem:[#allocation4 + $0x2b8] sm:$0xff]
      %v2667 = vld [vmem:[#allocation4 + $0x2c0] sm:$0xff]
      %v2668 = vld [vmem:[#allocation4 + $0x2c8] sm:$0xff]
      %v2669 = vld [vmem:[#allocation4 + $0x2d0] sm:$0xff]
      %v2670 = vld [vmem:[#allocation4 + $0x2d8] sm:$0xff]
      %v2671 = vld [vmem:[#allocation4 + $0x2e0] sm:$0xff]
      %v2672 = vld [vmem:[#allocation4 + $0x2e8] sm:$0xff]
      %v2673 = vld [vmem:[#allocation4 + $0x2f0] sm:$0xff]
      %v2674 = vld [vmem:[#allocation4 + $0x2f8] sm:$0xff]
      %v2675 = vld [vmem:[#allocation4 + $0x300] sm:$0xff]
      %v2676 = vld [vmem:[#allocation4 + $0x308] sm:$0xff]
      %v2677 = vld [vmem:[#allocation4 + $0x310] sm:$0xff]
      %v2678 = vld [vmem:[#allocation4 + $0x318] sm:$0xff]
      %v2679 = vld [vmem:[#allocation4 + $0x320] sm:$0xff]
      %v2680 = vld [vmem:[#allocation4 + $0x328] sm:$0xff]
      %v2681 = vld [vmem:[#allocation4 + $0x330] sm:$0xff]
      %v2682 = vld [vmem:[#allocation4 + $0x338] sm:$0xff]
      %v2683 = vld [vmem:[#allocation4 + $0x340] sm:$0xff]
      %v2684 = vld [vmem:[#allocation4 + $0x348] sm:$0xff]
      %v2685 = vld [vmem:[#allocation4 + $0x350] sm:$0xff]
      %v2686 = vld [vmem:[#allocation4 + $0x358] sm:$0xff]
      %v2687 = vld [vmem:[#allocation4 + $0x360] sm:$0xff]
      %v2688 = vld [vmem:[#allocation4 + $0x368] sm:$0xff]
      %v2689 = vld [vmem:[#allocation4 + $0x370] sm:$0xff]
      %v2690 = vld [vmem:[#allocation4 + $0x378] sm:$0xff]
      %v2691 = vld [vmem:[#allocation4 + $0x380] sm:$0xff]
      %v2692 = vld [vmem:[#allocation4 + $0x388] sm:$0xff]
      %v2693 = vld [vmem:[#allocation4 + $0x390] sm:$0xff]
      %v2694 = vld [vmem:[#allocation4 + $0x398] sm:$0xff]
      %v2695 = vld [vmem:[#allocation4 + $0x3a0] sm:$0xff]
      %v2696 = vld [vmem:[#allocation4 + $0x3a8] sm:$0xff]
      %v2697 = vld [vmem:[#allocation4 + $0x3b0] sm:$0xff]
      %v2698 = vld [vmem:[#allocation4 + $0x3b8] sm:$0xff]
      %v2699 = vld [vmem:[#allocation4 + $0x3c0] sm:$0xff]
      %v2700 = vld [vmem:[#allocation4 + $0x3c8] sm:$0xff]
      %v2701 = vld [vmem:[#allocation4 + $0x3d0] sm:$0xff]
      %v2702 = vld [vmem:[#allocation4 + $0x3d8] sm:$0xff]
      %v2703 = vld [vmem:[#allocation4 + $0x3e0] sm:$0xff]
      %v2704 = vld [vmem:[#allocation4 + $0x3e8] sm:$0xff]
      %v2705 = vld [vmem:[#allocation4 + $0x3f0] sm:$0xff]
      %v2706 = vld [vmem:[#allocation4 + $0x3f8] sm:$0xff]
      %v2835 = vunpack.c.l.b16 %v2579
      %v2836 = vunpack.c.h.b16 %v2579
      %v2837 = vunpack.c.l.b16 %v2580
      %v2838 = vunpack.c.h.b16 %v2580
      %v2839 = vunpack.c.l.b16 %v2581
      %v2840 = vunpack.c.h.b16 %v2581
      %v2841 = vunpack.c.l.b16 %v2582
      %v2842 = vunpack.c.h.b16 %v2582
      %v2843 = vunpack.c.l.b16 %v2583
      %v2844 = vunpack.c.h.b16 %v2583
      %v2845 = vunpack.c.l.b16 %v2584
      %v2846 = vunpack.c.h.b16 %v2584
      %v2847 = vunpack.c.l.b16 %v2585
      %v2848 = vunpack.c.h.b16 %v2585
      %v2849 = vunpack.c.l.b16 %v2586
      %v2850 = vunpack.c.h.b16 %v2586
      %v2851 = vunpack.c.l.b16 %v2587
      %v2852 = vunpack.c.h.b16 %v2587
      %v2853 = vunpack.c.l.b16 %v2588
      %v2854 = vunpack.c.h.b16 %v2588
      %v2855 = vunpack.c.l.b16 %v2589
      %v2856 = vunpack.c.h.b16 %v2589
      %v2857 = vunpack.c.l.b16 %v2590
      %v2858 = vunpack.c.h.b16 %v2590
      %v2859 = vunpack.c.l.b16 %v2591
      %v2860 = vunpack.c.h.b16 %v2591
      %v2861 = vunpack.c.l.b16 %v2592
      %v2862 = vunpack.c.h.b16 %v2592
      %v2863 = vunpack.c.l.b16 %v2593
      %v2864 = vunpack.c.h.b16 %v2593
      %v2865 = vunpack.c.l.b16 %v2594
      %v2866 = vunpack.c.h.b16 %v2594
      %v2867 = vunpack.c.l.b16 %v2595
      %v2868 = vunpack.c.h.b16 %v2595
      %v2869 = vunpack.c.l.b16 %v2596
      %v2870 = vunpack.c.h.b16 %v2596
      %v2871 = vunpack.c.l.b16 %v2597
      %v2872 = vunpack.c.h.b16 %v2597
      %v2873 = vunpack.c.l.b16 %v2598
      %v2874 = vunpack.c.h.b16 %v2598
      %v2875 = vunpack.c.l.b16 %v2599
      %v2876 = vunpack.c.h.b16 %v2599
      %v2877 = vunpack.c.l.b16 %v2600
      %v2878 = vunpack.c.h.b16 %v2600
      %v2879 = vunpack.c.l.b16 %v2601
      %v2880 = vunpack.c.h.b16 %v2601
      %v2881 = vunpack.c.l.b16 %v2602
      %v2882 = vunpack.c.h.b16 %v2602
      %v2883 = vunpack.c.l.b16 %v2603
      %v2884 = vunpack.c.h.b16 %v2603
      %v2885 = vunpack.c.l.b16 %v2604
      %v2886 = vunpack.c.h.b16 %v2604
      %v2887 = vunpack.c.l.b16 %v2605
      %v2888 = vunpack.c.h.b16 %v2605
      %v2889 = vunpack.c.l.b16 %v2606
      %v2890 = vunpack.c.h.b16 %v2606
      %v2891 = vunpack.c.l.b16 %v2607
      %v2892 = vunpack.c.h.b16 %v2607
      %v2893 = vunpack.c.l.b16 %v2608
      %v2894 = vunpack.c.h.b16 %v2608
      %v2895 = vunpack.c.l.b16 %v2609
      %v2896 = vunpack.c.h.b16 %v2609
      %v2897 = vunpack.c.l.b16 %v2610
      %v2898 = vunpack.c.h.b16 %v2610
      %v2899 = vunpack.c.l.b16 %v2611
      %v2900 = vunpack.c.h.b16 %v2611
      %v2901 = vunpack.c.l.b16 %v2612
      %v2902 = vunpack.c.h.b16 %v2612
      %v2903 = vunpack.c.l.b16 %v2613
      %v2904 = vunpack.c.h.b16 %v2613
      %v2905 = vunpack.c.l.b16 %v2614
      %v2906 = vunpack.c.h.b16 %v2614
      %v2907 = vunpack.c.l.b16 %v2615
      %v2908 = vunpack.c.h.b16 %v2615
      %v2909 = vunpack.c.l.b16 %v2616
      %v2910 = vunpack.c.h.b16 %v2616
      %v2911 = vunpack.c.l.b16 %v2617
      %v2912 = vunpack.c.h.b16 %v2617
      %v2913 = vunpack.c.l.b16 %v2618
      %v2914 = vunpack.c.h.b16 %v2618
      %v2915 = vunpack.c.l.b16 %v2619
      %v2916 = vunpack.c.h.b16 %v2619
      %v2917 = vunpack.c.l.b16 %v2620
      %v2918 = vunpack.c.h.b16 %v2620
      %v2919 = vunpack.c.l.b16 %v2621
      %v2920 = vunpack.c.h.b16 %v2621
      %v2921 = vunpack.c.l.b16 %v2622
      %v2922 = vunpack.c.h.b16 %v2622
      %v2923 = vunpack.c.l.b16 %v2623
      %v2924 = vunpack.c.h.b16 %v2623
      %v2925 = vunpack.c.l.b16 %v2624
      %v2926 = vunpack.c.h.b16 %v2624
      %v2927 = vunpack.c.l.b16 %v2625
      %v2928 = vunpack.c.h.b16 %v2625
      %v2929 = vunpack.c.l.b16 %v2626
      %v2930 = vunpack.c.h.b16 %v2626
      %v2931 = vunpack.c.l.b16 %v2627
      %v2932 = vunpack.c.h.b16 %v2627
      %v2933 = vunpack.c.l.b16 %v2628
      %v2934 = vunpack.c.h.b16 %v2628
      %v2935 = vunpack.c.l.b16 %v2629
      %v2936 = vunpack.c.h.b16 %v2629
      %v2937 = vunpack.c.l.b16 %v2630
      %v2938 = vunpack.c.h.b16 %v2630
      %v2939 = vunpack.c.l.b16 %v2631
      %v2940 = vunpack.c.h.b16 %v2631
      %v2941 = vunpack.c.l.b16 %v2632
      %v2942 = vunpack.c.h.b16 %v2632
      %v2943 = vunpack.c.l.b16 %v2633
      %v2944 = vunpack.c.h.b16 %v2633
      %v2945 = vunpack.c.l.b16 %v2634
      %v2946 = vunpack.c.h.b16 %v2634
      %v2947 = vunpack.c.l.b16 %v2635
      %v2948 = vunpack.c.h.b16 %v2635
      %v2949 = vunpack.c.l.b16 %v2636
      %v2950 = vunpack.c.h.b16 %v2636
      %v2951 = vunpack.c.l.b16 %v2637
      %v2952 = vunpack.c.h.b16 %v2637
      %v2953 = vunpack.c.l.b16 %v2638
      %v2954 = vunpack.c.h.b16 %v2638
      %v2955 = vunpack.c.l.b16 %v2639
      %v2956 = vunpack.c.h.b16 %v2639
      %v2957 = vunpack.c.l.b16 %v2640
      %v2958 = vunpack.c.h.b16 %v2640
      %v2959 = vunpack.c.l.b16 %v2641
      %v2960 = vunpack.c.h.b16 %v2641
      %v2961 = vunpack.c.l.b16 %v2642
      %v2962 = vunpack.c.h.b16 %v2642
      %v2963 = vunpack.c.l.b16 %v2643
      %v2964 = vunpack.c.h.b16 %v2643
      %v2965 = vunpack.c.l.b16 %v2644
      %v2966 = vunpack.c.h.b16 %v2644
      %v2967 = vunpack.c.l.b16 %v2645
      %v2968 = vunpack.c.h.b16 %v2645
      %v2969 = vunpack.c.l.b16 %v2646
      %v2970 = vunpack.c.h.b16 %v2646
      %v2971 = vunpack.c.l.b16 %v2647
      %v2972 = vunpack.c.h.b16 %v2647
      %v2973 = vunpack.c.l.b16 %v2648
      %v2974 = vunpack.c.h.b16 %v2648
      %v2975 = vunpack.c.l.b16 %v2649
      %v2976 = vunpack.c.h.b16 %v2649
      %v2977 = vunpack.c.l.b16 %v2650
      %v2978 = vunpack.c.h.b16 %v2650
      %v2979 = vunpack.c.l.b16 %v2651
      %v2980 = vunpack.c.h.b16 %v2651
      %v2981 = vunpack.c.l.b16 %v2652
      %v2982 = vunpack.c.h.b16 %v2652
      %v2983 = vunpack.c.l.b16 %v2653
      %v2984 = vunpack.c.h.b16 %v2653
      %v2985 = vunpack.c.l.b16 %v2654
      %v2986 = vunpack.c.h.b16 %v2654
      %v2987 = vunpack.c.l.b16 %v2655
      %v2988 = vunpack.c.h.b16 %v2655
      %v2989 = vunpack.c.l.b16 %v2656
      %v2990 = vunpack.c.h.b16 %v2656
      %v2991 = vunpack.c.l.b16 %v2657
      %v2992 = vunpack.c.h.b16 %v2657
      %v2993 = vunpack.c.l.b16 %v2658
      %v2994 = vunpack.c.h.b16 %v2658
      %v2995 = vunpack.c.l.b16 %v2659
      %v2996 = vunpack.c.h.b16 %v2659
      %v2997 = vunpack.c.l.b16 %v2660
      %v2998 = vunpack.c.h.b16 %v2660
      %v2999 = vunpack.c.l.b16 %v2661
      %v3000 = vunpack.c.h.b16 %v2661
      %v3001 = vunpack.c.l.b16 %v2662
      %v3002 = vunpack.c.h.b16 %v2662
      %v3003 = vunpack.c.l.b16 %v2663
      %v3004 = vunpack.c.h.b16 %v2663
      %v3005 = vunpack.c.l.b16 %v2664
      %v3006 = vunpack.c.h.b16 %v2664
      %v3007 = vunpack.c.l.b16 %v2665
      %v3008 = vunpack.c.h.b16 %v2665
      %v3009 = vunpack.c.l.b16 %v2666
      %v3010 = vunpack.c.h.b16 %v2666
      %v3011 = vunpack.c.l.b16 %v2667
      %v3012 = vunpack.c.h.b16 %v2667
      %v3013 = vunpack.c.l.b16 %v2668
      %v3014 = vunpack.c.h.b16 %v2668
      %v3015 = vunpack.c.l.b16 %v2669
      %v3016 = vunpack.c.h.b16 %v2669
      %v3017 = vunpack.c.l.b16 %v2670
      %v3018 = vunpack.c.h.b16 %v2670
      %v3019 = vunpack.c.l.b16 %v2671
      %v3020 = vunpack.c.h.b16 %v2671
      %v3021 = vunpack.c.l.b16 %v2672
      %v3022 = vunpack.c.h.b16 %v2672
      %v3023 = vunpack.c.l.b16 %v2673
      %v3024 = vunpack.c.h.b16 %v2673
      %v3025 = vunpack.c.l.b16 %v2674
      %v3026 = vunpack.c.h.b16 %v2674
      %v3027 = vunpack.c.l.b16 %v2675
      %v3028 = vunpack.c.h.b16 %v2675
      %v3029 = vunpack.c.l.b16 %v2676
      %v3030 = vunpack.c.h.b16 %v2676
      %v3031 = vunpack.c.l.b16 %v2677
      %v3032 = vunpack.c.h.b16 %v2677
      %v3033 = vunpack.c.l.b16 %v2678
      %v3034 = vunpack.c.h.b16 %v2678
      %v3035 = vunpack.c.l.b16 %v2679
      %v3036 = vunpack.c.h.b16 %v2679
      %v3037 = vunpack.c.l.b16 %v2680
      %v3038 = vunpack.c.h.b16 %v2680
      %v3039 = vunpack.c.l.b16 %v2681
      %v3040 = vunpack.c.h.b16 %v2681
      %v3041 = vunpack.c.l.b16 %v2682
      %v3042 = vunpack.c.h.b16 %v2682
      %v3043 = vunpack.c.l.b16 %v2683
      %v3044 = vunpack.c.h.b16 %v2683
      %v3045 = vunpack.c.l.b16 %v2684
      %v3046 = vunpack.c.h.b16 %v2684
      %v3047 = vunpack.c.l.b16 %v2685
      %v3048 = vunpack.c.h.b16 %v2685
      %v3049 = vunpack.c.l.b16 %v2686
      %v3050 = vunpack.c.h.b16 %v2686
      %v3051 = vunpack.c.l.b16 %v2687
      %v3052 = vunpack.c.h.b16 %v2687
      %v3053 = vunpack.c.l.b16 %v2688
      %v3054 = vunpack.c.h.b16 %v2688
      %v3055 = vunpack.c.l.b16 %v2689
      %v3056 = vunpack.c.h.b16 %v2689
      %v3057 = vunpack.c.l.b16 %v2690
      %v3058 = vunpack.c.h.b16 %v2690
      %v3059 = vunpack.c.l.b16 %v2691
      %v3060 = vunpack.c.h.b16 %v2691
      %v3061 = vunpack.c.l.b16 %v2692
      %v3062 = vunpack.c.h.b16 %v2692
      %v3063 = vunpack.c.l.b16 %v2693
      %v3064 = vunpack.c.h.b16 %v2693
      %v3065 = vunpack.c.l.b16 %v2694
      %v3066 = vunpack.c.h.b16 %v2694
      %v3067 = vunpack.c.l.b16 %v2695
      %v3068 = vunpack.c.h.b16 %v2695
      %v3069 = vunpack.c.l.b16 %v2696
      %v3070 = vunpack.c.h.b16 %v2696
      %v3071 = vunpack.c.l.b16 %v2697
      %v3072 = vunpack.c.h.b16 %v2697
      %v3073 = vunpack.c.l.b16 %v2698
      %v3074 = vunpack.c.h.b16 %v2698
      %v3075 = vunpack.c.l.b16 %v2699
      %v3076 = vunpack.c.h.b16 %v2699
      %v3077 = vunpack.c.l.b16 %v2700
      %v3078 = vunpack.c.h.b16 %v2700
      %v3079 = vunpack.c.l.b16 %v2701
      %v3080 = vunpack.c.h.b16 %v2701
      %v3081 = vunpack.c.l.b16 %v2702
      %v3082 = vunpack.c.h.b16 %v2702
      %v3083 = vunpack.c.l.b16 %v2703
      %v3084 = vunpack.c.h.b16 %v2703
      %v3085 = vunpack.c.l.b16 %v2704
      %v3086 = vunpack.c.h.b16 %v2704
      %v3087 = vunpack.c.l.b16 %v2705
      %v3088 = vunpack.c.h.b16 %v2705
      %v3089 = vunpack.c.l.b16 %v2706
      %v3090 = vunpack.c.h.b16 %v2706
      %v3091 = vpack.c.b16 %v2839, %v2835
      %v3092 = vpack.c.b16 %v2840, %v2836
      %v3093 = vpack.c.b16 %v2841, %v2837
      %v3094 = vpack.c.b16 %v2842, %v2838
      %v3095 = vpack.c.b16 %v2847, %v2843
      %v3096 = vpack.c.b16 %v2848, %v2844
      %v3097 = vpack.c.b16 %v2849, %v2845
      %v3098 = vpack.c.b16 %v2850, %v2846
      %v3099 = vpack.c.b16 %v2855, %v2851
      %v3100 = vpack.c.b16 %v2856, %v2852
      %v3101 = vpack.c.b16 %v2857, %v2853
      %v3102 = vpack.c.b16 %v2858, %v2854
      %v3103 = vpack.c.b16 %v2863, %v2859
      %v3104 = vpack.c.b16 %v2864, %v2860
      %v3105 = vpack.c.b16 %v2865, %v2861
      %v3106 = vpack.c.b16 %v2866, %v2862
      %v3107 = vpack.c.b16 %v2871, %v2867
      %v3108 = vpack.c.b16 %v2872, %v2868
      %v3109 = vpack.c.b16 %v2873, %v2869
      %v3110 = vpack.c.b16 %v2874, %v2870
      %v3111 = vpack.c.b16 %v2879, %v2875
      %v3112 = vpack.c.b16 %v2880, %v2876
      %v3113 = vpack.c.b16 %v2881, %v2877
      %v3114 = vpack.c.b16 %v2882, %v2878
      %v3115 = vpack.c.b16 %v2887, %v2883
      %v3116 = vpack.c.b16 %v2888, %v2884
      %v3117 = vpack.c.b16 %v2889, %v2885
      %v3118 = vpack.c.b16 %v2890, %v2886
      %v3119 = vpack.c.b16 %v2895, %v2891
      %v3120 = vpack.c.b16 %v2896, %v2892
      %v3121 = vpack.c.b16 %v2897, %v2893
      %v3122 = vpack.c.b16 %v2898, %v2894
      %v3123 = vpack.c.b16 %v2903, %v2899
      %v3124 = vpack.c.b16 %v2904, %v2900
      %v3125 = vpack.c.b16 %v2905, %v2901
      %v3126 = vpack.c.b16 %v2906, %v2902
      %v3127 = vpack.c.b16 %v2911, %v2907
      %v3128 = vpack.c.b16 %v2912, %v2908
      %v3129 = vpack.c.b16 %v2913, %v2909
      %v3130 = vpack.c.b16 %v2914, %v2910
      %v3131 = vpack.c.b16 %v2919, %v2915
      %v3132 = vpack.c.b16 %v2920, %v2916
      %v3133 = vpack.c.b16 %v2921, %v2917
      %v3134 = vpack.c.b16 %v2922, %v2918
      %v3135 = vpack.c.b16 %v2927, %v2923
      %v3136 = vpack.c.b16 %v2928, %v2924
      %v3137 = vpack.c.b16 %v2929, %v2925
      %v3138 = vpack.c.b16 %v2930, %v2926
      %v3139 = vpack.c.b16 %v2935, %v2931
      %v3140 = vpack.c.b16 %v2936, %v2932
      %v3141 = vpack.c.b16 %v2937, %v2933
      %v3142 = vpack.c.b16 %v2938, %v2934
      %v3143 = vpack.c.b16 %v2943, %v2939
      %v3144 = vpack.c.b16 %v2944, %v2940
      %v3145 = vpack.c.b16 %v2945, %v2941
      %v3146 = vpack.c.b16 %v2946, %v2942
      %v3147 = vpack.c.b16 %v2951, %v2947
      %v3148 = vpack.c.b16 %v2952, %v2948
      %v3149 = vpack.c.b16 %v2953, %v2949
      %v3150 = vpack.c.b16 %v2954, %v2950
      %v3151 = vpack.c.b16 %v2959, %v2955
      %v3152 = vpack.c.b16 %v2960, %v2956
      %v3153 = vpack.c.b16 %v2961, %v2957
      %v3154 = vpack.c.b16 %v2962, %v2958
      %v3155 = vpack.c.b16 %v2967, %v2963
      %v3156 = vpack.c.b16 %v2968, %v2964
      %v3157 = vpack.c.b16 %v2969, %v2965
      %v3158 = vpack.c.b16 %v2970, %v2966
      %v3159 = vpack.c.b16 %v2975, %v2971
      %v3160 = vpack.c.b16 %v2976, %v2972
      %v3161 = vpack.c.b16 %v2977, %v2973
      %v3162 = vpack.c.b16 %v2978, %v2974
      %v3163 = vpack.c.b16 %v2983, %v2979
      %v3164 = vpack.c.b16 %v2984, %v2980
      %v3165 = vpack.c.b16 %v2985, %v2981
      %v3166 = vpack.c.b16 %v2986, %v2982
      %v3167 = vpack.c.b16 %v2991, %v2987
      %v3168 = vpack.c.b16 %v2992, %v2988
      %v3169 = vpack.c.b16 %v2993, %v2989
      %v3170 = vpack.c.b16 %v2994, %v2990
      %v3171 = vpack.c.b16 %v2999, %v2995
      %v3172 = vpack.c.b16 %v3000, %v2996
      %v3173 = vpack.c.b16 %v3001, %v2997
      %v3174 = vpack.c.b16 %v3002, %v2998
      %v3175 = vpack.c.b16 %v3007, %v3003
      %v3176 = vpack.c.b16 %v3008, %v3004
      %v3177 = vpack.c.b16 %v3009, %v3005
      %v3178 = vpack.c.b16 %v3010, %v3006
      %v3179 = vpack.c.b16 %v3015, %v3011
      %v3180 = vpack.c.b16 %v3016, %v3012
      %v3181 = vpack.c.b16 %v3017, %v3013
      %v3182 = vpack.c.b16 %v3018, %v3014
      %v3183 = vpack.c.b16 %v3023, %v3019
      %v3184 = vpack.c.b16 %v3024, %v3020
      %v3185 = vpack.c.b16 %v3025, %v3021
      %v3186 = vpack.c.b16 %v3026, %v3022
      %v3187 = vpack.c.b16 %v3031, %v3027
      %v3188 = vpack.c.b16 %v3032, %v3028
      %v3189 = vpack.c.b16 %v3033, %v3029
      %v3190 = vpack.c.b16 %v3034, %v3030
      %v3191 = vpack.c.b16 %v3039, %v3035
      %v3192 = vpack.c.b16 %v3040, %v3036
      %v3193 = vpack.c.b16 %v3041, %v3037
      %v3194 = vpack.c.b16 %v3042, %v3038
      %v3195 = vpack.c.b16 %v3047, %v3043
      %v3196 = vpack.c.b16 %v3048, %v3044
      %v3197 = vpack.c.b16 %v3049, %v3045
      %v3198 = vpack.c.b16 %v3050, %v3046
      %v3199 = vpack.c.b16 %v3055, %v3051
      %v3200 = vpack.c.b16 %v3056, %v3052
      %v3201 = vpack.c.b16 %v3057, %v3053
      %v3202 = vpack.c.b16 %v3058, %v3054
      %v3203 = vpack.c.b16 %v3063, %v3059
      %v3204 = vpack.c.b16 %v3064, %v3060
      %v3205 = vpack.c.b16 %v3065, %v3061
      %v3206 = vpack.c.b16 %v3066, %v3062
      %v3207 = vpack.c.b16 %v3071, %v3067
      %v3208 = vpack.c.b16 %v3072, %v3068
      %v3209 = vpack.c.b16 %v3073, %v3069
      %v3210 = vpack.c.b16 %v3074, %v3070
      %v3211 = vpack.c.b16 %v3079, %v3075
      %v3212 = vpack.c.b16 %v3080, %v3076
      %v3213 = vpack.c.b16 %v3081, %v3077
      %v3214 = vpack.c.b16 %v3082, %v3078
      %v3215 = vpack.c.b16 %v3087, %v3083
      %v3216 = vpack.c.b16 %v3088, %v3084
      %v3217 = vpack.c.b16 %v3089, %v3085
      %v3218 = vpack.c.b16 %v3090, %v3086
      %v3411 = vunpack.c.l.b16 %v2433
      %v3412 = vunpack.c.l.b16 %v2434
      %v3413 = vunpack.c.l.b16 %v2435
      %v3414 = vunpack.c.l.b16 %v2436
      %v3415 = vunpack.c.l.b16 %v2437
      %v3416 = vunpack.c.l.b16 %v2438
      %v3417 = vunpack.c.l.b16 %v2439
      %v3418 = vunpack.c.l.b16 %v2440
      %v3419 = vunpack.c.l.b16 %v2441
      %v3420 = vunpack.c.l.b16 %v2442
      %v3421 = vunpack.c.l.b16 %v2443
      %v3422 = vunpack.c.l.b16 %v2444
      %v3423 = vunpack.c.l.b16 %v2445
      %v3424 = vunpack.c.l.b16 %v2446
      %v3425 = vunpack.c.l.b16 %v2447
      %v3426 = vunpack.c.l.b16 %v2448
      %v3427 = vunpack.c.l.b16 %v2449
      %v3428 = vunpack.c.l.b16 %v2450
      %v3429 = vunpack.c.l.b16 %v2451
      %v3430 = vunpack.c.l.b16 %v2452
      %v3431 = vunpack.c.l.b16 %v2453
      %v3432 = vunpack.c.l.b16 %v2454
      %v3433 = vunpack.c.l.b16 %v2455
      %v3434 = vunpack.c.l.b16 %v2456
      %v3435 = vunpack.c.l.b16 %v2457
      %v3436 = vunpack.c.l.b16 %v2458
      %v3437 = vunpack.c.l.b16 %v2459
      %v3438 = vunpack.c.l.b16 %v2460
      %v3439 = vunpack.c.l.b16 %v2461
      %v3440 = vunpack.c.l.b16 %v2462
      %v3441 = vunpack.c.l.b16 %v2463
      %v3442 = vunpack.c.l.b16 %v2464
      %v3443 = vunpack.c.l.b16 %v2465
      %v3444 = vunpack.c.l.b16 %v2466
      %v3445 = vunpack.c.l.b16 %v2467
      %v3446 = vunpack.c.l.b16 %v2468
      %v3447 = vunpack.c.l.b16 %v2469
      %v3448 = vunpack.c.l.b16 %v2470
      %v3449 = vunpack.c.l.b16 %v2471
      %v3450 = vunpack.c.l.b16 %v2472
      %v3451 = vunpack.c.l.b16 %v2473
      %v3452 = vunpack.c.l.b16 %v2474
      %v3453 = vunpack.c.l.b16 %v2475
      %v3454 = vunpack.c.l.b16 %v2476
      %v3455 = vunpack.c.l.b16 %v2477
      %v3456 = vunpack.c.l.b16 %v2478
      %v3457 = vunpack.c.l.b16 %v2479
      %v3458 = vunpack.c.l.b16 %v2480
      %v3459 = vunpack.c.l.b16 %v2481
      %v3460 = vunpack.c.l.b16 %v2482
      %v3461 = vunpack.c.l.b16 %v2483
      %v3462 = vunpack.c.l.b16 %v2484
      %v3463 = vunpack.c.l.b16 %v2485
      %v3464 = vunpack.c.l.b16 %v2486
      %v3465 = vunpack.c.l.b16 %v2487
      %v3466 = vunpack.c.l.b16 %v2488
      %v3467 = vunpack.c.l.b16 %v2489
      %v3468 = vunpack.c.l.b16 %v2490
      %v3469 = vunpack.c.l.b16 %v2491
      %v3470 = vunpack.c.l.b16 %v2492
      %v3471 = vunpack.c.l.b16 %v2493
      %v3472 = vunpack.c.l.b16 %v2494
      %v3473 = vunpack.c.l.b16 %v2495
      %v3474 = vunpack.c.l.b16 %v2496
      %v3475 = vpack.c.b16 %v3412, %v3411
      %v3476 = vpack.c.b16 %v3414, %v3413
      %v3477 = vpack.c.b16 %v3416, %v3415
      %v3478 = vpack.c.b16 %v3418, %v3417
      %v3479 = vpack.c.b16 %v3420, %v3419
      %v3480 = vpack.c.b16 %v3422, %v3421
      %v3481 = vpack.c.b16 %v3424, %v3423
      %v3482 = vpack.c.b16 %v3426, %v3425
      %v3483 = vpack.c.b16 %v3428, %v3427
      %v3484 = vpack.c.b16 %v3430, %v3429
      %v3485 = vpack.c.b16 %v3432, %v3431
      %v3486 = vpack.c.b16 %v3434, %v3433
      %v3487 = vpack.c.b16 %v3436, %v3435
      %v3488 = vpack.c.b16 %v3438, %v3437
      %v3489 = vpack.c.b16 %v3440, %v3439
      %v3490 = vpack.c.b16 %v3442, %v3441
      %v3491 = vpack.c.b16 %v3444, %v3443
      %v3492 = vpack.c.b16 %v3446, %v3445
      %v3493 = vpack.c.b16 %v3448, %v3447
      %v3494 = vpack.c.b16 %v3450, %v3449
      %v3495 = vpack.c.b16 %v3452, %v3451
      %v3496 = vpack.c.b16 %v3454, %v3453
      %v3497 = vpack.c.b16 %v3456, %v3455
      %v3498 = vpack.c.b16 %v3458, %v3457
      %v3499 = vpack.c.b16 %v3460, %v3459
      %v3500 = vpack.c.b16 %v3462, %v3461
      %v3501 = vpack.c.b16 %v3464, %v3463
      %v3502 = vpack.c.b16 %v3466, %v3465
      %v3503 = vpack.c.b16 %v3468, %v3467
      %v3504 = vpack.c.b16 %v3470, %v3469
      %v3505 = vpack.c.b16 %v3472, %v3471
      %v3506 = vpack.c.b16 %v3474, %v3473
      %3539 = vmatprep.subr.bf16.mxu0 0
      %3540 = vmatpush1.bf16.msra.mxu0 %v3482
      %3541 = vmatprep.subr.bf16.mxu0 0
      %3542 = vmatpush1.bf16.msra.mxu0 %v3481
      %3543 = vmatprep.subr.bf16.mxu0 0
      %3544 = vmatpush1.bf16.msra.mxu0 %v3480
      %3545 = vmatprep.subr.bf16.mxu0 0
      %3546 = vmatpush1.bf16.msra.mxu0 %v3479
      %3547 = vmatprep.subr.bf16.mxu0 0
      %3548 = vmatpush1.bf16.msra.mxu0 %v3478
      %3549 = vmatprep.subr.bf16.mxu0 0
      %3550 = vmatpush1.bf16.msra.mxu0 %v3477
      %3551 = vmatprep.subr.bf16.mxu0 0
      %3552 = vmatpush1.bf16.msra.mxu0 %v3476
      %3553 = vmatprep.subr.bf16.mxu0 0
      %3554 = vmatpush1.bf16.msra.mxu0 %v3475
      %3555 = vmatprep.subr.bf16.mxu0 0
      %3556 = vmatpush2.bf16.msra.mxu0 %v3490
      %3557 = vmatprep.subr.bf16.mxu0 0
      %3558 = vmatpush2.bf16.msra.mxu0 %v3489
      %3559 = vmatprep.subr.bf16.mxu0 0
      %3560 = vmatpush2.bf16.msra.mxu0 %v3488
      %3561 = vmatprep.subr.bf16.mxu0 0
      %3562 = vmatpush2.bf16.msra.mxu0 %v3487
      %3563 = vmatprep.subr.bf16.mxu0 0
      %3564 = vmatpush2.bf16.msra.mxu0 %v3486
      %3565 = vmatprep.subr.bf16.mxu0 0
      %3566 = vmatpush2.bf16.msra.mxu0 %v3485
      %3567 = vmatprep.subr.bf16.mxu0 0
      %3568 = vmatpush2.bf16.msra.mxu0 %v3484
      %3569 = vmatprep.subr.bf16.mxu0 0
      %3570 = vmatpush2.bf16.msra.mxu0 %v3483
      %3571 = vmatprep.mubr.bf16.mxu0 %v3092
      %3572 = vmatmul.mubr.bf16.gmra.mxu0 %v3091
      %v3573 = vpop.f32.mrf.mxu0
      %v3574 = vadd.f32 0.0, %v3573
      %v3575 = vpop.f32.mrf.mxu0
      %v3576 = vpop.f32.mrf.mxu0
      %v3577 = vadd.f32 0.0, %v3576
      %v3578 = vpop.f32.mrf.mxu0
      %3579 = vmatprep.mubr.bf16.mxu0 %v3096
      %3580 = vmatmul.mubr.bf16.gmra.mxu0 %v3095
      %v3581 = vpop.f32.mrf.mxu0
      %v3582 = vadd.f32 0.0, %v3581
      %v3583 = vpop.f32.mrf.mxu0
      %v3584 = vpop.f32.mrf.mxu0
      %v3585 = vadd.f32 0.0, %v3584
      %v3586 = vpop.f32.mrf.mxu0
      %3587 = vmatprep.mubr.bf16.mxu0 %v3100
      %3588 = vmatmul.mubr.bf16.gmra.mxu0 %v3099
      %v3589 = vpop.f32.mrf.mxu0
      %v3590 = vadd.f32 0.0, %v3589
      %v3591 = vpop.f32.mrf.mxu0
      %v3592 = vpop.f32.mrf.mxu0
      %v3593 = vadd.f32 0.0, %v3592
      %v3594 = vpop.f32.mrf.mxu0
      %3595 = vmatprep.mubr.bf16.mxu0 %v3104
      %3596 = vmatmul.mubr.bf16.gmra.mxu0 %v3103
      %v3597 = vpop.f32.mrf.mxu0
      %v3598 = vadd.f32 0.0, %v3597
      %v3599 = vpop.f32.mrf.mxu0
      %v3600 = vpop.f32.mrf.mxu0
      %v3601 = vadd.f32 0.0, %v3600
      %v3602 = vpop.f32.mrf.mxu0
      %3603 = vmatprep.mubr.bf16.mxu0 %v3108
      %3604 = vmatmul.mubr.bf16.gmra.mxu0 %v3107
      %v3605 = vpop.f32.mrf.mxu0
      %v3606 = vadd.f32 0.0, %v3605
      %v3607 = vpop.f32.mrf.mxu0
      %v3608 = vpop.f32.mrf.mxu0
      %v3609 = vadd.f32 0.0, %v3608
      %v3610 = vpop.f32.mrf.mxu0
      %3611 = vmatprep.mubr.bf16.mxu0 %v3112
      %3612 = vmatmul.mubr.bf16.gmra.mxu0 %v3111
      %v3613 = vpop.f32.mrf.mxu0
      %v3614 = vadd.f32 0.0, %v3613
      %v3615 = vpop.f32.mrf.mxu0
      %v3616 = vpop.f32.mrf.mxu0
      %v3617 = vadd.f32 0.0, %v3616
      %v3618 = vpop.f32.mrf.mxu0
      %3619 = vmatprep.mubr.bf16.mxu0 %v3116
      %3620 = vmatmul.mubr.bf16.gmra.mxu0 %v3115
      %v3621 = vpop.f32.mrf.mxu0
      %v3622 = vadd.f32 0.0, %v3621
      %v3623 = vpop.f32.mrf.mxu0
      %v3624 = vpop.f32.mrf.mxu0
      %v3625 = vadd.f32 0.0, %v3624
      %v3626 = vpop.f32.mrf.mxu0
      %3627 = vmatprep.mubr.bf16.mxu0 %v3120
      %3628 = vmatmul.mubr.bf16.gmra.mxu0 %v3119
      %v3629 = vpop.f32.mrf.mxu0
      %v3630 = vadd.f32 0.0, %v3629
      %v3631 = vpop.f32.mrf.mxu0
      %v3632 = vpop.f32.mrf.mxu0
      %v3633 = vadd.f32 0.0, %v3632
      %v3634 = vpop.f32.mrf.mxu0
      %3635 = vmatprep.mubr.bf16.mxu0 %v3124
      %3636 = vmatmul.mubr.bf16.gmra.mxu0 %v3123
      %v3637 = vpop.f32.mrf.mxu0
      %v3638 = vadd.f32 0.0, %v3637
      %v3639 = vpop.f32.mrf.mxu0
      %v3640 = vpop.f32.mrf.mxu0
      %v3641 = vadd.f32 0.0, %v3640
      %v3642 = vpop.f32.mrf.mxu0
      %3643 = vmatprep.mubr.bf16.mxu0 %v3128
      %3644 = vmatmul.mubr.bf16.gmra.mxu0 %v3127
      %v3645 = vpop.f32.mrf.mxu0
      %v3646 = vadd.f32 0.0, %v3645
      %v3647 = vpop.f32.mrf.mxu0
      %v3648 = vpop.f32.mrf.mxu0
      %v3649 = vadd.f32 0.0, %v3648
      %v3650 = vpop.f32.mrf.mxu0
      %3651 = vmatprep.mubr.bf16.mxu0 %v3132
      %3652 = vmatmul.mubr.bf16.gmra.mxu0 %v3131
      %v3653 = vpop.f32.mrf.mxu0
      %v3654 = vadd.f32 0.0, %v3653
      %v3655 = vpop.f32.mrf.mxu0
      %v3656 = vpop.f32.mrf.mxu0
      %v3657 = vadd.f32 0.0, %v3656
      %v3658 = vpop.f32.mrf.mxu0
      %3659 = vmatprep.mubr.bf16.mxu0 %v3136
      %3660 = vmatmul.mubr.bf16.gmra.mxu0 %v3135
      %v3661 = vpop.f32.mrf.mxu0
      %v3662 = vadd.f32 0.0, %v3661
      %v3663 = vpop.f32.mrf.mxu0
      %v3664 = vpop.f32.mrf.mxu0
      %v3665 = vadd.f32 0.0, %v3664
      %v3666 = vpop.f32.mrf.mxu0
      %3667 = vmatprep.mubr.bf16.mxu0 %v3140
      %3668 = vmatmul.mubr.bf16.gmra.mxu0 %v3139
      %v3669 = vpop.f32.mrf.mxu0
      %v3670 = vadd.f32 0.0, %v3669
      %v3671 = vpop.f32.mrf.mxu0
      %v3672 = vpop.f32.mrf.mxu0
      %v3673 = vadd.f32 0.0, %v3672
      %v3674 = vpop.f32.mrf.mxu0
      %3675 = vmatprep.mubr.bf16.mxu0 %v3144
      %3676 = vmatmul.mubr.bf16.gmra.mxu0 %v3143
      %v3677 = vpop.f32.mrf.mxu0
      %v3678 = vadd.f32 0.0, %v3677
      %v3679 = vpop.f32.mrf.mxu0
      %v3680 = vpop.f32.mrf.mxu0
      %v3681 = vadd.f32 0.0, %v3680
      %v3682 = vpop.f32.mrf.mxu0
      %3683 = vmatprep.mubr.bf16.mxu0 %v3148
      %3684 = vmatmul.mubr.bf16.gmra.mxu0 %v3147
      %v3685 = vpop.f32.mrf.mxu0
      %v3686 = vadd.f32 0.0, %v3685
      %v3687 = vpop.f32.mrf.mxu0
      %v3688 = vpop.f32.mrf.mxu0
      %v3689 = vadd.f32 0.0, %v3688
      %v3690 = vpop.f32.mrf.mxu0
      %3691 = vmatprep.mubr.bf16.mxu0 %v3152
      %3692 = vmatmul.mubr.bf16.gmra.mxu0 %v3151
      %v3693 = vpop.f32.mrf.mxu0
      %v3694 = vadd.f32 0.0, %v3693
      %v3695 = vpop.f32.mrf.mxu0
      %v3696 = vpop.f32.mrf.mxu0
      %v3697 = vadd.f32 0.0, %v3696
      %v3698 = vpop.f32.mrf.mxu0
      %3699 = vmatprep.mubr.bf16.mxu0 %v3156
      %3700 = vmatmul.mubr.bf16.gmra.mxu0 %v3155
      %v3701 = vpop.f32.mrf.mxu0
      %v3702 = vadd.f32 0.0, %v3701
      %v3703 = vpop.f32.mrf.mxu0
      %v3704 = vpop.f32.mrf.mxu0
      %v3705 = vadd.f32 0.0, %v3704
      %v3706 = vpop.f32.mrf.mxu0
      %3707 = vmatprep.mubr.bf16.mxu0 %v3160
      %3708 = vmatmul.mubr.bf16.gmra.mxu0 %v3159
      %v3709 = vpop.f32.mrf.mxu0
      %v3710 = vadd.f32 0.0, %v3709
      %v3711 = vpop.f32.mrf.mxu0
      %v3712 = vpop.f32.mrf.mxu0
      %v3713 = vadd.f32 0.0, %v3712
      %v3714 = vpop.f32.mrf.mxu0
      %3715 = vmatprep.mubr.bf16.mxu0 %v3164
      %3716 = vmatmul.mubr.bf16.gmra.mxu0 %v3163
      %v3717 = vpop.f32.mrf.mxu0
      %v3718 = vadd.f32 0.0, %v3717
      %v3719 = vpop.f32.mrf.mxu0
      %v3720 = vpop.f32.mrf.mxu0
      %v3721 = vadd.f32 0.0, %v3720
      %v3722 = vpop.f32.mrf.mxu0
      %3723 = vmatprep.mubr.bf16.mxu0 %v3168
      %3724 = vmatmul.mubr.bf16.gmra.mxu0 %v3167
      %v3725 = vpop.f32.mrf.mxu0
      %v3726 = vadd.f32 0.0, %v3725
      %v3727 = vpop.f32.mrf.mxu0
      %v3728 = vpop.f32.mrf.mxu0
      %v3729 = vadd.f32 0.0, %v3728
      %v3730 = vpop.f32.mrf.mxu0
      %3731 = vmatprep.mubr.bf16.mxu0 %v3172
      %3732 = vmatmul.mubr.bf16.gmra.mxu0 %v3171
      %v3733 = vpop.f32.mrf.mxu0
      %v3734 = vadd.f32 0.0, %v3733
      %v3735 = vpop.f32.mrf.mxu0
      %v3736 = vpop.f32.mrf.mxu0
      %v3737 = vadd.f32 0.0, %v3736
      %v3738 = vpop.f32.mrf.mxu0
      %3739 = vmatprep.mubr.bf16.mxu0 %v3176
      %3740 = vmatmul.mubr.bf16.gmra.mxu0 %v3175
      %v3741 = vpop.f32.mrf.mxu0
      %v3742 = vadd.f32 0.0, %v3741
      %v3743 = vpop.f32.mrf.mxu0
      %v3744 = vpop.f32.mrf.mxu0
      %v3745 = vadd.f32 0.0, %v3744
      %v3746 = vpop.f32.mrf.mxu0
      %3747 = vmatprep.mubr.bf16.mxu0 %v3180
      %3748 = vmatmul.mubr.bf16.gmra.mxu0 %v3179
      %v3749 = vpop.f32.mrf.mxu0
      %v3750 = vadd.f32 0.0, %v3749
      %v3751 = vpop.f32.mrf.mxu0
      %v3752 = vpop.f32.mrf.mxu0
      %v3753 = vadd.f32 0.0, %v3752
      %v3754 = vpop.f32.mrf.mxu0
      %3755 = vmatprep.mubr.bf16.mxu0 %v3184
      %3756 = vmatmul.mubr.bf16.gmra.mxu0 %v3183
      %v3757 = vpop.f32.mrf.mxu0
      %v3758 = vadd.f32 0.0, %v3757
      %v3759 = vpop.f32.mrf.mxu0
      %v3760 = vpop.f32.mrf.mxu0
      %v3761 = vadd.f32 0.0, %v3760
      %v3762 = vpop.f32.mrf.mxu0
      %3763 = vmatprep.mubr.bf16.mxu0 %v3188
      %3764 = vmatmul.mubr.bf16.gmra.mxu0 %v3187
      %v3765 = vpop.f32.mrf.mxu0
      %v3766 = vadd.f32 0.0, %v3765
      %v3767 = vpop.f32.mrf.mxu0
      %v3768 = vpop.f32.mrf.mxu0
      %v3769 = vadd.f32 0.0, %v3768
      %v3770 = vpop.f32.mrf.mxu0
      %3771 = vmatprep.mubr.bf16.mxu0 %v3192
      %3772 = vmatmul.mubr.bf16.gmra.mxu0 %v3191
      %v3773 = vpop.f32.mrf.mxu0
      %v3774 = vadd.f32 0.0, %v3773
      %v3775 = vpop.f32.mrf.mxu0
      %v3776 = vpop.f32.mrf.mxu0
      %v3777 = vadd.f32 0.0, %v3776
      %v3778 = vpop.f32.mrf.mxu0
      %3779 = vmatprep.mubr.bf16.mxu0 %v3196
      %3780 = vmatmul.mubr.bf16.gmra.mxu0 %v3195
      %v3781 = vpop.f32.mrf.mxu0
      %v3782 = vadd.f32 0.0, %v3781
      %v3783 = vpop.f32.mrf.mxu0
      %v3784 = vpop.f32.mrf.mxu0
      %v3785 = vadd.f32 0.0, %v3784
      %v3786 = vpop.f32.mrf.mxu0
      %3787 = vmatprep.mubr.bf16.mxu0 %v3200
      %3788 = vmatmul.mubr.bf16.gmra.mxu0 %v3199
      %v3789 = vpop.f32.mrf.mxu0
      %v3790 = vadd.f32 0.0, %v3789
      %v3791 = vpop.f32.mrf.mxu0
      %v3792 = vpop.f32.mrf.mxu0
      %v3793 = vadd.f32 0.0, %v3792
      %v3794 = vpop.f32.mrf.mxu0
      %3795 = vmatprep.mubr.bf16.mxu0 %v3204
      %3796 = vmatmul.mubr.bf16.gmra.mxu0 %v3203
      %v3797 = vpop.f32.mrf.mxu0
      %v3798 = vadd.f32 0.0, %v3797
      %v3799 = vpop.f32.mrf.mxu0
      %v3800 = vpop.f32.mrf.mxu0
      %v3801 = vadd.f32 0.0, %v3800
      %v3802 = vpop.f32.mrf.mxu0
      %3803 = vmatprep.mubr.bf16.mxu0 %v3208
      %3804 = vmatmul.mubr.bf16.gmra.mxu0 %v3207
      %v3805 = vpop.f32.mrf.mxu0
      %v3806 = vadd.f32 0.0, %v3805
      %v3807 = vpop.f32.mrf.mxu0
      %v3808 = vpop.f32.mrf.mxu0
      %v3809 = vadd.f32 0.0, %v3808
      %v3810 = vpop.f32.mrf.mxu0
      %3811 = vmatprep.mubr.bf16.mxu0 %v3212
      %3812 = vmatmul.mubr.bf16.gmra.mxu0 %v3211
      %v3813 = vpop.f32.mrf.mxu0
      %v3814 = vadd.f32 0.0, %v3813
      %v3815 = vpop.f32.mrf.mxu0
      %v3816 = vpop.f32.mrf.mxu0
      %v3817 = vadd.f32 0.0, %v3816
      %v3818 = vpop.f32.mrf.mxu0
      %3819 = vmatprep.mubr.bf16.mxu0 %v3216
      %3820 = vmatmul.mubr.bf16.gmra.mxu0 %v3215
      %v3821 = vpop.f32.mrf.mxu0
      %v3822 = vadd.f32 0.0, %v3821
      %v3823 = vpop.f32.mrf.mxu0
      %v3824 = vpop.f32.mrf.mxu0
      %v3825 = vadd.f32 0.0, %v3824
      %v3826 = vpop.f32.mrf.mxu0
      %3827 = vdwg.mxu0
      %3828 = vmatprep.subr.bf16.mxu0 0
      %3829 = vmatpush1.bf16.msra.mxu0 %v3498
      %3830 = vmatprep.subr.bf16.mxu0 0
      %3831 = vmatpush1.bf16.msra.mxu0 %v3497
      %3832 = vmatprep.subr.bf16.mxu0 0
      %3833 = vmatpush1.bf16.msra.mxu0 %v3496
      %3834 = vmatprep.subr.bf16.mxu0 0
      %3835 = vmatpush1.bf16.msra.mxu0 %v3495
      %3836 = vmatprep.subr.bf16.mxu0 0
      %3837 = vmatpush1.bf16.msra.mxu0 %v3494
      %3838 = vmatprep.subr.bf16.mxu0 0
      %3839 = vmatpush1.bf16.msra.mxu0 %v3493
      %3840 = vmatprep.subr.bf16.mxu0 0
      %3841 = vmatpush1.bf16.msra.mxu0 %v3492
      %3842 = vmatprep.subr.bf16.mxu0 0
      %3843 = vmatpush1.bf16.msra.mxu0 %v3491
      %3844 = vmatprep.subr.bf16.mxu0 0
      %3845 = vmatpush2.bf16.msra.mxu0 %v3506
      %3846 = vmatprep.subr.bf16.mxu0 0
      %3847 = vmatpush2.bf16.msra.mxu0 %v3505
      %3848 = vmatprep.subr.bf16.mxu0 0
      %3849 = vmatpush2.bf16.msra.mxu0 %v3504
      %3850 = vmatprep.subr.bf16.mxu0 0
      %3851 = vmatpush2.bf16.msra.mxu0 %v3503
      %3852 = vmatprep.subr.bf16.mxu0 0
      %3853 = vmatpush2.bf16.msra.mxu0 %v3502
      %3854 = vmatprep.subr.bf16.mxu0 0
      %3855 = vmatpush2.bf16.msra.mxu0 %v3501
      %3856 = vmatprep.subr.bf16.mxu0 0
      %3857 = vmatpush2.bf16.msra.mxu0 %v3500
      %3858 = vmatprep.subr.bf16.mxu0 0
      %3859 = vmatpush2.bf16.msra.mxu0 %v3499
      %3860 = vmatprep.mubr.bf16.mxu0 %v3094
      %3861 = vmatmul.mubr.bf16.gmra.mxu0 %v3093
      %v3862 = vpop.f32.mrf.mxu0
      %v3863 = vadd.f32 %v3574, %v3862
      %v3864 = vpop.f32.mrf.mxu0
      %v3865 = vpop.f32.mrf.mxu0
      %v3866 = vadd.f32 %v3577, %v3865
      %v3867 = vpop.f32.mrf.mxu0
      %3868 = vmatprep.mubr.bf16.mxu0 %v3098
      %3869 = vmatmul.mubr.bf16.gmra.mxu0 %v3097
      %v3870 = vpop.f32.mrf.mxu0
      %v3871 = vadd.f32 %v3582, %v3870
      %v3872 = vpop.f32.mrf.mxu0
      %v3873 = vpop.f32.mrf.mxu0
      %v3874 = vadd.f32 %v3585, %v3873
      %v3875 = vpop.f32.mrf.mxu0
      %3876 = vmatprep.mubr.bf16.mxu0 %v3102
      %3877 = vmatmul.mubr.bf16.gmra.mxu0 %v3101
      %v3878 = vpop.f32.mrf.mxu0
      %v3879 = vadd.f32 %v3590, %v3878
      %v3880 = vpop.f32.mrf.mxu0
      %v3881 = vpop.f32.mrf.mxu0
      %v3882 = vadd.f32 %v3593, %v3881
      %v3883 = vpop.f32.mrf.mxu0
      %3884 = vmatprep.mubr.bf16.mxu0 %v3106
      %3885 = vmatmul.mubr.bf16.gmra.mxu0 %v3105
      %v3886 = vpop.f32.mrf.mxu0
      %v3887 = vadd.f32 %v3598, %v3886
      %v3888 = vpop.f32.mrf.mxu0
      %v3889 = vpop.f32.mrf.mxu0
      %v3890 = vadd.f32 %v3601, %v3889
      %v3891 = vpop.f32.mrf.mxu0
      %3892 = vmatprep.mubr.bf16.mxu0 %v3110
      %3893 = vmatmul.mubr.bf16.gmra.mxu0 %v3109
      %v3894 = vpop.f32.mrf.mxu0
      %v3895 = vadd.f32 %v3606, %v3894
      %v3896 = vpop.f32.mrf.mxu0
      %v3897 = vpop.f32.mrf.mxu0
      %v3898 = vadd.f32 %v3609, %v3897
      %v3899 = vpop.f32.mrf.mxu0
      %3900 = vmatprep.mubr.bf16.mxu0 %v3114
      %3901 = vmatmul.mubr.bf16.gmra.mxu0 %v3113
      %v3902 = vpop.f32.mrf.mxu0
      %v3903 = vadd.f32 %v3614, %v3902
      %v3904 = vpop.f32.mrf.mxu0
      %v3905 = vpop.f32.mrf.mxu0
      %v3906 = vadd.f32 %v3617, %v3905
      %v3907 = vpop.f32.mrf.mxu0
      %3908 = vmatprep.mubr.bf16.mxu0 %v3118
      %3909 = vmatmul.mubr.bf16.gmra.mxu0 %v3117
      %v3910 = vpop.f32.mrf.mxu0
      %v3911 = vadd.f32 %v3622, %v3910
      %v3912 = vpop.f32.mrf.mxu0
      %v3913 = vpop.f32.mrf.mxu0
      %v3914 = vadd.f32 %v3625, %v3913
      %v3915 = vpop.f32.mrf.mxu0
      %3916 = vmatprep.mubr.bf16.mxu0 %v3122
      %3917 = vmatmul.mubr.bf16.gmra.mxu0 %v3121
      %v3918 = vpop.f32.mrf.mxu0
      %v3919 = vadd.f32 %v3630, %v3918
      %v3920 = vpop.f32.mrf.mxu0
      %v3921 = vpop.f32.mrf.mxu0
      %v3922 = vadd.f32 %v3633, %v3921
      %v3923 = vpop.f32.mrf.mxu0
      %3924 = vmatprep.mubr.bf16.mxu0 %v3126
      %3925 = vmatmul.mubr.bf16.gmra.mxu0 %v3125
      %v3926 = vpop.f32.mrf.mxu0
      %v3927 = vadd.f32 %v3638, %v3926
      %v3928 = vpop.f32.mrf.mxu0
      %v3929 = vpop.f32.mrf.mxu0
      %v3930 = vadd.f32 %v3641, %v3929
      %v3931 = vpop.f32.mrf.mxu0
      %3932 = vmatprep.mubr.bf16.mxu0 %v3130
      %3933 = vmatmul.mubr.bf16.gmra.mxu0 %v3129
      %v3934 = vpop.f32.mrf.mxu0
      %v3935 = vadd.f32 %v3646, %v3934
      %v3936 = vpop.f32.mrf.mxu0
      %v3937 = vpop.f32.mrf.mxu0
      %v3938 = vadd.f32 %v3649, %v3937
      %v3939 = vpop.f32.mrf.mxu0
      %3940 = vmatprep.mubr.bf16.mxu0 %v3134
      %3941 = vmatmul.mubr.bf16.gmra.mxu0 %v3133
      %v3942 = vpop.f32.mrf.mxu0
      %v3943 = vadd.f32 %v3654, %v3942
      %v3944 = vpop.f32.mrf.mxu0
      %v3945 = vpop.f32.mrf.mxu0
      %v3946 = vadd.f32 %v3657, %v3945
      %v3947 = vpop.f32.mrf.mxu0
      %3948 = vmatprep.mubr.bf16.mxu0 %v3138
      %3949 = vmatmul.mubr.bf16.gmra.mxu0 %v3137
      %v3950 = vpop.f32.mrf.mxu0
      %v3951 = vadd.f32 %v3662, %v3950
      %v3952 = vpop.f32.mrf.mxu0
      %v3953 = vpop.f32.mrf.mxu0
      %v3954 = vadd.f32 %v3665, %v3953
      %v3955 = vpop.f32.mrf.mxu0
      %3956 = vmatprep.mubr.bf16.mxu0 %v3142
      %3957 = vmatmul.mubr.bf16.gmra.mxu0 %v3141
      %v3958 = vpop.f32.mrf.mxu0
      %v3959 = vadd.f32 %v3670, %v3958
      %v3960 = vpop.f32.mrf.mxu0
      %v3961 = vpop.f32.mrf.mxu0
      %v3962 = vadd.f32 %v3673, %v3961
      %v3963 = vpop.f32.mrf.mxu0
      %3964 = vmatprep.mubr.bf16.mxu0 %v3146
      %3965 = vmatmul.mubr.bf16.gmra.mxu0 %v3145
      %v3966 = vpop.f32.mrf.mxu0
      %v3967 = vadd.f32 %v3678, %v3966
      %v3968 = vpop.f32.mrf.mxu0
      %v3969 = vpop.f32.mrf.mxu0
      %v3970 = vadd.f32 %v3681, %v3969
      %v3971 = vpop.f32.mrf.mxu0
      %3972 = vmatprep.mubr.bf16.mxu0 %v3150
      %3973 = vmatmul.mubr.bf16.gmra.mxu0 %v3149
      %v3974 = vpop.f32.mrf.mxu0
      %v3975 = vadd.f32 %v3686, %v3974
      %v3976 = vpop.f32.mrf.mxu0
      %v3977 = vpop.f32.mrf.mxu0
      %v3978 = vadd.f32 %v3689, %v3977
      %v3979 = vpop.f32.mrf.mxu0
      %3980 = vmatprep.mubr.bf16.mxu0 %v3154
      %3981 = vmatmul.mubr.bf16.gmra.mxu0 %v3153
      %v3982 = vpop.f32.mrf.mxu0
      %v3983 = vadd.f32 %v3694, %v3982
      %v3984 = vpop.f32.mrf.mxu0
      %v3985 = vpop.f32.mrf.mxu0
      %v3986 = vadd.f32 %v3697, %v3985
      %v3987 = vpop.f32.mrf.mxu0
      %3988 = vmatprep.mubr.bf16.mxu0 %v3158
      %3989 = vmatmul.mubr.bf16.gmra.mxu0 %v3157
      %v3990 = vpop.f32.mrf.mxu0
      %v3991 = vadd.f32 %v3702, %v3990
      %v3992 = vpop.f32.mrf.mxu0
      %v3993 = vpop.f32.mrf.mxu0
      %v3994 = vadd.f32 %v3705, %v3993
      %v3995 = vpop.f32.mrf.mxu0
      %3996 = vmatprep.mubr.bf16.mxu0 %v3162
      %3997 = vmatmul.mubr.bf16.gmra.mxu0 %v3161
      %v3998 = vpop.f32.mrf.mxu0
      %v3999 = vadd.f32 %v3710, %v3998
      %v4000 = vpop.f32.mrf.mxu0
      %v4001 = vpop.f32.mrf.mxu0
      %v4002 = vadd.f32 %v3713, %v4001
      %v4003 = vpop.f32.mrf.mxu0
      %4004 = vmatprep.mubr.bf16.mxu0 %v3166
      %4005 = vmatmul.mubr.bf16.gmra.mxu0 %v3165
      %v4006 = vpop.f32.mrf.mxu0
      %v4007 = vadd.f32 %v3718, %v4006
      %v4008 = vpop.f32.mrf.mxu0
      %v4009 = vpop.f32.mrf.mxu0
      %v4010 = vadd.f32 %v3721, %v4009
      %v4011 = vpop.f32.mrf.mxu0
      %4012 = vmatprep.mubr.bf16.mxu0 %v3170
      %4013 = vmatmul.mubr.bf16.gmra.mxu0 %v3169
      %v4014 = vpop.f32.mrf.mxu0
      %v4015 = vadd.f32 %v3726, %v4014
      %v4016 = vpop.f32.mrf.mxu0
      %v4017 = vpop.f32.mrf.mxu0
      %v4018 = vadd.f32 %v3729, %v4017
      %v4019 = vpop.f32.mrf.mxu0
      %4020 = vmatprep.mubr.bf16.mxu0 %v3174
      %4021 = vmatmul.mubr.bf16.gmra.mxu0 %v3173
      %v4022 = vpop.f32.mrf.mxu0
      %v4023 = vadd.f32 %v3734, %v4022
      %v4024 = vpop.f32.mrf.mxu0
      %v4025 = vpop.f32.mrf.mxu0
      %v4026 = vadd.f32 %v3737, %v4025
      %v4027 = vpop.f32.mrf.mxu0
      %4028 = vmatprep.mubr.bf16.mxu0 %v3178
      %4029 = vmatmul.mubr.bf16.gmra.mxu0 %v3177
      %v4030 = vpop.f32.mrf.mxu0
      %v4031 = vadd.f32 %v3742, %v4030
      %v4032 = vpop.f32.mrf.mxu0
      %v4033 = vpop.f32.mrf.mxu0
      %v4034 = vadd.f32 %v3745, %v4033
      %v4035 = vpop.f32.mrf.mxu0
      %4036 = vmatprep.mubr.bf16.mxu0 %v3182
      %4037 = vmatmul.mubr.bf16.gmra.mxu0 %v3181
      %v4038 = vpop.f32.mrf.mxu0
      %v4039 = vadd.f32 %v3750, %v4038
      %v4040 = vpop.f32.mrf.mxu0
      %v4041 = vpop.f32.mrf.mxu0
      %v4042 = vadd.f32 %v3753, %v4041
      %v4043 = vpop.f32.mrf.mxu0
      %4044 = vmatprep.mubr.bf16.mxu0 %v3186
      %4045 = vmatmul.mubr.bf16.gmra.mxu0 %v3185
      %v4046 = vpop.f32.mrf.mxu0
      %v4047 = vadd.f32 %v3758, %v4046
      %v4048 = vpop.f32.mrf.mxu0
      %v4049 = vpop.f32.mrf.mxu0
      %v4050 = vadd.f32 %v3761, %v4049
      %v4051 = vpop.f32.mrf.mxu0
      %4052 = vmatprep.mubr.bf16.mxu0 %v3190
      %4053 = vmatmul.mubr.bf16.gmra.mxu0 %v3189
      %v4054 = vpop.f32.mrf.mxu0
      %v4055 = vadd.f32 %v3766, %v4054
      %v4056 = vpop.f32.mrf.mxu0
      %v4057 = vpop.f32.mrf.mxu0
      %v4058 = vadd.f32 %v3769, %v4057
      %v4059 = vpop.f32.mrf.mxu0
      %4060 = vmatprep.mubr.bf16.mxu0 %v3194
      %4061 = vmatmul.mubr.bf16.gmra.mxu0 %v3193
      %v4062 = vpop.f32.mrf.mxu0
      %v4063 = vadd.f32 %v3774, %v4062
      %v4064 = vpop.f32.mrf.mxu0
      %v4065 = vpop.f32.mrf.mxu0
      %v4066 = vadd.f32 %v3777, %v4065
      %v4067 = vpop.f32.mrf.mxu0
      %4068 = vmatprep.mubr.bf16.mxu0 %v3198
      %4069 = vmatmul.mubr.bf16.gmra.mxu0 %v3197
      %v4070 = vpop.f32.mrf.mxu0
      %v4071 = vadd.f32 %v3782, %v4070
      %v4072 = vpop.f32.mrf.mxu0
      %v4073 = vpop.f32.mrf.mxu0
      %v4074 = vadd.f32 %v3785, %v4073
      %v4075 = vpop.f32.mrf.mxu0
      %4076 = vmatprep.mubr.bf16.mxu0 %v3202
      %4077 = vmatmul.mubr.bf16.gmra.mxu0 %v3201
      %v4078 = vpop.f32.mrf.mxu0
      %v4079 = vadd.f32 %v3790, %v4078
      %v4080 = vpop.f32.mrf.mxu0
      %v4081 = vpop.f32.mrf.mxu0
      %v4082 = vadd.f32 %v3793, %v4081
      %v4083 = vpop.f32.mrf.mxu0
      %4084 = vmatprep.mubr.bf16.mxu0 %v3206
      %4085 = vmatmul.mubr.bf16.gmra.mxu0 %v3205
      %v4086 = vpop.f32.mrf.mxu0
      %v4087 = vadd.f32 %v3798, %v4086
      %v4088 = vpop.f32.mrf.mxu0
      %v4089 = vpop.f32.mrf.mxu0
      %v4090 = vadd.f32 %v3801, %v4089
      %v4091 = vpop.f32.mrf.mxu0
      %4092 = vmatprep.mubr.bf16.mxu0 %v3210
      %4093 = vmatmul.mubr.bf16.gmra.mxu0 %v3209
      %v4094 = vpop.f32.mrf.mxu0
      %v4095 = vadd.f32 %v3806, %v4094
      %v4096 = vpop.f32.mrf.mxu0
      %v4097 = vpop.f32.mrf.mxu0
      %v4098 = vadd.f32 %v3809, %v4097
      %v4099 = vpop.f32.mrf.mxu0
      %4100 = vmatprep.mubr.bf16.mxu0 %v3214
      %4101 = vmatmul.mubr.bf16.gmra.mxu0 %v3213
      %v4102 = vpop.f32.mrf.mxu0
      %v4103 = vadd.f32 %v3814, %v4102
      %v4104 = vpop.f32.mrf.mxu0
      %v4105 = vpop.f32.mrf.mxu0
      %v4106 = vadd.f32 %v3817, %v4105
      %v4107 = vpop.f32.mrf.mxu0
      %4108 = vmatprep.mubr.bf16.mxu0 %v3218
      %4109 = vmatmul.mubr.bf16.gmra.mxu0 %v3217
      %v4110 = vpop.f32.mrf.mxu0
      %v4111 = vadd.f32 %v3822, %v4110
      %v4112 = vpop.f32.mrf.mxu0
      %v4113 = vpop.f32.mrf.mxu0
      %v4114 = vadd.f32 %v3825, %v4113
      %v4115 = vpop.f32.mrf.mxu0
      %4116 = vdwg.mxu0
      %4117 = vadd.xlane.f32.xlu0 %v3863
      %v4118 = vpop.xlane.xlu0 %4117
      %4119 = vadd.xlane.f32.xlu0 %v3866
      %v4120 = vpop.xlane.xlu0 %4119
      %4121 = vadd.xlane.f32.xlu0 %v3871
      %v4122 = vpop.xlane.xlu0 %4121
      %4123 = vadd.xlane.f32.xlu0 %v3874
      %v4124 = vpop.xlane.xlu0 %4123
      %4125 = vadd.xlane.f32.xlu0 %v3879
      %v4126 = vpop.xlane.xlu0 %4125
      %4127 = vadd.xlane.f32.xlu0 %v3882
      %v4128 = vpop.xlane.xlu0 %4127
      %4129 = vadd.xlane.f32.xlu0 %v3887
      %v4130 = vpop.xlane.xlu0 %4129
      %4131 = vadd.xlane.f32.xlu0 %v3890
      %v4132 = vpop.xlane.xlu0 %4131
      %4133 = vadd.xlane.f32.xlu0 %v3895
      %v4134 = vpop.xlane.xlu0 %4133
      %4135 = vadd.xlane.f32.xlu0 %v3898
      %v4136 = vpop.xlane.xlu0 %4135
      %4137 = vadd.xlane.f32.xlu0 %v3903
      %v4138 = vpop.xlane.xlu0 %4137
      %4139 = vadd.xlane.f32.xlu0 %v3906
      %v4140 = vpop.xlane.xlu0 %4139
      %4141 = vadd.xlane.f32.xlu0 %v3911
      %v4142 = vpop.xlane.xlu0 %4141
      %4143 = vadd.xlane.f32.xlu0 %v3914
      %v4144 = vpop.xlane.xlu0 %4143
      %4145 = vadd.xlane.f32.xlu0 %v3919
      %v4146 = vpop.xlane.xlu0 %4145
      %4147 = vadd.xlane.f32.xlu0 %v3922
      %v4148 = vpop.xlane.xlu0 %4147
      %4149 = vadd.xlane.f32.xlu0 %v3927
      %v4150 = vpop.xlane.xlu0 %4149
      %4151 = vadd.xlane.f32.xlu0 %v3930
      %v4152 = vpop.xlane.xlu0 %4151
      %4153 = vadd.xlane.f32.xlu0 %v3935
      %v4154 = vpop.xlane.xlu0 %4153
      %4155 = vadd.xlane.f32.xlu0 %v3938
      %v4156 = vpop.xlane.xlu0 %4155
      %4157 = vadd.xlane.f32.xlu0 %v3943
      %v4158 = vpop.xlane.xlu0 %4157
      %4159 = vadd.xlane.f32.xlu0 %v3946
      %v4160 = vpop.xlane.xlu0 %4159
      %4161 = vadd.xlane.f32.xlu0 %v3951
      %v4162 = vpop.xlane.xlu0 %4161
      %4163 = vadd.xlane.f32.xlu0 %v3954
      %v4164 = vpop.xlane.xlu0 %4163
      %4165 = vadd.xlane.f32.xlu0 %v3959
      %v4166 = vpop.xlane.xlu0 %4165
      %4167 = vadd.xlane.f32.xlu0 %v3962
      %v4168 = vpop.xlane.xlu0 %4167
      %4169 = vadd.xlane.f32.xlu0 %v3967
      %v4170 = vpop.xlane.xlu0 %4169
      %4171 = vadd.xlane.f32.xlu0 %v3970
      %v4172 = vpop.xlane.xlu0 %4171
      %4173 = vadd.xlane.f32.xlu0 %v3975
      %v4174 = vpop.xlane.xlu0 %4173
      %4175 = vadd.xlane.f32.xlu0 %v3978
      %v4176 = vpop.xlane.xlu0 %4175
      %4177 = vadd.xlane.f32.xlu0 %v3983
      %v4178 = vpop.xlane.xlu0 %4177
      %4179 = vadd.xlane.f32.xlu0 %v3986
      %v4180 = vpop.xlane.xlu0 %4179
      %4181 = vadd.xlane.f32.xlu0 %v3991
      %v4182 = vpop.xlane.xlu0 %4181
      %4183 = vadd.xlane.f32.xlu0 %v3994
      %v4184 = vpop.xlane.xlu0 %4183
      %4185 = vadd.xlane.f32.xlu0 %v3999
      %v4186 = vpop.xlane.xlu0 %4185
      %4187 = vadd.xlane.f32.xlu0 %v4002
      %v4188 = vpop.xlane.xlu0 %4187
      %4189 = vadd.xlane.f32.xlu0 %v4007
      %v4190 = vpop.xlane.xlu0 %4189
      %4191 = vadd.xlane.f32.xlu0 %v4010
      %v4192 = vpop.xlane.xlu0 %4191
      %4193 = vadd.xlane.f32.xlu0 %v4015
      %v4194 = vpop.xlane.xlu0 %4193
      %4195 = vadd.xlane.f32.xlu0 %v4018
      %v4196 = vpop.xlane.xlu0 %4195
      %4197 = vadd.xlane.f32.xlu0 %v4023
      %v4198 = vpop.xlane.xlu0 %4197
      %4199 = vadd.xlane.f32.xlu0 %v4026
      %v4200 = vpop.xlane.xlu0 %4199
      %4201 = vadd.xlane.f32.xlu0 %v4031
      %v4202 = vpop.xlane.xlu0 %4201
      %4203 = vadd.xlane.f32.xlu0 %v4034
      %v4204 = vpop.xlane.xlu0 %4203
      %4205 = vadd.xlane.f32.xlu0 %v4039
      %v4206 = vpop.xlane.xlu0 %4205
      %4207 = vadd.xlane.f32.xlu0 %v4042
      %v4208 = vpop.xlane.xlu0 %4207
      %4209 = vadd.xlane.f32.xlu0 %v4047
      %v4210 = vpop.xlane.xlu0 %4209
      %4211 = vadd.xlane.f32.xlu0 %v4050
      %v4212 = vpop.xlane.xlu0 %4211
      %4213 = vadd.xlane.f32.xlu0 %v4055
      %v4214 = vpop.xlane.xlu0 %4213
      %4215 = vadd.xlane.f32.xlu0 %v4058
      %v4216 = vpop.xlane.xlu0 %4215
      %4217 = vadd.xlane.f32.xlu0 %v4063
      %v4218 = vpop.xlane.xlu0 %4217
      %4219 = vadd.xlane.f32.xlu0 %v4066
      %v4220 = vpop.xlane.xlu0 %4219
      %4221 = vadd.xlane.f32.xlu0 %v4071
      %v4222 = vpop.xlane.xlu0 %4221
      %4223 = vadd.xlane.f32.xlu0 %v4074
      %v4224 = vpop.xlane.xlu0 %4223
      %4225 = vadd.xlane.f32.xlu0 %v4079
      %v4226 = vpop.xlane.xlu0 %4225
      %4227 = vadd.xlane.f32.xlu0 %v4082
      %v4228 = vpop.xlane.xlu0 %4227
      %4229 = vadd.xlane.f32.xlu0 %v4087
      %v4230 = vpop.xlane.xlu0 %4229
      %4231 = vadd.xlane.f32.xlu0 %v4090
      %v4232 = vpop.xlane.xlu0 %4231
      %4233 = vadd.xlane.f32.xlu0 %v4095
      %v4234 = vpop.xlane.xlu0 %4233
      %4235 = vadd.xlane.f32.xlu0 %v4098
      %v4236 = vpop.xlane.xlu0 %4235
      %4237 = vadd.xlane.f32.xlu0 %v4103
      %v4238 = vpop.xlane.xlu0 %4237
      %4239 = vadd.xlane.f32.xlu0 %v4106
      %v4240 = vpop.xlane.xlu0 %4239
      %4241 = vadd.xlane.f32.xlu0 %v4111
      %v4242 = vpop.xlane.xlu0 %4241
      %4243 = vadd.xlane.f32.xlu0 %v4114
      %v4244 = vpop.xlane.xlu0 %4243
      %v4261 = vunpack.c.l.b16 %v2563
      %v4262 = vunpack.c.l.b16 %v2564
      %v4263 = vunpack.c.l.b16 %v2565
      %v4264 = vunpack.c.l.b16 %v2566
      %v4265 = vunpack.c.l.b16 %v2567
      %v4266 = vunpack.c.l.b16 %v2568
      %v4267 = vunpack.c.l.b16 %v2569
      %v4268 = vunpack.c.l.b16 %v2570
      %v4269 = vunpack.c.l.b16 %v2571
      %v4270 = vunpack.c.l.b16 %v2572
      %v4271 = vunpack.c.l.b16 %v2573
      %v4272 = vunpack.c.l.b16 %v2574
      %v4273 = vunpack.c.l.b16 %v2575
      %v4274 = vunpack.c.l.b16 %v2576
      %v4275 = vunpack.c.l.b16 %v2577
      %v4276 = vunpack.c.l.b16 %v2578
      %v4277 = vpack.c.b16 %v4262, %v4261
      %v4278 = vpack.c.b16 %v4264, %v4263
      %v4279 = vpack.c.b16 %v4266, %v4265
      %v4280 = vpack.c.b16 %v4268, %v4267
      %v4281 = vpack.c.b16 %v4270, %v4269
      %v4282 = vpack.c.b16 %v4272, %v4271
      %v4283 = vpack.c.b16 %v4274, %v4273
      %v4284 = vpack.c.b16 %v4276, %v4275
      %4293 = vmatprep.subr.bf16.mxu0 0
      %4294 = vmatpush1.bf16.msra.mxu0 %v4284
      %4295 = vmatprep.subr.bf16.mxu0 0
      %4296 = vmatpush1.bf16.msra.mxu0 %v4283
      %4297 = vmatprep.subr.bf16.mxu0 0
      %4298 = vmatpush1.bf16.msra.mxu0 %v4282
      %4299 = vmatprep.subr.bf16.mxu0 0
      %4300 = vmatpush1.bf16.msra.mxu0 %v4281
      %4301 = vmatprep.subr.bf16.mxu0 0
      %4302 = vmatpush1.bf16.msra.mxu0 %v4280
      %4303 = vmatprep.subr.bf16.mxu0 0
      %4304 = vmatpush1.bf16.msra.mxu0 %v4279
      %4305 = vmatprep.subr.bf16.mxu0 0
      %4306 = vmatpush1.bf16.msra.mxu0 %v4278
      %4307 = vmatprep.subr.bf16.mxu0 0
      %4308 = vmatpush1.bf16.msra.mxu0 %v4277
      %4309 = vmatprep.subr.bf16.mxu0 0
      %4310 = vmatpush2.bf16.msra.mxu0 0
      %4311 = vmatprep.subr.bf16.mxu0 0
      %4312 = vmatpush2.bf16.msra.mxu0 0
      %4313 = vmatprep.subr.bf16.mxu0 0
      %4314 = vmatpush2.bf16.msra.mxu0 0
      %4315 = vmatprep.subr.bf16.mxu0 0
      %4316 = vmatpush2.bf16.msra.mxu0 0
      %4317 = vmatprep.subr.bf16.mxu0 0
      %4318 = vmatpush2.bf16.msra.mxu0 0
      %4319 = vmatprep.subr.bf16.mxu0 0
      %4320 = vmatpush2.bf16.msra.mxu0 0
      %4321 = vmatprep.subr.bf16.mxu0 0
      %4322 = vmatpush2.bf16.msra.mxu0 0
      %4323 = vmatprep.subr.bf16.mxu0 0
      %4324 = vmatpush2.bf16.msra.mxu0 0
      %4325 = vmatprep.mubr.bf16.mxu0 0
      %4326 = vmatmul.mubr.bf16.gmra.mxu0 %v3475
      %v4327 = vpop.f32.mrf.mxu0
      %v4328 = vadd.f32 %v4118, %v4327
      %v4329 = vpop.f32.mrf.mxu0
      %v4330 = vpop.f32.mrf.mxu0
      %v4331 = vadd.f32 %v4120, %v4330
      %v4332 = vpop.f32.mrf.mxu0
      %4333 = vmatprep.mubr.bf16.mxu0 0
      %4334 = vmatmul.mubr.bf16.gmra.mxu0 %v3476
      %v4335 = vpop.f32.mrf.mxu0
      %v4336 = vadd.f32 %v4122, %v4335
      %v4337 = vpop.f32.mrf.mxu0
      %v4338 = vpop.f32.mrf.mxu0
      %v4339 = vadd.f32 %v4124, %v4338
      %v4340 = vpop.f32.mrf.mxu0
      %4341 = vmatprep.mubr.bf16.mxu0 0
      %4342 = vmatmul.mubr.bf16.gmra.mxu0 %v3477
      %v4343 = vpop.f32.mrf.mxu0
      %v4344 = vadd.f32 %v4126, %v4343
      %v4345 = vpop.f32.mrf.mxu0
      %v4346 = vpop.f32.mrf.mxu0
      %v4347 = vadd.f32 %v4128, %v4346
      %v4348 = vpop.f32.mrf.mxu0
      %4349 = vmatprep.mubr.bf16.mxu0 0
      %4350 = vmatmul.mubr.bf16.gmra.mxu0 %v3478
      %v4351 = vpop.f32.mrf.mxu0
      %v4352 = vadd.f32 %v4130, %v4351
      %v4353 = vpop.f32.mrf.mxu0
      %v4354 = vpop.f32.mrf.mxu0
      %v4355 = vadd.f32 %v4132, %v4354
      %v4356 = vpop.f32.mrf.mxu0
      %4357 = vmatprep.mubr.bf16.mxu0 0
      %4358 = vmatmul.mubr.bf16.gmra.mxu0 %v3479
      %v4359 = vpop.f32.mrf.mxu0
      %v4360 = vadd.f32 %v4134, %v4359
      %v4361 = vpop.f32.mrf.mxu0
      %v4362 = vpop.f32.mrf.mxu0
      %v4363 = vadd.f32 %v4136, %v4362
      %v4364 = vpop.f32.mrf.mxu0
      %4365 = vmatprep.mubr.bf16.mxu0 0
      %4366 = vmatmul.mubr.bf16.gmra.mxu0 %v3480
      %v4367 = vpop.f32.mrf.mxu0
      %v4368 = vadd.f32 %v4138, %v4367
      %v4369 = vpop.f32.mrf.mxu0
      %v4370 = vpop.f32.mrf.mxu0
      %v4371 = vadd.f32 %v4140, %v4370
      %v4372 = vpop.f32.mrf.mxu0
      %4373 = vmatprep.mubr.bf16.mxu0 0
      %4374 = vmatmul.mubr.bf16.gmra.mxu0 %v3481
      %v4375 = vpop.f32.mrf.mxu0
      %v4376 = vadd.f32 %v4142, %v4375
      %v4377 = vpop.f32.mrf.mxu0
      %v4378 = vpop.f32.mrf.mxu0
      %v4379 = vadd.f32 %v4144, %v4378
      %v4380 = vpop.f32.mrf.mxu0
      %4381 = vmatprep.mubr.bf16.mxu0 0
      %4382 = vmatmul.mubr.bf16.gmra.mxu0 %v3482
      %v4383 = vpop.f32.mrf.mxu0
      %v4384 = vadd.f32 %v4146, %v4383
      %v4385 = vpop.f32.mrf.mxu0
      %v4386 = vpop.f32.mrf.mxu0
      %v4387 = vadd.f32 %v4148, %v4386
      %v4388 = vpop.f32.mrf.mxu0
      %4389 = vmatprep.mubr.bf16.mxu0 0
      %4390 = vmatmul.mubr.bf16.gmra.mxu0 %v3483
      %v4391 = vpop.f32.mrf.mxu0
      %v4392 = vadd.f32 %v4150, %v4391
      %v4393 = vpop.f32.mrf.mxu0
      %v4394 = vpop.f32.mrf.mxu0
      %v4395 = vadd.f32 %v4152, %v4394
      %v4396 = vpop.f32.mrf.mxu0
      %4397 = vmatprep.mubr.bf16.mxu0 0
      %4398 = vmatmul.mubr.bf16.gmra.mxu0 %v3484
      %v4399 = vpop.f32.mrf.mxu0
      %v4400 = vadd.f32 %v4154, %v4399
      %v4401 = vpop.f32.mrf.mxu0
      %v4402 = vpop.f32.mrf.mxu0
      %v4403 = vadd.f32 %v4156, %v4402
      %v4404 = vpop.f32.mrf.mxu0
      %4405 = vmatprep.mubr.bf16.mxu0 0
      %4406 = vmatmul.mubr.bf16.gmra.mxu0 %v3485
      %v4407 = vpop.f32.mrf.mxu0
      %v4408 = vadd.f32 %v4158, %v4407
      %v4409 = vpop.f32.mrf.mxu0
      %v4410 = vpop.f32.mrf.mxu0
      %v4411 = vadd.f32 %v4160, %v4410
      %v4412 = vpop.f32.mrf.mxu0
      %4413 = vmatprep.mubr.bf16.mxu0 0
      %4414 = vmatmul.mubr.bf16.gmra.mxu0 %v3486
      %v4415 = vpop.f32.mrf.mxu0
      %v4416 = vadd.f32 %v4162, %v4415
      %v4417 = vpop.f32.mrf.mxu0
      %v4418 = vpop.f32.mrf.mxu0
      %v4419 = vadd.f32 %v4164, %v4418
      %v4420 = vpop.f32.mrf.mxu0
      %4421 = vmatprep.mubr.bf16.mxu0 0
      %4422 = vmatmul.mubr.bf16.gmra.mxu0 %v3487
      %v4423 = vpop.f32.mrf.mxu0
      %v4424 = vadd.f32 %v4166, %v4423
      %v4425 = vpop.f32.mrf.mxu0
      %v4426 = vpop.f32.mrf.mxu0
      %v4427 = vadd.f32 %v4168, %v4426
      %v4428 = vpop.f32.mrf.mxu0
      %4429 = vmatprep.mubr.bf16.mxu0 0
      %4430 = vmatmul.mubr.bf16.gmra.mxu0 %v3488
      %v4431 = vpop.f32.mrf.mxu0
      %v4432 = vadd.f32 %v4170, %v4431
      %v4433 = vpop.f32.mrf.mxu0
      %v4434 = vpop.f32.mrf.mxu0
      %v4435 = vadd.f32 %v4172, %v4434
      %v4436 = vpop.f32.mrf.mxu0
      %4437 = vmatprep.mubr.bf16.mxu0 0
      %4438 = vmatmul.mubr.bf16.gmra.mxu0 %v3489
      %v4439 = vpop.f32.mrf.mxu0
      %v4440 = vadd.f32 %v4174, %v4439
      %v4441 = vpop.f32.mrf.mxu0
      %v4442 = vpop.f32.mrf.mxu0
      %v4443 = vadd.f32 %v4176, %v4442
      %v4444 = vpop.f32.mrf.mxu0
      %4445 = vmatprep.mubr.bf16.mxu0 0
      %4446 = vmatmul.mubr.bf16.gmra.mxu0 %v3490
      %v4447 = vpop.f32.mrf.mxu0
      %v4448 = vadd.f32 %v4178, %v4447
      %v4449 = vpop.f32.mrf.mxu0
      %v4450 = vpop.f32.mrf.mxu0
      %v4451 = vadd.f32 %v4180, %v4450
      %v4452 = vpop.f32.mrf.mxu0
      %4453 = vmatprep.mubr.bf16.mxu0 0
      %4454 = vmatmul.mubr.bf16.gmra.mxu0 %v3491
      %v4455 = vpop.f32.mrf.mxu0
      %v4456 = vadd.f32 %v4182, %v4455
      %v4457 = vpop.f32.mrf.mxu0
      %v4458 = vpop.f32.mrf.mxu0
      %v4459 = vadd.f32 %v4184, %v4458
      %v4460 = vpop.f32.mrf.mxu0
      %4461 = vmatprep.mubr.bf16.mxu0 0
      %4462 = vmatmul.mubr.bf16.gmra.mxu0 %v3492
      %v4463 = vpop.f32.mrf.mxu0
      %v4464 = vadd.f32 %v4186, %v4463
      %v4465 = vpop.f32.mrf.mxu0
      %v4466 = vpop.f32.mrf.mxu0
      %v4467 = vadd.f32 %v4188, %v4466
      %v4468 = vpop.f32.mrf.mxu0
      %4469 = vmatprep.mubr.bf16.mxu0 0
      %4470 = vmatmul.mubr.bf16.gmra.mxu0 %v3493
      %v4471 = vpop.f32.mrf.mxu0
      %v4472 = vadd.f32 %v4190, %v4471
      %v4473 = vpop.f32.mrf.mxu0
      %v4474 = vpop.f32.mrf.mxu0
      %v4475 = vadd.f32 %v4192, %v4474
      %v4476 = vpop.f32.mrf.mxu0
      %4477 = vmatprep.mubr.bf16.mxu0 0
      %4478 = vmatmul.mubr.bf16.gmra.mxu0 %v3494
      %v4479 = vpop.f32.mrf.mxu0
      %v4480 = vadd.f32 %v4194, %v4479
      %v4481 = vpop.f32.mrf.mxu0
      %v4482 = vpop.f32.mrf.mxu0
      %v4483 = vadd.f32 %v4196, %v4482
      %v4484 = vpop.f32.mrf.mxu0
      %4485 = vmatprep.mubr.bf16.mxu0 0
      %4486 = vmatmul.mubr.bf16.gmra.mxu0 %v3495
      %v4487 = vpop.f32.mrf.mxu0
      %v4488 = vadd.f32 %v4198, %v4487
      %v4489 = vpop.f32.mrf.mxu0
      %v4490 = vpop.f32.mrf.mxu0
      %v4491 = vadd.f32 %v4200, %v4490
      %v4492 = vpop.f32.mrf.mxu0
      %4493 = vmatprep.mubr.bf16.mxu0 0
      %4494 = vmatmul.mubr.bf16.gmra.mxu0 %v3496
      %v4495 = vpop.f32.mrf.mxu0
      %v4496 = vadd.f32 %v4202, %v4495
      %v4497 = vpop.f32.mrf.mxu0
      %v4498 = vpop.f32.mrf.mxu0
      %v4499 = vadd.f32 %v4204, %v4498
      %v4500 = vpop.f32.mrf.mxu0
      %4501 = vmatprep.mubr.bf16.mxu0 0
      %4502 = vmatmul.mubr.bf16.gmra.mxu0 %v3497
      %v4503 = vpop.f32.mrf.mxu0
      %v4504 = vadd.f32 %v4206, %v4503
      %v4505 = vpop.f32.mrf.mxu0
      %v4506 = vpop.f32.mrf.mxu0
      %v4507 = vadd.f32 %v4208, %v4506
      %v4508 = vpop.f32.mrf.mxu0
      %4509 = vmatprep.mubr.bf16.mxu0 0
      %4510 = vmatmul.mubr.bf16.gmra.mxu0 %v3498
      %v4511 = vpop.f32.mrf.mxu0
      %v4512 = vadd.f32 %v4210, %v4511
      %v4513 = vpop.f32.mrf.mxu0
      %v4514 = vpop.f32.mrf.mxu0
      %v4515 = vadd.f32 %v4212, %v4514
      %v4516 = vpop.f32.mrf.mxu0
      %4517 = vmatprep.mubr.bf16.mxu0 0
      %4518 = vmatmul.mubr.bf16.gmra.mxu0 %v3499
      %v4519 = vpop.f32.mrf.mxu0
      %v4520 = vadd.f32 %v4214, %v4519
      %v4521 = vpop.f32.mrf.mxu0
      %v4522 = vpop.f32.mrf.mxu0
      %v4523 = vadd.f32 %v4216, %v4522
      %v4524 = vpop.f32.mrf.mxu0
      %4525 = vmatprep.mubr.bf16.mxu0 0
      %4526 = vmatmul.mubr.bf16.gmra.mxu0 %v3500
      %v4527 = vpop.f32.mrf.mxu0
      %v4528 = vadd.f32 %v4218, %v4527
      %v4529 = vpop.f32.mrf.mxu0
      %v4530 = vpop.f32.mrf.mxu0
      %v4531 = vadd.f32 %v4220, %v4530
      %v4532 = vpop.f32.mrf.mxu0
      %4533 = vmatprep.mubr.bf16.mxu0 0
      %4534 = vmatmul.mubr.bf16.gmra.mxu0 %v3501
      %v4535 = vpop.f32.mrf.mxu0
      %v4536 = vadd.f32 %v4222, %v4535
      %v4537 = vpop.f32.mrf.mxu0
      %v4538 = vpop.f32.mrf.mxu0
      %v4539 = vadd.f32 %v4224, %v4538
      %v4540 = vpop.f32.mrf.mxu0
      %4541 = vmatprep.mubr.bf16.mxu0 0
      %4542 = vmatmul.mubr.bf16.gmra.mxu0 %v3502
      %v4543 = vpop.f32.mrf.mxu0
      %v4544 = vadd.f32 %v4226, %v4543
      %v4545 = vpop.f32.mrf.mxu0
      %v4546 = vpop.f32.mrf.mxu0
      %v4547 = vadd.f32 %v4228, %v4546
      %v4548 = vpop.f32.mrf.mxu0
      %4549 = vmatprep.mubr.bf16.mxu0 0
      %4550 = vmatmul.mubr.bf16.gmra.mxu0 %v3503
      %v4551 = vpop.f32.mrf.mxu0
      %v4552 = vadd.f32 %v4230, %v4551
      %v4553 = vpop.f32.mrf.mxu0
      %v4554 = vpop.f32.mrf.mxu0
      %v4555 = vadd.f32 %v4232, %v4554
      %v4556 = vpop.f32.mrf.mxu0
      %4557 = vmatprep.mubr.bf16.mxu0 0
      %4558 = vmatmul.mubr.bf16.gmra.mxu0 %v3504
      %v4559 = vpop.f32.mrf.mxu0
      %v4560 = vadd.f32 %v4234, %v4559
      %v4561 = vpop.f32.mrf.mxu0
      %v4562 = vpop.f32.mrf.mxu0
      %v4563 = vadd.f32 %v4236, %v4562
      %v4564 = vpop.f32.mrf.mxu0
      %4565 = vmatprep.mubr.bf16.mxu0 0
      %4566 = vmatmul.mubr.bf16.gmra.mxu0 %v3505
      %v4567 = vpop.f32.mrf.mxu0
      %v4568 = vadd.f32 %v4238, %v4567
      %v4569 = vpop.f32.mrf.mxu0
      %v4570 = vpop.f32.mrf.mxu0
      %v4571 = vadd.f32 %v4240, %v4570
      %v4572 = vpop.f32.mrf.mxu0
      %4573 = vmatprep.mubr.bf16.mxu0 0
      %4574 = vmatmul.mubr.bf16.gmra.mxu0 %v3506
      %v4575 = vpop.f32.mrf.mxu0
      %v4576 = vadd.f32 %v4242, %v4575
      %v4577 = vpop.f32.mrf.mxu0
      %v4578 = vpop.f32.mrf.mxu0
      %v4579 = vadd.f32 %v4244, %v4578
      %v4580 = vpop.f32.mrf.mxu0
      %4581 = vdwg.mxu0
      %v4583 = vlaneseq
      %v4584 = vshrl.u32 %v4583, 7
      %v4585 = vsub.s32 0, %v4584
      %v4586 = vrot.slane %v2562, %v4585
      %v4588 = vadd.f32 %v4328, %v4586
      %v4589 = vadd.f32 %v4331, %v4586
      %v4590 = vadd.f32 %v4336, %v4586
      %v4591 = vadd.f32 %v4339, %v4586
      %v4592 = vadd.f32 %v4344, %v4586
      %v4593 = vadd.f32 %v4347, %v4586
      %v4594 = vadd.f32 %v4352, %v4586
      %v4595 = vadd.f32 %v4355, %v4586
      %v4596 = vadd.f32 %v4360, %v4586
      %v4597 = vadd.f32 %v4363, %v4586
      %v4598 = vadd.f32 %v4368, %v4586
      %v4599 = vadd.f32 %v4371, %v4586
      %v4600 = vadd.f32 %v4376, %v4586
      %v4601 = vadd.f32 %v4379, %v4586
      %v4602 = vadd.f32 %v4384, %v4586
      %v4603 = vadd.f32 %v4387, %v4586
      %v4604 = vadd.f32 %v4392, %v4586
      %v4605 = vadd.f32 %v4395, %v4586
      %v4606 = vadd.f32 %v4400, %v4586
      %v4607 = vadd.f32 %v4403, %v4586
      %v4608 = vadd.f32 %v4408, %v4586
      %v4609 = vadd.f32 %v4411, %v4586
      %v4610 = vadd.f32 %v4416, %v4586
      %v4611 = vadd.f32 %v4419, %v4586
      %v4612 = vadd.f32 %v4424, %v4586
      %v4613 = vadd.f32 %v4427, %v4586
      %v4614 = vadd.f32 %v4432, %v4586
      %v4615 = vadd.f32 %v4435, %v4586
      %v4616 = vadd.f32 %v4440, %v4586
      %v4617 = vadd.f32 %v4443, %v4586
      %v4618 = vadd.f32 %v4448, %v4586
      %v4619 = vadd.f32 %v4451, %v4586
      %v4620 = vadd.f32 %v4456, %v4586
      %v4621 = vadd.f32 %v4459, %v4586
      %v4622 = vadd.f32 %v4464, %v4586
      %v4623 = vadd.f32 %v4467, %v4586
      %v4624 = vadd.f32 %v4472, %v4586
      %v4625 = vadd.f32 %v4475, %v4586
      %v4626 = vadd.f32 %v4480, %v4586
      %v4627 = vadd.f32 %v4483, %v4586
      %v4628 = vadd.f32 %v4488, %v4586
      %v4629 = vadd.f32 %v4491, %v4586
      %v4630 = vadd.f32 %v4496, %v4586
      %v4631 = vadd.f32 %v4499, %v4586
      %v4632 = vadd.f32 %v4504, %v4586
      %v4633 = vadd.f32 %v4507, %v4586
      %v4634 = vadd.f32 %v4512, %v4586
      %v4635 = vadd.f32 %v4515, %v4586
      %v4636 = vadd.f32 %v4520, %v4586
      %v4637 = vadd.f32 %v4523, %v4586
      %v4638 = vadd.f32 %v4528, %v4586
      %v4639 = vadd.f32 %v4531, %v4586
      %v4640 = vadd.f32 %v4536, %v4586
      %v4641 = vadd.f32 %v4539, %v4586
      %v4642 = vadd.f32 %v4544, %v4586
      %v4643 = vadd.f32 %v4547, %v4586
      %v4644 = vadd.f32 %v4552, %v4586
      %v4645 = vadd.f32 %v4555, %v4586
      %v4646 = vadd.f32 %v4560, %v4586
      %v4647 = vadd.f32 %v4563, %v4586
      %v4648 = vadd.f32 %v4568, %v4586
      %v4649 = vadd.f32 %v4571, %v4586
      %v4650 = vadd.f32 %v4576, %v4586
      %v4651 = vadd.f32 %v4579, %v4586
      %v4652 = vsub.f32 %v4588, %v2497
      %v4653 = vsub.f32 %v4589, %v2498
      %v4654 = vsub.f32 %v4590, %v2499
      %v4655 = vsub.f32 %v4591, %v2500
      %v4656 = vsub.f32 %v4592, %v2501
      %v4657 = vsub.f32 %v4593, %v2502
      %v4658 = vsub.f32 %v4594, %v2503
      %v4659 = vsub.f32 %v4595, %v2504
      %v4660 = vsub.f32 %v4596, %v2505
      %v4661 = vsub.f32 %v4597, %v2506
      %v4662 = vsub.f32 %v4598, %v2507
      %v4663 = vsub.f32 %v4599, %v2508
      %v4664 = vsub.f32 %v4600, %v2509
      %v4665 = vsub.f32 %v4601, %v2510
      %v4666 = vsub.f32 %v4602, %v2511
      %v4667 = vsub.f32 %v4603, %v2512
      %v4668 = vsub.f32 %v4604, %v2513
      %v4669 = vsub.f32 %v4605, %v2514
      %v4670 = vsub.f32 %v4606, %v2515
      %v4671 = vsub.f32 %v4607, %v2516
      %v4672 = vsub.f32 %v4608, %v2517
      %v4673 = vsub.f32 %v4609, %v2518
      %v4674 = vsub.f32 %v4610, %v2519
      %v4675 = vsub.f32 %v4611, %v2520
      %v4676 = vsub.f32 %v4612, %v2521
      %v4677 = vsub.f32 %v4613, %v2522
      %v4678 = vsub.f32 %v4614, %v2523
      %v4679 = vsub.f32 %v4615, %v2524
      %v4680 = vsub.f32 %v4616, %v2525
      %v4681 = vsub.f32 %v4617, %v2526
      %v4682 = vsub.f32 %v4618, %v2527
      %v4683 = vsub.f32 %v4619, %v2528
      %v4684 = vsub.f32 %v4620, %v2529
      %v4685 = vsub.f32 %v4621, %v2530
      %v4686 = vsub.f32 %v4622, %v2531
      %v4687 = vsub.f32 %v4623, %v2532
      %v4688 = vsub.f32 %v4624, %v2533
      %v4689 = vsub.f32 %v4625, %v2534
      %v4690 = vsub.f32 %v4626, %v2535
      %v4691 = vsub.f32 %v4627, %v2536
      %v4692 = vsub.f32 %v4628, %v2537
      %v4693 = vsub.f32 %v4629, %v2538
      %v4694 = vsub.f32 %v4630, %v2539
      %v4695 = vsub.f32 %v4631, %v2540
      %v4696 = vsub.f32 %v4632, %v2541
      %v4697 = vsub.f32 %v4633, %v2542
      %v4698 = vsub.f32 %v4634, %v2543
      %v4699 = vsub.f32 %v4635, %v2544
      %v4700 = vsub.f32 %v4636, %v2545
      %v4701 = vsub.f32 %v4637, %v2546
      %v4702 = vsub.f32 %v4638, %v2547
      %v4703 = vsub.f32 %v4639, %v2548
      %v4704 = vsub.f32 %v4640, %v2549
      %v4705 = vsub.f32 %v4641, %v2550
      %v4706 = vsub.f32 %v4642, %v2551
      %v4707 = vsub.f32 %v4643, %v2552
      %v4708 = vsub.f32 %v4644, %v2553
      %v4709 = vsub.f32 %v4645, %v2554
      %v4710 = vsub.f32 %v4646, %v2555
      %v4711 = vsub.f32 %v4647, %v2556
      %v4712 = vsub.f32 %v4648, %v2557
      %v4713 = vsub.f32 %v4649, %v2558
      %v4714 = vsub.f32 %v4650, %v2559
      %v4715 = vsub.f32 %v4651, %v2560
      %v4716 = vld [vmem:[#allocation5] sm:$0xff]
      %v4717 = vld [vmem:[#allocation5 + $0x8] sm:$0xff]
      %v4718 = vld [vmem:[#allocation5 + $0x10] sm:$0xff]
      %v4719 = vld [vmem:[#allocation5 + $0x18] sm:$0xff]
      %v4720 = vld [vmem:[#allocation5 + $0x20] sm:$0xff]
      %v4721 = vld [vmem:[#allocation5 + $0x28] sm:$0xff]
      %v4722 = vld [vmem:[#allocation5 + $0x30] sm:$0xff]
      %v4723 = vld [vmem:[#allocation5 + $0x38] sm:$0xff]
      %v4724 = vld [vmem:[#allocation5 + $0x40] sm:$0xff]
      %v4725 = vld [vmem:[#allocation5 + $0x48] sm:$0xff]
      %v4726 = vld [vmem:[#allocation5 + $0x50] sm:$0xff]
      %v4727 = vld [vmem:[#allocation5 + $0x58] sm:$0xff]
      %v4728 = vld [vmem:[#allocation5 + $0x60] sm:$0xff]
      %v4729 = vld [vmem:[#allocation5 + $0x68] sm:$0xff]
      %v4730 = vld [vmem:[#allocation5 + $0x70] sm:$0xff]
      %v4731 = vld [vmem:[#allocation5 + $0x78] sm:$0xff]
      %v4732 = vld [vmem:[#allocation5 + $0x80] sm:$0xff]
      %v4733 = vld [vmem:[#allocation5 + $0x88] sm:$0xff]
      %v4734 = vld [vmem:[#allocation5 + $0x90] sm:$0xff]
      %v4735 = vld [vmem:[#allocation5 + $0x98] sm:$0xff]
      %v4736 = vld [vmem:[#allocation5 + $0xa0] sm:$0xff]
      %v4737 = vld [vmem:[#allocation5 + $0xa8] sm:$0xff]
      %v4738 = vld [vmem:[#allocation5 + $0xb0] sm:$0xff]
      %v4739 = vld [vmem:[#allocation5 + $0xb8] sm:$0xff]
      %v4740 = vld [vmem:[#allocation5 + $0xc0] sm:$0xff]
      %v4741 = vld [vmem:[#allocation5 + $0xc8] sm:$0xff]
      %v4742 = vld [vmem:[#allocation5 + $0xd0] sm:$0xff]
      %v4743 = vld [vmem:[#allocation5 + $0xd8] sm:$0xff]
      %v4744 = vld [vmem:[#allocation5 + $0xe0] sm:$0xff]
      %v4745 = vld [vmem:[#allocation5 + $0xe8] sm:$0xff]
      %v4746 = vld [vmem:[#allocation5 + $0xf0] sm:$0xff]
      %v4747 = vld [vmem:[#allocation5 + $0xf8] sm:$0xff]
      %v4748 = vld [vmem:[#allocation5 + $0x100] sm:$0xff]
      %v4749 = vld [vmem:[#allocation5 + $0x108] sm:$0xff]
      %v4750 = vld [vmem:[#allocation5 + $0x110] sm:$0xff]
      %v4751 = vld [vmem:[#allocation5 + $0x118] sm:$0xff]
      %v4752 = vld [vmem:[#allocation5 + $0x120] sm:$0xff]
      %v4753 = vld [vmem:[#allocation5 + $0x128] sm:$0xff]
      %v4754 = vld [vmem:[#allocation5 + $0x130] sm:$0xff]
      %v4755 = vld [vmem:[#allocation5 + $0x138] sm:$0xff]
      %v4756 = vld [vmem:[#allocation5 + $0x140] sm:$0xff]
      %v4757 = vld [vmem:[#allocation5 + $0x148] sm:$0xff]
      %v4758 = vld [vmem:[#allocation5 + $0x150] sm:$0xff]
      %v4759 = vld [vmem:[#allocation5 + $0x158] sm:$0xff]
      %v4760 = vld [vmem:[#allocation5 + $0x160] sm:$0xff]
      %v4761 = vld [vmem:[#allocation5 + $0x168] sm:$0xff]
      %v4762 = vld [vmem:[#allocation5 + $0x170] sm:$0xff]
      %v4763 = vld [vmem:[#allocation5 + $0x178] sm:$0xff]
      %v4764 = vld [vmem:[#allocation5 + $0x180] sm:$0xff]
      %v4765 = vld [vmem:[#allocation5 + $0x188] sm:$0xff]
      %v4766 = vld [vmem:[#allocation5 + $0x190] sm:$0xff]
      %v4767 = vld [vmem:[#allocation5 + $0x198] sm:$0xff]
      %v4768 = vld [vmem:[#allocation5 + $0x1a0] sm:$0xff]
      %v4769 = vld [vmem:[#allocation5 + $0x1a8] sm:$0xff]
      %v4770 = vld [vmem:[#allocation5 + $0x1b0] sm:$0xff]
      %v4771 = vld [vmem:[#allocation5 + $0x1b8] sm:$0xff]
      %v4772 = vld [vmem:[#allocation5 + $0x1c0] sm:$0xff]
      %v4773 = vld [vmem:[#allocation5 + $0x1c8] sm:$0xff]
      %v4774 = vld [vmem:[#allocation5 + $0x1d0] sm:$0xff]
      %v4775 = vld [vmem:[#allocation5 + $0x1d8] sm:$0xff]
      %v4776 = vld [vmem:[#allocation5 + $0x1e0] sm:$0xff]
      %v4777 = vld [vmem:[#allocation5 + $0x1e8] sm:$0xff]
      %v4778 = vld [vmem:[#allocation5 + $0x1f0] sm:$0xff]
      %v4779 = vld [vmem:[#allocation5 + $0x1f8] sm:$0xff]
      %s4780 = smul.u32 %s14, 65536
      %s4781 = scvt.s32.f32 %s4780
      %v4782 = vstv %s4781
      %v4783 = vadd.f32 %v4716, %v4782
      %v4784 = vadd.f32 %v4717, %v4782
      %v4785 = vadd.f32 %v4718, %v4782
      %v4786 = vadd.f32 %v4719, %v4782
      %v4787 = vadd.f32 %v4720, %v4782
      %v4788 = vadd.f32 %v4721, %v4782
      %v4789 = vadd.f32 %v4722, %v4782
      %v4790 = vadd.f32 %v4723, %v4782
      %v4791 = vadd.f32 %v4724, %v4782
      %v4792 = vadd.f32 %v4725, %v4782
      %v4793 = vadd.f32 %v4726, %v4782
      %v4794 = vadd.f32 %v4727, %v4782
      %v4795 = vadd.f32 %v4728, %v4782
      %v4796 = vadd.f32 %v4729, %v4782
      %v4797 = vadd.f32 %v4730, %v4782
      %v4798 = vadd.f32 %v4731, %v4782
      %v4799 = vadd.f32 %v4732, %v4782
      %v4800 = vadd.f32 %v4733, %v4782
      %v4801 = vadd.f32 %v4734, %v4782
      %v4802 = vadd.f32 %v4735, %v4782
      %v4803 = vadd.f32 %v4736, %v4782
      %v4804 = vadd.f32 %v4737, %v4782
      %v4805 = vadd.f32 %v4738, %v4782
      %v4806 = vadd.f32 %v4739, %v4782
      %v4807 = vadd.f32 %v4740, %v4782
      %v4808 = vadd.f32 %v4741, %v4782
      %v4809 = vadd.f32 %v4742, %v4782
      %v4810 = vadd.f32 %v4743, %v4782
      %v4811 = vadd.f32 %v4744, %v4782
      %v4812 = vadd.f32 %v4745, %v4782
      %v4813 = vadd.f32 %v4746, %v4782
      %v4814 = vadd.f32 %v4747, %v4782
      %v4815 = vadd.f32 %v4748, %v4782
      %v4816 = vadd.f32 %v4749, %v4782
      %v4817 = vadd.f32 %v4750, %v4782
      %v4818 = vadd.f32 %v4751, %v4782
      %v4819 = vadd.f32 %v4752, %v4782
      %v4820 = vadd.f32 %v4753, %v4782
      %v4821 = vadd.f32 %v4754, %v4782
      %v4822 = vadd.f32 %v4755, %v4782
      %v4823 = vadd.f32 %v4756, %v4782
      %v4824 = vadd.f32 %v4757, %v4782
      %v4825 = vadd.f32 %v4758, %v4782
      %v4826 = vadd.f32 %v4759, %v4782
      %v4827 = vadd.f32 %v4760, %v4782
      %v4828 = vadd.f32 %v4761, %v4782
      %v4829 = vadd.f32 %v4762, %v4782
      %v4830 = vadd.f32 %v4763, %v4782
      %v4831 = vadd.f32 %v4764, %v4782
      %v4832 = vadd.f32 %v4765, %v4782
      %v4833 = vadd.f32 %v4766, %v4782
      %v4834 = vadd.f32 %v4767, %v4782
      %v4835 = vadd.f32 %v4768, %v4782
      %v4836 = vadd.f32 %v4769, %v4782
      %v4837 = vadd.f32 %v4770, %v4782
      %v4838 = vadd.f32 %v4771, %v4782
      %v4839 = vadd.f32 %v4772, %v4782
      %v4840 = vadd.f32 %v4773, %v4782
      %v4841 = vadd.f32 %v4774, %v4782
      %v4842 = vadd.f32 %v4775, %v4782
      %v4843 = vadd.f32 %v4776, %v4782
      %v4844 = vadd.f32 %v4777, %v4782
      %v4845 = vadd.f32 %v4778, %v4782
      %v4846 = vadd.f32 %v4779, %v4782
      %v4848 = vlaneseq
      %v4849 = vshrl.u32 %v4848, 7
      %v4850 = vsub.s32 0, %v4849
      %v4851 = vrot.slane %v2561, %v4850
      %v4853 = vsub.f32 %v4851, %v4588
      %v4854 = vsub.f32 %v4851, %v4589
      %v4855 = vsub.f32 %v4851, %v4590
      %v4856 = vsub.f32 %v4851, %v4591
      %v4857 = vsub.f32 %v4851, %v4592
      %v4858 = vsub.f32 %v4851, %v4593
      %v4859 = vsub.f32 %v4851, %v4594
      %v4860 = vsub.f32 %v4851, %v4595
      %v4861 = vsub.f32 %v4851, %v4596
      %v4862 = vsub.f32 %v4851, %v4597
      %v4863 = vsub.f32 %v4851, %v4598
      %v4864 = vsub.f32 %v4851, %v4599
      %v4865 = vsub.f32 %v4851, %v4600
      %v4866 = vsub.f32 %v4851, %v4601
      %v4867 = vsub.f32 %v4851, %v4602
      %v4868 = vsub.f32 %v4851, %v4603
      %v4869 = vsub.f32 %v4851, %v4604
      %v4870 = vsub.f32 %v4851, %v4605
      %v4871 = vsub.f32 %v4851, %v4606
      %v4872 = vsub.f32 %v4851, %v4607
      %v4873 = vsub.f32 %v4851, %v4608
      %v4874 = vsub.f32 %v4851, %v4609
      %v4875 = vsub.f32 %v4851, %v4610
      %v4876 = vsub.f32 %v4851, %v4611
      %v4877 = vsub.f32 %v4851, %v4612
      %v4878 = vsub.f32 %v4851, %v4613
      %v4879 = vsub.f32 %v4851, %v4614
      %v4880 = vsub.f32 %v4851, %v4615
      %v4881 = vsub.f32 %v4851, %v4616
      %v4882 = vsub.f32 %v4851, %v4617
      %v4883 = vsub.f32 %v4851, %v4618
      %v4884 = vsub.f32 %v4851, %v4619
      %v4885 = vsub.f32 %v4851, %v4620
      %v4886 = vsub.f32 %v4851, %v4621
      %v4887 = vsub.f32 %v4851, %v4622
      %v4888 = vsub.f32 %v4851, %v4623
      %v4889 = vsub.f32 %v4851, %v4624
      %v4890 = vsub.f32 %v4851, %v4625
      %v4891 = vsub.f32 %v4851, %v4626
      %v4892 = vsub.f32 %v4851, %v4627
      %v4893 = vsub.f32 %v4851, %v4628
      %v4894 = vsub.f32 %v4851, %v4629
      %v4895 = vsub.f32 %v4851, %v4630
      %v4896 = vsub.f32 %v4851, %v4631
      %v4897 = vsub.f32 %v4851, %v4632
      %v4898 = vsub.f32 %v4851, %v4633
      %v4899 = vsub.f32 %v4851, %v4634
      %v4900 = vsub.f32 %v4851, %v4635
      %v4901 = vsub.f32 %v4851, %v4636
      %v4902 = vsub.f32 %v4851, %v4637
      %v4903 = vsub.f32 %v4851, %v4638
      %v4904 = vsub.f32 %v4851, %v4639
      %v4905 = vsub.f32 %v4851, %v4640
      %v4906 = vsub.f32 %v4851, %v4641
      %v4907 = vsub.f32 %v4851, %v4642
      %v4908 = vsub.f32 %v4851, %v4643
      %v4909 = vsub.f32 %v4851, %v4644
      %v4910 = vsub.f32 %v4851, %v4645
      %v4911 = vsub.f32 %v4851, %v4646
      %v4912 = vsub.f32 %v4851, %v4647
      %v4913 = vsub.f32 %v4851, %v4648
      %v4914 = vsub.f32 %v4851, %v4649
      %v4915 = vsub.f32 %v4851, %v4650
      %v4916 = vsub.f32 %v4851, %v4651
      %v4917 = vadd.f32 %v4851, %v4783
      %v4918 = vadd.f32 %v4851, %v4784
      %v4919 = vadd.f32 %v4851, %v4785
      %v4920 = vadd.f32 %v4851, %v4786
      %v4921 = vadd.f32 %v4851, %v4787
      %v4922 = vadd.f32 %v4851, %v4788
      %v4923 = vadd.f32 %v4851, %v4789
      %v4924 = vadd.f32 %v4851, %v4790
      %v4925 = vadd.f32 %v4851, %v4791
      %v4926 = vadd.f32 %v4851, %v4792
      %v4927 = vadd.f32 %v4851, %v4793
      %v4928 = vadd.f32 %v4851, %v4794
      %v4929 = vadd.f32 %v4851, %v4795
      %v4930 = vadd.f32 %v4851, %v4796
      %v4931 = vadd.f32 %v4851, %v4797
      %v4932 = vadd.f32 %v4851, %v4798
      %v4933 = vadd.f32 %v4851, %v4799
      %v4934 = vadd.f32 %v4851, %v4800
      %v4935 = vadd.f32 %v4851, %v4801
      %v4936 = vadd.f32 %v4851, %v4802
      %v4937 = vadd.f32 %v4851, %v4803
      %v4938 = vadd.f32 %v4851, %v4804
      %v4939 = vadd.f32 %v4851, %v4805
      %v4940 = vadd.f32 %v4851, %v4806
      %v4941 = vadd.f32 %v4851, %v4807
      %v4942 = vadd.f32 %v4851, %v4808
      %v4943 = vadd.f32 %v4851, %v4809
      %v4944 = vadd.f32 %v4851, %v4810
      %v4945 = vadd.f32 %v4851, %v4811
      %v4946 = vadd.f32 %v4851, %v4812
      %v4947 = vadd.f32 %v4851, %v4813
      %v4948 = vadd.f32 %v4851, %v4814
      %v4949 = vadd.f32 %v4851, %v4815
      %v4950 = vadd.f32 %v4851, %v4816
      %v4951 = vadd.f32 %v4851, %v4817
      %v4952 = vadd.f32 %v4851, %v4818
      %v4953 = vadd.f32 %v4851, %v4819
      %v4954 = vadd.f32 %v4851, %v4820
      %v4955 = vadd.f32 %v4851, %v4821
      %v4956 = vadd.f32 %v4851, %v4822
      %v4957 = vadd.f32 %v4851, %v4823
      %v4958 = vadd.f32 %v4851, %v4824
      %v4959 = vadd.f32 %v4851, %v4825
      %v4960 = vadd.f32 %v4851, %v4826
      %v4961 = vadd.f32 %v4851, %v4827
      %v4962 = vadd.f32 %v4851, %v4828
      %v4963 = vadd.f32 %v4851, %v4829
      %v4964 = vadd.f32 %v4851, %v4830
      %v4965 = vadd.f32 %v4851, %v4831
      %v4966 = vadd.f32 %v4851, %v4832
      %v4967 = vadd.f32 %v4851, %v4833
      %v4968 = vadd.f32 %v4851, %v4834
      %v4969 = vadd.f32 %v4851, %v4835
      %v4970 = vadd.f32 %v4851, %v4836
      %v4971 = vadd.f32 %v4851, %v4837
      %v4972 = vadd.f32 %v4851, %v4838
      %v4973 = vadd.f32 %v4851, %v4839
      %v4974 = vadd.f32 %v4851, %v4840
      %v4975 = vadd.f32 %v4851, %v4841
      %v4976 = vadd.f32 %v4851, %v4842
      %v4977 = vadd.f32 %v4851, %v4843
      %v4978 = vadd.f32 %v4851, %v4844
      %v4979 = vadd.f32 %v4851, %v4845
      %v4980 = vadd.f32 %v4851, %v4846
      %v4981 = vsub.f32 %v4917, %v4588
      %v4982 = vsub.f32 %v4918, %v4589
      %v4983 = vsub.f32 %v4919, %v4590
      %v4984 = vsub.f32 %v4920, %v4591
      %v4985 = vsub.f32 %v4921, %v4592
      %v4986 = vsub.f32 %v4922, %v4593
      %v4987 = vsub.f32 %v4923, %v4594
      %v4988 = vsub.f32 %v4924, %v4595
      %v4989 = vsub.f32 %v4925, %v4596
      %v4990 = vsub.f32 %v4926, %v4597
      %v4991 = vsub.f32 %v4927, %v4598
      %v4992 = vsub.f32 %v4928, %v4599
      %v4993 = vsub.f32 %v4929, %v4600
      %v4994 = vsub.f32 %v4930, %v4601
      %v4995 = vsub.f32 %v4931, %v4602
      %v4996 = vsub.f32 %v4932, %v4603
      %v4997 = vsub.f32 %v4933, %v4604
      %v4998 = vsub.f32 %v4934, %v4605
      %v4999 = vsub.f32 %v4935, %v4606
      %v5000 = vsub.f32 %v4936, %v4607
      %v5001 = vsub.f32 %v4937, %v4608
      %v5002 = vsub.f32 %v4938, %v4609
      %v5003 = vsub.f32 %v4939, %v4610
      %v5004 = vsub.f32 %v4940, %v4611
      %v5005 = vsub.f32 %v4941, %v4612
      %v5006 = vsub.f32 %v4942, %v4613
      %v5007 = vsub.f32 %v4943, %v4614
      %v5008 = vsub.f32 %v4944, %v4615
      %v5009 = vsub.f32 %v4945, %v4616
      %v5010 = vsub.f32 %v4946, %v4617
      %v5011 = vsub.f32 %v4947, %v4618
      %v5012 = vsub.f32 %v4948, %v4619
      %v5013 = vsub.f32 %v4949, %v4620
      %v5014 = vsub.f32 %v4950, %v4621
      %v5015 = vsub.f32 %v4951, %v4622
      %v5016 = vsub.f32 %v4952, %v4623
      %v5017 = vsub.f32 %v4953, %v4624
      %v5018 = vsub.f32 %v4954, %v4625
      %v5019 = vsub.f32 %v4955, %v4626
      %v5020 = vsub.f32 %v4956, %v4627
      %v5021 = vsub.f32 %v4957, %v4628
      %v5022 = vsub.f32 %v4958, %v4629
      %v5023 = vsub.f32 %v4959, %v4630
      %v5024 = vsub.f32 %v4960, %v4631
      %v5025 = vsub.f32 %v4961, %v4632
      %v5026 = vsub.f32 %v4962, %v4633
      %v5027 = vsub.f32 %v4963, %v4634
      %v5028 = vsub.f32 %v4964, %v4635
      %v5029 = vsub.f32 %v4965, %v4636
      %v5030 = vsub.f32 %v4966, %v4637
      %v5031 = vsub.f32 %v4967, %v4638
      %v5032 = vsub.f32 %v4968, %v4639
      %v5033 = vsub.f32 %v4969, %v4640
      %v5034 = vsub.f32 %v4970, %v4641
      %v5035 = vsub.f32 %v4971, %v4642
      %v5036 = vsub.f32 %v4972, %v4643
      %v5037 = vsub.f32 %v4973, %v4644
      %v5038 = vsub.f32 %v4974, %v4645
      %v5039 = vsub.f32 %v4975, %v4646
      %v5040 = vsub.f32 %v4976, %v4647
      %v5041 = vsub.f32 %v4977, %v4648
      %v5042 = vsub.f32 %v4978, %v4649
      %v5043 = vsub.f32 %v4979, %v4650
      %v5044 = vsub.f32 %v4980, %v4651
      %v5045 = vrcp.pop %v4981
      %v5046 = vmul.f32 %v4853, %v5045
      %v5047 = vrcp.pop %v4982
      %v5048 = vmul.f32 %v4854, %v5047
      %v5049 = vrcp.pop %v4983
      %v5050 = vmul.f32 %v4855, %v5049
      %v5051 = vrcp.pop %v4984
      %v5052 = vmul.f32 %v4856, %v5051
      %v5053 = vrcp.pop %v4985
      %v5054 = vmul.f32 %v4857, %v5053
      %v5055 = vrcp.pop %v4986
      %v5056 = vmul.f32 %v4858, %v5055
      %v5057 = vrcp.pop %v4987
      %v5058 = vmul.f32 %v4859, %v5057
      %v5059 = vrcp.pop %v4988
      %v5060 = vmul.f32 %v4860, %v5059
      %v5061 = vrcp.pop %v4989
      %v5062 = vmul.f32 %v4861, %v5061
      %v5063 = vrcp.pop %v4990
      %v5064 = vmul.f32 %v4862, %v5063
      %v5065 = vrcp.pop %v4991
      %v5066 = vmul.f32 %v4863, %v5065
      %v5067 = vrcp.pop %v4992
      %v5068 = vmul.f32 %v4864, %v5067
      %v5069 = vrcp.pop %v4993
      %v5070 = vmul.f32 %v4865, %v5069
      %v5071 = vrcp.pop %v4994
      %v5072 = vmul.f32 %v4866, %v5071
      %v5073 = vrcp.pop %v4995
      %v5074 = vmul.f32 %v4867, %v5073
      %v5075 = vrcp.pop %v4996
      %v5076 = vmul.f32 %v4868, %v5075
      %v5077 = vrcp.pop %v4997
      %v5078 = vmul.f32 %v4869, %v5077
      %v5079 = vrcp.pop %v4998
      %v5080 = vmul.f32 %v4870, %v5079
      %v5081 = vrcp.pop %v4999
      %v5082 = vmul.f32 %v4871, %v5081
      %v5083 = vrcp.pop %v5000
      %v5084 = vmul.f32 %v4872, %v5083
      %v5085 = vrcp.pop %v5001
      %v5086 = vmul.f32 %v4873, %v5085
      %v5087 = vrcp.pop %v5002
      %v5088 = vmul.f32 %v4874, %v5087
      %v5089 = vrcp.pop %v5003
      %v5090 = vmul.f32 %v4875, %v5089
      %v5091 = vrcp.pop %v5004
      %v5092 = vmul.f32 %v4876, %v5091
      %v5093 = vrcp.pop %v5005
      %v5094 = vmul.f32 %v4877, %v5093
      %v5095 = vrcp.pop %v5006
      %v5096 = vmul.f32 %v4878, %v5095
      %v5097 = vrcp.pop %v5007
      %v5098 = vmul.f32 %v4879, %v5097
      %v5099 = vrcp.pop %v5008
      %v5100 = vmul.f32 %v4880, %v5099
      %v5101 = vrcp.pop %v5009
      %v5102 = vmul.f32 %v4881, %v5101
      %v5103 = vrcp.pop %v5010
      %v5104 = vmul.f32 %v4882, %v5103
      %v5105 = vrcp.pop %v5011
      %v5106 = vmul.f32 %v4883, %v5105
      %v5107 = vrcp.pop %v5012
      %v5108 = vmul.f32 %v4884, %v5107
      %v5109 = vrcp.pop %v5013
      %v5110 = vmul.f32 %v4885, %v5109
      %v5111 = vrcp.pop %v5014
      %v5112 = vmul.f32 %v4886, %v5111
      %v5113 = vrcp.pop %v5015
      %v5114 = vmul.f32 %v4887, %v5113
      %v5115 = vrcp.pop %v5016
      %v5116 = vmul.f32 %v4888, %v5115
      %v5117 = vrcp.pop %v5017
      %v5118 = vmul.f32 %v4889, %v5117
      %v5119 = vrcp.pop %v5018
      %v5120 = vmul.f32 %v4890, %v5119
      %v5121 = vrcp.pop %v5019
      %v5122 = vmul.f32 %v4891, %v5121
      %v5123 = vrcp.pop %v5020
      %v5124 = vmul.f32 %v4892, %v5123
      %v5125 = vrcp.pop %v5021
      %v5126 = vmul.f32 %v4893, %v5125
      %v5127 = vrcp.pop %v5022
      %v5128 = vmul.f32 %v4894, %v5127
      %v5129 = vrcp.pop %v5023
      %v5130 = vmul.f32 %v4895, %v5129
      %v5131 = vrcp.pop %v5024
      %v5132 = vmul.f32 %v4896, %v5131
      %v5133 = vrcp.pop %v5025
      %v5134 = vmul.f32 %v4897, %v5133
      %v5135 = vrcp.pop %v5026
      %v5136 = vmul.f32 %v4898, %v5135
      %v5137 = vrcp.pop %v5027
      %v5138 = vmul.f32 %v4899, %v5137
      %v5139 = vrcp.pop %v5028
      %v5140 = vmul.f32 %v4900, %v5139
      %v5141 = vrcp.pop %v5029
      %v5142 = vmul.f32 %v4901, %v5141
      %v5143 = vrcp.pop %v5030
      %v5144 = vmul.f32 %v4902, %v5143
      %v5145 = vrcp.pop %v5031
      %v5146 = vmul.f32 %v4903, %v5145
      %v5147 = vrcp.pop %v5032
      %v5148 = vmul.f32 %v4904, %v5147
      %v5149 = vrcp.pop %v5033
      %v5150 = vmul.f32 %v4905, %v5149
      %v5151 = vrcp.pop %v5034
      %v5152 = vmul.f32 %v4906, %v5151
      %v5153 = vrcp.pop %v5035
      %v5154 = vmul.f32 %v4907, %v5153
      %v5155 = vrcp.pop %v5036
      %v5156 = vmul.f32 %v4908, %v5155
      %v5157 = vrcp.pop %v5037
      %v5158 = vmul.f32 %v4909, %v5157
      %v5159 = vrcp.pop %v5038
      %v5160 = vmul.f32 %v4910, %v5159
      %v5161 = vrcp.pop %v5039
      %v5162 = vmul.f32 %v4911, %v5161
      %v5163 = vrcp.pop %v5040
      %v5164 = vmul.f32 %v4912, %v5163
      %v5165 = vrcp.pop %v5041
      %v5166 = vmul.f32 %v4913, %v5165
      %v5167 = vrcp.pop %v5042
      %v5168 = vmul.f32 %v4914, %v5167
      %v5169 = vrcp.pop %v5043
      %v5170 = vmul.f32 %v4915, %v5169
      %v5171 = vrcp.pop %v5044
      %v5172 = vmul.f32 %v4916, %v5171
      %v5173 = vsub.f32 1.0, %v5046
      %v5174 = vsub.f32 1.0, %v5048
      %v5175 = vsub.f32 1.0, %v5050
      %v5176 = vsub.f32 1.0, %v5052
      %v5177 = vsub.f32 1.0, %v5054
      %v5178 = vsub.f32 1.0, %v5056
      %v5179 = vsub.f32 1.0, %v5058
      %v5180 = vsub.f32 1.0, %v5060
      %v5181 = vsub.f32 1.0, %v5062
      %v5182 = vsub.f32 1.0, %v5064
      %v5183 = vsub.f32 1.0, %v5066
      %v5184 = vsub.f32 1.0, %v5068
      %v5185 = vsub.f32 1.0, %v5070
      %v5186 = vsub.f32 1.0, %v5072
      %v5187 = vsub.f32 1.0, %v5074
      %v5188 = vsub.f32 1.0, %v5076
      %v5189 = vsub.f32 1.0, %v5078
      %v5190 = vsub.f32 1.0, %v5080
      %v5191 = vsub.f32 1.0, %v5082
      %v5192 = vsub.f32 1.0, %v5084
      %v5193 = vsub.f32 1.0, %v5086
      %v5194 = vsub.f32 1.0, %v5088
      %v5195 = vsub.f32 1.0, %v5090
      %v5196 = vsub.f32 1.0, %v5092
      %v5197 = vsub.f32 1.0, %v5094
      %v5198 = vsub.f32 1.0, %v5096
      %v5199 = vsub.f32 1.0, %v5098
      %v5200 = vsub.f32 1.0, %v5100
      %v5201 = vsub.f32 1.0, %v5102
      %v5202 = vsub.f32 1.0, %v5104
      %v5203 = vsub.f32 1.0, %v5106
      %v5204 = vsub.f32 1.0, %v5108
      %v5205 = vsub.f32 1.0, %v5110
      %v5206 = vsub.f32 1.0, %v5112
      %v5207 = vsub.f32 1.0, %v5114
      %v5208 = vsub.f32 1.0, %v5116
      %v5209 = vsub.f32 1.0, %v5118
      %v5210 = vsub.f32 1.0, %v5120
      %v5211 = vsub.f32 1.0, %v5122
      %v5212 = vsub.f32 1.0, %v5124
      %v5213 = vsub.f32 1.0, %v5126
      %v5214 = vsub.f32 1.0, %v5128
      %v5215 = vsub.f32 1.0, %v5130
      %v5216 = vsub.f32 1.0, %v5132
      %v5217 = vsub.f32 1.0, %v5134
      %v5218 = vsub.f32 1.0, %v5136
      %v5219 = vsub.f32 1.0, %v5138
      %v5220 = vsub.f32 1.0, %v5140
      %v5221 = vsub.f32 1.0, %v5142
      %v5222 = vsub.f32 1.0, %v5144
      %v5223 = vsub.f32 1.0, %v5146
      %v5224 = vsub.f32 1.0, %v5148
      %v5225 = vsub.f32 1.0, %v5150
      %v5226 = vsub.f32 1.0, %v5152
      %v5227 = vsub.f32 1.0, %v5154
      %v5228 = vsub.f32 1.0, %v5156
      %v5229 = vsub.f32 1.0, %v5158
      %v5230 = vsub.f32 1.0, %v5160
      %v5231 = vsub.f32 1.0, %v5162
      %v5232 = vsub.f32 1.0, %v5164
      %v5233 = vsub.f32 1.0, %v5166
      %v5234 = vsub.f32 1.0, %v5168
      %v5235 = vsub.f32 1.0, %v5170
      %v5236 = vsub.f32 1.0, %v5172
      %v5237 = vsub.f32 %v4851, %v4652
      %v5238 = vsub.f32 %v4851, %v4653
      %v5239 = vsub.f32 %v4851, %v4654
      %v5240 = vsub.f32 %v4851, %v4655
      %v5241 = vsub.f32 %v4851, %v4656
      %v5242 = vsub.f32 %v4851, %v4657
      %v5243 = vsub.f32 %v4851, %v4658
      %v5244 = vsub.f32 %v4851, %v4659
      %v5245 = vsub.f32 %v4851, %v4660
      %v5246 = vsub.f32 %v4851, %v4661
      %v5247 = vsub.f32 %v4851, %v4662
      %v5248 = vsub.f32 %v4851, %v4663
      %v5249 = vsub.f32 %v4851, %v4664
      %v5250 = vsub.f32 %v4851, %v4665
      %v5251 = vsub.f32 %v4851, %v4666
      %v5252 = vsub.f32 %v4851, %v4667
      %v5253 = vsub.f32 %v4851, %v4668
      %v5254 = vsub.f32 %v4851, %v4669
      %v5255 = vsub.f32 %v4851, %v4670
      %v5256 = vsub.f32 %v4851, %v4671
      %v5257 = vsub.f32 %v4851, %v4672
      %v5258 = vsub.f32 %v4851, %v4673
      %v5259 = vsub.f32 %v4851, %v4674
      %v5260 = vsub.f32 %v4851, %v4675
      %v5261 = vsub.f32 %v4851, %v4676
      %v5262 = vsub.f32 %v4851, %v4677
      %v5263 = vsub.f32 %v4851, %v4678
      %v5264 = vsub.f32 %v4851, %v4679
      %v5265 = vsub.f32 %v4851, %v4680
      %v5266 = vsub.f32 %v4851, %v4681
      %v5267 = vsub.f32 %v4851, %v4682
      %v5268 = vsub.f32 %v4851, %v4683
      %v5269 = vsub.f32 %v4851, %v4684
      %v5270 = vsub.f32 %v4851, %v4685
      %v5271 = vsub.f32 %v4851, %v4686
      %v5272 = vsub.f32 %v4851, %v4687
      %v5273 = vsub.f32 %v4851, %v4688
      %v5274 = vsub.f32 %v4851, %v4689
      %v5275 = vsub.f32 %v4851, %v4690
      %v5276 = vsub.f32 %v4851, %v4691
      %v5277 = vsub.f32 %v4851, %v4692
      %v5278 = vsub.f32 %v4851, %v4693
      %v5279 = vsub.f32 %v4851, %v4694
      %v5280 = vsub.f32 %v4851, %v4695
      %v5281 = vsub.f32 %v4851, %v4696
      %v5282 = vsub.f32 %v4851, %v4697
      %v5283 = vsub.f32 %v4851, %v4698
      %v5284 = vsub.f32 %v4851, %v4699
      %v5285 = vsub.f32 %v4851, %v4700
      %v5286 = vsub.f32 %v4851, %v4701
      %v5287 = vsub.f32 %v4851, %v4702
      %v5288 = vsub.f32 %v4851, %v4703
      %v5289 = vsub.f32 %v4851, %v4704
      %v5290 = vsub.f32 %v4851, %v4705
      %v5291 = vsub.f32 %v4851, %v4706
      %v5292 = vsub.f32 %v4851, %v4707
      %v5293 = vsub.f32 %v4851, %v4708
      %v5294 = vsub.f32 %v4851, %v4709
      %v5295 = vsub.f32 %v4851, %v4710
      %v5296 = vsub.f32 %v4851, %v4711
      %v5297 = vsub.f32 %v4851, %v4712
      %v5298 = vsub.f32 %v4851, %v4713
      %v5299 = vsub.f32 %v4851, %v4714
      %v5300 = vsub.f32 %v4851, %v4715
      %v5301 = vsub.f32 %v4783, 1.0
      %v5302 = vsub.f32 %v4784, 1.0
      %v5303 = vsub.f32 %v4785, 1.0
      %v5304 = vsub.f32 %v4786, 1.0
      %v5305 = vsub.f32 %v4787, 1.0
      %v5306 = vsub.f32 %v4788, 1.0
      %v5307 = vsub.f32 %v4789, 1.0
      %v5308 = vsub.f32 %v4790, 1.0
      %v5309 = vsub.f32 %v4791, 1.0
      %v5310 = vsub.f32 %v4792, 1.0
      %v5311 = vsub.f32 %v4793, 1.0
      %v5312 = vsub.f32 %v4794, 1.0
      %v5313 = vsub.f32 %v4795, 1.0
      %v5314 = vsub.f32 %v4796, 1.0
      %v5315 = vsub.f32 %v4797, 1.0
      %v5316 = vsub.f32 %v4798, 1.0
      %v5317 = vsub.f32 %v4799, 1.0
      %v5318 = vsub.f32 %v4800, 1.0
      %v5319 = vsub.f32 %v4801, 1.0
      %v5320 = vsub.f32 %v4802, 1.0
      %v5321 = vsub.f32 %v4803, 1.0
      %v5322 = vsub.f32 %v4804, 1.0
      %v5323 = vsub.f32 %v4805, 1.0
      %v5324 = vsub.f32 %v4806, 1.0
      %v5325 = vsub.f32 %v4807, 1.0
      %v5326 = vsub.f32 %v4808, 1.0
      %v5327 = vsub.f32 %v4809, 1.0
      %v5328 = vsub.f32 %v4810, 1.0
      %v5329 = vsub.f32 %v4811, 1.0
      %v5330 = vsub.f32 %v4812, 1.0
      %v5331 = vsub.f32 %v4813, 1.0
      %v5332 = vsub.f32 %v4814, 1.0
      %v5333 = vsub.f32 %v4815, 1.0
      %v5334 = vsub.f32 %v4816, 1.0
      %v5335 = vsub.f32 %v4817, 1.0
      %v5336 = vsub.f32 %v4818, 1.0
      %v5337 = vsub.f32 %v4819, 1.0
      %v5338 = vsub.f32 %v4820, 1.0
      %v5339 = vsub.f32 %v4821, 1.0
      %v5340 = vsub.f32 %v4822, 1.0
      %v5341 = vsub.f32 %v4823, 1.0
      %v5342 = vsub.f32 %v4824, 1.0
      %v5343 = vsub.f32 %v4825, 1.0
      %v5344 = vsub.f32 %v4826, 1.0
      %v5345 = vsub.f32 %v4827, 1.0
      %v5346 = vsub.f32 %v4828, 1.0
      %v5347 = vsub.f32 %v4829, 1.0
      %v5348 = vsub.f32 %v4830, 1.0
      %v5349 = vsub.f32 %v4831, 1.0
      %v5350 = vsub.f32 %v4832, 1.0
      %v5351 = vsub.f32 %v4833, 1.0
      %v5352 = vsub.f32 %v4834, 1.0
      %v5353 = vsub.f32 %v4835, 1.0
      %v5354 = vsub.f32 %v4836, 1.0
      %v5355 = vsub.f32 %v4837, 1.0
      %v5356 = vsub.f32 %v4838, 1.0
      %v5357 = vsub.f32 %v4839, 1.0
      %v5358 = vsub.f32 %v4840, 1.0
      %v5359 = vsub.f32 %v4841, 1.0
      %v5360 = vsub.f32 %v4842, 1.0
      %v5361 = vsub.f32 %v4843, 1.0
      %v5362 = vsub.f32 %v4844, 1.0
      %v5363 = vsub.f32 %v4845, 1.0
      %v5364 = vsub.f32 %v4846, 1.0
      %v5365 = vadd.f32 %v4851, %v5301
      %v5366 = vadd.f32 %v4851, %v5302
      %v5367 = vadd.f32 %v4851, %v5303
      %v5368 = vadd.f32 %v4851, %v5304
      %v5369 = vadd.f32 %v4851, %v5305
      %v5370 = vadd.f32 %v4851, %v5306
      %v5371 = vadd.f32 %v4851, %v5307
      %v5372 = vadd.f32 %v4851, %v5308
      %v5373 = vadd.f32 %v4851, %v5309
      %v5374 = vadd.f32 %v4851, %v5310
      %v5375 = vadd.f32 %v4851, %v5311
      %v5376 = vadd.f32 %v4851, %v5312
      %v5377 = vadd.f32 %v4851, %v5313
      %v5378 = vadd.f32 %v4851, %v5314
      %v5379 = vadd.f32 %v4851, %v5315
      %v5380 = vadd.f32 %v4851, %v5316
      %v5381 = vadd.f32 %v4851, %v5317
      %v5382 = vadd.f32 %v4851, %v5318
      %v5383 = vadd.f32 %v4851, %v5319
      %v5384 = vadd.f32 %v4851, %v5320
      %v5385 = vadd.f32 %v4851, %v5321
      %v5386 = vadd.f32 %v4851, %v5322
      %v5387 = vadd.f32 %v4851, %v5323
      %v5388 = vadd.f32 %v4851, %v5324
      %v5389 = vadd.f32 %v4851, %v5325
      %v5390 = vadd.f32 %v4851, %v5326
      %v5391 = vadd.f32 %v4851, %v5327
      %v5392 = vadd.f32 %v4851, %v5328
      %v5393 = vadd.f32 %v4851, %v5329
      %v5394 = vadd.f32 %v4851, %v5330
      %v5395 = vadd.f32 %v4851, %v5331
      %v5396 = vadd.f32 %v4851, %v5332
      %v5397 = vadd.f32 %v4851, %v5333
      %v5398 = vadd.f32 %v4851, %v5334
      %v5399 = vadd.f32 %v4851, %v5335
      %v5400 = vadd.f32 %v4851, %v5336
      %v5401 = vadd.f32 %v4851, %v5337
      %v5402 = vadd.f32 %v4851, %v5338
      %v5403 = vadd.f32 %v4851, %v5339
      %v5404 = vadd.f32 %v4851, %v5340
      %v5405 = vadd.f32 %v4851, %v5341
      %v5406 = vadd.f32 %v4851, %v5342
      %v5407 = vadd.f32 %v4851, %v5343
      %v5408 = vadd.f32 %v4851, %v5344
      %v5409 = vadd.f32 %v4851, %v5345
      %v5410 = vadd.f32 %v4851, %v5346
      %v5411 = vadd.f32 %v4851, %v5347
      %v5412 = vadd.f32 %v4851, %v5348
      %v5413 = vadd.f32 %v4851, %v5349
      %v5414 = vadd.f32 %v4851, %v5350
      %v5415 = vadd.f32 %v4851, %v5351
      %v5416 = vadd.f32 %v4851, %v5352
      %v5417 = vadd.f32 %v4851, %v5353
      %v5418 = vadd.f32 %v4851, %v5354
      %v5419 = vadd.f32 %v4851, %v5355
      %v5420 = vadd.f32 %v4851, %v5356
      %v5421 = vadd.f32 %v4851, %v5357
      %v5422 = vadd.f32 %v4851, %v5358
      %v5423 = vadd.f32 %v4851, %v5359
      %v5424 = vadd.f32 %v4851, %v5360
      %v5425 = vadd.f32 %v4851, %v5361
      %v5426 = vadd.f32 %v4851, %v5362
      %v5427 = vadd.f32 %v4851, %v5363
      %v5428 = vadd.f32 %v4851, %v5364
      %v5429 = vsub.f32 %v5365, %v4652
      %v5430 = vsub.f32 %v5366, %v4653
      %v5431 = vsub.f32 %v5367, %v4654
      %v5432 = vsub.f32 %v5368, %v4655
      %v5433 = vsub.f32 %v5369, %v4656
      %v5434 = vsub.f32 %v5370, %v4657
      %v5435 = vsub.f32 %v5371, %v4658
      %v5436 = vsub.f32 %v5372, %v4659
      %v5437 = vsub.f32 %v5373, %v4660
      %v5438 = vsub.f32 %v5374, %v4661
      %v5439 = vsub.f32 %v5375, %v4662
      %v5440 = vsub.f32 %v5376, %v4663
      %v5441 = vsub.f32 %v5377, %v4664
      %v5442 = vsub.f32 %v5378, %v4665
      %v5443 = vsub.f32 %v5379, %v4666
      %v5444 = vsub.f32 %v5380, %v4667
      %v5445 = vsub.f32 %v5381, %v4668
      %v5446 = vsub.f32 %v5382, %v4669
      %v5447 = vsub.f32 %v5383, %v4670
      %v5448 = vsub.f32 %v5384, %v4671
      %v5449 = vsub.f32 %v5385, %v4672
      %v5450 = vsub.f32 %v5386, %v4673
      %v5451 = vsub.f32 %v5387, %v4674
      %v5452 = vsub.f32 %v5388, %v4675
      %v5453 = vsub.f32 %v5389, %v4676
      %v5454 = vsub.f32 %v5390, %v4677
      %v5455 = vsub.f32 %v5391, %v4678
      %v5456 = vsub.f32 %v5392, %v4679
      %v5457 = vsub.f32 %v5393, %v4680
      %v5458 = vsub.f32 %v5394, %v4681
      %v5459 = vsub.f32 %v5395, %v4682
      %v5460 = vsub.f32 %v5396, %v4683
      %v5461 = vsub.f32 %v5397, %v4684
      %v5462 = vsub.f32 %v5398, %v4685
      %v5463 = vsub.f32 %v5399, %v4686
      %v5464 = vsub.f32 %v5400, %v4687
      %v5465 = vsub.f32 %v5401, %v4688
      %v5466 = vsub.f32 %v5402, %v4689
      %v5467 = vsub.f32 %v5403, %v4690
      %v5468 = vsub.f32 %v5404, %v4691
      %v5469 = vsub.f32 %v5405, %v4692
      %v5470 = vsub.f32 %v5406, %v4693
      %v5471 = vsub.f32 %v5407, %v4694
      %v5472 = vsub.f32 %v5408, %v4695
      %v5473 = vsub.f32 %v5409, %v4696
      %v5474 = vsub.f32 %v5410, %v4697
      %v5475 = vsub.f32 %v5411, %v4698
      %v5476 = vsub.f32 %v5412, %v4699
      %v5477 = vsub.f32 %v5413, %v4700
      %v5478 = vsub.f32 %v5414, %v4701
      %v5479 = vsub.f32 %v5415, %v4702
      %v5480 = vsub.f32 %v5416, %v4703
      %v5481 = vsub.f32 %v5417, %v4704
      %v5482 = vsub.f32 %v5418, %v4705
      %v5483 = vsub.f32 %v5419, %v4706
      %v5484 = vsub.f32 %v5420, %v4707
      %v5485 = vsub.f32 %v5421, %v4708
      %v5486 = vsub.f32 %v5422, %v4709
      %v5487 = vsub.f32 %v5423, %v4710
      %v5488 = vsub.f32 %v5424, %v4711
      %v5489 = vsub.f32 %v5425, %v4712
      %v5490 = vsub.f32 %v5426, %v4713
      %v5491 = vsub.f32 %v5427, %v4714
      %v5492 = vsub.f32 %v5428, %v4715
      %v5493 = vmax.f32 %v5429, 1.0
      %v5494 = vmax.f32 %v5430, 1.0
      %v5495 = vmax.f32 %v5431, 1.0
      %v5496 = vmax.f32 %v5432, 1.0
      %v5497 = vmax.f32 %v5433, 1.0
      %v5498 = vmax.f32 %v5434, 1.0
      %v5499 = vmax.f32 %v5435, 1.0
      %v5500 = vmax.f32 %v5436, 1.0
      %v5501 = vmax.f32 %v5437, 1.0
      %v5502 = vmax.f32 %v5438, 1.0
      %v5503 = vmax.f32 %v5439, 1.0
      %v5504 = vmax.f32 %v5440, 1.0
      %v5505 = vmax.f32 %v5441, 1.0
      %v5506 = vmax.f32 %v5442, 1.0
      %v5507 = vmax.f32 %v5443, 1.0
      %v5508 = vmax.f32 %v5444, 1.0
      %v5509 = vmax.f32 %v5445, 1.0
      %v5510 = vmax.f32 %v5446, 1.0
      %v5511 = vmax.f32 %v5447, 1.0
      %v5512 = vmax.f32 %v5448, 1.0
      %v5513 = vmax.f32 %v5449, 1.0
      %v5514 = vmax.f32 %v5450, 1.0
      %v5515 = vmax.f32 %v5451, 1.0
      %v5516 = vmax.f32 %v5452, 1.0
      %v5517 = vmax.f32 %v5453, 1.0
      %v5518 = vmax.f32 %v5454, 1.0
      %v5519 = vmax.f32 %v5455, 1.0
      %v5520 = vmax.f32 %v5456, 1.0
      %v5521 = vmax.f32 %v5457, 1.0
      %v5522 = vmax.f32 %v5458, 1.0
      %v5523 = vmax.f32 %v5459, 1.0
      %v5524 = vmax.f32 %v5460, 1.0
      %v5525 = vmax.f32 %v5461, 1.0
      %v5526 = vmax.f32 %v5462, 1.0
      %v5527 = vmax.f32 %v5463, 1.0
      %v5528 = vmax.f32 %v5464, 1.0
      %v5529 = vmax.f32 %v5465, 1.0
      %v5530 = vmax.f32 %v5466, 1.0
      %v5531 = vmax.f32 %v5467, 1.0
      %v5532 = vmax.f32 %v5468, 1.0
      %v5533 = vmax.f32 %v5469, 1.0
      %v5534 = vmax.f32 %v5470, 1.0
      %v5535 = vmax.f32 %v5471, 1.0
      %v5536 = vmax.f32 %v5472, 1.0
      %v5537 = vmax.f32 %v5473, 1.0
      %v5538 = vmax.f32 %v5474, 1.0
      %v5539 = vmax.f32 %v5475, 1.0
      %v5540 = vmax.f32 %v5476, 1.0
      %v5541 = vmax.f32 %v5477, 1.0
      %v5542 = vmax.f32 %v5478, 1.0
      %v5543 = vmax.f32 %v5479, 1.0
      %v5544 = vmax.f32 %v5480, 1.0
      %v5545 = vmax.f32 %v5481, 1.0
      %v5546 = vmax.f32 %v5482, 1.0
      %v5547 = vmax.f32 %v5483, 1.0
      %v5548 = vmax.f32 %v5484, 1.0
      %v5549 = vmax.f32 %v5485, 1.0
      %v5550 = vmax.f32 %v5486, 1.0
      %v5551 = vmax.f32 %v5487, 1.0
      %v5552 = vmax.f32 %v5488, 1.0
      %v5553 = vmax.f32 %v5489, 1.0
      %v5554 = vmax.f32 %v5490, 1.0
      %v5555 = vmax.f32 %v5491, 1.0
      %v5556 = vmax.f32 %v5492, 1.0
      %v5557 = vrcp.pop %v5493
      %v5558 = vmul.f32 %v5237, %v5557
      %v5559 = vrcp.pop %v5494
      %v5560 = vmul.f32 %v5238, %v5559
      %v5561 = vrcp.pop %v5495
      %v5562 = vmul.f32 %v5239, %v5561
      %v5563 = vrcp.pop %v5496
      %v5564 = vmul.f32 %v5240, %v5563
      %v5565 = vrcp.pop %v5497
      %v5566 = vmul.f32 %v5241, %v5565
      %v5567 = vrcp.pop %v5498
      %v5568 = vmul.f32 %v5242, %v5567
      %v5569 = vrcp.pop %v5499
      %v5570 = vmul.f32 %v5243, %v5569
      %v5571 = vrcp.pop %v5500
      %v5572 = vmul.f32 %v5244, %v5571
      %v5573 = vrcp.pop %v5501
      %v5574 = vmul.f32 %v5245, %v5573
      %v5575 = vrcp.pop %v5502
      %v5576 = vmul.f32 %v5246, %v5575
      %v5577 = vrcp.pop %v5503
      %v5578 = vmul.f32 %v5247, %v5577
      %v5579 = vrcp.pop %v5504
      %v5580 = vmul.f32 %v5248, %v5579
      %v5581 = vrcp.pop %v5505
      %v5582 = vmul.f32 %v5249, %v5581
      %v5583 = vrcp.pop %v5506
      %v5584 = vmul.f32 %v5250, %v5583
      %v5585 = vrcp.pop %v5507
      %v5586 = vmul.f32 %v5251, %v5585
      %v5587 = vrcp.pop %v5508
      %v5588 = vmul.f32 %v5252, %v5587
      %v5589 = vrcp.pop %v5509
      %v5590 = vmul.f32 %v5253, %v5589
      %v5591 = vrcp.pop %v5510
      %v5592 = vmul.f32 %v5254, %v5591
      %v5593 = vrcp.pop %v5511
      %v5594 = vmul.f32 %v5255, %v5593
      %v5595 = vrcp.pop %v5512
      %v5596 = vmul.f32 %v5256, %v5595
      %v5597 = vrcp.pop %v5513
      %v5598 = vmul.f32 %v5257, %v5597
      %v5599 = vrcp.pop %v5514
      %v5600 = vmul.f32 %v5258, %v5599
      %v5601 = vrcp.pop %v5515
      %v5602 = vmul.f32 %v5259, %v5601
      %v5603 = vrcp.pop %v5516
      %v5604 = vmul.f32 %v5260, %v5603
      %v5605 = vrcp.pop %v5517
      %v5606 = vmul.f32 %v5261, %v5605
      %v5607 = vrcp.pop %v5518
      %v5608 = vmul.f32 %v5262, %v5607
      %v5609 = vrcp.pop %v5519
      %v5610 = vmul.f32 %v5263, %v5609
      %v5611 = vrcp.pop %v5520
      %v5612 = vmul.f32 %v5264, %v5611
      %v5613 = vrcp.pop %v5521
      %v5614 = vmul.f32 %v5265, %v5613
      %v5615 = vrcp.pop %v5522
      %v5616 = vmul.f32 %v5266, %v5615
      %v5617 = vrcp.pop %v5523
      %v5618 = vmul.f32 %v5267, %v5617
      %v5619 = vrcp.pop %v5524
      %v5620 = vmul.f32 %v5268, %v5619
      %v5621 = vrcp.pop %v5525
      %v5622 = vmul.f32 %v5269, %v5621
      %v5623 = vrcp.pop %v5526
      %v5624 = vmul.f32 %v5270, %v5623
      %v5625 = vrcp.pop %v5527
      %v5626 = vmul.f32 %v5271, %v5625
      %v5627 = vrcp.pop %v5528
      %v5628 = vmul.f32 %v5272, %v5627
      %v5629 = vrcp.pop %v5529
      %v5630 = vmul.f32 %v5273, %v5629
      %v5631 = vrcp.pop %v5530
      %v5632 = vmul.f32 %v5274, %v5631
      %v5633 = vrcp.pop %v5531
      %v5634 = vmul.f32 %v5275, %v5633
      %v5635 = vrcp.pop %v5532
      %v5636 = vmul.f32 %v5276, %v5635
      %v5637 = vrcp.pop %v5533
      %v5638 = vmul.f32 %v5277, %v5637
      %v5639 = vrcp.pop %v5534
      %v5640 = vmul.f32 %v5278, %v5639
      %v5641 = vrcp.pop %v5535
      %v5642 = vmul.f32 %v5279, %v5641
      %v5643 = vrcp.pop %v5536
      %v5644 = vmul.f32 %v5280, %v5643
      %v5645 = vrcp.pop %v5537
      %v5646 = vmul.f32 %v5281, %v5645
      %v5647 = vrcp.pop %v5538
      %v5648 = vmul.f32 %v5282, %v5647
      %v5649 = vrcp.pop %v5539
      %v5650 = vmul.f32 %v5283, %v5649
      %v5651 = vrcp.pop %v5540
      %v5652 = vmul.f32 %v5284, %v5651
      %v5653 = vrcp.pop %v5541
      %v5654 = vmul.f32 %v5285, %v5653
      %v5655 = vrcp.pop %v5542
      %v5656 = vmul.f32 %v5286, %v5655
      %v5657 = vrcp.pop %v5543
      %v5658 = vmul.f32 %v5287, %v5657
      %v5659 = vrcp.pop %v5544
      %v5660 = vmul.f32 %v5288, %v5659
      %v5661 = vrcp.pop %v5545
      %v5662 = vmul.f32 %v5289, %v5661
      %v5663 = vrcp.pop %v5546
      %v5664 = vmul.f32 %v5290, %v5663
      %v5665 = vrcp.pop %v5547
      %v5666 = vmul.f32 %v5291, %v5665
      %v5667 = vrcp.pop %v5548
      %v5668 = vmul.f32 %v5292, %v5667
      %v5669 = vrcp.pop %v5549
      %v5670 = vmul.f32 %v5293, %v5669
      %v5671 = vrcp.pop %v5550
      %v5672 = vmul.f32 %v5294, %v5671
      %v5673 = vrcp.pop %v5551
      %v5674 = vmul.f32 %v5295, %v5673
      %v5675 = vrcp.pop %v5552
      %v5676 = vmul.f32 %v5296, %v5675
      %v5677 = vrcp.pop %v5553
      %v5678 = vmul.f32 %v5297, %v5677
      %v5679 = vrcp.pop %v5554
      %v5680 = vmul.f32 %v5298, %v5679
      %v5681 = vrcp.pop %v5555
      %v5682 = vmul.f32 %v5299, %v5681
      %v5683 = vrcp.pop %v5556
      %v5684 = vmul.f32 %v5300, %v5683
      %v5685 = vsub.f32 1.0, %v5558
      %v5686 = vsub.f32 1.0, %v5560
      %v5687 = vsub.f32 1.0, %v5562
      %v5688 = vsub.f32 1.0, %v5564
      %v5689 = vsub.f32 1.0, %v5566
      %v5690 = vsub.f32 1.0, %v5568
      %v5691 = vsub.f32 1.0, %v5570
      %v5692 = vsub.f32 1.0, %v5572
      %v5693 = vsub.f32 1.0, %v5574
      %v5694 = vsub.f32 1.0, %v5576
      %v5695 = vsub.f32 1.0, %v5578
      %v5696 = vsub.f32 1.0, %v5580
      %v5697 = vsub.f32 1.0, %v5582
      %v5698 = vsub.f32 1.0, %v5584
      %v5699 = vsub.f32 1.0, %v5586
      %v5700 = vsub.f32 1.0, %v5588
      %v5701 = vsub.f32 1.0, %v5590
      %v5702 = vsub.f32 1.0, %v5592
      %v5703 = vsub.f32 1.0, %v5594
      %v5704 = vsub.f32 1.0, %v5596
      %v5705 = vsub.f32 1.0, %v5598
      %v5706 = vsub.f32 1.0, %v5600
      %v5707 = vsub.f32 1.0, %v5602
      %v5708 = vsub.f32 1.0, %v5604
      %v5709 = vsub.f32 1.0, %v5606
      %v5710 = vsub.f32 1.0, %v5608
      %v5711 = vsub.f32 1.0, %v5610
      %v5712 = vsub.f32 1.0, %v5612
      %v5713 = vsub.f32 1.0, %v5614
      %v5714 = vsub.f32 1.0, %v5616
      %v5715 = vsub.f32 1.0, %v5618
      %v5716 = vsub.f32 1.0, %v5620
      %v5717 = vsub.f32 1.0, %v5622
      %v5718 = vsub.f32 1.0, %v5624
      %v5719 = vsub.f32 1.0, %v5626
      %v5720 = vsub.f32 1.0, %v5628
      %v5721 = vsub.f32 1.0, %v5630
      %v5722 = vsub.f32 1.0, %v5632
      %v5723 = vsub.f32 1.0, %v5634
      %v5724 = vsub.f32 1.0, %v5636
      %v5725 = vsub.f32 1.0, %v5638
      %v5726 = vsub.f32 1.0, %v5640
      %v5727 = vsub.f32 1.0, %v5642
      %v5728 = vsub.f32 1.0, %v5644
      %v5729 = vsub.f32 1.0, %v5646
      %v5730 = vsub.f32 1.0, %v5648
      %v5731 = vsub.f32 1.0, %v5650
      %v5732 = vsub.f32 1.0, %v5652
      %v5733 = vsub.f32 1.0, %v5654
      %v5734 = vsub.f32 1.0, %v5656
      %v5735 = vsub.f32 1.0, %v5658
      %v5736 = vsub.f32 1.0, %v5660
      %v5737 = vsub.f32 1.0, %v5662
      %v5738 = vsub.f32 1.0, %v5664
      %v5739 = vsub.f32 1.0, %v5666
      %v5740 = vsub.f32 1.0, %v5668
      %v5741 = vsub.f32 1.0, %v5670
      %v5742 = vsub.f32 1.0, %v5672
      %v5743 = vsub.f32 1.0, %v5674
      %v5744 = vsub.f32 1.0, %v5676
      %v5745 = vsub.f32 1.0, %v5678
      %v5746 = vsub.f32 1.0, %v5680
      %v5747 = vsub.f32 1.0, %v5682
      %v5748 = vsub.f32 1.0, %v5684
      %vm5749 = vcmp.eq.f32.partialorder %v4783, 1.0
      %vm5750 = vcmp.eq.f32.partialorder %v4784, 1.0
      %vm5751 = vcmp.eq.f32.partialorder %v4785, 1.0
      %vm5752 = vcmp.eq.f32.partialorder %v4786, 1.0
      %vm5753 = vcmp.eq.f32.partialorder %v4787, 1.0
      %vm5754 = vcmp.eq.f32.partialorder %v4788, 1.0
      %vm5755 = vcmp.eq.f32.partialorder %v4789, 1.0
      %vm5756 = vcmp.eq.f32.partialorder %v4790, 1.0
      %vm5757 = vcmp.eq.f32.partialorder %v4791, 1.0
      %vm5758 = vcmp.eq.f32.partialorder %v4792, 1.0
      %vm5759 = vcmp.eq.f32.partialorder %v4793, 1.0
      %vm5760 = vcmp.eq.f32.partialorder %v4794, 1.0
      %vm5761 = vcmp.eq.f32.partialorder %v4795, 1.0
      %vm5762 = vcmp.eq.f32.partialorder %v4796, 1.0
      %vm5763 = vcmp.eq.f32.partialorder %v4797, 1.0
      %vm5764 = vcmp.eq.f32.partialorder %v4798, 1.0
      %vm5765 = vcmp.eq.f32.partialorder %v4799, 1.0
      %vm5766 = vcmp.eq.f32.partialorder %v4800, 1.0
      %vm5767 = vcmp.eq.f32.partialorder %v4801, 1.0
      %vm5768 = vcmp.eq.f32.partialorder %v4802, 1.0
      %vm5769 = vcmp.eq.f32.partialorder %v4803, 1.0
      %vm5770 = vcmp.eq.f32.partialorder %v4804, 1.0
      %vm5771 = vcmp.eq.f32.partialorder %v4805, 1.0
      %vm5772 = vcmp.eq.f32.partialorder %v4806, 1.0
      %vm5773 = vcmp.eq.f32.partialorder %v4807, 1.0
      %vm5774 = vcmp.eq.f32.partialorder %v4808, 1.0
      %vm5775 = vcmp.eq.f32.partialorder %v4809, 1.0
      %vm5776 = vcmp.eq.f32.partialorder %v4810, 1.0
      %vm5777 = vcmp.eq.f32.partialorder %v4811, 1.0
      %vm5778 = vcmp.eq.f32.partialorder %v4812, 1.0
      %vm5779 = vcmp.eq.f32.partialorder %v4813, 1.0
      %vm5780 = vcmp.eq.f32.partialorder %v4814, 1.0
      %vm5781 = vcmp.eq.f32.partialorder %v4815, 1.0
      %vm5782 = vcmp.eq.f32.partialorder %v4816, 1.0
      %vm5783 = vcmp.eq.f32.partialorder %v4817, 1.0
      %vm5784 = vcmp.eq.f32.partialorder %v4818, 1.0
      %vm5785 = vcmp.eq.f32.partialorder %v4819, 1.0
      %vm5786 = vcmp.eq.f32.partialorder %v4820, 1.0
      %vm5787 = vcmp.eq.f32.partialorder %v4821, 1.0
      %vm5788 = vcmp.eq.f32.partialorder %v4822, 1.0
      %vm5789 = vcmp.eq.f32.partialorder %v4823, 1.0
      %vm5790 = vcmp.eq.f32.partialorder %v4824, 1.0
      %vm5791 = vcmp.eq.f32.partialorder %v4825, 1.0
      %vm5792 = vcmp.eq.f32.partialorder %v4826, 1.0
      %vm5793 = vcmp.eq.f32.partialorder %v4827, 1.0
      %vm5794 = vcmp.eq.f32.partialorder %v4828, 1.0
      %vm5795 = vcmp.eq.f32.partialorder %v4829, 1.0
      %vm5796 = vcmp.eq.f32.partialorder %v4830, 1.0
      %vm5797 = vcmp.eq.f32.partialorder %v4831, 1.0
      %vm5798 = vcmp.eq.f32.partialorder %v4832, 1.0
      %vm5799 = vcmp.eq.f32.partialorder %v4833, 1.0
      %vm5800 = vcmp.eq.f32.partialorder %v4834, 1.0
      %vm5801 = vcmp.eq.f32.partialorder %v4835, 1.0
      %vm5802 = vcmp.eq.f32.partialorder %v4836, 1.0
      %vm5803 = vcmp.eq.f32.partialorder %v4837, 1.0
      %vm5804 = vcmp.eq.f32.partialorder %v4838, 1.0
      %vm5805 = vcmp.eq.f32.partialorder %v4839, 1.0
      %vm5806 = vcmp.eq.f32.partialorder %v4840, 1.0
      %vm5807 = vcmp.eq.f32.partialorder %v4841, 1.0
      %vm5808 = vcmp.eq.f32.partialorder %v4842, 1.0
      %vm5809 = vcmp.eq.f32.partialorder %v4843, 1.0
      %vm5810 = vcmp.eq.f32.partialorder %v4844, 1.0
      %vm5811 = vcmp.eq.f32.partialorder %v4845, 1.0
      %vm5812 = vcmp.eq.f32.partialorder %v4846, 1.0
      %v5813 = vsel %vm5749, 0.0, %v5685
      %v5814 = vsel %vm5750, 0.0, %v5686
      %v5815 = vsel %vm5751, 0.0, %v5687
      %v5816 = vsel %vm5752, 0.0, %v5688
      %v5817 = vsel %vm5753, 0.0, %v5689
      %v5818 = vsel %vm5754, 0.0, %v5690
      %v5819 = vsel %vm5755, 0.0, %v5691
      %v5820 = vsel %vm5756, 0.0, %v5692
      %v5821 = vsel %vm5757, 0.0, %v5693
      %v5822 = vsel %vm5758, 0.0, %v5694
      %v5823 = vsel %vm5759, 0.0, %v5695
      %v5824 = vsel %vm5760, 0.0, %v5696
      %v5825 = vsel %vm5761, 0.0, %v5697
      %v5826 = vsel %vm5762, 0.0, %v5698
      %v5827 = vsel %vm5763, 0.0, %v5699
      %v5828 = vsel %vm5764, 0.0, %v5700
      %v5829 = vsel %vm5765, 0.0, %v5701
      %v5830 = vsel %vm5766, 0.0, %v5702
      %v5831 = vsel %vm5767, 0.0, %v5703
      %v5832 = vsel %vm5768, 0.0, %v5704
      %v5833 = vsel %vm5769, 0.0, %v5705
      %v5834 = vsel %vm5770, 0.0, %v5706
      %v5835 = vsel %vm5771, 0.0, %v5707
      %v5836 = vsel %vm5772, 0.0, %v5708
      %v5837 = vsel %vm5773, 0.0, %v5709
      %v5838 = vsel %vm5774, 0.0, %v5710
      %v5839 = vsel %vm5775, 0.0, %v5711
      %v5840 = vsel %vm5776, 0.0, %v5712
      %v5841 = vsel %vm5777, 0.0, %v5713
      %v5842 = vsel %vm5778, 0.0, %v5714
      %v5843 = vsel %vm5779, 0.0, %v5715
      %v5844 = vsel %vm5780, 0.0, %v5716
      %v5845 = vsel %vm5781, 0.0, %v5717
      %v5846 = vsel %vm5782, 0.0, %v5718
      %v5847 = vsel %vm5783, 0.0, %v5719
      %v5848 = vsel %vm5784, 0.0, %v5720
      %v5849 = vsel %vm5785, 0.0, %v5721
      %v5850 = vsel %vm5786, 0.0, %v5722
      %v5851 = vsel %vm5787, 0.0, %v5723
      %v5852 = vsel %vm5788, 0.0, %v5724
      %v5853 = vsel %vm5789, 0.0, %v5725
      %v5854 = vsel %vm5790, 0.0, %v5726
      %v5855 = vsel %vm5791, 0.0, %v5727
      %v5856 = vsel %vm5792, 0.0, %v5728
      %v5857 = vsel %vm5793, 0.0, %v5729
      %v5858 = vsel %vm5794, 0.0, %v5730
      %v5859 = vsel %vm5795, 0.0, %v5731
      %v5860 = vsel %vm5796, 0.0, %v5732
      %v5861 = vsel %vm5797, 0.0, %v5733
      %v5862 = vsel %vm5798, 0.0, %v5734
      %v5863 = vsel %vm5799, 0.0, %v5735
      %v5864 = vsel %vm5800, 0.0, %v5736
      %v5865 = vsel %vm5801, 0.0, %v5737
      %v5866 = vsel %vm5802, 0.0, %v5738
      %v5867 = vsel %vm5803, 0.0, %v5739
      %v5868 = vsel %vm5804, 0.0, %v5740
      %v5869 = vsel %vm5805, 0.0, %v5741
      %v5870 = vsel %vm5806, 0.0, %v5742
      %v5871 = vsel %vm5807, 0.0, %v5743
      %v5872 = vsel %vm5808, 0.0, %v5744
      %v5873 = vsel %vm5809, 0.0, %v5745
      %v5874 = vsel %vm5810, 0.0, %v5746
      %v5875 = vsel %vm5811, 0.0, %v5747
      %v5876 = vsel %vm5812, 0.0, %v5748
      %v5877 = vsub.f32 0.0, %v2369
      %v5878 = vsub.f32 0.0, %v2370
      %v5879 = vsub.f32 0.0, %v2371
      %v5880 = vsub.f32 0.0, %v2372
      %v5881 = vsub.f32 0.0, %v2373
      %v5882 = vsub.f32 0.0, %v2374
      %v5883 = vsub.f32 0.0, %v2375
      %v5884 = vsub.f32 0.0, %v2376
      %v5885 = vsub.f32 0.0, %v2377
      %v5886 = vsub.f32 0.0, %v2378
      %v5887 = vsub.f32 0.0, %v2379
      %v5888 = vsub.f32 0.0, %v2380
      %v5889 = vsub.f32 0.0, %v2381
      %v5890 = vsub.f32 0.0, %v2382
      %v5891 = vsub.f32 0.0, %v2383
      %v5892 = vsub.f32 0.0, %v2384
      %v5893 = vsub.f32 0.0, %v2385
      %v5894 = vsub.f32 0.0, %v2386
      %v5895 = vsub.f32 0.0, %v2387
      %v5896 = vsub.f32 0.0, %v2388
      %v5897 = vsub.f32 0.0, %v2389
      %v5898 = vsub.f32 0.0, %v2390
      %v5899 = vsub.f32 0.0, %v2391
      %v5900 = vsub.f32 0.0, %v2392
      %v5901 = vsub.f32 0.0, %v2393
      %v5902 = vsub.f32 0.0, %v2394
      %v5903 = vsub.f32 0.0, %v2395
      %v5904 = vsub.f32 0.0, %v2396
      %v5905 = vsub.f32 0.0, %v2397
      %v5906 = vsub.f32 0.0, %v2398
      %v5907 = vsub.f32 0.0, %v2399
      %v5908 = vsub.f32 0.0, %v2400
      %v5909 = vsub.f32 0.0, %v2401
      %v5910 = vsub.f32 0.0, %v2402
      %v5911 = vsub.f32 0.0, %v2403
      %v5912 = vsub.f32 0.0, %v2404
      %v5913 = vsub.f32 0.0, %v2405
      %v5914 = vsub.f32 0.0, %v2406
      %v5915 = vsub.f32 0.0, %v2407
      %v5916 = vsub.f32 0.0, %v2408
      %v5917 = vsub.f32 0.0, %v2409
      %v5918 = vsub.f32 0.0, %v2410
      %v5919 = vsub.f32 0.0, %v2411
      %v5920 = vsub.f32 0.0, %v2412
      %v5921 = vsub.f32 0.0, %v2413
      %v5922 = vsub.f32 0.0, %v2414
      %v5923 = vsub.f32 0.0, %v2415
      %v5924 = vsub.f32 0.0, %v2416
      %v5925 = vsub.f32 0.0, %v2417
      %v5926 = vsub.f32 0.0, %v2418
      %v5927 = vsub.f32 0.0, %v2419
      %v5928 = vsub.f32 0.0, %v2420
      %v5929 = vsub.f32 0.0, %v2421
      %v5930 = vsub.f32 0.0, %v2422
      %v5931 = vsub.f32 0.0, %v2423
      %v5932 = vsub.f32 0.0, %v2424
      %v5933 = vsub.f32 0.0, %v2425
      %v5934 = vsub.f32 0.0, %v2426
      %v5935 = vsub.f32 0.0, %v2427
      %v5936 = vsub.f32 0.0, %v2428
      %v5937 = vsub.f32 0.0, %v2429
      %v5938 = vsub.f32 0.0, %v2430
      %v5939 = vsub.f32 0.0, %v2431
      %v5940 = vsub.f32 0.0, %v2432
      %v5941 = vmax.f32 %v5877, 0.0
      %v5942 = vmax.f32 %v5878, 0.0
      %v5943 = vmax.f32 %v5879, 0.0
      %v5944 = vmax.f32 %v5880, 0.0
      %v5945 = vmax.f32 %v5881, 0.0
      %v5946 = vmax.f32 %v5882, 0.0
      %v5947 = vmax.f32 %v5883, 0.0
      %v5948 = vmax.f32 %v5884, 0.0
      %v5949 = vmax.f32 %v5885, 0.0
      %v5950 = vmax.f32 %v5886, 0.0
      %v5951 = vmax.f32 %v5887, 0.0
      %v5952 = vmax.f32 %v5888, 0.0
      %v5953 = vmax.f32 %v5889, 0.0
      %v5954 = vmax.f32 %v5890, 0.0
      %v5955 = vmax.f32 %v5891, 0.0
      %v5956 = vmax.f32 %v5892, 0.0
      %v5957 = vmax.f32 %v5893, 0.0
      %v5958 = vmax.f32 %v5894, 0.0
      %v5959 = vmax.f32 %v5895, 0.0
      %v5960 = vmax.f32 %v5896, 0.0
      %v5961 = vmax.f32 %v5897, 0.0
      %v5962 = vmax.f32 %v5898, 0.0
      %v5963 = vmax.f32 %v5899, 0.0
      %v5964 = vmax.f32 %v5900, 0.0
      %v5965 = vmax.f32 %v5901, 0.0
      %v5966 = vmax.f32 %v5902, 0.0
      %v5967 = vmax.f32 %v5903, 0.0
      %v5968 = vmax.f32 %v5904, 0.0
      %v5969 = vmax.f32 %v5905, 0.0
      %v5970 = vmax.f32 %v5906, 0.0
      %v5971 = vmax.f32 %v5907, 0.0
      %v5972 = vmax.f32 %v5908, 0.0
      %v5973 = vmax.f32 %v5909, 0.0
      %v5974 = vmax.f32 %v5910, 0.0
      %v5975 = vmax.f32 %v5911, 0.0
      %v5976 = vmax.f32 %v5912, 0.0
      %v5977 = vmax.f32 %v5913, 0.0
      %v5978 = vmax.f32 %v5914, 0.0
      %v5979 = vmax.f32 %v5915, 0.0
      %v5980 = vmax.f32 %v5916, 0.0
      %v5981 = vmax.f32 %v5917, 0.0
      %v5982 = vmax.f32 %v5918, 0.0
      %v5983 = vmax.f32 %v5919, 0.0
      %v5984 = vmax.f32 %v5920, 0.0
      %v5985 = vmax.f32 %v5921, 0.0
      %v5986 = vmax.f32 %v5922, 0.0
      %v5987 = vmax.f32 %v5923, 0.0
      %v5988 = vmax.f32 %v5924, 0.0
      %v5989 = vmax.f32 %v5925, 0.0
      %v5990 = vmax.f32 %v5926, 0.0
      %v5991 = vmax.f32 %v5927, 0.0
      %v5992 = vmax.f32 %v5928, 0.0
      %v5993 = vmax.f32 %v5929, 0.0
      %v5994 = vmax.f32 %v5930, 0.0
      %v5995 = vmax.f32 %v5931, 0.0
      %v5996 = vmax.f32 %v5932, 0.0
      %v5997 = vmax.f32 %v5933, 0.0
      %v5998 = vmax.f32 %v5934, 0.0
      %v5999 = vmax.f32 %v5935, 0.0
      %v6000 = vmax.f32 %v5936, 0.0
      %v6001 = vmax.f32 %v5937, 0.0
      %v6002 = vmax.f32 %v5938, 0.0
      %v6003 = vmax.f32 %v5939, 0.0
      %v6004 = vmax.f32 %v5940, 0.0
      %v6005 = vsub.f32 %v5173, %v5813
      %v6006 = vsub.f32 %v5174, %v5814
      %v6007 = vsub.f32 %v5175, %v5815
      %v6008 = vsub.f32 %v5176, %v5816
      %v6009 = vsub.f32 %v5177, %v5817
      %v6010 = vsub.f32 %v5178, %v5818
      %v6011 = vsub.f32 %v5179, %v5819
      %v6012 = vsub.f32 %v5180, %v5820
      %v6013 = vsub.f32 %v5181, %v5821
      %v6014 = vsub.f32 %v5182, %v5822
      %v6015 = vsub.f32 %v5183, %v5823
      %v6016 = vsub.f32 %v5184, %v5824
      %v6017 = vsub.f32 %v5185, %v5825
      %v6018 = vsub.f32 %v5186, %v5826
      %v6019 = vsub.f32 %v5187, %v5827
      %v6020 = vsub.f32 %v5188, %v5828
      %v6021 = vsub.f32 %v5189, %v5829
      %v6022 = vsub.f32 %v5190, %v5830
      %v6023 = vsub.f32 %v5191, %v5831
      %v6024 = vsub.f32 %v5192, %v5832
      %v6025 = vsub.f32 %v5193, %v5833
      %v6026 = vsub.f32 %v5194, %v5834
      %v6027 = vsub.f32 %v5195, %v5835
      %v6028 = vsub.f32 %v5196, %v5836
      %v6029 = vsub.f32 %v5197, %v5837
      %v6030 = vsub.f32 %v5198, %v5838
      %v6031 = vsub.f32 %v5199, %v5839
      %v6032 = vsub.f32 %v5200, %v5840
      %v6033 = vsub.f32 %v5201, %v5841
      %v6034 = vsub.f32 %v5202, %v5842
      %v6035 = vsub.f32 %v5203, %v5843
      %v6036 = vsub.f32 %v5204, %v5844
      %v6037 = vsub.f32 %v5205, %v5845
      %v6038 = vsub.f32 %v5206, %v5846
      %v6039 = vsub.f32 %v5207, %v5847
      %v6040 = vsub.f32 %v5208, %v5848
      %v6041 = vsub.f32 %v5209, %v5849
      %v6042 = vsub.f32 %v5210, %v5850
      %v6043 = vsub.f32 %v5211, %v5851
      %v6044 = vsub.f32 %v5212, %v5852
      %v6045 = vsub.f32 %v5213, %v5853
      %v6046 = vsub.f32 %v5214, %v5854
      %v6047 = vsub.f32 %v5215, %v5855
      %v6048 = vsub.f32 %v5216, %v5856
      %v6049 = vsub.f32 %v5217, %v5857
      %v6050 = vsub.f32 %v5218, %v5858
      %v6051 = vsub.f32 %v5219, %v5859
      %v6052 = vsub.f32 %v5220, %v5860
      %v6053 = vsub.f32 %v5221, %v5861
      %v6054 = vsub.f32 %v5222, %v5862
      %v6055 = vsub.f32 %v5223, %v5863
      %v6056 = vsub.f32 %v5224, %v5864
      %v6057 = vsub.f32 %v5225, %v5865
      %v6058 = vsub.f32 %v5226, %v5866
      %v6059 = vsub.f32 %v5227, %v5867
      %v6060 = vsub.f32 %v5228, %v5868
      %v6061 = vsub.f32 %v5229, %v5869
      %v6062 = vsub.f32 %v5230, %v5870
      %v6063 = vsub.f32 %v5231, %v5871
      %v6064 = vsub.f32 %v5232, %v5872
      %v6065 = vsub.f32 %v5233, %v5873
      %v6066 = vsub.f32 %v5234, %v5874
      %v6067 = vsub.f32 %v5235, %v5875
      %v6068 = vsub.f32 %v5236, %v5876
      %v6069 = vmul.f32 %v5941, %v6005
      %v6070 = vmul.f32 %v5942, %v6006
      %v6071 = vmul.f32 %v5943, %v6007
      %v6072 = vmul.f32 %v5944, %v6008
      %v6073 = vmul.f32 %v5945, %v6009
      %v6074 = vmul.f32 %v5946, %v6010
      %v6075 = vmul.f32 %v5947, %v6011
      %v6076 = vmul.f32 %v5948, %v6012
      %v6077 = vmul.f32 %v5949, %v6013
      %v6078 = vmul.f32 %v5950, %v6014
      %v6079 = vmul.f32 %v5951, %v6015
      %v6080 = vmul.f32 %v5952, %v6016
      %v6081 = vmul.f32 %v5953, %v6017
      %v6082 = vmul.f32 %v5954, %v6018
      %v6083 = vmul.f32 %v5955, %v6019
      %v6084 = vmul.f32 %v5956, %v6020
      %v6085 = vmul.f32 %v5957, %v6021
      %v6086 = vmul.f32 %v5958, %v6022
      %v6087 = vmul.f32 %v5959, %v6023
      %v6088 = vmul.f32 %v5960, %v6024
      %v6089 = vmul.f32 %v5961, %v6025
      %v6090 = vmul.f32 %v5962, %v6026
      %v6091 = vmul.f32 %v5963, %v6027
      %v6092 = vmul.f32 %v5964, %v6028
      %v6093 = vmul.f32 %v5965, %v6029
      %v6094 = vmul.f32 %v5966, %v6030
      %v6095 = vmul.f32 %v5967, %v6031
      %v6096 = vmul.f32 %v5968, %v6032
      %v6097 = vmul.f32 %v5969, %v6033
      %v6098 = vmul.f32 %v5970, %v6034
      %v6099 = vmul.f32 %v5971, %v6035
      %v6100 = vmul.f32 %v5972, %v6036
      %v6101 = vmul.f32 %v5973, %v6037
      %v6102 = vmul.f32 %v5974, %v6038
      %v6103 = vmul.f32 %v5975, %v6039
      %v6104 = vmul.f32 %v5976, %v6040
      %v6105 = vmul.f32 %v5977, %v6041
      %v6106 = vmul.f32 %v5978, %v6042
      %v6107 = vmul.f32 %v5979, %v6043
      %v6108 = vmul.f32 %v5980, %v6044
      %v6109 = vmul.f32 %v5981, %v6045
      %v6110 = vmul.f32 %v5982, %v6046
      %v6111 = vmul.f32 %v5983, %v6047
      %v6112 = vmul.f32 %v5984, %v6048
      %v6113 = vmul.f32 %v5985, %v6049
      %v6114 = vmul.f32 %v5986, %v6050
      %v6115 = vmul.f32 %v5987, %v6051
      %v6116 = vmul.f32 %v5988, %v6052
      %v6117 = vmul.f32 %v5989, %v6053
      %v6118 = vmul.f32 %v5990, %v6054
      %v6119 = vmul.f32 %v5991, %v6055
      %v6120 = vmul.f32 %v5992, %v6056
      %v6121 = vmul.f32 %v5993, %v6057
      %v6122 = vmul.f32 %v5994, %v6058
      %v6123 = vmul.f32 %v5995, %v6059
      %v6124 = vmul.f32 %v5996, %v6060
      %v6125 = vmul.f32 %v5997, %v6061
      %v6126 = vmul.f32 %v5998, %v6062
      %v6127 = vmul.f32 %v5999, %v6063
      %v6128 = vmul.f32 %v6000, %v6064
      %v6129 = vmul.f32 %v6001, %v6065
      %v6130 = vmul.f32 %v6002, %v6066
      %v6131 = vmul.f32 %v6003, %v6067
      %v6132 = vmul.f32 %v6004, %v6068
      %v6133 = vld [vmem:[%s3] sm:$0x1]
      %v6134 = vadd.f32 %v6069, %v6070
      %v6135 = vadd.f32 %v6134, %v6071
      %v6136 = vadd.f32 %v6135, %v6072
      %v6137 = vadd.f32 %v6136, %v6073
      %v6138 = vadd.f32 %v6137, %v6074
      %v6139 = vadd.f32 %v6138, %v6075
      %v6140 = vadd.f32 %v6139, %v6076
      %v6141 = vadd.f32 %v6140, %v6077
      %v6142 = vadd.f32 %v6141, %v6078
      %v6143 = vadd.f32 %v6142, %v6079
      %v6144 = vadd.f32 %v6143, %v6080
      %v6145 = vadd.f32 %v6144, %v6081
      %v6146 = vadd.f32 %v6145, %v6082
      %v6147 = vadd.f32 %v6146, %v6083
      %v6148 = vadd.f32 %v6147, %v6084
      %v6149 = vadd.f32 %v6148, %v6085
      %v6150 = vadd.f32 %v6149, %v6086
      %v6151 = vadd.f32 %v6150, %v6087
      %v6152 = vadd.f32 %v6151, %v6088
      %v6153 = vadd.f32 %v6152, %v6089
      %v6154 = vadd.f32 %v6153, %v6090
      %v6155 = vadd.f32 %v6154, %v6091
      %v6156 = vadd.f32 %v6155, %v6092
      %v6157 = vadd.f32 %v6156, %v6093
      %v6158 = vadd.f32 %v6157, %v6094
      %v6159 = vadd.f32 %v6158, %v6095
      %v6160 = vadd.f32 %v6159, %v6096
      %v6161 = vadd.f32 %v6160, %v6097
      %v6162 = vadd.f32 %v6161, %v6098
      %v6163 = vadd.f32 %v6162, %v6099
      %v6164 = vadd.f32 %v6163, %v6100
      %v6165 = vadd.f32 %v6164, %v6101
      %v6166 = vadd.f32 %v6165, %v6102
      %v6167 = vadd.f32 %v6166, %v6103
      %v6168 = vadd.f32 %v6167, %v6104
      %v6169 = vadd.f32 %v6168, %v6105
      %v6170 = vadd.f32 %v6169, %v6106
      %v6171 = vadd.f32 %v6170, %v6107
      %v6172 = vadd.f32 %v6171, %v6108
      %v6173 = vadd.f32 %v6172, %v6109
      %v6174 = vadd.f32 %v6173, %v6110
      %v6175 = vadd.f32 %v6174, %v6111
      %v6176 = vadd.f32 %v6175, %v6112
      %v6177 = vadd.f32 %v6176, %v6113
      %v6178 = vadd.f32 %v6177, %v6114
      %v6179 = vadd.f32 %v6178, %v6115
      %v6180 = vadd.f32 %v6179, %v6116
      %v6181 = vadd.f32 %v6180, %v6117
      %v6182 = vadd.f32 %v6181, %v6118
      %v6183 = vadd.f32 %v6182, %v6119
      %v6184 = vadd.f32 %v6183, %v6120
      %v6185 = vadd.f32 %v6184, %v6121
      %v6186 = vadd.f32 %v6185, %v6122
      %v6187 = vadd.f32 %v6186, %v6123
      %v6188 = vadd.f32 %v6187, %v6124
      %v6189 = vadd.f32 %v6188, %v6125
      %v6190 = vadd.f32 %v6189, %v6126
      %v6191 = vadd.f32 %v6190, %v6127
      %v6192 = vadd.f32 %v6191, %v6128
      %v6193 = vadd.f32 %v6192, %v6129
      %v6194 = vadd.f32 %v6193, %v6130
      %v6195 = vadd.f32 %v6194, %v6131
      %v6196 = vadd.f32 %v6195, %v6132
      %v6197 = vrot.slane %v6196, 4
      %v6198 = vadd.f32 %v6196, %v6197
      %v6199 = vrot.slane %v6198, 2
      %v6200 = vadd.f32 %v6198, %v6199
      %v6201 = vrot.slane %v6200, 1
      %v6202 = vadd.f32 %v6200, %v6201
      %v6203 = vadd.f32 %v6133, %v6202
      %6204 = vst [vmem:[%s3] sm:$0x1] %v6203
      %v6205 = vadd.f32 %v2497, %v2498
      %v6206 = vadd.f32 %v6205, %v2499
      %v6207 = vadd.f32 %v6206, %v2500
      %v6208 = vadd.f32 %v6207, %v2501
      %v6209 = vadd.f32 %v6208, %v2502
      %v6210 = vadd.f32 %v6209, %v2503
      %v6211 = vadd.f32 %v6210, %v2504
      %v6212 = vadd.f32 %v6211, %v2505
      %v6213 = vadd.f32 %v6212, %v2506
      %v6214 = vadd.f32 %v6213, %v2507
      %v6215 = vadd.f32 %v6214, %v2508
      %v6216 = vadd.f32 %v6215, %v2509
      %v6217 = vadd.f32 %v6216, %v2510
      %v6218 = vadd.f32 %v6217, %v2511
      %v6219 = vadd.f32 %v6218, %v2512
      %v6220 = vadd.f32 %v6219, %v2513
      %v6221 = vadd.f32 %v6220, %v2514
      %v6222 = vadd.f32 %v6221, %v2515
      %v6223 = vadd.f32 %v6222, %v2516
      %v6224 = vadd.f32 %v6223, %v2517
      %v6225 = vadd.f32 %v6224, %v2518
      %v6226 = vadd.f32 %v6225, %v2519
      %v6227 = vadd.f32 %v6226, %v2520
      %v6228 = vadd.f32 %v6227, %v2521
      %v6229 = vadd.f32 %v6228, %v2522
      %v6230 = vadd.f32 %v6229, %v2523
      %v6231 = vadd.f32 %v6230, %v2524
      %v6232 = vadd.f32 %v6231, %v2525
      %v6233 = vadd.f32 %v6232, %v2526
      %v6234 = vadd.f32 %v6233, %v2527
      %v6235 = vadd.f32 %v6234, %v2528
      %v6236 = vadd.f32 %v6235, %v2529
      %v6237 = vadd.f32 %v6236, %v2530
      %v6238 = vadd.f32 %v6237, %v2531
      %v6239 = vadd.f32 %v6238, %v2532
      %v6240 = vadd.f32 %v6239, %v2533
      %v6241 = vadd.f32 %v6240, %v2534
      %v6242 = vadd.f32 %v6241, %v2535
      %v6243 = vadd.f32 %v6242, %v2536
      %v6244 = vadd.f32 %v6243, %v2537
      %v6245 = vadd.f32 %v6244, %v2538
      %v6246 = vadd.f32 %v6245, %v2539
      %v6247 = vadd.f32 %v6246, %v2540
      %v6248 = vadd.f32 %v6247, %v2541
      %v6249 = vadd.f32 %v6248, %v2542
      %v6250 = vadd.f32 %v6249, %v2543
      %v6251 = vadd.f32 %v6250, %v2544
      %v6252 = vadd.f32 %v6251, %v2545
      %v6253 = vadd.f32 %v6252, %v2546
      %v6254 = vadd.f32 %v6253, %v2547
      %v6255 = vadd.f32 %v6254, %v2548
      %v6256 = vadd.f32 %v6255, %v2549
      %v6257 = vadd.f32 %v6256, %v2550
      %v6258 = vadd.f32 %v6257, %v2551
      %v6259 = vadd.f32 %v6258, %v2552
      %v6260 = vadd.f32 %v6259, %v2553
      %v6261 = vadd.f32 %v6260, %v2554
      %v6262 = vadd.f32 %v6261, %v2555
      %v6263 = vadd.f32 %v6262, %v2556
      %v6264 = vadd.f32 %v6263, %v2557
      %v6265 = vadd.f32 %v6264, %v2558
      %v6266 = vadd.f32 %v6265, %v2559
      %v6267 = vadd.f32 %v6266, %v2560
      %6268 = vadd.xlane.f32.xlu0 %v6267
      %v6269 = vpop.xlane.xlu0 %6268
      %v6270 = vrot.slane %v6269, 4
      %v6271 = vadd.f32 %v6269, %v6270
      %v6272 = vrot.slane %v6271, 2
      %v6273 = vadd.f32 %v6271, %v6272
      %v6274 = vrot.slane %v6273, 1
      %v6275 = vadd.f32 %v6273, %v6274
      %s6276 = vtos %v6275
      %v6277 = vstv %s6276
      %v6278 = vadd.f32 %v2562, %v6277
      %6279 = vst [vmem:[#allocation2] sm:$0x1] %v6278
      // Predicated region
      $region37: #{dice_lovasz_bce_loss.3} parent=31 // pred_check
        %p6280 = pneg %p100
      $region38: #{dice_lovasz_bce_loss.3} parent=31 // pred_check_branch
        %6282 = sbr.rel (%p6280) target = $region40
      $region39: #{dice_lovasz_bce_loss.3} parent=31 // pred_region
        _
      $region40: #{dice_lovasz_bce_loss.3} parent=31 // pred_fallthru
        _
      // Predicated region
      $region41: #{dice_lovasz_bce_loss.3} parent=31 // pred_check
        %p6283 = pneg %p100
      $region42: #{dice_lovasz_bce_loss.3} parent=31 // pred_check_branch
        %6285 = sbr.rel (%p6283) target = $region44
      $region43: #{dice_lovasz_bce_loss.3} parent=31 // pred_region
        _
      $region44: #{dice_lovasz_bce_loss.3} parent=31 // pred_fallthru
        _
    $region32: #{dice_lovasz_bce_loss.3} parent=5 // pred_fallthru
      _
    %p6286 = scmp.le.s32.totalorder 2, %s9
    // Predicated region
    $region45: #{dice_lovasz_bce_loss.3} parent=5 // pred_check
      %p6287 = pneg %p6286
    $region46: #{dice_lovasz_bce_loss.3} parent=5 // pred_check_branch
      %6289 = sbr.rel (%p6287) target = $region48
    $region47: #{dice_lovasz_bce_loss.3} parent=5 // pred_region
      %s6290 = ssub.s32 %s9, 2
    $region48: #{dice_lovasz_bce_loss.3} parent=5 // pred_fallthru
      _
  $region6: #{dice_lovasz_bce_loss.3} parent=0 // loop_footer
    %s13 = sadd.s32 1, %s9
  $region7: #{dice_lovasz_bce_loss.3} parent=0 // loop_footer_branch
    %8 = sbr.rel target = $region3
  $region8: #{dice_lovasz_bce_loss.3} parent=0 // loop_exit
    _

</llo_original>
